<compile_context>
chip_gen: v7x
topology: tpu7x:2x2x1
jax: 0.10.0
libtpu: 0.0.40
codegen_flags: <defaults>
</compile_context>

<pallas_src>
import jax
import jax.numpy as jnp
import numpy as np
from jax.experimental import pallas as pl
from jax.experimental.pallas import tpu as pltpu

EPS = 1e-5


# --------------------------- Pallas kernel -----------------------------------

def fused_cnn_kernel(x_ref, w1_ref, sc1_ref, sh1_ref, w2_ref, sc2_ref, sh2_ref,
                     fcw_ref, o_ref, xpad_ref):
    """conv1(3x3,s1,'same')+BN+ReLU -> [pad+avgpool(2x2,s1)+conv2(3x3,s2) folded
    into one 4x4 stride-2 conv]+BN+ReLU -> fused FC, for one batch element.

    x_ref   : (1, H, W, Cin)       NHWC input block
    w1_ref  : (9*Cin, n1)          bf16 im2col conv1 weight, rows (ky,kx,c)
    sc1/sh1 : (1, n1)              f32 folded BN1 scale/shift (conv bias incl.)
    w2_ref  : (16*n1, n2)          bf16 effective 4x4 (pool-folded) conv2 weight
    sc2/sh2 : (1, n2)              f32 folded BN2 scale/shift
    fcw_ref : (n_classes, Ho*Wx, n2) f32 FC weight (NCHW flatten perm + stride-2
                                     x subsampling folded in; odd x' rows are 0)
    o_ref   : (1, 1, n_classes)    logits
    xpad_ref: VMEM (H+2, W+2, Cin) f32 scratch ('same' zero padding for conv1)
    """
    _, H, W, Cin = x_ref.shape
    n1 = w1_ref.shape[1]
    n_classes = fcw_ref.shape[0]
    Ho = (H - 2) // 2          # conv2 output rows (7 for H=16)
    Wx = W - 3                 # stride-1 x positions kept for conv2 (13)

    # ---- conv1 'same' padding: zero only the 1-px border, write interior once
    zrow = jnp.zeros((1, W + 2, Cin), jnp.float32)
    zcol = jnp.zeros((H + 2, 1, Cin), jnp.float32)
    xpad_ref[0:1, :, :] = zrow
    xpad_ref[H + 1:H + 2, :, :] = zrow
    xpad_ref[:, 0:1, :] = zcol
    xpad_ref[:, W + 1:W + 2, :] = zcol
    xpad_ref[1:H + 1, 1:W + 1, :] = x_ref[0]

    # ---- conv1: one im2col MXU matmul, bf16 operands, f32 accumulate ----
    p1 = jnp.concatenate(
        [xpad_ref[ky:ky + H, kx:kx + W, :].reshape(H * W, Cin)
         for ky in range(3) for kx in range(3)], axis=1)            # (H*W, 9*Cin)
    h1m = jnp.dot(p1.astype(jnp.bfloat16), w1_ref[...],
                  preferred_element_type=jnp.float32)               # (H*W, n1)
    h1m = jnp.maximum(h1m * sc1_ref[...] + sh1_ref[...], 0.0)

    # ---- pool(2x2,s1) + conv2(3x3,s2,'valid') as one effective 4x4 conv ----
    # y-stride-2 via row-parity planes (leading-dim reshape only, no relayout);
    # x is computed at stride 1 (13 positions) -- the odd positions carry zero
    # weight in fcw_ref, which realises conv2's stride-2 x subsampling exactly.
    h1 = h1m.reshape(H, W, n1)
    h1r = h1.reshape(H // 2, 2, W, n1)
    hr_ev = h1r[:, 0]                        # rows 0,2,...,H-2  (H//2, W, n1)
    hr_od = h1r[:, 1]                        # rows 1,3,...,H-1
    taps = []
    for a in range(4):
        plane = hr_ev if a % 2 == 0 else hr_od
        ha = plane[a // 2:a // 2 + Ho]                         # (Ho, W, n1)
        for b in range(4):
            taps.append(ha[:, b:b + Wx, :].reshape(Ho * Wx, n1))
    p2 = jnp.concatenate(taps, axis=1)                         # (Ho*Wx, 16*n1)
    h3 = jnp.dot(p2.astype(jnp.bfloat16), w2_ref[...],
                 preferred_element_type=jnp.float32)           # (Ho*Wx, n2)
    h3 = jnp.maximum(h3 * sc2_ref[...] + sh2_ref[...], 0.0)

    # ---- fused FC (bias=False): logits[n] = sum_{p,c} h3[p,c] * fcw[n,p,c] ----
    # Per-class multiply + two single-axis reduces keeps live data ~6 vregs.
    logits = jnp.concatenate(
        [jnp.sum(jnp.sum(h3 * fcw_ref[n], axis=0, keepdims=True),
                 axis=1, keepdims=True)
         for n in range(n_classes)], axis=1)                   # (1, n_classes)
    o_ref[...] = logits[None].astype(o_ref.dtype)


# --------------------------- pallas_call wrapper ------------------------------

def _fused_call(x_nhwc, p):
    B, H, W, Cin = x_nhwc.shape
    n_classes = p["fcw"].shape[0]
    return pl.pallas_call(
        fused_cnn_kernel,
        out_shape=jax.ShapeDtypeStruct((B, 1, n_classes), jnp.float32),
        grid=(B,),
        in_specs=[
            pl.BlockSpec((1, H, W, Cin), lambda b: (b, 0, 0, 0)),
            pl.BlockSpec(p["w1k"].shape, lambda b: (0, 0)),
            pl.BlockSpec(p["scale1"].shape, lambda b: (0, 0)),
            pl.BlockSpec(p["shift1"].shape, lambda b: (0, 0)),
            pl.BlockSpec(p["w2e"].shape, lambda b: (0, 0)),
            pl.BlockSpec(p["scale2"].shape, lambda b: (0, 0)),
            pl.BlockSpec(p["shift2"].shape, lambda b: (0, 0)),
            pl.BlockSpec(p["fcw"].shape, lambda b: (0, 0, 0)),
        ],
        out_specs=pl.BlockSpec((1, 1, n_classes), lambda b: (b, 0, 0)),
        scratch_shapes=[pltpu.VMEM((H + 2, W + 2, Cin), jnp.float32)],
        compiler_params=pltpu.CompilerParams(dimension_semantics=("parallel",)),
    )(x_nhwc, p["w1k"], p["scale1"], p["shift1"], p["w2e"], p["scale2"],
      p["shift2"], p["fcw"])


# --------------------------- forward pass (glue) ------------------------------

@jax.jit
def cnn_forward(x_nchw, params):
    # TODO(synk): NCHW->NHWC transpose kept as one tiny wrapper op (3 KB).
    x = jnp.transpose(x_nchw, (0, 2, 3, 1))
    out = _fused_call(x, params)              # (B, 1, n_classes)
    return out.reshape(out.shape[0], -1)      # free row-major reshape


# --------------------------- parameter folding --------------------------------

def prepare_params(w1, b1, g1, be1, m1, v1, w2, b2, g2, be2, m2, v2, fc_w, H, W):
    """Fold conv bias + BN into scale/shift; fold avgpool into conv2 (4x4 eff.
    kernel); fold torch's NCHW flatten + conv2's x-stride-2 into the FC weight;
    cast MXU operands to bf16.  All done once, host-side."""
    assert H == W and H % 2 == 0, "square, even spatial dims assumed"
    Cin, n1 = w1.shape[2], w1.shape[3]
    n2 = w2.shape[3]
    n_classes = fc_w.shape[0]
    Ho = (H - 2) // 2
    Wx = W - 3

    w1n = np.asarray(w1, np.float32)
    w2n = np.asarray(w2, np.float32)
    fcn = np.asarray(fc_w, np.float32)
    b1n, g1n, be1n, m1n, v1n = (np.asarray(a, np.float32) for a in (b1, g1, be1, m1, v1))
    b2n, g2n, be2n, m2n, v2n = (np.asarray(a, np.float32) for a in (b2, g2, be2, m2, v2))

    s1 = g1n / np.sqrt(v1n + EPS)
    s2 = g2n / np.sqrt(v2n + EPS)

    # conv1 im2col weight, rows ordered (ky, kx, cin) to match the kernel's p1.
    w1k = w1n.reshape(9 * Cin, n1)

    # AvgPool(2x2, s1) folded into conv2 -> effective 4x4 kernel, rows (a,b,cin).
    # (ZeroPad2d((0,1,0,1)) padding is never reached by conv2's stride-2 valid
    #  windows for even H, so this folding is exact.)
    w2eff = np.zeros((4, 4, n1, n2), np.float32)
    for a in range(4):
        for b in range(4):
            for ky in (a - 1, a):
                if 0 <= ky <= 2:
                    for kx in (b - 1, b):
                        if 0 <= kx <= 2:
                            w2eff[a, b] += 0.25 * w2n[ky, kx]
    w2e = w2eff.reshape(16 * n1, n2)

    # FC weight: torch NCHW-flatten permutation folded in, laid out on the
    # kernel's (oy, x') grid; odd x' positions get weight 0, realising conv2's
    # stride-2 x subsampling with no in-kernel gather.
    fc3 = fcn.reshape(n_classes, n2, Ho, Ho)
    fcw = np.zeros((n_classes, Ho * Wx, n2), np.float32)
    for oy in range(Ho):
        for ox in range(Ho):
            fcw[:, oy * Wx + 2 * ox, :] = fc3[:, :, oy, ox]

    return dict(
        w1k=jnp.asarray(w1k, jnp.bfloat16),
        scale1=jnp.asarray(s1.reshape(1, n1)),
        shift1=jnp.asarray(((b1n - m1n) * s1 + be1n).reshape(1, n1)),
        w2e=jnp.asarray(w2e, jnp.bfloat16),
        scale2=jnp.asarray(s2.reshape(1, n2)),
        shift2=jnp.asarray(((b2n - m2n) * s2 + be2n).reshape(1, n2)),
        fcw=jnp.asarray(fcw),
        # raw parameters, used only by the pure-JAX reference
        w1=w1, b1=b1, g1=g1, be1=be1, m1=m1, v1=v1,
        w2=w2, b2=b2, g2=g2, be2=be2, m2=m2, v2=v2, fc_w=fc_w,
    )


# --------------------------- pure-JAX reference -------------------------------

def reference_forward(x_nchw, params):
    x = jnp.transpose(x_nchw, (0, 2, 3, 1))
    dn = ("NHWC", "HWIO", "NHWC")
    y = jax.lax.conv_general_dilated(x, params["w1"], (1, 1), "SAME",
                                     dimension_numbers=dn) + params["b1"]
    y = (y - params["m1"]) / jnp.sqrt(params["v1"] + EPS) * params["g1"] + params["be1"]
    y = jnp.maximum(y, 0.0)
    y = jnp.pad(y, ((0, 0), (0, 1), (0, 1), (0, 0)))
    y = jax.lax.reduce_window(y, 0.0, jax.lax.add, (1, 2, 2, 1), (1, 1, 1, 1),
                              "VALID") / 4.0
    y = jax.lax.conv_general_dilated(y, params["w2"], (2, 2), "VALID",
                                     dimension_numbers=dn) + params["b2"]
    y = (y - params["m2"]) / jnp.sqrt(params["v2"] + EPS) * params["g2"] + params["be2"]
    y = jnp.maximum(y, 0.0)
    y = jnp.transpose(y, (0, 3, 1, 2)).reshape(y.shape[0], -1)
    return y @ params["fc_w"].T


# --------------------------------- main ----------------------------------------

if __name__ == "__main__":
    B, Cin, H, W = 2, 3, 16, 16           # small input consistent with the module
    n1, n2, n_classes = 32, 64, 10        # small channel widths for the test

    key = jax.random.PRNGKey(0)
    ks = jax.random.split(key, 12)
    x_nchw = jax.random.normal(ks[0], (B, Cin, H, W), jnp.float32)

    # conv1 / bn1 parameters (deterministic synthetic init)
    w1 = jax.random.normal(ks[1], (3, 3, Cin, n1), jnp.float32) * 0.1   # HWIO
    b1 = jax.random.normal(ks[2], (n1,), jnp.float32) * 0.1
    g1 = 1.0 + 0.1 * jax.random.normal(ks[3], (n1,), jnp.float32)
    be1 = 0.1 * jax.random.normal(ks[4], (n1,), jnp.float32)
    m1 = 0.1 * jax.random.normal(ks[5], (n1,), jnp.float32)
    v1 = 1.0 + 0.1 * jnp.abs(jax.random.normal(ks[6], (n1,), jnp.float32))

    # conv2 / bn2 parameters
    w2 = jax.random.normal(ks[7], (3, 3, n1, n2), jnp.float32) * 0.05   # HWIO
    b2 = jax.random.normal(ks[8], (n2,), jnp.float32) * 0.1
    g2 = 1.0 + 0.1 * jax.random.normal(ks[9], (n2,), jnp.float32)
    be2 = 0.1 * jax.random.normal(ks[10], (n2,), jnp.float32)
    m2 = jnp.zeros((n2,), jnp.float32)
    v2 = jnp.ones((n2,), jnp.float32)

    # fc (bias=False); fc_in_features formula from the torch module (layers=2)
    Ho = (H - 3) // 2 + 1
    fc_in = int(n2 * ((W - 2) / 2) ** 2)
    assert fc_in == n2 * Ho * Ho
    fc_w = jax.random.normal(ks[11], (n_classes, fc_in), jnp.float32) * 0.02

    params = prepare_params(w1, b1, g1, be1, m1, v1,
                            w2, b2, g2, be2, m2, v2, fc_w, H, W)

    out = jax.block_until_ready(cnn_forward(x_nchw, params))
    ref = jax.block_until_ready(reference_forward(x_nchw, params))
    assert out.shape == (B, n_classes)
    # Tolerance absorbs bf16 MXU operands (f32 accumulate) vs the f32 XLA conv
    # reference; layout bugs would blow past this by orders of magnitude.
    np.testing.assert_allclose(np.asarray(out), np.asarray(ref), rtol=3e-2, atol=3e-2)
    print("KERNEL_OK")
</pallas_src>

<mosaic_0001>
module attributes {stable_mosaic.version = 11 : i64} {
  func.func @fused_cnn_kernel(%arg0: i32, %arg1: memref<1x16x16x3xf32, #tpu.memory_space<vmem>>, %arg2: memref<27x32xbf16, #tpu.memory_space<vmem>>, %arg3: memref<1x32xf32, #tpu.memory_space<vmem>>, %arg4: memref<1x32xf32, #tpu.memory_space<vmem>>, %arg5: memref<512x64xbf16, #tpu.memory_space<vmem>>, %arg6: memref<1x64xf32, #tpu.memory_space<vmem>>, %arg7: memref<1x64xf32, #tpu.memory_space<vmem>>, %arg8: memref<10x91x64xf32, #tpu.memory_space<vmem>>, %arg9: memref<1x1x10xf32, #tpu.memory_space<vmem>>, %arg10: memref<18x18x3xf32, #tpu.memory_space<vmem>>) attributes {dimension_semantics = [#tpu.dimension_semantics<parallel>], iteration_bounds = array<i64: 2>, scalar_prefetch = 0 : i64, scratch_operands = 1 : i64, tpu.core_type = #tpu.core_type<tc>, window_params = [{transform_indices = @transform_0, window_bounds = array<i64: 1, 16, 16, 3>}, {pipeline_mode = #tpu.pipeline_mode<synchronous>, transform_indices = @transform_1, window_bounds = array<i64: 27, 32>}, {pipeline_mode = #tpu.pipeline_mode<synchronous>, transform_indices = @transform_2, window_bounds = array<i64: 1, 32>}, {pipeline_mode = #tpu.pipeline_mode<synchronous>, transform_indices = @transform_3, window_bounds = array<i64: 1, 32>}, {pipeline_mode = #tpu.pipeline_mode<synchronous>, transform_indices = @transform_4, window_bounds = array<i64: 512, 64>}, {pipeline_mode = #tpu.pipeline_mode<synchronous>, transform_indices = @transform_5, window_bounds = array<i64: 1, 64>}, {pipeline_mode = #tpu.pipeline_mode<synchronous>, transform_indices = @transform_6, window_bounds = array<i64: 1, 64>}, {pipeline_mode = #tpu.pipeline_mode<synchronous>, transform_indices = @transform_7, window_bounds = array<i64: 10, 91, 64>}, {transform_indices = @transform_8, window_bounds = array<i64: 1, 1, 10>}]} {
    %cst = arith.constant 0.000000e+00 : f32
    %0 = vector.broadcast %cst : f32 to vector<1x18x3xf32>
    %cst_0 = arith.constant 0.000000e+00 : f32
    %1 = vector.broadcast %cst_0 : f32 to vector<18x1x3xf32>
    %c0 = arith.constant 0 : index
    %c0_1 = arith.constant 0 : index
    %c0_2 = arith.constant 0 : index
    %2 = vector.load %arg10[%c0, %c0_1, %c0_2] : memref<18x18x3xf32, #tpu.memory_space<vmem>>, vector<1x18x3xf32>
    tpu.vector_store %arg10[%c0, %c0_1, %c0_2], %0 {strides = array<i32>} : memref<18x18x3xf32, #tpu.memory_space<vmem>>, vector<1x18x3xf32>,
    %c17 = arith.constant 17 : index
    %c0_3 = arith.constant 0 : index
    %c0_4 = arith.constant 0 : index
    %3 = vector.load %arg10[%c17, %c0_3, %c0_4] : memref<18x18x3xf32, #tpu.memory_space<vmem>>, vector<1x18x3xf32>
    tpu.vector_store %arg10[%c17, %c0_3, %c0_4], %0 {strides = array<i32>} : memref<18x18x3xf32, #tpu.memory_space<vmem>>, vector<1x18x3xf32>,
    %c0_5 = arith.constant 0 : index
    %c0_6 = arith.constant 0 : index
    %c0_7 = arith.constant 0 : index
    %4 = vector.load %arg10[%c0_5, %c0_6, %c0_7] : memref<18x18x3xf32, #tpu.memory_space<vmem>>, vector<18x1x3xf32>
    tpu.vector_store %arg10[%c0_5, %c0_6, %c0_7], %1 {strides = array<i32>} : memref<18x18x3xf32, #tpu.memory_space<vmem>>, vector<18x1x3xf32>,
    %c0_8 = arith.constant 0 : index
    %c17_9 = arith.constant 17 : index
    %c0_10 = arith.constant 0 : index
    %5 = vector.load %arg10[%c0_8, %c17_9, %c0_10] : memref<18x18x3xf32, #tpu.memory_space<vmem>>, vector<18x1x3xf32>
    tpu.vector_store %arg10[%c0_8, %c17_9, %c0_10], %1 {strides = array<i32>} : memref<18x18x3xf32, #tpu.memory_space<vmem>>, vector<18x1x3xf32>,
    %c0_11 = arith.constant 0 : index
    %c0_12 = arith.constant 0 : index
    %c0_13 = arith.constant 0 : index
    %c0_14 = arith.constant 0 : index
    %6 = vector.load %arg1[%c0_11, %c0_12, %c0_13, %c0_14] : memref<1x16x16x3xf32, #tpu.memory_space<vmem>>, vector<1x16x16x3xf32>
    %7 = vector.shape_cast %6 : vector<1x16x16x3xf32> to vector<16x16x3xf32>
    %c1 = arith.constant 1 : index
    %c1_15 = arith.constant 1 : index
    %c0_16 = arith.constant 0 : index
    %8 = vector.load %arg10[%c1, %c1_15, %c0_16] : memref<18x18x3xf32, #tpu.memory_space<vmem>>, vector<16x16x3xf32>
    tpu.vector_store %arg10[%c1, %c1_15, %c0_16], %7 {strides = array<i32>} : memref<18x18x3xf32, #tpu.memory_space<vmem>>, vector<16x16x3xf32>,
    %c0_17 = arith.constant 0 : index
    %c0_18 = arith.constant 0 : index
    %c0_19 = arith.constant 0 : index
    %9 = vector.load %arg10[%c0_17, %c0_18, %c0_19] : memref<18x18x3xf32, #tpu.memory_space<vmem>>, vector<16x16x3xf32>
    %10 = vector.shape_cast %9 : vector<16x16x3xf32> to vector<256x3xf32>
    %c0_20 = arith.constant 0 : index
    %c1_21 = arith.constant 1 : index
    %c0_22 = arith.constant 0 : index
    %11 = vector.load %arg10[%c0_20, %c1_21, %c0_22] : memref<18x18x3xf32, #tpu.memory_space<vmem>>, vector<16x16x3xf32>
    %12 = vector.shape_cast %11 : vector<16x16x3xf32> to vector<256x3xf32>
    %c0_23 = arith.constant 0 : index
    %c2 = arith.constant 2 : index
    %c0_24 = arith.constant 0 : index
    %13 = vector.load %arg10[%c0_23, %c2, %c0_24] : memref<18x18x3xf32, #tpu.memory_space<vmem>>, vector<16x16x3xf32>
    %14 = vector.shape_cast %13 : vector<16x16x3xf32> to vector<256x3xf32>
    %c1_25 = arith.constant 1 : index
    %c0_26 = arith.constant 0 : index
    %c0_27 = arith.constant 0 : index
    %15 = vector.load %arg10[%c1_25, %c0_26, %c0_27] : memref<18x18x3xf32, #tpu.memory_space<vmem>>, vector<16x16x3xf32>
    %16 = vector.shape_cast %15 : vector<16x16x3xf32> to vector<256x3xf32>
    %c1_28 = arith.constant 1 : index
    %c1_29 = arith.constant 1 : index
    %c0_30 = arith.constant 0 : index
    %17 = vector.load %arg10[%c1_28, %c1_29, %c0_30] : memref<18x18x3xf32, #tpu.memory_space<vmem>>, vector<16x16x3xf32>
    %18 = vector.shape_cast %17 : vector<16x16x3xf32> to vector<256x3xf32>
    %c1_31 = arith.constant 1 : index
    %c2_32 = arith.constant 2 : index
    %c0_33 = arith.constant 0 : index
    %19 = vector.load %arg10[%c1_31, %c2_32, %c0_33] : memref<18x18x3xf32, #tpu.memory_space<vmem>>, vector<16x16x3xf32>
    %20 = vector.shape_cast %19 : vector<16x16x3xf32> to vector<256x3xf32>
    %c2_34 = arith.constant 2 : index
    %c0_35 = arith.constant 0 : index
    %c0_36 = arith.constant 0 : index
    %21 = vector.load %arg10[%c2_34, %c0_35, %c0_36] : memref<18x18x3xf32, #tpu.memory_space<vmem>>, vector<16x16x3xf32>
    %22 = vector.shape_cast %21 : vector<16x16x3xf32> to vector<256x3xf32>
    %c2_37 = arith.constant 2 : index
    %c1_38 = arith.constant 1 : index
    %c0_39 = arith.constant 0 : index
    %23 = vector.load %arg10[%c2_37, %c1_38, %c0_39] : memref<18x18x3xf32, #tpu.memory_space<vmem>>, vector<16x16x3xf32>
    %24 = vector.shape_cast %23 : vector<16x16x3xf32> to vector<256x3xf32>
    %c2_40 = arith.constant 2 : index
    %c2_41 = arith.constant 2 : index
    %c0_42 = arith.constant 0 : index
    %25 = vector.load %arg10[%c2_40, %c2_41, %c0_42] : memref<18x18x3xf32, #tpu.memory_space<vmem>>, vector<16x16x3xf32>
    %26 = vector.shape_cast %25 : vector<16x16x3xf32> to vector<256x3xf32>
    %27 = tpu.concatenate %10, %12, %14, %16, %18, %20, %22, %24, %26 in 1 : vector<256x3xf32>, vector<256x3xf32>, vector<256x3xf32>, vector<256x3xf32>, vector<256x3xf32>, vector<256x3xf32>, vector<256x3xf32>, vector<256x3xf32>, vector<256x3xf32> -> vector<256x27xf32>
    %28 = arith.truncf %27 : vector<256x27xf32> to vector<256x27xbf16>
    %c0_43 = arith.constant 0 : index
    %c0_44 = arith.constant 0 : index
    %29 = vector.load %arg2[%c0_43, %c0_44] : memref<27x32xbf16, #tpu.memory_space<vmem>>, vector<27x32xbf16>
    %cst_45 = arith.constant dense<0.000000e+00> : vector<256x32xf32>
    %30 = tpu.matmul %28, %29, %cst_45 {dimension_numbers = #tpu.dot_dimension_numbers<[1], [0], [0], [1], [0, 0, 1, 1], [], []>} : vector<256x27xbf16>, vector<27x32xbf16>, vector<256x32xf32> -> vector<256x32xf32>
    %c0_46 = arith.constant 0 : index
    %c0_47 = arith.constant 0 : index
    %31 = vector.load %arg3[%c0_46, %c0_47] : memref<1x32xf32, #tpu.memory_space<vmem>>, vector<1x32xf32>
    %32 = vector.broadcast %31 : vector<1x32xf32> to vector<256x32xf32>
    %33 = arith.mulf %30, %32 : vector<256x32xf32>
    %c0_48 = arith.constant 0 : index
    %c0_49 = arith.constant 0 : index
    %34 = vector.load %arg4[%c0_48, %c0_49] : memref<1x32xf32, #tpu.memory_space<vmem>>, vector<1x32xf32>
    %35 = vector.broadcast %34 : vector<1x32xf32> to vector<256x32xf32>
    %36 = arith.addf %33, %35 : vector<256x32xf32>
    %cst_50 = arith.constant 0.000000e+00 : f32
    %37 = vector.broadcast %cst_50 : f32 to vector<256x32xf32>
    %38 = arith.maximumf %36, %37 : vector<256x32xf32>
    %39 = vector.shape_cast %38 : vector<256x32xf32> to vector<16x16x32xf32>
    %40 = vector.shape_cast %39 : vector<16x16x32xf32> to vector<8x2x16x32xf32>
    %41 = vector.extract_strided_slice %40 {offsets = [0, 0, 0, 0], sizes = [8, 1, 16, 32], strides = [1, 1, 1, 1]} : vector<8x2x16x32xf32> to vector<8x1x16x32xf32>
    %42 = vector.shape_cast %41 : vector<8x1x16x32xf32> to vector<8x16x32xf32>
    %43 = vector.extract_strided_slice %40 {offsets = [0, 1, 0, 0], sizes = [8, 1, 16, 32], strides = [1, 1, 1, 1]} : vector<8x2x16x32xf32> to vector<8x1x16x32xf32>
    %44 = vector.shape_cast %43 : vector<8x1x16x32xf32> to vector<8x16x32xf32>
    %45 = vector.extract_strided_slice %42 {offsets = [0, 0, 0], sizes = [7, 16, 32], strides = [1, 1, 1]} : vector<8x16x32xf32> to vector<7x16x32xf32>
    %46 = vector.extract_strided_slice %45 {offsets = [0, 0, 0], sizes = [7, 13, 32], strides = [1, 1, 1]} : vector<7x16x32xf32> to vector<7x13x32xf32>
    %47 = vector.shape_cast %46 : vector<7x13x32xf32> to vector<91x32xf32>
    %48 = vector.extract_strided_slice %45 {offsets = [0, 1, 0], sizes = [7, 13, 32], strides = [1, 1, 1]} : vector<7x16x32xf32> to vector<7x13x32xf32>
    %49 = vector.shape_cast %48 : vector<7x13x32xf32> to vector<91x32xf32>
    %50 = vector.extract_strided_slice %45 {offsets = [0, 2, 0], sizes = [7, 13, 32], strides = [1, 1, 1]} : vector<7x16x32xf32> to vector<7x13x32xf32>
    %51 = vector.shape_cast %50 : vector<7x13x32xf32> to vector<91x32xf32>
    %52 = vector.extract_strided_slice %45 {offsets = [0, 3, 0], sizes = [7, 13, 32], strides = [1, 1, 1]} : vector<7x16x32xf32> to vector<7x13x32xf32>
    %53 = vector.shape_cast %52 : vector<7x13x32xf32> to vector<91x32xf32>
    %54 = vector.extract_strided_slice %44 {offsets = [0, 0, 0], sizes = [7, 16, 32], strides = [1, 1, 1]} : vector<8x16x32xf32> to vector<7x16x32xf32>
    %55 = vector.extract_strided_slice %54 {offsets = [0, 0, 0], sizes = [7, 13, 32], strides = [1, 1, 1]} : vector<7x16x32xf32> to vector<7x13x32xf32>
    %56 = vector.shape_cast %55 : vector<7x13x32xf32> to vector<91x32xf32>
    %57 = vector.extract_strided_slice %54 {offsets = [0, 1, 0], sizes = [7, 13, 32], strides = [1, 1, 1]} : vector<7x16x32xf32> to vector<7x13x32xf32>
    %58 = vector.shape_cast %57 : vector<7x13x32xf32> to vector<91x32xf32>
    %59 = vector.extract_strided_slice %54 {offsets = [0, 2, 0], sizes = [7, 13, 32], strides = [1, 1, 1]} : vector<7x16x32xf32> to vector<7x13x32xf32>
    %60 = vector.shape_cast %59 : vector<7x13x32xf32> to vector<91x32xf32>
    %61 = vector.extract_strided_slice %54 {offsets = [0, 3, 0], sizes = [7, 13, 32], strides = [1, 1, 1]} : vector<7x16x32xf32> to vector<7x13x32xf32>
    %62 = vector.shape_cast %61 : vector<7x13x32xf32> to vector<91x32xf32>
    %63 = vector.extract_strided_slice %42 {offsets = [1, 0, 0], sizes = [7, 16, 32], strides = [1, 1, 1]} : vector<8x16x32xf32> to vector<7x16x32xf32>
    %64 = vector.extract_strided_slice %63 {offsets = [0, 0, 0], sizes = [7, 13, 32], strides = [1, 1, 1]} : vector<7x16x32xf32> to vector<7x13x32xf32>
    %65 = vector.shape_cast %64 : vector<7x13x32xf32> to vector<91x32xf32>
    %66 = vector.extract_strided_slice %63 {offsets = [0, 1, 0], sizes = [7, 13, 32], strides = [1, 1, 1]} : vector<7x16x32xf32> to vector<7x13x32xf32>
    %67 = vector.shape_cast %66 : vector<7x13x32xf32> to vector<91x32xf32>
    %68 = vector.extract_strided_slice %63 {offsets = [0, 2, 0], sizes = [7, 13, 32], strides = [1, 1, 1]} : vector<7x16x32xf32> to vector<7x13x32xf32>
    %69 = vector.shape_cast %68 : vector<7x13x32xf32> to vector<91x32xf32>
    %70 = vector.extract_strided_slice %63 {offsets = [0, 3, 0], sizes = [7, 13, 32], strides = [1, 1, 1]} : vector<7x16x32xf32> to vector<7x13x32xf32>
    %71 = vector.shape_cast %70 : vector<7x13x32xf32> to vector<91x32xf32>
    %72 = vector.extract_strided_slice %44 {offsets = [1, 0, 0], sizes = [7, 16, 32], strides = [1, 1, 1]} : vector<8x16x32xf32> to vector<7x16x32xf32>
    %73 = vector.extract_strided_slice %72 {offsets = [0, 0, 0], sizes = [7, 13, 32], strides = [1, 1, 1]} : vector<7x16x32xf32> to vector<7x13x32xf32>
    %74 = vector.shape_cast %73 : vector<7x13x32xf32> to vector<91x32xf32>
    %75 = vector.extract_strided_slice %72 {offsets = [0, 1, 0], sizes = [7, 13, 32], strides = [1, 1, 1]} : vector<7x16x32xf32> to vector<7x13x32xf32>
    %76 = vector.shape_cast %75 : vector<7x13x32xf32> to vector<91x32xf32>
    %77 = vector.extract_strided_slice %72 {offsets = [0, 2, 0], sizes = [7, 13, 32], strides = [1, 1, 1]} : vector<7x16x32xf32> to vector<7x13x32xf32>
    %78 = vector.shape_cast %77 : vector<7x13x32xf32> to vector<91x32xf32>
    %79 = vector.extract_strided_slice %72 {offsets = [0, 3, 0], sizes = [7, 13, 32], strides = [1, 1, 1]} : vector<7x16x32xf32> to vector<7x13x32xf32>
    %80 = vector.shape_cast %79 : vector<7x13x32xf32> to vector<91x32xf32>
    %81 = tpu.concatenate %47, %49, %51, %53, %56, %58, %60, %62, %65, %67, %69, %71, %74, %76, %78, %80 in 1 : vector<91x32xf32>, vector<91x32xf32>, vector<91x32xf32>, vector<91x32xf32>, vector<91x32xf32>, vector<91x32xf32>, vector<91x32xf32>, vector<91x32xf32>, vector<91x32xf32>, vector<91x32xf32>, vector<91x32xf32>, vector<91x32xf32>, vector<91x32xf32>, vector<91x32xf32>, vector<91x32xf32>, vector<91x32xf32> -> vector<91x512xf32>
    %82 = arith.truncf %81 : vector<91x512xf32> to vector<91x512xbf16>
    %c0_51 = arith.constant 0 : index
    %c0_52 = arith.constant 0 : index
    %83 = vector.load %arg5[%c0_51, %c0_52] : memref<512x64xbf16, #tpu.memory_space<vmem>>, vector<512x64xbf16>
    %cst_53 = arith.constant dense<0.000000e+00> : vector<91x64xf32>
    %84 = tpu.matmul %82, %83, %cst_53 {dimension_numbers = #tpu.dot_dimension_numbers<[1], [0], [0], [1], [0, 0, 1, 1], [], []>} : vector<91x512xbf16>, vector<512x64xbf16>, vector<91x64xf32> -> vector<91x64xf32>
    %c0_54 = arith.constant 0 : index
    %c0_55 = arith.constant 0 : index
    %85 = vector.load %arg6[%c0_54, %c0_55] : memref<1x64xf32, #tpu.memory_space<vmem>>, vector<1x64xf32>
    %86 = vector.broadcast %85 : vector<1x64xf32> to vector<91x64xf32>
    %87 = arith.mulf %84, %86 : vector<91x64xf32>
    %c0_56 = arith.constant 0 : index
    %c0_57 = arith.constant 0 : index
    %88 = vector.load %arg7[%c0_56, %c0_57] : memref<1x64xf32, #tpu.memory_space<vmem>>, vector<1x64xf32>
    %89 = vector.broadcast %88 : vector<1x64xf32> to vector<91x64xf32>
    %90 = arith.addf %87, %89 : vector<91x64xf32>
    %cst_58 = arith.constant 0.000000e+00 : f32
    %91 = vector.broadcast %cst_58 : f32 to vector<91x64xf32>
    %92 = arith.maximumf %90, %91 : vector<91x64xf32>
    %c0_59 = arith.constant 0 : index
    %c0_60 = arith.constant 0 : index
    %c0_61 = arith.constant 0 : index
    %93 = vector.load %arg8[%c0_59, %c0_60, %c0_61] : memref<10x91x64xf32, #tpu.memory_space<vmem>>, vector<1x91x64xf32>
    %94 = vector.shape_cast %93 : vector<1x91x64xf32> to vector<91x64xf32>
    %95 = arith.mulf %92, %94 : vector<91x64xf32>
    %cst_62 = arith.constant dense<0.000000e+00> : vector<64xf32>
    %96 = vector.multi_reduction <add>, %95, %cst_62 [0] : vector<91x64xf32> to vector<64xf32>
    %97 = vector.shape_cast %96 : vector<64xf32> to vector<1x64xf32>
    %cst_63 = arith.constant dense<0.000000e+00> : vector<1xf32>
    %98 = vector.multi_reduction <add>, %97, %cst_63 [1] : vector<1x64xf32> to vector<1xf32>
    %99 = vector.shape_cast %98 : vector<1xf32> to vector<1x1xf32>
    %c1_64 = arith.constant 1 : index
    %c0_65 = arith.constant 0 : index
    %c0_66 = arith.constant 0 : index
    %100 = vector.load %arg8[%c1_64, %c0_65, %c0_66] : memref<10x91x64xf32, #tpu.memory_space<vmem>>, vector<1x91x64xf32>
    %101 = vector.shape_cast %100 : vector<1x91x64xf32> to vector<91x64xf32>
    %102 = arith.mulf %92, %101 : vector<91x64xf32>
    %cst_67 = arith.constant dense<0.000000e+00> : vector<64xf32>
    %103 = vector.multi_reduction <add>, %102, %cst_67 [0] : vector<91x64xf32> to vector<64xf32>
    %104 = vector.shape_cast %103 : vector<64xf32> to vector<1x64xf32>
    %cst_68 = arith.constant dense<0.000000e+00> : vector<1xf32>
    %105 = vector.multi_reduction <add>, %104, %cst_68 [1] : vector<1x64xf32> to vector<1xf32>
    %106 = vector.shape_cast %105 : vector<1xf32> to vector<1x1xf32>
    %c2_69 = arith.constant 2 : index
    %c0_70 = arith.constant 0 : index
    %c0_71 = arith.constant 0 : index
    %107 = vector.load %arg8[%c2_69, %c0_70, %c0_71] : memref<10x91x64xf32, #tpu.memory_space<vmem>>, vector<1x91x64xf32>
    %108 = vector.shape_cast %107 : vector<1x91x64xf32> to vector<91x64xf32>
    %109 = arith.mulf %92, %108 : vector<91x64xf32>
    %cst_72 = arith.constant dense<0.000000e+00> : vector<64xf32>
    %110 = vector.multi_reduction <add>, %109, %cst_72 [0] : vector<91x64xf32> to vector<64xf32>
    %111 = vector.shape_cast %110 : vector<64xf32> to vector<1x64xf32>
    %cst_73 = arith.constant dense<0.000000e+00> : vector<1xf32>
    %112 = vector.multi_reduction <add>, %111, %cst_73 [1] : vector<1x64xf32> to vector<1xf32>
    %113 = vector.shape_cast %112 : vector<1xf32> to vector<1x1xf32>
    %c3 = arith.constant 3 : index
    %c0_74 = arith.constant 0 : index
    %c0_75 = arith.constant 0 : index
    %114 = vector.load %arg8[%c3, %c0_74, %c0_75] : memref<10x91x64xf32, #tpu.memory_space<vmem>>, vector<1x91x64xf32>
    %115 = vector.shape_cast %114 : vector<1x91x64xf32> to vector<91x64xf32>
    %116 = arith.mulf %92, %115 : vector<91x64xf32>
    %cst_76 = arith.constant dense<0.000000e+00> : vector<64xf32>
    %117 = vector.multi_reduction <add>, %116, %cst_76 [0] : vector<91x64xf32> to vector<64xf32>
    %118 = vector.shape_cast %117 : vector<64xf32> to vector<1x64xf32>
    %cst_77 = arith.constant dense<0.000000e+00> : vector<1xf32>
    %119 = vector.multi_reduction <add>, %118, %cst_77 [1] : vector<1x64xf32> to vector<1xf32>
    %120 = vector.shape_cast %119 : vector<1xf32> to vector<1x1xf32>
    %c4 = arith.constant 4 : index
    %c0_78 = arith.constant 0 : index
    %c0_79 = arith.constant 0 : index
    %121 = vector.load %arg8[%c4, %c0_78, %c0_79] : memref<10x91x64xf32, #tpu.memory_space<vmem>>, vector<1x91x64xf32>
    %122 = vector.shape_cast %121 : vector<1x91x64xf32> to vector<91x64xf32>
    %123 = arith.mulf %92, %122 : vector<91x64xf32>
    %cst_80 = arith.constant dense<0.000000e+00> : vector<64xf32>
    %124 = vector.multi_reduction <add>, %123, %cst_80 [0] : vector<91x64xf32> to vector<64xf32>
    %125 = vector.shape_cast %124 : vector<64xf32> to vector<1x64xf32>
    %cst_81 = arith.constant dense<0.000000e+00> : vector<1xf32>
    %126 = vector.multi_reduction <add>, %125, %cst_81 [1] : vector<1x64xf32> to vector<1xf32>
    %127 = vector.shape_cast %126 : vector<1xf32> to vector<1x1xf32>
    %c5 = arith.constant 5 : index
    %c0_82 = arith.constant 0 : index
    %c0_83 = arith.constant 0 : index
    %128 = vector.load %arg8[%c5, %c0_82, %c0_83] : memref<10x91x64xf32, #tpu.memory_space<vmem>>, vector<1x91x64xf32>
    %129 = vector.shape_cast %128 : vector<1x91x64xf32> to vector<91x64xf32>
    %130 = arith.mulf %92, %129 : vector<91x64xf32>
    %cst_84 = arith.constant dense<0.000000e+00> : vector<64xf32>
    %131 = vector.multi_reduction <add>, %130, %cst_84 [0] : vector<91x64xf32> to vector<64xf32>
    %132 = vector.shape_cast %131 : vector<64xf32> to vector<1x64xf32>
    %cst_85 = arith.constant dense<0.000000e+00> : vector<1xf32>
    %133 = vector.multi_reduction <add>, %132, %cst_85 [1] : vector<1x64xf32> to vector<1xf32>
    %134 = vector.shape_cast %133 : vector<1xf32> to vector<1x1xf32>
    %c6 = arith.constant 6 : index
    %c0_86 = arith.constant 0 : index
    %c0_87 = arith.constant 0 : index
    %135 = vector.load %arg8[%c6, %c0_86, %c0_87] : memref<10x91x64xf32, #tpu.memory_space<vmem>>, vector<1x91x64xf32>
    %136 = vector.shape_cast %135 : vector<1x91x64xf32> to vector<91x64xf32>
    %137 = arith.mulf %92, %136 : vector<91x64xf32>
    %cst_88 = arith.constant dense<0.000000e+00> : vector<64xf32>
    %138 = vector.multi_reduction <add>, %137, %cst_88 [0] : vector<91x64xf32> to vector<64xf32>
    %139 = vector.shape_cast %138 : vector<64xf32> to vector<1x64xf32>
    %cst_89 = arith.constant dense<0.000000e+00> : vector<1xf32>
    %140 = vector.multi_reduction <add>, %139, %cst_89 [1] : vector<1x64xf32> to vector<1xf32>
    %141 = vector.shape_cast %140 : vector<1xf32> to vector<1x1xf32>
    %c7 = arith.constant 7 : index
    %c0_90 = arith.constant 0 : index
    %c0_91 = arith.constant 0 : index
    %142 = vector.load %arg8[%c7, %c0_90, %c0_91] : memref<10x91x64xf32, #tpu.memory_space<vmem>>, vector<1x91x64xf32>
    %143 = vector.shape_cast %142 : vector<1x91x64xf32> to vector<91x64xf32>
    %144 = arith.mulf %92, %143 : vector<91x64xf32>
    %cst_92 = arith.constant dense<0.000000e+00> : vector<64xf32>
    %145 = vector.multi_reduction <add>, %144, %cst_92 [0] : vector<91x64xf32> to vector<64xf32>
    %146 = vector.shape_cast %145 : vector<64xf32> to vector<1x64xf32>
    %cst_93 = arith.constant dense<0.000000e+00> : vector<1xf32>
    %147 = vector.multi_reduction <add>, %146, %cst_93 [1] : vector<1x64xf32> to vector<1xf32>
    %148 = vector.shape_cast %147 : vector<1xf32> to vector<1x1xf32>
    %c8 = arith.constant 8 : index
    %c0_94 = arith.constant 0 : index
    %c0_95 = arith.constant 0 : index
    %149 = vector.load %arg8[%c8, %c0_94, %c0_95] : memref<10x91x64xf32, #tpu.memory_space<vmem>>, vector<1x91x64xf32>
    %150 = vector.shape_cast %149 : vector<1x91x64xf32> to vector<91x64xf32>
    %151 = arith.mulf %92, %150 : vector<91x64xf32>
    %cst_96 = arith.constant dense<0.000000e+00> : vector<64xf32>
    %152 = vector.multi_reduction <add>, %151, %cst_96 [0] : vector<91x64xf32> to vector<64xf32>
    %153 = vector.shape_cast %152 : vector<64xf32> to vector<1x64xf32>
    %cst_97 = arith.constant dense<0.000000e+00> : vector<1xf32>
    %154 = vector.multi_reduction <add>, %153, %cst_97 [1] : vector<1x64xf32> to vector<1xf32>
    %155 = vector.shape_cast %154 : vector<1xf32> to vector<1x1xf32>
    %c9 = arith.constant 9 : index
    %c0_98 = arith.constant 0 : index
    %c0_99 = arith.constant 0 : index
    %156 = vector.load %arg8[%c9, %c0_98, %c0_99] : memref<10x91x64xf32, #tpu.memory_space<vmem>>, vector<1x91x64xf32>
    %157 = vector.shape_cast %156 : vector<1x91x64xf32> to vector<91x64xf32>
    %158 = arith.mulf %92, %157 : vector<91x64xf32>
    %cst_100 = arith.constant dense<0.000000e+00> : vector<64xf32>
    %159 = vector.multi_reduction <add>, %158, %cst_100 [0] : vector<91x64xf32> to vector<64xf32>
    %160 = vector.shape_cast %159 : vector<64xf32> to vector<1x64xf32>
    %cst_101 = arith.constant dense<0.000000e+00> : vector<1xf32>
    %161 = vector.multi_reduction <add>, %160, %cst_101 [1] : vector<1x64xf32> to vector<1xf32>
    %162 = vector.shape_cast %161 : vector<1xf32> to vector<1x1xf32>
    %163 = tpu.concatenate %99, %106, %113, %120, %127, %134, %141, %148, %155, %162 in 1 : vector<1x1xf32>, vector<1x1xf32>, vector<1x1xf32>, vector<1x1xf32>, vector<1x1xf32>, vector<1x1xf32>, vector<1x1xf32>, vector<1x1xf32>, vector<1x1xf32>, vector<1x1xf32> -> vector<1x10xf32>
    %164 = vector.shape_cast %163 : vector<1x10xf32> to vector<1x1x10xf32>
    %c0_102 = arith.constant 0 : index
    %c0_103 = arith.constant 0 : index
    %c0_104 = arith.constant 0 : index
    %165 = vector.load %arg9[%c0_102, %c0_103, %c0_104] : memref<1x1x10xf32, #tpu.memory_space<vmem>>, vector<1x1x10xf32>
    tpu.vector_store %arg9[%c0_102, %c0_103, %c0_104], %164 {strides = array<i32>} : memref<1x1x10xf32, #tpu.memory_space<vmem>>, vector<1x1x10xf32>,
    return
  }
  func.func @transform_0(%arg0: i32) -> (i32, i32, i32, i32) {
    %c0_i32 = arith.constant 0 : i32
    %c0_i32_0 = arith.constant 0 : i32
    %c0_i32_1 = arith.constant 0 : i32
    %c0_i32_2 = arith.constant 0 : i32
    return %arg0, %c0_i32, %c0_i32_0, %c0_i32_1 : i32, i32, i32, i32
  }
  func.func @transform_1(%arg0: i32) -> (i32, i32) {
    %c0_i32 = arith.constant 0 : i32
    %c0_i32_0 = arith.constant 0 : i32
    %c0_i32_1 = arith.constant 0 : i32
    return %c0_i32, %c0_i32_0 : i32, i32
  }
  func.func @transform_2(%arg0: i32) -> (i32, i32) {
    %c0_i32 = arith.constant 0 : i32
    %c0_i32_0 = arith.constant 0 : i32
    %c0_i32_1 = arith.constant 0 : i32
    return %c0_i32, %c0_i32_0 : i32, i32
  }
  func.func @transform_3(%arg0: i32) -> (i32, i32) {
    %c0_i32 = arith.constant 0 : i32
    %c0_i32_0 = arith.constant 0 : i32
    %c0_i32_1 = arith.constant 0 : i32
    return %c0_i32, %c0_i32_0 : i32, i32
  }
  func.func @transform_4(%arg0: i32) -> (i32, i32) {
    %c0_i32 = arith.constant 0 : i32
    %c0_i32_0 = arith.constant 0 : i32
    %c0_i32_1 = arith.constant 0 : i32
    return %c0_i32, %c0_i32_0 : i32, i32
  }
  func.func @transform_5(%arg0: i32) -> (i32, i32) {
    %c0_i32 = arith.constant 0 : i32
    %c0_i32_0 = arith.constant 0 : i32
    %c0_i32_1 = arith.constant 0 : i32
    return %c0_i32, %c0_i32_0 : i32, i32
  }
  func.func @transform_6(%arg0: i32) -> (i32, i32) {
    %c0_i32 = arith.constant 0 : i32
    %c0_i32_0 = arith.constant 0 : i32
    %c0_i32_1 = arith.constant 0 : i32
    return %c0_i32, %c0_i32_0 : i32, i32
  }
  func.func @transform_7(%arg0: i32) -> (i32, i32, i32) {
    %c0_i32 = arith.constant 0 : i32
    %c0_i32_0 = arith.constant 0 : i32
    %c0_i32_1 = arith.constant 0 : i32
    %c0_i32_2 = arith.constant 0 : i32
    return %c0_i32, %c0_i32_0, %c0_i32_1 : i32, i32, i32
  }
  func.func @transform_8(%arg0: i32) -> (i32, i32, i32) {
    %c0_i32 = arith.constant 0 : i32
    %c0_i32_0 = arith.constant 0 : i32
    %c0_i32_1 = arith.constant 0 : i32
    return %arg0, %c0_i32, %c0_i32_0 : i32, i32, i32
  }
}

</mosaic_0001>

<llo_original>
// kernel: cnn_forward.1
$region0: #{cnn_forward.1}
  #allocation0 [shape = 'u32[]', space=smem, size = 0x4, offset = 0x4, fixed_abs, tag = 'smem constant byte address 0x4 - core index']
  #allocation1 [shape = 'u32[144,128]{1,0:T(1,128)}', space=vmem, size = 0x12000, scoped, tag = 'internal scratch']
  #allocation2 [shape = 'f32[18,18,3]{2,1,0:T(8,128)}', space=vmem, size = 0x36000, scoped, tag = 'scratch operand']
  %s0 = inlined_call_operand.vmem [shape: f32[2,16,16,3], index: 0, kind: input, shape index: {}]
  %s1 = inlined_call_operand.vmem [shape: bf16[27,32], index: 1, kind: input, shape index: {}]
  %s2 = inlined_call_operand.vmem [shape: f32[1,32], index: 2, kind: input, shape index: {}]
  %s3 = inlined_call_operand.vmem [shape: f32[1,32], index: 3, kind: input, shape index: {}]
  %s4 = inlined_call_operand.vmem [shape: bf16[512,64], index: 4, kind: input, shape index: {}]
  %s5 = inlined_call_operand.vmem [shape: f32[1,64], index: 5, kind: input, shape index: {}]
  %s6 = inlined_call_operand.vmem [shape: f32[1,64], index: 6, kind: input, shape index: {}]
  %s7 = inlined_call_operand.vmem [shape: f32[10,91,64], index: 7, kind: input, shape index: {}]
  %s8 = inlined_call_operand.hbm [shape: f32[2,1,10], index: 8, kind: output, shape index: {}]
  %s9 = sld [smem:[#allocation0]]
  $region65: #{cnn_forward.1} parent=0
    _
  %s11 = ssub.s32 1, %s9
  %s12 = scalar_select 0, %s11, %s9
  $region1: #{cnn_forward.1} parent=0
    #allocation3 [shape = 'u8[1024]{0}', space=vmem, size = 0x400, scoped, tag = 'output window, operand 0']
    #allocation4 [shape = 's32[2]{0}', space=sflag, size = 0x8, scoped, tag = 'scoped memory for cnn_forward.1']
    %13 = vsyncpa [#allocation4], 0
    %s14 = scalar_lea.sflag [#allocation4], 1
    %15 = vsyncpa %s14, 0
    loop: start=0, step=1, limit=4
    $region2: #{cnn_forward.1} parent=1 // loop_pre_header
      _
    $region3: #{cnn_forward.1} parent=1 // loop_header
      %s17 = sphi 0, %s21
      %p18 = scmp.ge.s32.totalorder %s17, 4
      %s27 = sphi 0, %s29
      %s30 = sphi 0, %s27
      %s31 = sphi 0, %s30
      %s47 = sphi 0, %s31
      %s51 = sphi 0, %s51
      %s53 = sphi 0, %s51
      %s54 = sphi 0, %s53
      %s68 = sphi 0, %s54
      %s72 = sphi 0, %s72
      %s74 = sphi 0, %s72
      %s75 = sphi 0, %s74
      %s89 = sphi 0, %s75
      %s93 = sphi 0, %s93
      %s95 = sphi 0, %s93
      %s96 = sphi 0, %s95
      %s110 = sphi 0, %s96
      %s114 = sphi 0, %s114
      %s116 = sphi 0, %s114
      %s117 = sphi 0, %s116
      %s131 = sphi 0, %s117
      %s135 = sphi 0, %s135
      %s137 = sphi 0, %s135
      %s138 = sphi 0, %s137
      %s152 = sphi 0, %s138
      %s156 = sphi 0, %s156
      %s158 = sphi 0, %s156
      %s159 = sphi 0, %s158
      %s173 = sphi 0, %s159
      %s177 = sphi 0, %s177
      %s179 = sphi 0, %s177
      %s180 = sphi 0, %s179
      %s194 = sphi 0, %s180
      %s200 = sphi 0, %s202
      %s203 = sphi 0, %s200
      %s204 = sphi 0, %s203
      %s220 = sphi 0, %s204
    $region4: #{cnn_forward.1} parent=1 // loop_header_branch
      %20 = sbr.rel (%p18) target = $region8
    $region5: #{cnn_forward.1} parent=1 // loop_body
      %s22 = ssub.s32 %s17, 1
      %s23 = ssub.s32 %s17, 2
      %s24 = sadd.s32 %s17, 1
      %s25 = ssub.s32 %s17, %s24
      %p26 = scmp.eq.s32.totalorder %s25, 0
      %s28 = sadd.s32 %s27, 1
      %s29 = scalar_select %p26, %s27, %s28
      %p32 = pneg %p26
      %p33 = scmp.eq.s32.totalorder %s17, 1
      %p34 = por %p32, %p33
      %p35 = scmp.ne.s32.totalorder %s27, %s30
      %p36 = scmp.eq.s32.totalorder %s17, 0
      %p37 = por %p35, %p36
      %p38 = scmp.ne.s32.totalorder %s27, %s30
      %p39 = scmp.eq.s32.totalorder %s22, 1
      %p40 = por %p38, %p39
      %p41 = scmp.ne.s32.totalorder %s30, %s31
      %p42 = scmp.eq.s32.totalorder %s22, 0
      %p43 = por %p41, %p42
      %p44 = scmp.ne.s32.totalorder %s30, %s31
      %p45 = scmp.eq.s32.totalorder %s23, 1
      %p46 = por %p44, %p45
      %p48 = scmp.ne.s32.totalorder %s31, %s47
      %p49 = scmp.eq.s32.totalorder %s23, 0
      %p50 = por %p48, %p49
      %s52 = sadd.s32 %s51, 1
      %p55 = scmp.eq.s32.totalorder %s17, 1
      %p56 = scmp.ne.s32.totalorder %s51, %s53
      %p57 = scmp.eq.s32.totalorder %s17, 0
      %p58 = por %p56, %p57
      %p59 = scmp.ne.s32.totalorder %s51, %s53
      %p60 = scmp.eq.s32.totalorder %s22, 1
      %p61 = por %p59, %p60
      %p62 = scmp.ne.s32.totalorder %s53, %s54
      %p63 = scmp.eq.s32.totalorder %s22, 0
      %p64 = por %p62, %p63
      %p65 = scmp.ne.s32.totalorder %s53, %s54
      %p66 = scmp.eq.s32.totalorder %s23, 1
      %p67 = por %p65, %p66
      %p69 = scmp.ne.s32.totalorder %s54, %s68
      %p70 = scmp.eq.s32.totalorder %s23, 0
      %p71 = por %p69, %p70
      %s73 = sadd.s32 %s72, 1
      %p76 = scmp.eq.s32.totalorder %s17, 1
      %p77 = scmp.ne.s32.totalorder %s72, %s74
      %p78 = scmp.eq.s32.totalorder %s17, 0
      %p79 = por %p77, %p78
      %p80 = scmp.ne.s32.totalorder %s72, %s74
      %p81 = scmp.eq.s32.totalorder %s22, 1
      %p82 = por %p80, %p81
      %p83 = scmp.ne.s32.totalorder %s74, %s75
      %p84 = scmp.eq.s32.totalorder %s22, 0
      %p85 = por %p83, %p84
      %p86 = scmp.ne.s32.totalorder %s74, %s75
      %p87 = scmp.eq.s32.totalorder %s23, 1
      %p88 = por %p86, %p87
      %p90 = scmp.ne.s32.totalorder %s75, %s89
      %p91 = scmp.eq.s32.totalorder %s23, 0
      %p92 = por %p90, %p91
      %s94 = sadd.s32 %s93, 1
      %p97 = scmp.eq.s32.totalorder %s17, 1
      %p98 = scmp.ne.s32.totalorder %s93, %s95
      %p99 = scmp.eq.s32.totalorder %s17, 0
      %p100 = por %p98, %p99
      %p101 = scmp.ne.s32.totalorder %s93, %s95
      %p102 = scmp.eq.s32.totalorder %s22, 1
      %p103 = por %p101, %p102
      %p104 = scmp.ne.s32.totalorder %s95, %s96
      %p105 = scmp.eq.s32.totalorder %s22, 0
      %p106 = por %p104, %p105
      %p107 = scmp.ne.s32.totalorder %s95, %s96
      %p108 = scmp.eq.s32.totalorder %s23, 1
      %p109 = por %p107, %p108
      %p111 = scmp.ne.s32.totalorder %s96, %s110
      %p112 = scmp.eq.s32.totalorder %s23, 0
      %p113 = por %p111, %p112
      %s115 = sadd.s32 %s114, 1
      %p118 = scmp.eq.s32.totalorder %s17, 1
      %p119 = scmp.ne.s32.totalorder %s114, %s116
      %p120 = scmp.eq.s32.totalorder %s17, 0
      %p121 = por %p119, %p120
      %p122 = scmp.ne.s32.totalorder %s114, %s116
      %p123 = scmp.eq.s32.totalorder %s22, 1
      %p124 = por %p122, %p123
      %p125 = scmp.ne.s32.totalorder %s116, %s117
      %p126 = scmp.eq.s32.totalorder %s22, 0
      %p127 = por %p125, %p126
      %p128 = scmp.ne.s32.totalorder %s116, %s117
      %p129 = scmp.eq.s32.totalorder %s23, 1
      %p130 = por %p128, %p129
      %p132 = scmp.ne.s32.totalorder %s117, %s131
      %p133 = scmp.eq.s32.totalorder %s23, 0
      %p134 = por %p132, %p133
      %s136 = sadd.s32 %s135, 1
      %p139 = scmp.eq.s32.totalorder %s17, 1
      %p140 = scmp.ne.s32.totalorder %s135, %s137
      %p141 = scmp.eq.s32.totalorder %s17, 0
      %p142 = por %p140, %p141
      %p143 = scmp.ne.s32.totalorder %s135, %s137
      %p144 = scmp.eq.s32.totalorder %s22, 1
      %p145 = por %p143, %p144
      %p146 = scmp.ne.s32.totalorder %s137, %s138
      %p147 = scmp.eq.s32.totalorder %s22, 0
      %p148 = por %p146, %p147
      %p149 = scmp.ne.s32.totalorder %s137, %s138
      %p150 = scmp.eq.s32.totalorder %s23, 1
      %p151 = por %p149, %p150
      %p153 = scmp.ne.s32.totalorder %s138, %s152
      %p154 = scmp.eq.s32.totalorder %s23, 0
      %p155 = por %p153, %p154
      %s157 = sadd.s32 %s156, 1
      %p160 = scmp.eq.s32.totalorder %s17, 1
      %p161 = scmp.ne.s32.totalorder %s156, %s158
      %p162 = scmp.eq.s32.totalorder %s17, 0
      %p163 = por %p161, %p162
      %p164 = scmp.ne.s32.totalorder %s156, %s158
      %p165 = scmp.eq.s32.totalorder %s22, 1
      %p166 = por %p164, %p165
      %p167 = scmp.ne.s32.totalorder %s158, %s159
      %p168 = scmp.eq.s32.totalorder %s22, 0
      %p169 = por %p167, %p168
      %p170 = scmp.ne.s32.totalorder %s158, %s159
      %p171 = scmp.eq.s32.totalorder %s23, 1
      %p172 = por %p170, %p171
      %p174 = scmp.ne.s32.totalorder %s159, %s173
      %p175 = scmp.eq.s32.totalorder %s23, 0
      %p176 = por %p174, %p175
      %s178 = sadd.s32 %s177, 1
      %p181 = scmp.eq.s32.totalorder %s17, 1
      %p182 = scmp.ne.s32.totalorder %s177, %s179
      %p183 = scmp.eq.s32.totalorder %s17, 0
      %p184 = por %p182, %p183
      %p185 = scmp.ne.s32.totalorder %s177, %s179
      %p186 = scmp.eq.s32.totalorder %s22, 1
      %p187 = por %p185, %p186
      %p188 = scmp.ne.s32.totalorder %s179, %s180
      %p189 = scmp.eq.s32.totalorder %s22, 0
      %p190 = por %p188, %p189
      %p191 = scmp.ne.s32.totalorder %s179, %s180
      %p192 = scmp.eq.s32.totalorder %s23, 1
      %p193 = por %p191, %p192
      %p195 = scmp.ne.s32.totalorder %s180, %s194
      %p196 = scmp.eq.s32.totalorder %s23, 0
      %p197 = por %p195, %p196
      %s198 = ssub.s32 %s17, %s24
      %p199 = scmp.eq.s32.totalorder %s198, 0
      %s201 = sadd.s32 %s200, 1
      %s202 = scalar_select %p199, %s200, %s201
      %p205 = pneg %p199
      %p206 = scmp.eq.s32.totalorder %s17, 1
      %p207 = por %p205, %p206
      %p208 = scmp.ne.s32.totalorder %s200, %s203
      %p209 = scmp.eq.s32.totalorder %s17, 0
      %p210 = por %p208, %p209
      %p211 = scmp.ne.s32.totalorder %s200, %s203
      %p212 = scmp.eq.s32.totalorder %s22, 1
      %p213 = por %p211, %p212
      %p214 = scmp.ne.s32.totalorder %s203, %s204
      %p215 = scmp.eq.s32.totalorder %s22, 0
      %p216 = por %p214, %p215
      %p217 = scmp.ne.s32.totalorder %s203, %s204
      %p218 = scmp.eq.s32.totalorder %s23, 1
      %p219 = por %p217, %p218
      %p221 = scmp.ne.s32.totalorder %s204, %s220
      %p222 = scmp.eq.s32.totalorder %s23, 0
      %p223 = por %p221, %p222
      %p224 = scmp.le.s32.totalorder 1, %s17
      %p225 = scmp.lt.s32.totalorder %s17, 3
      %p226 = pnand %p224, %p225
      %p227 = pneg %p226
      // Predicated region
      $region9: #{cnn_forward.1} parent=5 // pred_check
        _
      $region10: #{cnn_forward.1} parent=5 // pred_check_branch
        %229 = sbr.rel (%p226) target = $region12
      $region11: #{cnn_forward.1} parent=5 // pred_region
        %s230 = ssub.s32 %s17, 1
        // Predicated region
        $region13: #{cnn_forward.1} parent=11 // pred_check
          %p231 = pneg %p64
        $region14: #{cnn_forward.1} parent=11 // pred_check_branch
          %233 = sbr.rel (%p231) target = $region16
        $region15: #{cnn_forward.1} parent=11 // pred_region
          _
        $region16: #{cnn_forward.1} parent=11 // pred_fallthru
          _
        // Predicated region
        $region17: #{cnn_forward.1} parent=11 // pred_check
          %p234 = pneg %p85
        $region18: #{cnn_forward.1} parent=11 // pred_check_branch
          %236 = sbr.rel (%p234) target = $region20
        $region19: #{cnn_forward.1} parent=11 // pred_region
          _
        $region20: #{cnn_forward.1} parent=11 // pred_fallthru
          _
        // Predicated region
        $region21: #{cnn_forward.1} parent=11 // pred_check
          %p237 = pneg %p106
        $region22: #{cnn_forward.1} parent=11 // pred_check_branch
          %239 = sbr.rel (%p237) target = $region24
        $region23: #{cnn_forward.1} parent=11 // pred_region
          _
        $region24: #{cnn_forward.1} parent=11 // pred_fallthru
          _
        // Predicated region
        $region25: #{cnn_forward.1} parent=11 // pred_check
          %p240 = pneg %p127
        $region26: #{cnn_forward.1} parent=11 // pred_check_branch
          %242 = sbr.rel (%p240) target = $region28
        $region27: #{cnn_forward.1} parent=11 // pred_region
          _
        $region28: #{cnn_forward.1} parent=11 // pred_fallthru
          _
        // Predicated region
        $region29: #{cnn_forward.1} parent=11 // pred_check
          %p243 = pneg %p148
        $region30: #{cnn_forward.1} parent=11 // pred_check_branch
          %245 = sbr.rel (%p243) target = $region32
        $region31: #{cnn_forward.1} parent=11 // pred_region
          _
        $region32: #{cnn_forward.1} parent=11 // pred_fallthru
          _
        // Predicated region
        $region33: #{cnn_forward.1} parent=11 // pred_check
          %p246 = pneg %p169
        $region34: #{cnn_forward.1} parent=11 // pred_check_branch
          %248 = sbr.rel (%p246) target = $region36
        $region35: #{cnn_forward.1} parent=11 // pred_region
          _
        $region36: #{cnn_forward.1} parent=11 // pred_fallthru
          _
        // Predicated region
        $region37: #{cnn_forward.1} parent=11 // pred_check
          %p249 = pneg %p190
        $region38: #{cnn_forward.1} parent=11 // pred_check_branch
          %251 = sbr.rel (%p249) target = $region40
        $region39: #{cnn_forward.1} parent=11 // pred_region
          _
        $region40: #{cnn_forward.1} parent=11 // pred_fallthru
          _
      $region12: #{cnn_forward.1} parent=5 // pred_fallthru
        _
      %p252 = scmp.lt.s32.totalorder %s17, 2
      // Predicated region
      $region41: #{cnn_forward.1} parent=5 // pred_check
        %p253 = pneg %p252
      $region42: #{cnn_forward.1} parent=5 // pred_check_branch
        %255 = sbr.rel (%p253) target = $region44
      $region43: #{cnn_forward.1} parent=5 // pred_region
        // Predicated region
        $region45: #{cnn_forward.1} parent=43 // pred_check
          %p256 = pneg %p37
        $region46: #{cnn_forward.1} parent=43 // pred_check_branch
          %258 = sbr.rel (%p256) target = $region48
        $region47: #{cnn_forward.1} parent=43 // pred_region
          %p259 = scmp.lt.s32.totalorder %s17, 1
          %s260 = scalar_select %p259, %s17, 1
          %s261 = smul.addr %s260, 32
          %s262 = smul.addr %s261, 8
          %s263 = scalar_lea.vmem %s0, %s262
        $region48: #{cnn_forward.1} parent=43 // pred_fallthru
          _
      $region44: #{cnn_forward.1} parent=5 // pred_fallthru
        _
      %p264 = scmp.le.s32.totalorder 1, %s17
      %p265 = scmp.lt.s32.totalorder %s17, 3
      %p266 = pnand %p264, %p265
      %p267 = pneg %p266
      // Predicated region
      $region49: #{cnn_forward.1} parent=5 // pred_check
        _
      $region50: #{cnn_forward.1} parent=5 // pred_check_branch
        %269 = sbr.rel (%p266) target = $region52
      $region51: #{cnn_forward.1} parent=5 // pred_region
        %s270 = ssub.s32 %s17, 1
        %p271 = scmp.lt.s32.totalorder %s22, 1
        %s272 = scalar_select %p271, %s22, 1
        %s273 = smul.addr %s272, 32
        %s274 = smul.addr %s273, 8
        %s275 = scalar_lea.vmem %s0, %s274
        %p276 = pneg %p43
        %p277 = pneg %p40
        %p278 = pneg %p64
        %p279 = pneg %p61
        %p280 = pneg %p85
        %p281 = pneg %p82
        %p282 = pneg %p106
        %p283 = pneg %p103
        %p284 = pneg %p127
        %p285 = pneg %p124
        %p286 = pneg %p148
        %p287 = pneg %p145
        %p288 = pneg %p169
        %p289 = pneg %p166
        %p290 = pneg %p190
        %p291 = pneg %p187
        %p292 = pneg %p216
        %p293 = pneg %p213
        %s294 = sand.u32 %s203, 1
        %s295 = scalar_lea.sflag [#allocation4], %s294
        %s296 = sand.u32 %s203, 1
        %s297 = scalar_lea.vmem [#allocation3], %s296
        %p298 = scmp.lt.s32.totalorder %s22, 1
        %s299 = scalar_select %p298, %s22, 1
        %s300 = smul.addr %s299, 32
        %s301 = smul.addr %s300, 8
        %s302 = scalar_lea.vmem %s0, %s301
        %vm304 = vcmask 23552
        %305 = vst.msk [vmem:[#allocation2] sm:$0xff] %vm304, 0.0
        %306 = vst.msk [vmem:[#allocation2 + $0x8] sm:$0xff] %vm304, 0.0
        %vm307 = vcmask 17408
        %308 = vst.msk [vmem:[#allocation2 + $0x10] sm:$0x3] %vm307, 0.0
        %s309 = scalar_lea.vmem [#allocation2], 408
        %310 = vst.msk [vmem:[%s309] sm:$0xff] %vm304, 0.0
        %311 = vst.msk [vmem:[%s309 + $0x8] sm:$0xff] %vm304, 0.0
        %312 = vst.msk [vmem:[%s309 + $0x10] sm:$0x3] %vm307, 0.0
        %vm313 = vcmask 16384
        %314 = vst.msk [vmem:[#allocation2] sm:$0x1] %vm313, 0.0
        %315 = vst.msk [vmem:[#allocation2 + $0x18] sm:$0x1] %vm313, 0.0
        %316 = vst.msk [vmem:[#allocation2 + $0x30] sm:$0x1] %vm313, 0.0
        %317 = vst.msk [vmem:[#allocation2 + $0x48] sm:$0x1] %vm313, 0.0
        %318 = vst.msk [vmem:[#allocation2 + $0x60] sm:$0x1] %vm313, 0.0
        %319 = vst.msk [vmem:[#allocation2 + $0x78] sm:$0x1] %vm313, 0.0
        %320 = vst.msk [vmem:[#allocation2 + $0x90] sm:$0x1] %vm313, 0.0
        %321 = vst.msk [vmem:[#allocation2 + $0xa8] sm:$0x1] %vm313, 0.0
        %322 = vst.msk [vmem:[#allocation2 + $0xc0] sm:$0x1] %vm313, 0.0
        %323 = vst.msk [vmem:[#allocation2 + $0xd8] sm:$0x1] %vm313, 0.0
        %324 = vst.msk [vmem:[#allocation2 + $0xf0] sm:$0x1] %vm313, 0.0
        %325 = vst.msk [vmem:[#allocation2 + $0x108] sm:$0x1] %vm313, 0.0
        %326 = vst.msk [vmem:[#allocation2 + $0x120] sm:$0x1] %vm313, 0.0
        %327 = vst.msk [vmem:[#allocation2 + $0x138] sm:$0x1] %vm313, 0.0
        %328 = vst.msk [vmem:[#allocation2 + $0x150] sm:$0x1] %vm313, 0.0
        %329 = vst.msk [vmem:[#allocation2 + $0x168] sm:$0x1] %vm313, 0.0
        %330 = vst.msk [vmem:[#allocation2 + $0x180] sm:$0x1] %vm313, 0.0
        %331 = vst.msk [vmem:[#allocation2 + $0x198] sm:$0x1] %vm313, 0.0
        %332 = vst.msk [vmem:[#allocation2 + $0x11] sm:$0x1] %vm313, 0.0
        %333 = vst.msk [vmem:[#allocation2 + $0x29] sm:$0x1] %vm313, 0.0
        %334 = vst.msk [vmem:[#allocation2 + $0x41] sm:$0x1] %vm313, 0.0
        %335 = vst.msk [vmem:[#allocation2 + $0x59] sm:$0x1] %vm313, 0.0
        %336 = vst.msk [vmem:[#allocation2 + $0x71] sm:$0x1] %vm313, 0.0
        %337 = vst.msk [vmem:[#allocation2 + $0x89] sm:$0x1] %vm313, 0.0
        %338 = vst.msk [vmem:[#allocation2 + $0xa1] sm:$0x1] %vm313, 0.0
        %339 = vst.msk [vmem:[#allocation2 + $0xb9] sm:$0x1] %vm313, 0.0
        %340 = vst.msk [vmem:[#allocation2 + $0xd1] sm:$0x1] %vm313, 0.0
        %341 = vst.msk [vmem:[#allocation2 + $0xe9] sm:$0x1] %vm313, 0.0
        %342 = vst.msk [vmem:[#allocation2 + $0x101] sm:$0x1] %vm313, 0.0
        %343 = vst.msk [vmem:[#allocation2 + $0x119] sm:$0x1] %vm313, 0.0
        %344 = vst.msk [vmem:[#allocation2 + $0x131] sm:$0x1] %vm313, 0.0
        %345 = vst.msk [vmem:[#allocation2 + $0x149] sm:$0x1] %vm313, 0.0
        %346 = vst.msk [vmem:[#allocation2 + $0x161] sm:$0x1] %vm313, 0.0
        %347 = vst.msk [vmem:[#allocation2 + $0x179] sm:$0x1] %vm313, 0.0
        %348 = vst.msk [vmem:[#allocation2 + $0x191] sm:$0x1] %vm313, 0.0
        %349 = vst.msk [vmem:[#allocation2 + $0x1a9] sm:$0x1] %vm313, 0.0
        %v350 = vld [vmem:[%s302] sm:$0xff]
        %v351 = vld [vmem:[%s302 + $0x8] sm:$0xff]
        %v352 = vld [vmem:[%s302 + $0x10] sm:$0xff]
        %v353 = vld [vmem:[%s302 + $0x18] sm:$0xff]
        %v354 = vld [vmem:[%s302 + $0x20] sm:$0xff]
        %v355 = vld [vmem:[%s302 + $0x28] sm:$0xff]
        %v356 = vld [vmem:[%s302 + $0x30] sm:$0xff]
        %v357 = vld [vmem:[%s302 + $0x38] sm:$0xff]
        %v358 = vld [vmem:[%s302 + $0x40] sm:$0xff]
        %v359 = vld [vmem:[%s302 + $0x48] sm:$0xff]
        %v360 = vld [vmem:[%s302 + $0x50] sm:$0xff]
        %v361 = vld [vmem:[%s302 + $0x58] sm:$0xff]
        %v362 = vld [vmem:[%s302 + $0x60] sm:$0xff]
        %v363 = vld [vmem:[%s302 + $0x68] sm:$0xff]
        %v364 = vld [vmem:[%s302 + $0x70] sm:$0xff]
        %v365 = vld [vmem:[%s302 + $0x78] sm:$0xff]
        %v366 = vld [vmem:[%s302 + $0x80] sm:$0xff]
        %v367 = vld [vmem:[%s302 + $0x88] sm:$0xff]
        %v368 = vld [vmem:[%s302 + $0x90] sm:$0xff]
        %v369 = vld [vmem:[%s302 + $0x98] sm:$0xff]
        %v370 = vld [vmem:[%s302 + $0xa0] sm:$0xff]
        %v371 = vld [vmem:[%s302 + $0xa8] sm:$0xff]
        %v372 = vld [vmem:[%s302 + $0xb0] sm:$0xff]
        %v373 = vld [vmem:[%s302 + $0xb8] sm:$0xff]
        %v374 = vld [vmem:[%s302 + $0xc0] sm:$0xff]
        %v375 = vld [vmem:[%s302 + $0xc8] sm:$0xff]
        %v376 = vld [vmem:[%s302 + $0xd0] sm:$0xff]
        %v377 = vld [vmem:[%s302 + $0xd8] sm:$0xff]
        %v378 = vld [vmem:[%s302 + $0xe0] sm:$0xff]
        %v379 = vld [vmem:[%s302 + $0xe8] sm:$0xff]
        %v380 = vld [vmem:[%s302 + $0xf0] sm:$0xff]
        %v381 = vld [vmem:[%s302 + $0xf8] sm:$0xff]
        %s382 = scalar_lea.vmem [#allocation2], 24
        %383 = vst.msk [vmem:[%s382 + $0x1] sm:$0xff] %vm304, %v350
        %384 = vst.msk [vmem:[%s382 + $0x9] sm:$0xff] %vm304, %v351
        %385 = vst.msk [vmem:[%s382 + $0x19] sm:$0xff] %vm304, %v352
        %386 = vst.msk [vmem:[%s382 + $0x21] sm:$0xff] %vm304, %v353
        %387 = vst.msk [vmem:[%s382 + $0x31] sm:$0xff] %vm304, %v354
        %388 = vst.msk [vmem:[%s382 + $0x39] sm:$0xff] %vm304, %v355
        %389 = vst.msk [vmem:[%s382 + $0x49] sm:$0xff] %vm304, %v356
        %390 = vst.msk [vmem:[%s382 + $0x51] sm:$0xff] %vm304, %v357
        %391 = vst.msk [vmem:[%s382 + $0x61] sm:$0xff] %vm304, %v358
        %392 = vst.msk [vmem:[%s382 + $0x69] sm:$0xff] %vm304, %v359
        %393 = vst.msk [vmem:[%s382 + $0x79] sm:$0xff] %vm304, %v360
        %394 = vst.msk [vmem:[%s382 + $0x81] sm:$0xff] %vm304, %v361
        %395 = vst.msk [vmem:[%s382 + $0x91] sm:$0xff] %vm304, %v362
        %396 = vst.msk [vmem:[%s382 + $0x99] sm:$0xff] %vm304, %v363
        %397 = vst.msk [vmem:[%s382 + $0xa9] sm:$0xff] %vm304, %v364
        %398 = vst.msk [vmem:[%s382 + $0xb1] sm:$0xff] %vm304, %v365
        %399 = vst.msk [vmem:[%s382 + $0xc1] sm:$0xff] %vm304, %v366
        %400 = vst.msk [vmem:[%s382 + $0xc9] sm:$0xff] %vm304, %v367
        %401 = vst.msk [vmem:[%s382 + $0xd9] sm:$0xff] %vm304, %v368
        %402 = vst.msk [vmem:[%s382 + $0xe1] sm:$0xff] %vm304, %v369
        %403 = vst.msk [vmem:[%s382 + $0xf1] sm:$0xff] %vm304, %v370
        %404 = vst.msk [vmem:[%s382 + $0xf9] sm:$0xff] %vm304, %v371
        %405 = vst.msk [vmem:[%s382 + $0x109] sm:$0xff] %vm304, %v372
        %406 = vst.msk [vmem:[%s382 + $0x111] sm:$0xff] %vm304, %v373
        %407 = vst.msk [vmem:[%s382 + $0x121] sm:$0xff] %vm304, %v374
        %408 = vst.msk [vmem:[%s382 + $0x129] sm:$0xff] %vm304, %v375
        %409 = vst.msk [vmem:[%s382 + $0x139] sm:$0xff] %vm304, %v376
        %410 = vst.msk [vmem:[%s382 + $0x141] sm:$0xff] %vm304, %v377
        %411 = vst.msk [vmem:[%s382 + $0x151] sm:$0xff] %vm304, %v378
        %412 = vst.msk [vmem:[%s382 + $0x159] sm:$0xff] %vm304, %v379
        %413 = vst.msk [vmem:[%s382 + $0x169] sm:$0xff] %vm304, %v380
        %414 = vst.msk [vmem:[%s382 + $0x171] sm:$0xff] %vm304, %v381
        %v415 = vld [vmem:[#allocation2] sm:$0xff]
        %v416 = vld [vmem:[#allocation2 + $0x8] sm:$0xff]
        %v417 = vld [vmem:[#allocation2 + $0x18] sm:$0xff]
        %v418 = vld [vmem:[#allocation2 + $0x20] sm:$0xff]
        %v419 = vld [vmem:[#allocation2 + $0x30] sm:$0xff]
        %v420 = vld [vmem:[#allocation2 + $0x38] sm:$0xff]
        %v421 = vld [vmem:[#allocation2 + $0x48] sm:$0xff]
        %v422 = vld [vmem:[#allocation2 + $0x50] sm:$0xff]
        %v423 = vld [vmem:[#allocation2 + $0x60] sm:$0xff]
        %v424 = vld [vmem:[#allocation2 + $0x68] sm:$0xff]
        %v425 = vld [vmem:[#allocation2 + $0x78] sm:$0xff]
        %v426 = vld [vmem:[#allocation2 + $0x80] sm:$0xff]
        %v427 = vld [vmem:[#allocation2 + $0x90] sm:$0xff]
        %v428 = vld [vmem:[#allocation2 + $0x98] sm:$0xff]
        %v429 = vld [vmem:[#allocation2 + $0xa8] sm:$0xff]
        %v430 = vld [vmem:[#allocation2 + $0xb0] sm:$0xff]
        %v431 = vld [vmem:[#allocation2 + $0xc0] sm:$0xff]
        %v432 = vld [vmem:[#allocation2 + $0xc8] sm:$0xff]
        %v433 = vld [vmem:[#allocation2 + $0xd8] sm:$0xff]
        %v434 = vld [vmem:[#allocation2 + $0xe0] sm:$0xff]
        %v435 = vld [vmem:[#allocation2 + $0xf0] sm:$0xff]
        %v436 = vld [vmem:[#allocation2 + $0xf8] sm:$0xff]
        %v437 = vld [vmem:[#allocation2 + $0x108] sm:$0xff]
        %v438 = vld [vmem:[#allocation2 + $0x110] sm:$0xff]
        %v439 = vld [vmem:[#allocation2 + $0x120] sm:$0xff]
        %v440 = vld [vmem:[#allocation2 + $0x128] sm:$0xff]
        %v441 = vld [vmem:[#allocation2 + $0x138] sm:$0xff]
        %v442 = vld [vmem:[#allocation2 + $0x140] sm:$0xff]
        %v443 = vld [vmem:[#allocation2 + $0x150] sm:$0xff]
        %v444 = vld [vmem:[#allocation2 + $0x158] sm:$0xff]
        %v445 = vld [vmem:[#allocation2 + $0x168] sm:$0xff]
        %v446 = vld [vmem:[#allocation2 + $0x170] sm:$0xff]
        %v447 = vld [vmem:[#allocation2 + $0x1] sm:$0xff]
        %v448 = vld [vmem:[#allocation2 + $0x9] sm:$0xff]
        %v449 = vld [vmem:[#allocation2 + $0x19] sm:$0xff]
        %v450 = vld [vmem:[#allocation2 + $0x21] sm:$0xff]
        %v451 = vld [vmem:[#allocation2 + $0x31] sm:$0xff]
        %v452 = vld [vmem:[#allocation2 + $0x39] sm:$0xff]
        %v453 = vld [vmem:[#allocation2 + $0x49] sm:$0xff]
        %v454 = vld [vmem:[#allocation2 + $0x51] sm:$0xff]
        %v455 = vld [vmem:[#allocation2 + $0x61] sm:$0xff]
        %v456 = vld [vmem:[#allocation2 + $0x69] sm:$0xff]
        %v457 = vld [vmem:[#allocation2 + $0x79] sm:$0xff]
        %v458 = vld [vmem:[#allocation2 + $0x81] sm:$0xff]
        %v459 = vld [vmem:[#allocation2 + $0x91] sm:$0xff]
        %v460 = vld [vmem:[#allocation2 + $0x99] sm:$0xff]
        %v461 = vld [vmem:[#allocation2 + $0xa9] sm:$0xff]
        %v462 = vld [vmem:[#allocation2 + $0xb1] sm:$0xff]
        %v463 = vld [vmem:[#allocation2 + $0xc1] sm:$0xff]
        %v464 = vld [vmem:[#allocation2 + $0xc9] sm:$0xff]
        %v465 = vld [vmem:[#allocation2 + $0xd9] sm:$0xff]
        %v466 = vld [vmem:[#allocation2 + $0xe1] sm:$0xff]
        %v467 = vld [vmem:[#allocation2 + $0xf1] sm:$0xff]
        %v468 = vld [vmem:[#allocation2 + $0xf9] sm:$0xff]
        %v469 = vld [vmem:[#allocation2 + $0x109] sm:$0xff]
        %v470 = vld [vmem:[#allocation2 + $0x111] sm:$0xff]
        %v471 = vld [vmem:[#allocation2 + $0x121] sm:$0xff]
        %v472 = vld [vmem:[#allocation2 + $0x129] sm:$0xff]
        %v473 = vld [vmem:[#allocation2 + $0x139] sm:$0xff]
        %v474 = vld [vmem:[#allocation2 + $0x141] sm:$0xff]
        %v475 = vld [vmem:[#allocation2 + $0x151] sm:$0xff]
        %v476 = vld [vmem:[#allocation2 + $0x159] sm:$0xff]
        %v477 = vld [vmem:[#allocation2 + $0x169] sm:$0xff]
        %v478 = vld [vmem:[#allocation2 + $0x171] sm:$0xff]
        %v479 = vld [vmem:[#allocation2 + $0x2] sm:$0xff]
        %v480 = vld [vmem:[#allocation2 + $0xa] sm:$0xff]
        %v481 = vld [vmem:[#allocation2 + $0x1a] sm:$0xff]
        %v482 = vld [vmem:[#allocation2 + $0x22] sm:$0xff]
        %v483 = vld [vmem:[#allocation2 + $0x32] sm:$0xff]
        %v484 = vld [vmem:[#allocation2 + $0x3a] sm:$0xff]
        %v485 = vld [vmem:[#allocation2 + $0x4a] sm:$0xff]
        %v486 = vld [vmem:[#allocation2 + $0x52] sm:$0xff]
        %v487 = vld [vmem:[#allocation2 + $0x62] sm:$0xff]
        %v488 = vld [vmem:[#allocation2 + $0x6a] sm:$0xff]
        %v489 = vld [vmem:[#allocation2 + $0x7a] sm:$0xff]
        %v490 = vld [vmem:[#allocation2 + $0x82] sm:$0xff]
        %v491 = vld [vmem:[#allocation2 + $0x92] sm:$0xff]
        %v492 = vld [vmem:[#allocation2 + $0x9a] sm:$0xff]
        %v493 = vld [vmem:[#allocation2 + $0xaa] sm:$0xff]
        %v494 = vld [vmem:[#allocation2 + $0xb2] sm:$0xff]
        %v495 = vld [vmem:[#allocation2 + $0xc2] sm:$0xff]
        %v496 = vld [vmem:[#allocation2 + $0xca] sm:$0xff]
        %v497 = vld [vmem:[#allocation2 + $0xda] sm:$0xff]
        %v498 = vld [vmem:[#allocation2 + $0xe2] sm:$0xff]
        %v499 = vld [vmem:[#allocation2 + $0xf2] sm:$0xff]
        %v500 = vld [vmem:[#allocation2 + $0xfa] sm:$0xff]
        %v501 = vld [vmem:[#allocation2 + $0x10a] sm:$0xff]
        %v502 = vld [vmem:[#allocation2 + $0x112] sm:$0xff]
        %v503 = vld [vmem:[#allocation2 + $0x122] sm:$0xff]
        %v504 = vld [vmem:[#allocation2 + $0x12a] sm:$0xff]
        %v505 = vld [vmem:[#allocation2 + $0x13a] sm:$0xff]
        %v506 = vld [vmem:[#allocation2 + $0x142] sm:$0xff]
        %v507 = vld [vmem:[#allocation2 + $0x152] sm:$0xff]
        %v508 = vld [vmem:[#allocation2 + $0x15a] sm:$0xff]
        %v509 = vld [vmem:[#allocation2 + $0x16a] sm:$0xff]
        %v510 = vld [vmem:[#allocation2 + $0x172] sm:$0xff]
        %v511 = vld [vmem:[%s382] sm:$0xff]
        %v512 = vld [vmem:[%s382 + $0x8] sm:$0xff]
        %v513 = vld [vmem:[%s382 + $0x18] sm:$0xff]
        %v514 = vld [vmem:[%s382 + $0x20] sm:$0xff]
        %v515 = vld [vmem:[%s382 + $0x30] sm:$0xff]
        %v516 = vld [vmem:[%s382 + $0x38] sm:$0xff]
        %v517 = vld [vmem:[%s382 + $0x48] sm:$0xff]
        %v518 = vld [vmem:[%s382 + $0x50] sm:$0xff]
        %v519 = vld [vmem:[%s382 + $0x60] sm:$0xff]
        %v520 = vld [vmem:[%s382 + $0x68] sm:$0xff]
        %v521 = vld [vmem:[%s382 + $0x78] sm:$0xff]
        %v522 = vld [vmem:[%s382 + $0x80] sm:$0xff]
        %v523 = vld [vmem:[%s382 + $0x90] sm:$0xff]
        %v524 = vld [vmem:[%s382 + $0x98] sm:$0xff]
        %v525 = vld [vmem:[%s382 + $0xa8] sm:$0xff]
        %v526 = vld [vmem:[%s382 + $0xb0] sm:$0xff]
        %v527 = vld [vmem:[%s382 + $0xc0] sm:$0xff]
        %v528 = vld [vmem:[%s382 + $0xc8] sm:$0xff]
        %v529 = vld [vmem:[%s382 + $0xd8] sm:$0xff]
        %v530 = vld [vmem:[%s382 + $0xe0] sm:$0xff]
        %v531 = vld [vmem:[%s382 + $0xf0] sm:$0xff]
        %v532 = vld [vmem:[%s382 + $0xf8] sm:$0xff]
        %v533 = vld [vmem:[%s382 + $0x108] sm:$0xff]
        %v534 = vld [vmem:[%s382 + $0x110] sm:$0xff]
        %v535 = vld [vmem:[%s382 + $0x120] sm:$0xff]
        %v536 = vld [vmem:[%s382 + $0x128] sm:$0xff]
        %v537 = vld [vmem:[%s382 + $0x138] sm:$0xff]
        %v538 = vld [vmem:[%s382 + $0x140] sm:$0xff]
        %v539 = vld [vmem:[%s382 + $0x150] sm:$0xff]
        %v540 = vld [vmem:[%s382 + $0x158] sm:$0xff]
        %v541 = vld [vmem:[%s382 + $0x168] sm:$0xff]
        %v542 = vld [vmem:[%s382 + $0x170] sm:$0xff]
        %v543 = vld [vmem:[%s382 + $0x1] sm:$0xff]
        %v544 = vld [vmem:[%s382 + $0x9] sm:$0xff]
        %v545 = vld [vmem:[%s382 + $0x19] sm:$0xff]
        %v546 = vld [vmem:[%s382 + $0x21] sm:$0xff]
        %v547 = vld [vmem:[%s382 + $0x31] sm:$0xff]
        %v548 = vld [vmem:[%s382 + $0x39] sm:$0xff]
        %v549 = vld [vmem:[%s382 + $0x49] sm:$0xff]
        %v550 = vld [vmem:[%s382 + $0x51] sm:$0xff]
        %v551 = vld [vmem:[%s382 + $0x61] sm:$0xff]
        %v552 = vld [vmem:[%s382 + $0x69] sm:$0xff]
        %v553 = vld [vmem:[%s382 + $0x79] sm:$0xff]
        %v554 = vld [vmem:[%s382 + $0x81] sm:$0xff]
        %v555 = vld [vmem:[%s382 + $0x91] sm:$0xff]
        %v556 = vld [vmem:[%s382 + $0x99] sm:$0xff]
        %v557 = vld [vmem:[%s382 + $0xa9] sm:$0xff]
        %v558 = vld [vmem:[%s382 + $0xb1] sm:$0xff]
        %v559 = vld [vmem:[%s382 + $0xc1] sm:$0xff]
        %v560 = vld [vmem:[%s382 + $0xc9] sm:$0xff]
        %v561 = vld [vmem:[%s382 + $0xd9] sm:$0xff]
        %v562 = vld [vmem:[%s382 + $0xe1] sm:$0xff]
        %v563 = vld [vmem:[%s382 + $0xf1] sm:$0xff]
        %v564 = vld [vmem:[%s382 + $0xf9] sm:$0xff]
        %v565 = vld [vmem:[%s382 + $0x109] sm:$0xff]
        %v566 = vld [vmem:[%s382 + $0x111] sm:$0xff]
        %v567 = vld [vmem:[%s382 + $0x121] sm:$0xff]
        %v568 = vld [vmem:[%s382 + $0x129] sm:$0xff]
        %v569 = vld [vmem:[%s382 + $0x139] sm:$0xff]
        %v570 = vld [vmem:[%s382 + $0x141] sm:$0xff]
        %v571 = vld [vmem:[%s382 + $0x151] sm:$0xff]
        %v572 = vld [vmem:[%s382 + $0x159] sm:$0xff]
        %v573 = vld [vmem:[%s382 + $0x169] sm:$0xff]
        %v574 = vld [vmem:[%s382 + $0x171] sm:$0xff]
        %v575 = vld [vmem:[%s382 + $0x2] sm:$0xff]
        %v576 = vld [vmem:[%s382 + $0xa] sm:$0xff]
        %v577 = vld [vmem:[%s382 + $0x1a] sm:$0xff]
        %v578 = vld [vmem:[%s382 + $0x22] sm:$0xff]
        %v579 = vld [vmem:[%s382 + $0x32] sm:$0xff]
        %v580 = vld [vmem:[%s382 + $0x3a] sm:$0xff]
        %v581 = vld [vmem:[%s382 + $0x4a] sm:$0xff]
        %v582 = vld [vmem:[%s382 + $0x52] sm:$0xff]
        %v583 = vld [vmem:[%s382 + $0x62] sm:$0xff]
        %v584 = vld [vmem:[%s382 + $0x6a] sm:$0xff]
        %v585 = vld [vmem:[%s382 + $0x7a] sm:$0xff]
        %v586 = vld [vmem:[%s382 + $0x82] sm:$0xff]
        %v587 = vld [vmem:[%s382 + $0x92] sm:$0xff]
        %v588 = vld [vmem:[%s382 + $0x9a] sm:$0xff]
        %v589 = vld [vmem:[%s382 + $0xaa] sm:$0xff]
        %v590 = vld [vmem:[%s382 + $0xb2] sm:$0xff]
        %v591 = vld [vmem:[%s382 + $0xc2] sm:$0xff]
        %v592 = vld [vmem:[%s382 + $0xca] sm:$0xff]
        %v593 = vld [vmem:[%s382 + $0xda] sm:$0xff]
        %v594 = vld [vmem:[%s382 + $0xe2] sm:$0xff]
        %v595 = vld [vmem:[%s382 + $0xf2] sm:$0xff]
        %v596 = vld [vmem:[%s382 + $0xfa] sm:$0xff]
        %v597 = vld [vmem:[%s382 + $0x10a] sm:$0xff]
        %v598 = vld [vmem:[%s382 + $0x112] sm:$0xff]
        %v599 = vld [vmem:[%s382 + $0x122] sm:$0xff]
        %v600 = vld [vmem:[%s382 + $0x12a] sm:$0xff]
        %v601 = vld [vmem:[%s382 + $0x13a] sm:$0xff]
        %v602 = vld [vmem:[%s382 + $0x142] sm:$0xff]
        %v603 = vld [vmem:[%s382 + $0x152] sm:$0xff]
        %v604 = vld [vmem:[%s382 + $0x15a] sm:$0xff]
        %v605 = vld [vmem:[%s382 + $0x16a] sm:$0xff]
        %v606 = vld [vmem:[%s382 + $0x172] sm:$0xff]
        %s607 = scalar_lea.vmem [#allocation2], 48
        %v608 = vld [vmem:[%s607] sm:$0xff]
        %v609 = vld [vmem:[%s607 + $0x8] sm:$0xff]
        %v610 = vld [vmem:[%s607 + $0x18] sm:$0xff]
        %v611 = vld [vmem:[%s607 + $0x20] sm:$0xff]
        %v612 = vld [vmem:[%s607 + $0x30] sm:$0xff]
        %v613 = vld [vmem:[%s607 + $0x38] sm:$0xff]
        %v614 = vld [vmem:[%s607 + $0x48] sm:$0xff]
        %v615 = vld [vmem:[%s607 + $0x50] sm:$0xff]
        %v616 = vld [vmem:[%s607 + $0x60] sm:$0xff]
        %v617 = vld [vmem:[%s607 + $0x68] sm:$0xff]
        %v618 = vld [vmem:[%s607 + $0x78] sm:$0xff]
        %v619 = vld [vmem:[%s607 + $0x80] sm:$0xff]
        %v620 = vld [vmem:[%s607 + $0x90] sm:$0xff]
        %v621 = vld [vmem:[%s607 + $0x98] sm:$0xff]
        %v622 = vld [vmem:[%s607 + $0xa8] sm:$0xff]
        %v623 = vld [vmem:[%s607 + $0xb0] sm:$0xff]
        %v624 = vld [vmem:[%s607 + $0xc0] sm:$0xff]
        %v625 = vld [vmem:[%s607 + $0xc8] sm:$0xff]
        %v626 = vld [vmem:[%s607 + $0xd8] sm:$0xff]
        %v627 = vld [vmem:[%s607 + $0xe0] sm:$0xff]
        %v628 = vld [vmem:[%s607 + $0xf0] sm:$0xff]
        %v629 = vld [vmem:[%s607 + $0xf8] sm:$0xff]
        %v630 = vld [vmem:[%s607 + $0x108] sm:$0xff]
        %v631 = vld [vmem:[%s607 + $0x110] sm:$0xff]
        %v632 = vld [vmem:[%s607 + $0x120] sm:$0xff]
        %v633 = vld [vmem:[%s607 + $0x128] sm:$0xff]
        %v634 = vld [vmem:[%s607 + $0x138] sm:$0xff]
        %v635 = vld [vmem:[%s607 + $0x140] sm:$0xff]
        %v636 = vld [vmem:[%s607 + $0x150] sm:$0xff]
        %v637 = vld [vmem:[%s607 + $0x158] sm:$0xff]
        %v638 = vld [vmem:[%s607 + $0x168] sm:$0xff]
        %v639 = vld [vmem:[%s607 + $0x170] sm:$0xff]
        %v640 = vld [vmem:[%s607 + $0x1] sm:$0xff]
        %v641 = vld [vmem:[%s607 + $0x9] sm:$0xff]
        %v642 = vld [vmem:[%s607 + $0x19] sm:$0xff]
        %v643 = vld [vmem:[%s607 + $0x21] sm:$0xff]
        %v644 = vld [vmem:[%s607 + $0x31] sm:$0xff]
        %v645 = vld [vmem:[%s607 + $0x39] sm:$0xff]
        %v646 = vld [vmem:[%s607 + $0x49] sm:$0xff]
        %v647 = vld [vmem:[%s607 + $0x51] sm:$0xff]
        %v648 = vld [vmem:[%s607 + $0x61] sm:$0xff]
        %v649 = vld [vmem:[%s607 + $0x69] sm:$0xff]
        %v650 = vld [vmem:[%s607 + $0x79] sm:$0xff]
        %v651 = vld [vmem:[%s607 + $0x81] sm:$0xff]
        %v652 = vld [vmem:[%s607 + $0x91] sm:$0xff]
        %v653 = vld [vmem:[%s607 + $0x99] sm:$0xff]
        %v654 = vld [vmem:[%s607 + $0xa9] sm:$0xff]
        %v655 = vld [vmem:[%s607 + $0xb1] sm:$0xff]
        %v656 = vld [vmem:[%s607 + $0xc1] sm:$0xff]
        %v657 = vld [vmem:[%s607 + $0xc9] sm:$0xff]
        %v658 = vld [vmem:[%s607 + $0xd9] sm:$0xff]
        %v659 = vld [vmem:[%s607 + $0xe1] sm:$0xff]
        %v660 = vld [vmem:[%s607 + $0xf1] sm:$0xff]
        %v661 = vld [vmem:[%s607 + $0xf9] sm:$0xff]
        %v662 = vld [vmem:[%s607 + $0x109] sm:$0xff]
        %v663 = vld [vmem:[%s607 + $0x111] sm:$0xff]
        %v664 = vld [vmem:[%s607 + $0x121] sm:$0xff]
        %v665 = vld [vmem:[%s607 + $0x129] sm:$0xff]
        %v666 = vld [vmem:[%s607 + $0x139] sm:$0xff]
        %v667 = vld [vmem:[%s607 + $0x141] sm:$0xff]
        %v668 = vld [vmem:[%s607 + $0x151] sm:$0xff]
        %v669 = vld [vmem:[%s607 + $0x159] sm:$0xff]
        %v670 = vld [vmem:[%s607 + $0x169] sm:$0xff]
        %v671 = vld [vmem:[%s607 + $0x171] sm:$0xff]
        %v672 = vld [vmem:[%s607 + $0x2] sm:$0xff]
        %v673 = vld [vmem:[%s607 + $0xa] sm:$0xff]
        %v674 = vld [vmem:[%s607 + $0x1a] sm:$0xff]
        %v675 = vld [vmem:[%s607 + $0x22] sm:$0xff]
        %v676 = vld [vmem:[%s607 + $0x32] sm:$0xff]
        %v677 = vld [vmem:[%s607 + $0x3a] sm:$0xff]
        %v678 = vld [vmem:[%s607 + $0x4a] sm:$0xff]
        %v679 = vld [vmem:[%s607 + $0x52] sm:$0xff]
        %v680 = vld [vmem:[%s607 + $0x62] sm:$0xff]
        %v681 = vld [vmem:[%s607 + $0x6a] sm:$0xff]
        %v682 = vld [vmem:[%s607 + $0x7a] sm:$0xff]
        %v683 = vld [vmem:[%s607 + $0x82] sm:$0xff]
        %v684 = vld [vmem:[%s607 + $0x92] sm:$0xff]
        %v685 = vld [vmem:[%s607 + $0x9a] sm:$0xff]
        %v686 = vld [vmem:[%s607 + $0xaa] sm:$0xff]
        %v687 = vld [vmem:[%s607 + $0xb2] sm:$0xff]
        %v688 = vld [vmem:[%s607 + $0xc2] sm:$0xff]
        %v689 = vld [vmem:[%s607 + $0xca] sm:$0xff]
        %v690 = vld [vmem:[%s607 + $0xda] sm:$0xff]
        %v691 = vld [vmem:[%s607 + $0xe2] sm:$0xff]
        %v692 = vld [vmem:[%s607 + $0xf2] sm:$0xff]
        %v693 = vld [vmem:[%s607 + $0xfa] sm:$0xff]
        %v694 = vld [vmem:[%s607 + $0x10a] sm:$0xff]
        %v695 = vld [vmem:[%s607 + $0x112] sm:$0xff]
        %v696 = vld [vmem:[%s607 + $0x122] sm:$0xff]
        %v697 = vld [vmem:[%s607 + $0x12a] sm:$0xff]
        %v698 = vld [vmem:[%s607 + $0x13a] sm:$0xff]
        %v699 = vld [vmem:[%s607 + $0x142] sm:$0xff]
        %v700 = vld [vmem:[%s607 + $0x152] sm:$0xff]
        %v701 = vld [vmem:[%s607 + $0x15a] sm:$0xff]
        %v702 = vld [vmem:[%s607 + $0x16a] sm:$0xff]
        %v703 = vld [vmem:[%s607 + $0x172] sm:$0xff]
        %736 = vrot.lane.b32.xlu0 %v447, 3
        %v737 = vpop.permute.xlu0 %736
        %738 = vrot.lane.b32.xlu0 %v448, 3
        %v739 = vpop.permute.xlu0 %738
        %740 = vrot.lane.b32.xlu0 %v449, 3
        %v741 = vpop.permute.xlu0 %740
        %742 = vrot.lane.b32.xlu0 %v450, 3
        %v743 = vpop.permute.xlu0 %742
        %744 = vrot.lane.b32.xlu0 %v451, 3
        %v745 = vpop.permute.xlu0 %744
        %746 = vrot.lane.b32.xlu0 %v452, 3
        %v747 = vpop.permute.xlu0 %746
        %748 = vrot.lane.b32.xlu0 %v453, 3
        %v749 = vpop.permute.xlu0 %748
        %750 = vrot.lane.b32.xlu0 %v454, 3
        %v751 = vpop.permute.xlu0 %750
        %752 = vrot.lane.b32.xlu0 %v455, 3
        %v753 = vpop.permute.xlu0 %752
        %754 = vrot.lane.b32.xlu0 %v456, 3
        %v755 = vpop.permute.xlu0 %754
        %756 = vrot.lane.b32.xlu0 %v457, 3
        %v757 = vpop.permute.xlu0 %756
        %758 = vrot.lane.b32.xlu0 %v458, 3
        %v759 = vpop.permute.xlu0 %758
        %760 = vrot.lane.b32.xlu0 %v459, 3
        %v761 = vpop.permute.xlu0 %760
        %762 = vrot.lane.b32.xlu0 %v460, 3
        %v763 = vpop.permute.xlu0 %762
        %764 = vrot.lane.b32.xlu0 %v461, 3
        %v765 = vpop.permute.xlu0 %764
        %766 = vrot.lane.b32.xlu0 %v462, 3
        %v767 = vpop.permute.xlu0 %766
        %768 = vrot.lane.b32.xlu0 %v463, 3
        %v769 = vpop.permute.xlu0 %768
        %770 = vrot.lane.b32.xlu0 %v464, 3
        %v771 = vpop.permute.xlu0 %770
        %772 = vrot.lane.b32.xlu0 %v465, 3
        %v773 = vpop.permute.xlu0 %772
        %774 = vrot.lane.b32.xlu0 %v466, 3
        %v775 = vpop.permute.xlu0 %774
        %776 = vrot.lane.b32.xlu0 %v467, 3
        %v777 = vpop.permute.xlu0 %776
        %778 = vrot.lane.b32.xlu0 %v468, 3
        %v779 = vpop.permute.xlu0 %778
        %780 = vrot.lane.b32.xlu0 %v469, 3
        %v781 = vpop.permute.xlu0 %780
        %782 = vrot.lane.b32.xlu0 %v470, 3
        %v783 = vpop.permute.xlu0 %782
        %784 = vrot.lane.b32.xlu0 %v471, 3
        %v785 = vpop.permute.xlu0 %784
        %786 = vrot.lane.b32.xlu0 %v472, 3
        %v787 = vpop.permute.xlu0 %786
        %788 = vrot.lane.b32.xlu0 %v473, 3
        %v789 = vpop.permute.xlu0 %788
        %790 = vrot.lane.b32.xlu0 %v474, 3
        %v791 = vpop.permute.xlu0 %790
        %792 = vrot.lane.b32.xlu0 %v475, 3
        %v793 = vpop.permute.xlu0 %792
        %794 = vrot.lane.b32.xlu0 %v476, 3
        %v795 = vpop.permute.xlu0 %794
        %796 = vrot.lane.b32.xlu0 %v477, 3
        %v797 = vpop.permute.xlu0 %796
        %798 = vrot.lane.b32.xlu0 %v478, 3
        %v799 = vpop.permute.xlu0 %798
        %864 = vrot.lane.b32.xlu0 %v479, 6
        %v865 = vpop.permute.xlu0 %864
        %866 = vrot.lane.b32.xlu0 %v480, 6
        %v867 = vpop.permute.xlu0 %866
        %868 = vrot.lane.b32.xlu0 %v481, 6
        %v869 = vpop.permute.xlu0 %868
        %870 = vrot.lane.b32.xlu0 %v482, 6
        %v871 = vpop.permute.xlu0 %870
        %872 = vrot.lane.b32.xlu0 %v483, 6
        %v873 = vpop.permute.xlu0 %872
        %874 = vrot.lane.b32.xlu0 %v484, 6
        %v875 = vpop.permute.xlu0 %874
        %876 = vrot.lane.b32.xlu0 %v485, 6
        %v877 = vpop.permute.xlu0 %876
        %878 = vrot.lane.b32.xlu0 %v486, 6
        %v879 = vpop.permute.xlu0 %878
        %880 = vrot.lane.b32.xlu0 %v487, 6
        %v881 = vpop.permute.xlu0 %880
        %882 = vrot.lane.b32.xlu0 %v488, 6
        %v883 = vpop.permute.xlu0 %882
        %884 = vrot.lane.b32.xlu0 %v489, 6
        %v885 = vpop.permute.xlu0 %884
        %886 = vrot.lane.b32.xlu0 %v490, 6
        %v887 = vpop.permute.xlu0 %886
        %888 = vrot.lane.b32.xlu0 %v491, 6
        %v889 = vpop.permute.xlu0 %888
        %890 = vrot.lane.b32.xlu0 %v492, 6
        %v891 = vpop.permute.xlu0 %890
        %892 = vrot.lane.b32.xlu0 %v493, 6
        %v893 = vpop.permute.xlu0 %892
        %894 = vrot.lane.b32.xlu0 %v494, 6
        %v895 = vpop.permute.xlu0 %894
        %896 = vrot.lane.b32.xlu0 %v495, 6
        %v897 = vpop.permute.xlu0 %896
        %898 = vrot.lane.b32.xlu0 %v496, 6
        %v899 = vpop.permute.xlu0 %898
        %900 = vrot.lane.b32.xlu0 %v497, 6
        %v901 = vpop.permute.xlu0 %900
        %902 = vrot.lane.b32.xlu0 %v498, 6
        %v903 = vpop.permute.xlu0 %902
        %904 = vrot.lane.b32.xlu0 %v499, 6
        %v905 = vpop.permute.xlu0 %904
        %906 = vrot.lane.b32.xlu0 %v500, 6
        %v907 = vpop.permute.xlu0 %906
        %908 = vrot.lane.b32.xlu0 %v501, 6
        %v909 = vpop.permute.xlu0 %908
        %910 = vrot.lane.b32.xlu0 %v502, 6
        %v911 = vpop.permute.xlu0 %910
        %912 = vrot.lane.b32.xlu0 %v503, 6
        %v913 = vpop.permute.xlu0 %912
        %914 = vrot.lane.b32.xlu0 %v504, 6
        %v915 = vpop.permute.xlu0 %914
        %916 = vrot.lane.b32.xlu0 %v505, 6
        %v917 = vpop.permute.xlu0 %916
        %918 = vrot.lane.b32.xlu0 %v506, 6
        %v919 = vpop.permute.xlu0 %918
        %920 = vrot.lane.b32.xlu0 %v507, 6
        %v921 = vpop.permute.xlu0 %920
        %922 = vrot.lane.b32.xlu0 %v508, 6
        %v923 = vpop.permute.xlu0 %922
        %924 = vrot.lane.b32.xlu0 %v509, 6
        %v925 = vpop.permute.xlu0 %924
        %926 = vrot.lane.b32.xlu0 %v510, 6
        %v927 = vpop.permute.xlu0 %926
        %992 = vrot.lane.b32.xlu0 %v511, 9
        %v993 = vpop.permute.xlu0 %992
        %994 = vrot.lane.b32.xlu0 %v512, 9
        %v995 = vpop.permute.xlu0 %994
        %996 = vrot.lane.b32.xlu0 %v513, 9
        %v997 = vpop.permute.xlu0 %996
        %998 = vrot.lane.b32.xlu0 %v514, 9
        %v999 = vpop.permute.xlu0 %998
        %1000 = vrot.lane.b32.xlu0 %v515, 9
        %v1001 = vpop.permute.xlu0 %1000
        %1002 = vrot.lane.b32.xlu0 %v516, 9
        %v1003 = vpop.permute.xlu0 %1002
        %1004 = vrot.lane.b32.xlu0 %v517, 9
        %v1005 = vpop.permute.xlu0 %1004
        %1006 = vrot.lane.b32.xlu0 %v518, 9
        %v1007 = vpop.permute.xlu0 %1006
        %1008 = vrot.lane.b32.xlu0 %v519, 9
        %v1009 = vpop.permute.xlu0 %1008
        %1010 = vrot.lane.b32.xlu0 %v520, 9
        %v1011 = vpop.permute.xlu0 %1010
        %1012 = vrot.lane.b32.xlu0 %v521, 9
        %v1013 = vpop.permute.xlu0 %1012
        %1014 = vrot.lane.b32.xlu0 %v522, 9
        %v1015 = vpop.permute.xlu0 %1014
        %1016 = vrot.lane.b32.xlu0 %v523, 9
        %v1017 = vpop.permute.xlu0 %1016
        %1018 = vrot.lane.b32.xlu0 %v524, 9
        %v1019 = vpop.permute.xlu0 %1018
        %1020 = vrot.lane.b32.xlu0 %v525, 9
        %v1021 = vpop.permute.xlu0 %1020
        %1022 = vrot.lane.b32.xlu0 %v526, 9
        %v1023 = vpop.permute.xlu0 %1022
        %1024 = vrot.lane.b32.xlu0 %v527, 9
        %v1025 = vpop.permute.xlu0 %1024
        %1026 = vrot.lane.b32.xlu0 %v528, 9
        %v1027 = vpop.permute.xlu0 %1026
        %1028 = vrot.lane.b32.xlu0 %v529, 9
        %v1029 = vpop.permute.xlu0 %1028
        %1030 = vrot.lane.b32.xlu0 %v530, 9
        %v1031 = vpop.permute.xlu0 %1030
        %1032 = vrot.lane.b32.xlu0 %v531, 9
        %v1033 = vpop.permute.xlu0 %1032
        %1034 = vrot.lane.b32.xlu0 %v532, 9
        %v1035 = vpop.permute.xlu0 %1034
        %1036 = vrot.lane.b32.xlu0 %v533, 9
        %v1037 = vpop.permute.xlu0 %1036
        %1038 = vrot.lane.b32.xlu0 %v534, 9
        %v1039 = vpop.permute.xlu0 %1038
        %1040 = vrot.lane.b32.xlu0 %v535, 9
        %v1041 = vpop.permute.xlu0 %1040
        %1042 = vrot.lane.b32.xlu0 %v536, 9
        %v1043 = vpop.permute.xlu0 %1042
        %1044 = vrot.lane.b32.xlu0 %v537, 9
        %v1045 = vpop.permute.xlu0 %1044
        %1046 = vrot.lane.b32.xlu0 %v538, 9
        %v1047 = vpop.permute.xlu0 %1046
        %1048 = vrot.lane.b32.xlu0 %v539, 9
        %v1049 = vpop.permute.xlu0 %1048
        %1050 = vrot.lane.b32.xlu0 %v540, 9
        %v1051 = vpop.permute.xlu0 %1050
        %1052 = vrot.lane.b32.xlu0 %v541, 9
        %v1053 = vpop.permute.xlu0 %1052
        %1054 = vrot.lane.b32.xlu0 %v542, 9
        %v1055 = vpop.permute.xlu0 %1054
        %1120 = vrot.lane.b32.xlu0 %v543, 12
        %v1121 = vpop.permute.xlu0 %1120
        %1122 = vrot.lane.b32.xlu0 %v544, 12
        %v1123 = vpop.permute.xlu0 %1122
        %1124 = vrot.lane.b32.xlu0 %v545, 12
        %v1125 = vpop.permute.xlu0 %1124
        %1126 = vrot.lane.b32.xlu0 %v546, 12
        %v1127 = vpop.permute.xlu0 %1126
        %1128 = vrot.lane.b32.xlu0 %v547, 12
        %v1129 = vpop.permute.xlu0 %1128
        %1130 = vrot.lane.b32.xlu0 %v548, 12
        %v1131 = vpop.permute.xlu0 %1130
        %1132 = vrot.lane.b32.xlu0 %v549, 12
        %v1133 = vpop.permute.xlu0 %1132
        %1134 = vrot.lane.b32.xlu0 %v550, 12
        %v1135 = vpop.permute.xlu0 %1134
        %1136 = vrot.lane.b32.xlu0 %v551, 12
        %v1137 = vpop.permute.xlu0 %1136
        %1138 = vrot.lane.b32.xlu0 %v552, 12
        %v1139 = vpop.permute.xlu0 %1138
        %1140 = vrot.lane.b32.xlu0 %v553, 12
        %v1141 = vpop.permute.xlu0 %1140
        %1142 = vrot.lane.b32.xlu0 %v554, 12
        %v1143 = vpop.permute.xlu0 %1142
        %1144 = vrot.lane.b32.xlu0 %v555, 12
        %v1145 = vpop.permute.xlu0 %1144
        %1146 = vrot.lane.b32.xlu0 %v556, 12
        %v1147 = vpop.permute.xlu0 %1146
        %1148 = vrot.lane.b32.xlu0 %v557, 12
        %v1149 = vpop.permute.xlu0 %1148
        %1150 = vrot.lane.b32.xlu0 %v558, 12
        %v1151 = vpop.permute.xlu0 %1150
        %1152 = vrot.lane.b32.xlu0 %v559, 12
        %v1153 = vpop.permute.xlu0 %1152
        %1154 = vrot.lane.b32.xlu0 %v560, 12
        %v1155 = vpop.permute.xlu0 %1154
        %1156 = vrot.lane.b32.xlu0 %v561, 12
        %v1157 = vpop.permute.xlu0 %1156
        %1158 = vrot.lane.b32.xlu0 %v562, 12
        %v1159 = vpop.permute.xlu0 %1158
        %1160 = vrot.lane.b32.xlu0 %v563, 12
        %v1161 = vpop.permute.xlu0 %1160
        %1162 = vrot.lane.b32.xlu0 %v564, 12
        %v1163 = vpop.permute.xlu0 %1162
        %1164 = vrot.lane.b32.xlu0 %v565, 12
        %v1165 = vpop.permute.xlu0 %1164
        %1166 = vrot.lane.b32.xlu0 %v566, 12
        %v1167 = vpop.permute.xlu0 %1166
        %1168 = vrot.lane.b32.xlu0 %v567, 12
        %v1169 = vpop.permute.xlu0 %1168
        %1170 = vrot.lane.b32.xlu0 %v568, 12
        %v1171 = vpop.permute.xlu0 %1170
        %1172 = vrot.lane.b32.xlu0 %v569, 12
        %v1173 = vpop.permute.xlu0 %1172
        %1174 = vrot.lane.b32.xlu0 %v570, 12
        %v1175 = vpop.permute.xlu0 %1174
        %1176 = vrot.lane.b32.xlu0 %v571, 12
        %v1177 = vpop.permute.xlu0 %1176
        %1178 = vrot.lane.b32.xlu0 %v572, 12
        %v1179 = vpop.permute.xlu0 %1178
        %1180 = vrot.lane.b32.xlu0 %v573, 12
        %v1181 = vpop.permute.xlu0 %1180
        %1182 = vrot.lane.b32.xlu0 %v574, 12
        %v1183 = vpop.permute.xlu0 %1182
        %1248 = vrot.lane.b32.xlu0 %v575, 15
        %v1249 = vpop.permute.xlu0 %1248
        %1250 = vrot.lane.b32.xlu0 %v576, 15
        %v1251 = vpop.permute.xlu0 %1250
        %1252 = vrot.lane.b32.xlu0 %v577, 15
        %v1253 = vpop.permute.xlu0 %1252
        %1254 = vrot.lane.b32.xlu0 %v578, 15
        %v1255 = vpop.permute.xlu0 %1254
        %1256 = vrot.lane.b32.xlu0 %v579, 15
        %v1257 = vpop.permute.xlu0 %1256
        %1258 = vrot.lane.b32.xlu0 %v580, 15
        %v1259 = vpop.permute.xlu0 %1258
        %1260 = vrot.lane.b32.xlu0 %v581, 15
        %v1261 = vpop.permute.xlu0 %1260
        %1262 = vrot.lane.b32.xlu0 %v582, 15
        %v1263 = vpop.permute.xlu0 %1262
        %1264 = vrot.lane.b32.xlu0 %v583, 15
        %v1265 = vpop.permute.xlu0 %1264
        %1266 = vrot.lane.b32.xlu0 %v584, 15
        %v1267 = vpop.permute.xlu0 %1266
        %1268 = vrot.lane.b32.xlu0 %v585, 15
        %v1269 = vpop.permute.xlu0 %1268
        %1270 = vrot.lane.b32.xlu0 %v586, 15
        %v1271 = vpop.permute.xlu0 %1270
        %1272 = vrot.lane.b32.xlu0 %v587, 15
        %v1273 = vpop.permute.xlu0 %1272
        %1274 = vrot.lane.b32.xlu0 %v588, 15
        %v1275 = vpop.permute.xlu0 %1274
        %1276 = vrot.lane.b32.xlu0 %v589, 15
        %v1277 = vpop.permute.xlu0 %1276
        %1278 = vrot.lane.b32.xlu0 %v590, 15
        %v1279 = vpop.permute.xlu0 %1278
        %1280 = vrot.lane.b32.xlu0 %v591, 15
        %v1281 = vpop.permute.xlu0 %1280
        %1282 = vrot.lane.b32.xlu0 %v592, 15
        %v1283 = vpop.permute.xlu0 %1282
        %1284 = vrot.lane.b32.xlu0 %v593, 15
        %v1285 = vpop.permute.xlu0 %1284
        %1286 = vrot.lane.b32.xlu0 %v594, 15
        %v1287 = vpop.permute.xlu0 %1286
        %1288 = vrot.lane.b32.xlu0 %v595, 15
        %v1289 = vpop.permute.xlu0 %1288
        %1290 = vrot.lane.b32.xlu0 %v596, 15
        %v1291 = vpop.permute.xlu0 %1290
        %1292 = vrot.lane.b32.xlu0 %v597, 15
        %v1293 = vpop.permute.xlu0 %1292
        %1294 = vrot.lane.b32.xlu0 %v598, 15
        %v1295 = vpop.permute.xlu0 %1294
        %1296 = vrot.lane.b32.xlu0 %v599, 15
        %v1297 = vpop.permute.xlu0 %1296
        %1298 = vrot.lane.b32.xlu0 %v600, 15
        %v1299 = vpop.permute.xlu0 %1298
        %1300 = vrot.lane.b32.xlu0 %v601, 15
        %v1301 = vpop.permute.xlu0 %1300
        %1302 = vrot.lane.b32.xlu0 %v602, 15
        %v1303 = vpop.permute.xlu0 %1302
        %1304 = vrot.lane.b32.xlu0 %v603, 15
        %v1305 = vpop.permute.xlu0 %1304
        %1306 = vrot.lane.b32.xlu0 %v604, 15
        %v1307 = vpop.permute.xlu0 %1306
        %1308 = vrot.lane.b32.xlu0 %v605, 15
        %v1309 = vpop.permute.xlu0 %1308
        %1310 = vrot.lane.b32.xlu0 %v606, 15
        %v1311 = vpop.permute.xlu0 %1310
        %1376 = vrot.lane.b32.xlu0 %v608, 18
        %v1377 = vpop.permute.xlu0 %1376
        %1378 = vrot.lane.b32.xlu0 %v609, 18
        %v1379 = vpop.permute.xlu0 %1378
        %1380 = vrot.lane.b32.xlu0 %v610, 18
        %v1381 = vpop.permute.xlu0 %1380
        %1382 = vrot.lane.b32.xlu0 %v611, 18
        %v1383 = vpop.permute.xlu0 %1382
        %1384 = vrot.lane.b32.xlu0 %v612, 18
        %v1385 = vpop.permute.xlu0 %1384
        %1386 = vrot.lane.b32.xlu0 %v613, 18
        %v1387 = vpop.permute.xlu0 %1386
        %1388 = vrot.lane.b32.xlu0 %v614, 18
        %v1389 = vpop.permute.xlu0 %1388
        %1390 = vrot.lane.b32.xlu0 %v615, 18
        %v1391 = vpop.permute.xlu0 %1390
        %1392 = vrot.lane.b32.xlu0 %v616, 18
        %v1393 = vpop.permute.xlu0 %1392
        %1394 = vrot.lane.b32.xlu0 %v617, 18
        %v1395 = vpop.permute.xlu0 %1394
        %1396 = vrot.lane.b32.xlu0 %v618, 18
        %v1397 = vpop.permute.xlu0 %1396
        %1398 = vrot.lane.b32.xlu0 %v619, 18
        %v1399 = vpop.permute.xlu0 %1398
        %1400 = vrot.lane.b32.xlu0 %v620, 18
        %v1401 = vpop.permute.xlu0 %1400
        %1402 = vrot.lane.b32.xlu0 %v621, 18
        %v1403 = vpop.permute.xlu0 %1402
        %1404 = vrot.lane.b32.xlu0 %v622, 18
        %v1405 = vpop.permute.xlu0 %1404
        %1406 = vrot.lane.b32.xlu0 %v623, 18
        %v1407 = vpop.permute.xlu0 %1406
        %1408 = vrot.lane.b32.xlu0 %v624, 18
        %v1409 = vpop.permute.xlu0 %1408
        %1410 = vrot.lane.b32.xlu0 %v625, 18
        %v1411 = vpop.permute.xlu0 %1410
        %1412 = vrot.lane.b32.xlu0 %v626, 18
        %v1413 = vpop.permute.xlu0 %1412
        %1414 = vrot.lane.b32.xlu0 %v627, 18
        %v1415 = vpop.permute.xlu0 %1414
        %1416 = vrot.lane.b32.xlu0 %v628, 18
        %v1417 = vpop.permute.xlu0 %1416
        %1418 = vrot.lane.b32.xlu0 %v629, 18
        %v1419 = vpop.permute.xlu0 %1418
        %1420 = vrot.lane.b32.xlu0 %v630, 18
        %v1421 = vpop.permute.xlu0 %1420
        %1422 = vrot.lane.b32.xlu0 %v631, 18
        %v1423 = vpop.permute.xlu0 %1422
        %1424 = vrot.lane.b32.xlu0 %v632, 18
        %v1425 = vpop.permute.xlu0 %1424
        %1426 = vrot.lane.b32.xlu0 %v633, 18
        %v1427 = vpop.permute.xlu0 %1426
        %1428 = vrot.lane.b32.xlu0 %v634, 18
        %v1429 = vpop.permute.xlu0 %1428
        %1430 = vrot.lane.b32.xlu0 %v635, 18
        %v1431 = vpop.permute.xlu0 %1430
        %1432 = vrot.lane.b32.xlu0 %v636, 18
        %v1433 = vpop.permute.xlu0 %1432
        %1434 = vrot.lane.b32.xlu0 %v637, 18
        %v1435 = vpop.permute.xlu0 %1434
        %1436 = vrot.lane.b32.xlu0 %v638, 18
        %v1437 = vpop.permute.xlu0 %1436
        %1438 = vrot.lane.b32.xlu0 %v639, 18
        %v1439 = vpop.permute.xlu0 %1438
        %1504 = vrot.lane.b32.xlu0 %v640, 21
        %v1505 = vpop.permute.xlu0 %1504
        %1506 = vrot.lane.b32.xlu0 %v641, 21
        %v1507 = vpop.permute.xlu0 %1506
        %1508 = vrot.lane.b32.xlu0 %v642, 21
        %v1509 = vpop.permute.xlu0 %1508
        %1510 = vrot.lane.b32.xlu0 %v643, 21
        %v1511 = vpop.permute.xlu0 %1510
        %1512 = vrot.lane.b32.xlu0 %v644, 21
        %v1513 = vpop.permute.xlu0 %1512
        %1514 = vrot.lane.b32.xlu0 %v645, 21
        %v1515 = vpop.permute.xlu0 %1514
        %1516 = vrot.lane.b32.xlu0 %v646, 21
        %v1517 = vpop.permute.xlu0 %1516
        %1518 = vrot.lane.b32.xlu0 %v647, 21
        %v1519 = vpop.permute.xlu0 %1518
        %1520 = vrot.lane.b32.xlu0 %v648, 21
        %v1521 = vpop.permute.xlu0 %1520
        %1522 = vrot.lane.b32.xlu0 %v649, 21
        %v1523 = vpop.permute.xlu0 %1522
        %1524 = vrot.lane.b32.xlu0 %v650, 21
        %v1525 = vpop.permute.xlu0 %1524
        %1526 = vrot.lane.b32.xlu0 %v651, 21
        %v1527 = vpop.permute.xlu0 %1526
        %1528 = vrot.lane.b32.xlu0 %v652, 21
        %v1529 = vpop.permute.xlu0 %1528
        %1530 = vrot.lane.b32.xlu0 %v653, 21
        %v1531 = vpop.permute.xlu0 %1530
        %1532 = vrot.lane.b32.xlu0 %v654, 21
        %v1533 = vpop.permute.xlu0 %1532
        %1534 = vrot.lane.b32.xlu0 %v655, 21
        %v1535 = vpop.permute.xlu0 %1534
        %1536 = vrot.lane.b32.xlu0 %v656, 21
        %v1537 = vpop.permute.xlu0 %1536
        %1538 = vrot.lane.b32.xlu0 %v657, 21
        %v1539 = vpop.permute.xlu0 %1538
        %1540 = vrot.lane.b32.xlu0 %v658, 21
        %v1541 = vpop.permute.xlu0 %1540
        %1542 = vrot.lane.b32.xlu0 %v659, 21
        %v1543 = vpop.permute.xlu0 %1542
        %1544 = vrot.lane.b32.xlu0 %v660, 21
        %v1545 = vpop.permute.xlu0 %1544
        %1546 = vrot.lane.b32.xlu0 %v661, 21
        %v1547 = vpop.permute.xlu0 %1546
        %1548 = vrot.lane.b32.xlu0 %v662, 21
        %v1549 = vpop.permute.xlu0 %1548
        %1550 = vrot.lane.b32.xlu0 %v663, 21
        %v1551 = vpop.permute.xlu0 %1550
        %1552 = vrot.lane.b32.xlu0 %v664, 21
        %v1553 = vpop.permute.xlu0 %1552
        %1554 = vrot.lane.b32.xlu0 %v665, 21
        %v1555 = vpop.permute.xlu0 %1554
        %1556 = vrot.lane.b32.xlu0 %v666, 21
        %v1557 = vpop.permute.xlu0 %1556
        %1558 = vrot.lane.b32.xlu0 %v667, 21
        %v1559 = vpop.permute.xlu0 %1558
        %1560 = vrot.lane.b32.xlu0 %v668, 21
        %v1561 = vpop.permute.xlu0 %1560
        %1562 = vrot.lane.b32.xlu0 %v669, 21
        %v1563 = vpop.permute.xlu0 %1562
        %1564 = vrot.lane.b32.xlu0 %v670, 21
        %v1565 = vpop.permute.xlu0 %1564
        %1566 = vrot.lane.b32.xlu0 %v671, 21
        %v1567 = vpop.permute.xlu0 %1566
        %1632 = vrot.lane.b32.xlu0 %v672, 24
        %v1633 = vpop.permute.xlu0 %1632
        %1634 = vrot.lane.b32.xlu0 %v673, 24
        %v1635 = vpop.permute.xlu0 %1634
        %1636 = vrot.lane.b32.xlu0 %v674, 24
        %v1637 = vpop.permute.xlu0 %1636
        %1638 = vrot.lane.b32.xlu0 %v675, 24
        %v1639 = vpop.permute.xlu0 %1638
        %1640 = vrot.lane.b32.xlu0 %v676, 24
        %v1641 = vpop.permute.xlu0 %1640
        %1642 = vrot.lane.b32.xlu0 %v677, 24
        %v1643 = vpop.permute.xlu0 %1642
        %1644 = vrot.lane.b32.xlu0 %v678, 24
        %v1645 = vpop.permute.xlu0 %1644
        %1646 = vrot.lane.b32.xlu0 %v679, 24
        %v1647 = vpop.permute.xlu0 %1646
        %1648 = vrot.lane.b32.xlu0 %v680, 24
        %v1649 = vpop.permute.xlu0 %1648
        %1650 = vrot.lane.b32.xlu0 %v681, 24
        %v1651 = vpop.permute.xlu0 %1650
        %1652 = vrot.lane.b32.xlu0 %v682, 24
        %v1653 = vpop.permute.xlu0 %1652
        %1654 = vrot.lane.b32.xlu0 %v683, 24
        %v1655 = vpop.permute.xlu0 %1654
        %1656 = vrot.lane.b32.xlu0 %v684, 24
        %v1657 = vpop.permute.xlu0 %1656
        %1658 = vrot.lane.b32.xlu0 %v685, 24
        %v1659 = vpop.permute.xlu0 %1658
        %1660 = vrot.lane.b32.xlu0 %v686, 24
        %v1661 = vpop.permute.xlu0 %1660
        %1662 = vrot.lane.b32.xlu0 %v687, 24
        %v1663 = vpop.permute.xlu0 %1662
        %1664 = vrot.lane.b32.xlu0 %v688, 24
        %v1665 = vpop.permute.xlu0 %1664
        %1666 = vrot.lane.b32.xlu0 %v689, 24
        %v1667 = vpop.permute.xlu0 %1666
        %1668 = vrot.lane.b32.xlu0 %v690, 24
        %v1669 = vpop.permute.xlu0 %1668
        %1670 = vrot.lane.b32.xlu0 %v691, 24
        %v1671 = vpop.permute.xlu0 %1670
        %1672 = vrot.lane.b32.xlu0 %v692, 24
        %v1673 = vpop.permute.xlu0 %1672
        %1674 = vrot.lane.b32.xlu0 %v693, 24
        %v1675 = vpop.permute.xlu0 %1674
        %1676 = vrot.lane.b32.xlu0 %v694, 24
        %v1677 = vpop.permute.xlu0 %1676
        %1678 = vrot.lane.b32.xlu0 %v695, 24
        %v1679 = vpop.permute.xlu0 %1678
        %1680 = vrot.lane.b32.xlu0 %v696, 24
        %v1681 = vpop.permute.xlu0 %1680
        %1682 = vrot.lane.b32.xlu0 %v697, 24
        %v1683 = vpop.permute.xlu0 %1682
        %1684 = vrot.lane.b32.xlu0 %v698, 24
        %v1685 = vpop.permute.xlu0 %1684
        %1686 = vrot.lane.b32.xlu0 %v699, 24
        %v1687 = vpop.permute.xlu0 %1686
        %1688 = vrot.lane.b32.xlu0 %v700, 24
        %v1689 = vpop.permute.xlu0 %1688
        %1690 = vrot.lane.b32.xlu0 %v701, 24
        %v1691 = vpop.permute.xlu0 %1690
        %1692 = vrot.lane.b32.xlu0 %v702, 24
        %v1693 = vpop.permute.xlu0 %1692
        %1694 = vrot.lane.b32.xlu0 %v703, 24
        %v1695 = vpop.permute.xlu0 %1694
        %v1728 = vsel %vm304, %v415, %v737
        %v1729 = vsel %vm304, %v416, %v739
        %v1730 = vsel %vm304, %v417, %v741
        %v1731 = vsel %vm304, %v418, %v743
        %v1732 = vsel %vm304, %v419, %v745
        %v1733 = vsel %vm304, %v420, %v747
        %v1734 = vsel %vm304, %v421, %v749
        %v1735 = vsel %vm304, %v422, %v751
        %v1736 = vsel %vm304, %v423, %v753
        %v1737 = vsel %vm304, %v424, %v755
        %v1738 = vsel %vm304, %v425, %v757
        %v1739 = vsel %vm304, %v426, %v759
        %v1740 = vsel %vm304, %v427, %v761
        %v1741 = vsel %vm304, %v428, %v763
        %v1742 = vsel %vm304, %v429, %v765
        %v1743 = vsel %vm304, %v430, %v767
        %v1744 = vsel %vm304, %v431, %v769
        %v1745 = vsel %vm304, %v432, %v771
        %v1746 = vsel %vm304, %v433, %v773
        %v1747 = vsel %vm304, %v434, %v775
        %v1748 = vsel %vm304, %v435, %v777
        %v1749 = vsel %vm304, %v436, %v779
        %v1750 = vsel %vm304, %v437, %v781
        %v1751 = vsel %vm304, %v438, %v783
        %v1752 = vsel %vm304, %v439, %v785
        %v1753 = vsel %vm304, %v440, %v787
        %v1754 = vsel %vm304, %v441, %v789
        %v1755 = vsel %vm304, %v442, %v791
        %v1756 = vsel %vm304, %v443, %v793
        %v1757 = vsel %vm304, %v444, %v795
        %v1758 = vsel %vm304, %v445, %v797
        %v1759 = vsel %vm304, %v446, %v799
        %vm1760 = vcmask 48128
        %v1761 = vsel %vm1760, %v1728, %v865
        %v1762 = vsel %vm1760, %v1729, %v867
        %v1763 = vsel %vm1760, %v1730, %v869
        %v1764 = vsel %vm1760, %v1731, %v871
        %v1765 = vsel %vm1760, %v1732, %v873
        %v1766 = vsel %vm1760, %v1733, %v875
        %v1767 = vsel %vm1760, %v1734, %v877
        %v1768 = vsel %vm1760, %v1735, %v879
        %v1769 = vsel %vm1760, %v1736, %v881
        %v1770 = vsel %vm1760, %v1737, %v883
        %v1771 = vsel %vm1760, %v1738, %v885
        %v1772 = vsel %vm1760, %v1739, %v887
        %v1773 = vsel %vm1760, %v1740, %v889
        %v1774 = vsel %vm1760, %v1741, %v891
        %v1775 = vsel %vm1760, %v1742, %v893
        %v1776 = vsel %vm1760, %v1743, %v895
        %v1777 = vsel %vm1760, %v1744, %v897
        %v1778 = vsel %vm1760, %v1745, %v899
        %v1779 = vsel %vm1760, %v1746, %v901
        %v1780 = vsel %vm1760, %v1747, %v903
        %v1781 = vsel %vm1760, %v1748, %v905
        %v1782 = vsel %vm1760, %v1749, %v907
        %v1783 = vsel %vm1760, %v1750, %v909
        %v1784 = vsel %vm1760, %v1751, %v911
        %v1785 = vsel %vm1760, %v1752, %v913
        %v1786 = vsel %vm1760, %v1753, %v915
        %v1787 = vsel %vm1760, %v1754, %v917
        %v1788 = vsel %vm1760, %v1755, %v919
        %v1789 = vsel %vm1760, %v1756, %v921
        %v1790 = vsel %vm1760, %v1757, %v923
        %v1791 = vsel %vm1760, %v1758, %v925
        %v1792 = vsel %vm1760, %v1759, %v927
        %vm1793 = vcmask 72704
        %v1794 = vsel %vm1793, %v1761, %v993
        %v1795 = vsel %vm1793, %v1762, %v995
        %v1796 = vsel %vm1793, %v1763, %v997
        %v1797 = vsel %vm1793, %v1764, %v999
        %v1798 = vsel %vm1793, %v1765, %v1001
        %v1799 = vsel %vm1793, %v1766, %v1003
        %v1800 = vsel %vm1793, %v1767, %v1005
        %v1801 = vsel %vm1793, %v1768, %v1007
        %v1802 = vsel %vm1793, %v1769, %v1009
        %v1803 = vsel %vm1793, %v1770, %v1011
        %v1804 = vsel %vm1793, %v1771, %v1013
        %v1805 = vsel %vm1793, %v1772, %v1015
        %v1806 = vsel %vm1793, %v1773, %v1017
        %v1807 = vsel %vm1793, %v1774, %v1019
        %v1808 = vsel %vm1793, %v1775, %v1021
        %v1809 = vsel %vm1793, %v1776, %v1023
        %v1810 = vsel %vm1793, %v1777, %v1025
        %v1811 = vsel %vm1793, %v1778, %v1027
        %v1812 = vsel %vm1793, %v1779, %v1029
        %v1813 = vsel %vm1793, %v1780, %v1031
        %v1814 = vsel %vm1793, %v1781, %v1033
        %v1815 = vsel %vm1793, %v1782, %v1035
        %v1816 = vsel %vm1793, %v1783, %v1037
        %v1817 = vsel %vm1793, %v1784, %v1039
        %v1818 = vsel %vm1793, %v1785, %v1041
        %v1819 = vsel %vm1793, %v1786, %v1043
        %v1820 = vsel %vm1793, %v1787, %v1045
        %v1821 = vsel %vm1793, %v1788, %v1047
        %v1822 = vsel %vm1793, %v1789, %v1049
        %v1823 = vsel %vm1793, %v1790, %v1051
        %v1824 = vsel %vm1793, %v1791, %v1053
        %v1825 = vsel %vm1793, %v1792, %v1055
        %vm1826 = vcmask 97280
        %v1827 = vsel %vm1826, %v1794, %v1121
        %v1828 = vsel %vm1826, %v1795, %v1123
        %v1829 = vsel %vm1826, %v1796, %v1125
        %v1830 = vsel %vm1826, %v1797, %v1127
        %v1831 = vsel %vm1826, %v1798, %v1129
        %v1832 = vsel %vm1826, %v1799, %v1131
        %v1833 = vsel %vm1826, %v1800, %v1133
        %v1834 = vsel %vm1826, %v1801, %v1135
        %v1835 = vsel %vm1826, %v1802, %v1137
        %v1836 = vsel %vm1826, %v1803, %v1139
        %v1837 = vsel %vm1826, %v1804, %v1141
        %v1838 = vsel %vm1826, %v1805, %v1143
        %v1839 = vsel %vm1826, %v1806, %v1145
        %v1840 = vsel %vm1826, %v1807, %v1147
        %v1841 = vsel %vm1826, %v1808, %v1149
        %v1842 = vsel %vm1826, %v1809, %v1151
        %v1843 = vsel %vm1826, %v1810, %v1153
        %v1844 = vsel %vm1826, %v1811, %v1155
        %v1845 = vsel %vm1826, %v1812, %v1157
        %v1846 = vsel %vm1826, %v1813, %v1159
        %v1847 = vsel %vm1826, %v1814, %v1161
        %v1848 = vsel %vm1826, %v1815, %v1163
        %v1849 = vsel %vm1826, %v1816, %v1165
        %v1850 = vsel %vm1826, %v1817, %v1167
        %v1851 = vsel %vm1826, %v1818, %v1169
        %v1852 = vsel %vm1826, %v1819, %v1171
        %v1853 = vsel %vm1826, %v1820, %v1173
        %v1854 = vsel %vm1826, %v1821, %v1175
        %v1855 = vsel %vm1826, %v1822, %v1177
        %v1856 = vsel %vm1826, %v1823, %v1179
        %v1857 = vsel %vm1826, %v1824, %v1181
        %v1858 = vsel %vm1826, %v1825, %v1183
        %vm1859 = vcmask 121856
        %v1860 = vsel %vm1859, %v1827, %v1249
        %v1861 = vsel %vm1859, %v1828, %v1251
        %v1862 = vsel %vm1859, %v1829, %v1253
        %v1863 = vsel %vm1859, %v1830, %v1255
        %v1864 = vsel %vm1859, %v1831, %v1257
        %v1865 = vsel %vm1859, %v1832, %v1259
        %v1866 = vsel %vm1859, %v1833, %v1261
        %v1867 = vsel %vm1859, %v1834, %v1263
        %v1868 = vsel %vm1859, %v1835, %v1265
        %v1869 = vsel %vm1859, %v1836, %v1267
        %v1870 = vsel %vm1859, %v1837, %v1269
        %v1871 = vsel %vm1859, %v1838, %v1271
        %v1872 = vsel %vm1859, %v1839, %v1273
        %v1873 = vsel %vm1859, %v1840, %v1275
        %v1874 = vsel %vm1859, %v1841, %v1277
        %v1875 = vsel %vm1859, %v1842, %v1279
        %v1876 = vsel %vm1859, %v1843, %v1281
        %v1877 = vsel %vm1859, %v1844, %v1283
        %v1878 = vsel %vm1859, %v1845, %v1285
        %v1879 = vsel %vm1859, %v1846, %v1287
        %v1880 = vsel %vm1859, %v1847, %v1289
        %v1881 = vsel %vm1859, %v1848, %v1291
        %v1882 = vsel %vm1859, %v1849, %v1293
        %v1883 = vsel %vm1859, %v1850, %v1295
        %v1884 = vsel %vm1859, %v1851, %v1297
        %v1885 = vsel %vm1859, %v1852, %v1299
        %v1886 = vsel %vm1859, %v1853, %v1301
        %v1887 = vsel %vm1859, %v1854, %v1303
        %v1888 = vsel %vm1859, %v1855, %v1305
        %v1889 = vsel %vm1859, %v1856, %v1307
        %v1890 = vsel %vm1859, %v1857, %v1309
        %v1891 = vsel %vm1859, %v1858, %v1311
        %vm1892 = vcmask 146432
        %v1893 = vsel %vm1892, %v1860, %v1377
        %v1894 = vsel %vm1892, %v1861, %v1379
        %v1895 = vsel %vm1892, %v1862, %v1381
        %v1896 = vsel %vm1892, %v1863, %v1383
        %v1897 = vsel %vm1892, %v1864, %v1385
        %v1898 = vsel %vm1892, %v1865, %v1387
        %v1899 = vsel %vm1892, %v1866, %v1389
        %v1900 = vsel %vm1892, %v1867, %v1391
        %v1901 = vsel %vm1892, %v1868, %v1393
        %v1902 = vsel %vm1892, %v1869, %v1395
        %v1903 = vsel %vm1892, %v1870, %v1397
        %v1904 = vsel %vm1892, %v1871, %v1399
        %v1905 = vsel %vm1892, %v1872, %v1401
        %v1906 = vsel %vm1892, %v1873, %v1403
        %v1907 = vsel %vm1892, %v1874, %v1405
        %v1908 = vsel %vm1892, %v1875, %v1407
        %v1909 = vsel %vm1892, %v1876, %v1409
        %v1910 = vsel %vm1892, %v1877, %v1411
        %v1911 = vsel %vm1892, %v1878, %v1413
        %v1912 = vsel %vm1892, %v1879, %v1415
        %v1913 = vsel %vm1892, %v1880, %v1417
        %v1914 = vsel %vm1892, %v1881, %v1419
        %v1915 = vsel %vm1892, %v1882, %v1421
        %v1916 = vsel %vm1892, %v1883, %v1423
        %v1917 = vsel %vm1892, %v1884, %v1425
        %v1918 = vsel %vm1892, %v1885, %v1427
        %v1919 = vsel %vm1892, %v1886, %v1429
        %v1920 = vsel %vm1892, %v1887, %v1431
        %v1921 = vsel %vm1892, %v1888, %v1433
        %v1922 = vsel %vm1892, %v1889, %v1435
        %v1923 = vsel %vm1892, %v1890, %v1437
        %v1924 = vsel %vm1892, %v1891, %v1439
        %vm1925 = vcmask 171008
        %v1926 = vsel %vm1925, %v1893, %v1505
        %v1927 = vsel %vm1925, %v1894, %v1507
        %v1928 = vsel %vm1925, %v1895, %v1509
        %v1929 = vsel %vm1925, %v1896, %v1511
        %v1930 = vsel %vm1925, %v1897, %v1513
        %v1931 = vsel %vm1925, %v1898, %v1515
        %v1932 = vsel %vm1925, %v1899, %v1517
        %v1933 = vsel %vm1925, %v1900, %v1519
        %v1934 = vsel %vm1925, %v1901, %v1521
        %v1935 = vsel %vm1925, %v1902, %v1523
        %v1936 = vsel %vm1925, %v1903, %v1525
        %v1937 = vsel %vm1925, %v1904, %v1527
        %v1938 = vsel %vm1925, %v1905, %v1529
        %v1939 = vsel %vm1925, %v1906, %v1531
        %v1940 = vsel %vm1925, %v1907, %v1533
        %v1941 = vsel %vm1925, %v1908, %v1535
        %v1942 = vsel %vm1925, %v1909, %v1537
        %v1943 = vsel %vm1925, %v1910, %v1539
        %v1944 = vsel %vm1925, %v1911, %v1541
        %v1945 = vsel %vm1925, %v1912, %v1543
        %v1946 = vsel %vm1925, %v1913, %v1545
        %v1947 = vsel %vm1925, %v1914, %v1547
        %v1948 = vsel %vm1925, %v1915, %v1549
        %v1949 = vsel %vm1925, %v1916, %v1551
        %v1950 = vsel %vm1925, %v1917, %v1553
        %v1951 = vsel %vm1925, %v1918, %v1555
        %v1952 = vsel %vm1925, %v1919, %v1557
        %v1953 = vsel %vm1925, %v1920, %v1559
        %v1954 = vsel %vm1925, %v1921, %v1561
        %v1955 = vsel %vm1925, %v1922, %v1563
        %v1956 = vsel %vm1925, %v1923, %v1565
        %v1957 = vsel %vm1925, %v1924, %v1567
        %vm1958 = vcmask 195584
        %v1959 = vsel %vm1958, %v1926, %v1633
        %v1960 = vsel %vm1958, %v1927, %v1635
        %v1961 = vsel %vm1958, %v1928, %v1637
        %v1962 = vsel %vm1958, %v1929, %v1639
        %v1963 = vsel %vm1958, %v1930, %v1641
        %v1964 = vsel %vm1958, %v1931, %v1643
        %v1965 = vsel %vm1958, %v1932, %v1645
        %v1966 = vsel %vm1958, %v1933, %v1647
        %v1967 = vsel %vm1958, %v1934, %v1649
        %v1968 = vsel %vm1958, %v1935, %v1651
        %v1969 = vsel %vm1958, %v1936, %v1653
        %v1970 = vsel %vm1958, %v1937, %v1655
        %v1971 = vsel %vm1958, %v1938, %v1657
        %v1972 = vsel %vm1958, %v1939, %v1659
        %v1973 = vsel %vm1958, %v1940, %v1661
        %v1974 = vsel %vm1958, %v1941, %v1663
        %v1975 = vsel %vm1958, %v1942, %v1665
        %v1976 = vsel %vm1958, %v1943, %v1667
        %v1977 = vsel %vm1958, %v1944, %v1669
        %v1978 = vsel %vm1958, %v1945, %v1671
        %v1979 = vsel %vm1958, %v1946, %v1673
        %v1980 = vsel %vm1958, %v1947, %v1675
        %v1981 = vsel %vm1958, %v1948, %v1677
        %v1982 = vsel %vm1958, %v1949, %v1679
        %v1983 = vsel %vm1958, %v1950, %v1681
        %v1984 = vsel %vm1958, %v1951, %v1683
        %v1985 = vsel %vm1958, %v1952, %v1685
        %v1986 = vsel %vm1958, %v1953, %v1687
        %v1987 = vsel %vm1958, %v1954, %v1689
        %v1988 = vsel %vm1958, %v1955, %v1691
        %v1989 = vsel %vm1958, %v1956, %v1693
        %v1990 = vsel %vm1958, %v1957, %v1695
        %v1991 = vpack.c.bf16 %v1960, %v1959
        %v1992 = vpack.c.bf16 %v1962, %v1961
        %v1993 = vpack.c.bf16 %v1964, %v1963
        %v1994 = vpack.c.bf16 %v1966, %v1965
        %v1995 = vpack.c.bf16 %v1968, %v1967
        %v1996 = vpack.c.bf16 %v1970, %v1969
        %v1997 = vpack.c.bf16 %v1972, %v1971
        %v1998 = vpack.c.bf16 %v1974, %v1973
        %v1999 = vpack.c.bf16 %v1976, %v1975
        %v2000 = vpack.c.bf16 %v1978, %v1977
        %v2001 = vpack.c.bf16 %v1980, %v1979
        %v2002 = vpack.c.bf16 %v1982, %v1981
        %v2003 = vpack.c.bf16 %v1984, %v1983
        %v2004 = vpack.c.bf16 %v1986, %v1985
        %v2005 = vpack.c.bf16 %v1988, %v1987
        %v2006 = vpack.c.bf16 %v1990, %v1989
        %v2007 = vld [vmem:[%s1] sm:$0xf]
        %v2008 = vld [vmem:[%s1 + $0x4] sm:$0xf]
        %v2009 = vld [vmem:[%s1 + $0x8] sm:$0xf]
        %v2010 = vld [vmem:[%s1 + $0xc] sm:$0x3]
        %v2015 = vunpack.c.l.b16 %v2007
        %v2016 = vunpack.c.l.b16 %v2008
        %v2017 = vunpack.c.l.b16 %v2009
        %v2018 = vunpack.c.l.b16 %v2010
        %v2019 = vpack.c.b16 %v2016, %v2015
        %v2020 = vpack.c.b16 %v2018, %v2017
        %vm2022 = vcmask 220160
        %v2024 = vsel %vm2022, %v1991, 0
        %v2027 = vsel %vm2022, %v1992, 0
        %v2030 = vsel %vm2022, %v1993, 0
        %v2033 = vsel %vm2022, %v1994, 0
        %v2036 = vsel %vm2022, %v1995, 0
        %v2039 = vsel %vm2022, %v1996, 0
        %v2042 = vsel %vm2022, %v1997, 0
        %v2045 = vsel %vm2022, %v1998, 0
        %v2048 = vsel %vm2022, %v1999, 0
        %v2051 = vsel %vm2022, %v2000, 0
        %v2054 = vsel %vm2022, %v2001, 0
        %v2057 = vsel %vm2022, %v2002, 0
        %v2060 = vsel %vm2022, %v2003, 0
        %v2063 = vsel %vm2022, %v2004, 0
        %v2066 = vsel %vm2022, %v2005, 0
        %v2069 = vsel %vm2022, %v2006, 0
        %vm2071 = vcmask 1044480
        %vm2072 = vcmask 1045504
        %v2073 = vsel %vm2071, 4294967295, 65535
        %v2074 = vsel %vm2072, %v2073, 0
        %v2076 = vand.u32 %v2020, %v2074
        %2078 = vmatprep.subr.bf16.mxu0 0
        %2079 = vmatpush1.bf16.msra.mxu0 %v2019
        %2080 = vmatprep.subr.bf16.mxu0 0
        %2081 = vmatpush1.bf16.msra.mxu0 %v2076
        %2082 = vmatprep.subr.bf16.mxu0 0
        %2083 = vmatpush1.bf16.msra.mxu0 0
        %2084 = vmatprep.subr.bf16.mxu0 0
        %2085 = vmatpush1.bf16.msra.mxu0 0
        %2086 = vmatprep.subr.bf16.mxu0 0
        %2087 = vmatpush1.bf16.msra.mxu0 0
        %2088 = vmatprep.subr.bf16.mxu0 0
        %2089 = vmatpush1.bf16.msra.mxu0 0
        %2090 = vmatprep.subr.bf16.mxu0 0
        %2091 = vmatpush1.bf16.msra.mxu0 0
        %2092 = vmatprep.subr.bf16.mxu0 0
        %2093 = vmatpush1.bf16.msra.mxu0 0
        %2094 = vmatprep.subr.bf16.mxu0 0
        %2095 = vmatpush1.bf16.msra.mxu0 0
        %2096 = vmatprep.subr.bf16.mxu0 0
        %2097 = vmatpush1.bf16.msra.mxu0 0
        %2098 = vmatprep.subr.bf16.mxu0 0
        %2099 = vmatpush1.bf16.msra.mxu0 0
        %2100 = vmatprep.subr.bf16.mxu0 0
        %2101 = vmatpush1.bf16.msra.mxu0 0
        %2102 = vmatprep.subr.bf16.mxu0 0
        %2103 = vmatpush1.bf16.msra.mxu0 0
        %2104 = vmatprep.subr.bf16.mxu0 0
        %2105 = vmatpush1.bf16.msra.mxu0 0
        %2106 = vmatprep.subr.bf16.mxu0 0
        %2107 = vmatpush1.bf16.msra.mxu0 0
        %2108 = vmatprep.subr.bf16.mxu0 0
        %2109 = vmatpush1.bf16.msra.mxu0 0
        %2110 = vmatprep.mubr.bf16.mxu0 0
        %2111 = vmatmul.mubr.bf16.gmra.mrb[0].mxu0 %v2024
        %v2112 = vpop.f32.mrb[0].mxu0
        %v2113 = vadd.f32 0.0, %v2112
        %v2114 = vpop.f32.mrb[0].mxu0
        %v2115 = vpop.f32.mrb[0].mxu0
        %v2116 = vadd.f32 0.0, %v2115
        %v2117 = vpop.f32.mrb[0].mxu0
        %2118 = vmatprep.mubr.bf16.mxu0 0
        %2119 = vmatmul.mubr.bf16.gmra.mrb[0].mxu0 %v2027
        %v2120 = vpop.f32.mrb[0].mxu0
        %v2121 = vadd.f32 0.0, %v2120
        %v2122 = vpop.f32.mrb[0].mxu0
        %v2123 = vpop.f32.mrb[0].mxu0
        %v2124 = vadd.f32 0.0, %v2123
        %v2125 = vpop.f32.mrb[0].mxu0
        %2126 = vmatprep.mubr.bf16.mxu0 0
        %2127 = vmatmul.mubr.bf16.gmra.mrb[0].mxu0 %v2030
        %v2128 = vpop.f32.mrb[0].mxu0
        %v2129 = vadd.f32 0.0, %v2128
        %v2130 = vpop.f32.mrb[0].mxu0
        %v2131 = vpop.f32.mrb[0].mxu0
        %v2132 = vadd.f32 0.0, %v2131
        %v2133 = vpop.f32.mrb[0].mxu0
        %2134 = vmatprep.mubr.bf16.mxu0 0
        %2135 = vmatmul.mubr.bf16.gmra.mrb[0].mxu0 %v2033
        %v2136 = vpop.f32.mrb[0].mxu0
        %v2137 = vadd.f32 0.0, %v2136
        %v2138 = vpop.f32.mrb[0].mxu0
        %v2139 = vpop.f32.mrb[0].mxu0
        %v2140 = vadd.f32 0.0, %v2139
        %v2141 = vpop.f32.mrb[0].mxu0
        %2142 = vmatprep.mubr.bf16.mxu0 0
        %2143 = vmatmul.mubr.bf16.gmra.mrb[0].mxu0 %v2036
        %v2144 = vpop.f32.mrb[0].mxu0
        %v2145 = vadd.f32 0.0, %v2144
        %v2146 = vpop.f32.mrb[0].mxu0
        %v2147 = vpop.f32.mrb[0].mxu0
        %v2148 = vadd.f32 0.0, %v2147
        %v2149 = vpop.f32.mrb[0].mxu0
        %2150 = vmatprep.mubr.bf16.mxu0 0
        %2151 = vmatmul.mubr.bf16.gmra.mrb[0].mxu0 %v2039
        %v2152 = vpop.f32.mrb[0].mxu0
        %v2153 = vadd.f32 0.0, %v2152
        %v2154 = vpop.f32.mrb[0].mxu0
        %v2155 = vpop.f32.mrb[0].mxu0
        %v2156 = vadd.f32 0.0, %v2155
        %v2157 = vpop.f32.mrb[0].mxu0
        %2158 = vmatprep.mubr.bf16.mxu0 0
        %2159 = vmatmul.mubr.bf16.gmra.mrb[0].mxu0 %v2042
        %v2160 = vpop.f32.mrb[0].mxu0
        %v2161 = vadd.f32 0.0, %v2160
        %v2162 = vpop.f32.mrb[0].mxu0
        %v2163 = vpop.f32.mrb[0].mxu0
        %v2164 = vadd.f32 0.0, %v2163
        %v2165 = vpop.f32.mrb[0].mxu0
        %2166 = vmatprep.mubr.bf16.mxu0 0
        %2167 = vmatmul.mubr.bf16.gmra.mrb[0].mxu0 %v2045
        %v2168 = vpop.f32.mrb[0].mxu0
        %v2169 = vadd.f32 0.0, %v2168
        %v2170 = vpop.f32.mrb[0].mxu0
        %v2171 = vpop.f32.mrb[0].mxu0
        %v2172 = vadd.f32 0.0, %v2171
        %v2173 = vpop.f32.mrb[0].mxu0
        %2174 = vmatprep.mubr.bf16.mxu0 0
        %2175 = vmatmul.mubr.bf16.gmra.mrb[0].mxu0 %v2048
        %v2176 = vpop.f32.mrb[0].mxu0
        %v2177 = vadd.f32 0.0, %v2176
        %v2178 = vpop.f32.mrb[0].mxu0
        %v2179 = vpop.f32.mrb[0].mxu0
        %v2180 = vadd.f32 0.0, %v2179
        %v2181 = vpop.f32.mrb[0].mxu0
        %2182 = vmatprep.mubr.bf16.mxu0 0
        %2183 = vmatmul.mubr.bf16.gmra.mrb[0].mxu0 %v2051
        %v2184 = vpop.f32.mrb[0].mxu0
        %v2185 = vadd.f32 0.0, %v2184
        %v2186 = vpop.f32.mrb[0].mxu0
        %v2187 = vpop.f32.mrb[0].mxu0
        %v2188 = vadd.f32 0.0, %v2187
        %v2189 = vpop.f32.mrb[0].mxu0
        %2190 = vmatprep.mubr.bf16.mxu0 0
        %2191 = vmatmul.mubr.bf16.gmra.mrb[0].mxu0 %v2054
        %v2192 = vpop.f32.mrb[0].mxu0
        %v2193 = vadd.f32 0.0, %v2192
        %v2194 = vpop.f32.mrb[0].mxu0
        %v2195 = vpop.f32.mrb[0].mxu0
        %v2196 = vadd.f32 0.0, %v2195
        %v2197 = vpop.f32.mrb[0].mxu0
        %2198 = vmatprep.mubr.bf16.mxu0 0
        %2199 = vmatmul.mubr.bf16.gmra.mrb[0].mxu0 %v2057
        %v2200 = vpop.f32.mrb[0].mxu0
        %v2201 = vadd.f32 0.0, %v2200
        %v2202 = vpop.f32.mrb[0].mxu0
        %v2203 = vpop.f32.mrb[0].mxu0
        %v2204 = vadd.f32 0.0, %v2203
        %v2205 = vpop.f32.mrb[0].mxu0
        %2206 = vmatprep.mubr.bf16.mxu0 0
        %2207 = vmatmul.mubr.bf16.gmra.mrb[0].mxu0 %v2060
        %v2208 = vpop.f32.mrb[0].mxu0
        %v2209 = vadd.f32 0.0, %v2208
        %v2210 = vpop.f32.mrb[0].mxu0
        %v2211 = vpop.f32.mrb[0].mxu0
        %v2212 = vadd.f32 0.0, %v2211
        %v2213 = vpop.f32.mrb[0].mxu0
        %2214 = vmatprep.mubr.bf16.mxu0 0
        %2215 = vmatmul.mubr.bf16.gmra.mrb[0].mxu0 %v2063
        %v2216 = vpop.f32.mrb[0].mxu0
        %v2217 = vadd.f32 0.0, %v2216
        %v2218 = vpop.f32.mrb[0].mxu0
        %v2219 = vpop.f32.mrb[0].mxu0
        %v2220 = vadd.f32 0.0, %v2219
        %v2221 = vpop.f32.mrb[0].mxu0
        %2222 = vmatprep.mubr.bf16.mxu0 0
        %2223 = vmatmul.mubr.bf16.gmra.mrb[0].mxu0 %v2066
        %v2224 = vpop.f32.mrb[0].mxu0
        %v2225 = vadd.f32 0.0, %v2224
        %v2226 = vpop.f32.mrb[0].mxu0
        %v2227 = vpop.f32.mrb[0].mxu0
        %v2228 = vadd.f32 0.0, %v2227
        %v2229 = vpop.f32.mrb[0].mxu0
        %2230 = vmatprep.mubr.bf16.mxu0 0
        %2231 = vmatmul.mubr.bf16.gmra.mrb[0].mxu0 %v2069
        %v2232 = vpop.f32.mrb[0].mxu0
        %v2233 = vadd.f32 0.0, %v2232
        %v2234 = vpop.f32.mrb[0].mxu0
        %v2235 = vpop.f32.mrb[0].mxu0
        %v2236 = vadd.f32 0.0, %v2235
        %v2237 = vpop.f32.mrb[0].mxu0
        %2238 = vdwg.mxu0
        %v2239 = vld [vmem:[%s2] sm:$0x1]
        %v2241 = vlaneseq
        %v2242 = vshrl.u32 %v2241, 7
        %v2243 = vsub.s32 0, %v2242
        %v2244 = vrot.slane %v2239, %v2243
        %v2246 = vmul.f32 %v2113, %v2244
        %v2247 = vmul.f32 %v2116, %v2244
        %v2248 = vmul.f32 %v2121, %v2244
        %v2249 = vmul.f32 %v2124, %v2244
        %v2250 = vmul.f32 %v2129, %v2244
        %v2251 = vmul.f32 %v2132, %v2244
        %v2252 = vmul.f32 %v2137, %v2244
        %v2253 = vmul.f32 %v2140, %v2244
        %v2254 = vmul.f32 %v2145, %v2244
        %v2255 = vmul.f32 %v2148, %v2244
        %v2256 = vmul.f32 %v2153, %v2244
        %v2257 = vmul.f32 %v2156, %v2244
        %v2258 = vmul.f32 %v2161, %v2244
        %v2259 = vmul.f32 %v2164, %v2244
        %v2260 = vmul.f32 %v2169, %v2244
        %v2261 = vmul.f32 %v2172, %v2244
        %v2262 = vmul.f32 %v2177, %v2244
        %v2263 = vmul.f32 %v2180, %v2244
        %v2264 = vmul.f32 %v2185, %v2244
        %v2265 = vmul.f32 %v2188, %v2244
        %v2266 = vmul.f32 %v2193, %v2244
        %v2267 = vmul.f32 %v2196, %v2244
        %v2268 = vmul.f32 %v2201, %v2244
        %v2269 = vmul.f32 %v2204, %v2244
        %v2270 = vmul.f32 %v2209, %v2244
        %v2271 = vmul.f32 %v2212, %v2244
        %v2272 = vmul.f32 %v2217, %v2244
        %v2273 = vmul.f32 %v2220, %v2244
        %v2274 = vmul.f32 %v2225, %v2244
        %v2275 = vmul.f32 %v2228, %v2244
        %v2276 = vmul.f32 %v2233, %v2244
        %v2277 = vmul.f32 %v2236, %v2244
        %v2278 = vld [vmem:[%s3] sm:$0x1]
        %v2280 = vlaneseq
        %v2281 = vshrl.u32 %v2280, 7
        %v2282 = vsub.s32 0, %v2281
        %v2283 = vrot.slane %v2278, %v2282
        %v2285 = vadd.f32 %v2246, %v2283
        %v2286 = vadd.f32 %v2247, %v2283
        %v2287 = vadd.f32 %v2248, %v2283
        %v2288 = vadd.f32 %v2249, %v2283
        %v2289 = vadd.f32 %v2250, %v2283
        %v2290 = vadd.f32 %v2251, %v2283
        %v2291 = vadd.f32 %v2252, %v2283
        %v2292 = vadd.f32 %v2253, %v2283
        %v2293 = vadd.f32 %v2254, %v2283
        %v2294 = vadd.f32 %v2255, %v2283
        %v2295 = vadd.f32 %v2256, %v2283
        %v2296 = vadd.f32 %v2257, %v2283
        %v2297 = vadd.f32 %v2258, %v2283
        %v2298 = vadd.f32 %v2259, %v2283
        %v2299 = vadd.f32 %v2260, %v2283
        %v2300 = vadd.f32 %v2261, %v2283
        %v2301 = vadd.f32 %v2262, %v2283
        %v2302 = vadd.f32 %v2263, %v2283
        %v2303 = vadd.f32 %v2264, %v2283
        %v2304 = vadd.f32 %v2265, %v2283
        %v2305 = vadd.f32 %v2266, %v2283
        %v2306 = vadd.f32 %v2267, %v2283
        %v2307 = vadd.f32 %v2268, %v2283
        %v2308 = vadd.f32 %v2269, %v2283
        %v2309 = vadd.f32 %v2270, %v2283
        %v2310 = vadd.f32 %v2271, %v2283
        %v2311 = vadd.f32 %v2272, %v2283
        %v2312 = vadd.f32 %v2273, %v2283
        %v2313 = vadd.f32 %v2274, %v2283
        %v2314 = vadd.f32 %v2275, %v2283
        %v2315 = vadd.f32 %v2276, %v2283
        %v2316 = vadd.f32 %v2277, %v2283
        %v2317 = vmax.f32 %v2285, 0.0
        %v2318 = vmax.f32 %v2286, 0.0
        %v2319 = vmax.f32 %v2287, 0.0
        %v2320 = vmax.f32 %v2288, 0.0
        %v2321 = vmax.f32 %v2289, 0.0
        %v2322 = vmax.f32 %v2290, 0.0
        %v2323 = vmax.f32 %v2291, 0.0
        %v2324 = vmax.f32 %v2292, 0.0
        %v2325 = vmax.f32 %v2293, 0.0
        %v2326 = vmax.f32 %v2294, 0.0
        %v2327 = vmax.f32 %v2295, 0.0
        %v2328 = vmax.f32 %v2296, 0.0
        %v2329 = vmax.f32 %v2297, 0.0
        %v2330 = vmax.f32 %v2298, 0.0
        %v2331 = vmax.f32 %v2299, 0.0
        %v2332 = vmax.f32 %v2300, 0.0
        %v2333 = vmax.f32 %v2301, 0.0
        %v2334 = vmax.f32 %v2302, 0.0
        %v2335 = vmax.f32 %v2303, 0.0
        %v2336 = vmax.f32 %v2304, 0.0
        %v2337 = vmax.f32 %v2305, 0.0
        %v2338 = vmax.f32 %v2306, 0.0
        %v2339 = vmax.f32 %v2307, 0.0
        %v2340 = vmax.f32 %v2308, 0.0
        %v2341 = vmax.f32 %v2309, 0.0
        %v2342 = vmax.f32 %v2310, 0.0
        %v2343 = vmax.f32 %v2311, 0.0
        %v2344 = vmax.f32 %v2312, 0.0
        %v2345 = vmax.f32 %v2313, 0.0
        %v2346 = vmax.f32 %v2314, 0.0
        %v2347 = vmax.f32 %v2315, 0.0
        %v2348 = vmax.f32 %v2316, 0.0
        %v2363 = vcombine.high %v2317, %v2317
        %v2365 = vunpack.c.l.s4 1966171168
        %v2366 = vunpack.c.0.s8 %v2365
        %v2367 = vlaneseq
        %v2368 = vshrl.u32 %v2367, 7
        %v2369 = vsub.s32 %v2366, %v2368
        %v2370 = vrot.slane %v2317, %v2369
        %v2372 = vunpack.c.l.s4 1966171168
        %v2373 = vunpack.c.0.s8 %v2372
        %v2374 = vlaneseq
        %v2375 = vshrl.u32 %v2374, 7
        %v2376 = vsub.s32 %v2373, %v2375
        %v2377 = vrot.slane %v2363, %v2376
        %v2378 = vcombine.high %v2370, %v2370
        %v2379 = vcombine.high %v2377, %v2377
        %v2381 = vunpack.c.l.s4 1966171168
        %v2382 = vunpack.c.0.s8 %v2381
        %v2383 = vlaneseq
        %v2384 = vshrl.u32 %v2383, 7
        %v2385 = vsub.s32 %v2382, %v2384
        %v2386 = vrot.slane %v2370, %v2385
        %v2388 = vunpack.c.l.s4 1966171168
        %v2389 = vunpack.c.0.s8 %v2388
        %v2390 = vlaneseq
        %v2391 = vshrl.u32 %v2390, 7
        %v2392 = vsub.s32 %v2389, %v2391
        %v2393 = vrot.slane %v2377, %v2392
        %v2395 = vunpack.c.l.s4 1966171168
        %v2396 = vunpack.c.0.s8 %v2395
        %v2397 = vlaneseq
        %v2398 = vshrl.u32 %v2397, 7
        %v2399 = vsub.s32 %v2396, %v2398
        %v2400 = vrot.slane %v2378, %v2399
        %v2402 = vunpack.c.l.s4 1966171168
        %v2403 = vunpack.c.0.s8 %v2402
        %v2404 = vlaneseq
        %v2405 = vshrl.u32 %v2404, 7
        %v2406 = vsub.s32 %v2403, %v2405
        %v2407 = vrot.slane %v2379, %v2406
        %v2408 = vcombine.high %v2386, %v2386
        %v2409 = vcombine.high %v2393, %v2393
        %v2410 = vcombine.high %v2400, %v2400
        %v2411 = vcombine.high %v2407, %v2407
        %v2412 = vcombine.high %v2318, %v2318
        %v2414 = vunpack.c.l.s4 1966171168
        %v2415 = vunpack.c.0.s8 %v2414
        %v2416 = vlaneseq
        %v2417 = vshrl.u32 %v2416, 7
        %v2418 = vsub.s32 %v2415, %v2417
        %v2419 = vrot.slane %v2318, %v2418
        %v2421 = vunpack.c.l.s4 1966171168
        %v2422 = vunpack.c.0.s8 %v2421
        %v2423 = vlaneseq
        %v2424 = vshrl.u32 %v2423, 7
        %v2425 = vsub.s32 %v2422, %v2424
        %v2426 = vrot.slane %v2412, %v2425
        %v2427 = vcombine.high %v2419, %v2419
        %v2429 = vunpack.c.l.s4 1966171168
        %v2430 = vunpack.c.0.s8 %v2429
        %v2431 = vlaneseq
        %v2432 = vshrl.u32 %v2431, 7
        %v2433 = vsub.s32 %v2430, %v2432
        %v2434 = vrot.slane %v2419, %v2433
        %v2436 = vunpack.c.l.s4 1966171168
        %v2437 = vunpack.c.0.s8 %v2436
        %v2438 = vlaneseq
        %v2439 = vshrl.u32 %v2438, 7
        %v2440 = vsub.s32 %v2437, %v2439
        %v2441 = vrot.slane %v2426, %v2440
        %v2443 = vunpack.c.l.s4 1966171168
        %v2444 = vunpack.c.0.s8 %v2443
        %v2445 = vlaneseq
        %v2446 = vshrl.u32 %v2445, 7
        %v2447 = vsub.s32 %v2444, %v2446
        %v2448 = vrot.slane %v2427, %v2447
        %v2449 = vcombine.high %v2434, %v2434
        %v2450 = vcombine.high %v2448, %v2448
        %v2451 = vcombine.high %v2321, %v2321
        %v2453 = vunpack.c.l.s4 1966171168
        %v2454 = vunpack.c.0.s8 %v2453
        %v2455 = vlaneseq
        %v2456 = vshrl.u32 %v2455, 7
        %v2457 = vsub.s32 %v2454, %v2456
        %v2458 = vrot.slane %v2321, %v2457
        %v2460 = vunpack.c.l.s4 1966171168
        %v2461 = vunpack.c.0.s8 %v2460
        %v2462 = vlaneseq
        %v2463 = vshrl.u32 %v2462, 7
        %v2464 = vsub.s32 %v2461, %v2463
        %v2465 = vrot.slane %v2451, %v2464
        %v2466 = vcombine.high %v2458, %v2458
        %v2467 = vcombine.high %v2465, %v2465
        %v2469 = vunpack.c.l.s4 1966171168
        %v2470 = vunpack.c.0.s8 %v2469
        %v2471 = vlaneseq
        %v2472 = vshrl.u32 %v2471, 7
        %v2473 = vsub.s32 %v2470, %v2472
        %v2474 = vrot.slane %v2458, %v2473
        %v2476 = vunpack.c.l.s4 1966171168
        %v2477 = vunpack.c.0.s8 %v2476
        %v2478 = vlaneseq
        %v2479 = vshrl.u32 %v2478, 7
        %v2480 = vsub.s32 %v2477, %v2479
        %v2481 = vrot.slane %v2465, %v2480
        %v2483 = vunpack.c.l.s4 1966171168
        %v2484 = vunpack.c.0.s8 %v2483
        %v2485 = vlaneseq
        %v2486 = vshrl.u32 %v2485, 7
        %v2487 = vsub.s32 %v2484, %v2486
        %v2488 = vrot.slane %v2466, %v2487
        %v2490 = vunpack.c.l.s4 1966171168
        %v2491 = vunpack.c.0.s8 %v2490
        %v2492 = vlaneseq
        %v2493 = vshrl.u32 %v2492, 7
        %v2494 = vsub.s32 %v2491, %v2493
        %v2495 = vrot.slane %v2467, %v2494
        %v2496 = vcombine.high %v2474, %v2474
        %v2497 = vcombine.high %v2481, %v2481
        %v2498 = vcombine.high %v2488, %v2488
        %v2499 = vcombine.high %v2495, %v2495
        %v2500 = vcombine.high %v2322, %v2322
        %v2502 = vunpack.c.l.s4 1966171168
        %v2503 = vunpack.c.0.s8 %v2502
        %v2504 = vlaneseq
        %v2505 = vshrl.u32 %v2504, 7
        %v2506 = vsub.s32 %v2503, %v2505
        %v2507 = vrot.slane %v2322, %v2506
        %v2509 = vunpack.c.l.s4 1966171168
        %v2510 = vunpack.c.0.s8 %v2509
        %v2511 = vlaneseq
        %v2512 = vshrl.u32 %v2511, 7
        %v2513 = vsub.s32 %v2510, %v2512
        %v2514 = vrot.slane %v2500, %v2513
        %v2515 = vcombine.high %v2507, %v2507
        %v2517 = vunpack.c.l.s4 1966171168
        %v2518 = vunpack.c.0.s8 %v2517
        %v2519 = vlaneseq
        %v2520 = vshrl.u32 %v2519, 7
        %v2521 = vsub.s32 %v2518, %v2520
        %v2522 = vrot.slane %v2507, %v2521
        %v2524 = vunpack.c.l.s4 1966171168
        %v2525 = vunpack.c.0.s8 %v2524
        %v2526 = vlaneseq
        %v2527 = vshrl.u32 %v2526, 7
        %v2528 = vsub.s32 %v2525, %v2527
        %v2529 = vrot.slane %v2514, %v2528
        %v2531 = vunpack.c.l.s4 1966171168
        %v2532 = vunpack.c.0.s8 %v2531
        %v2533 = vlaneseq
        %v2534 = vshrl.u32 %v2533, 7
        %v2535 = vsub.s32 %v2532, %v2534
        %v2536 = vrot.slane %v2515, %v2535
        %v2537 = vcombine.high %v2522, %v2522
        %v2538 = vcombine.high %v2536, %v2536
        %v2539 = vcombine.high %v2325, %v2325
        %v2541 = vunpack.c.l.s4 1966171168
        %v2542 = vunpack.c.0.s8 %v2541
        %v2543 = vlaneseq
        %v2544 = vshrl.u32 %v2543, 7
        %v2545 = vsub.s32 %v2542, %v2544
        %v2546 = vrot.slane %v2325, %v2545
        %v2548 = vunpack.c.l.s4 1966171168
        %v2549 = vunpack.c.0.s8 %v2548
        %v2550 = vlaneseq
        %v2551 = vshrl.u32 %v2550, 7
        %v2552 = vsub.s32 %v2549, %v2551
        %v2553 = vrot.slane %v2539, %v2552
        %v2554 = vcombine.high %v2546, %v2546
        %v2555 = vcombine.high %v2553, %v2553
        %v2557 = vunpack.c.l.s4 1966171168
        %v2558 = vunpack.c.0.s8 %v2557
        %v2559 = vlaneseq
        %v2560 = vshrl.u32 %v2559, 7
        %v2561 = vsub.s32 %v2558, %v2560
        %v2562 = vrot.slane %v2546, %v2561
        %v2564 = vunpack.c.l.s4 1966171168
        %v2565 = vunpack.c.0.s8 %v2564
        %v2566 = vlaneseq
        %v2567 = vshrl.u32 %v2566, 7
        %v2568 = vsub.s32 %v2565, %v2567
        %v2569 = vrot.slane %v2553, %v2568
        %v2571 = vunpack.c.l.s4 1966171168
        %v2572 = vunpack.c.0.s8 %v2571
        %v2573 = vlaneseq
        %v2574 = vshrl.u32 %v2573, 7
        %v2575 = vsub.s32 %v2572, %v2574
        %v2576 = vrot.slane %v2554, %v2575
        %v2578 = vunpack.c.l.s4 1966171168
        %v2579 = vunpack.c.0.s8 %v2578
        %v2580 = vlaneseq
        %v2581 = vshrl.u32 %v2580, 7
        %v2582 = vsub.s32 %v2579, %v2581
        %v2583 = vrot.slane %v2555, %v2582
        %v2584 = vcombine.high %v2562, %v2562
        %v2585 = vcombine.high %v2569, %v2569
        %v2586 = vcombine.high %v2576, %v2576
        %v2587 = vcombine.high %v2583, %v2583
        %v2588 = vcombine.high %v2326, %v2326
        %v2590 = vunpack.c.l.s4 1966171168
        %v2591 = vunpack.c.0.s8 %v2590
        %v2592 = vlaneseq
        %v2593 = vshrl.u32 %v2592, 7
        %v2594 = vsub.s32 %v2591, %v2593
        %v2595 = vrot.slane %v2326, %v2594
        %v2597 = vunpack.c.l.s4 1966171168
        %v2598 = vunpack.c.0.s8 %v2597
        %v2599 = vlaneseq
        %v2600 = vshrl.u32 %v2599, 7
        %v2601 = vsub.s32 %v2598, %v2600
        %v2602 = vrot.slane %v2588, %v2601
        %v2603 = vcombine.high %v2595, %v2595
        %v2605 = vunpack.c.l.s4 1966171168
        %v2606 = vunpack.c.0.s8 %v2605
        %v2607 = vlaneseq
        %v2608 = vshrl.u32 %v2607, 7
        %v2609 = vsub.s32 %v2606, %v2608
        %v2610 = vrot.slane %v2595, %v2609
        %v2612 = vunpack.c.l.s4 1966171168
        %v2613 = vunpack.c.0.s8 %v2612
        %v2614 = vlaneseq
        %v2615 = vshrl.u32 %v2614, 7
        %v2616 = vsub.s32 %v2613, %v2615
        %v2617 = vrot.slane %v2602, %v2616
        %v2619 = vunpack.c.l.s4 1966171168
        %v2620 = vunpack.c.0.s8 %v2619
        %v2621 = vlaneseq
        %v2622 = vshrl.u32 %v2621, 7
        %v2623 = vsub.s32 %v2620, %v2622
        %v2624 = vrot.slane %v2603, %v2623
        %v2625 = vcombine.high %v2610, %v2610
        %v2626 = vcombine.high %v2624, %v2624
        %v2627 = vcombine.high %v2329, %v2329
        %v2629 = vunpack.c.l.s4 1966171168
        %v2630 = vunpack.c.0.s8 %v2629
        %v2631 = vlaneseq
        %v2632 = vshrl.u32 %v2631, 7
        %v2633 = vsub.s32 %v2630, %v2632
        %v2634 = vrot.slane %v2329, %v2633
        %v2636 = vunpack.c.l.s4 1966171168
        %v2637 = vunpack.c.0.s8 %v2636
        %v2638 = vlaneseq
        %v2639 = vshrl.u32 %v2638, 7
        %v2640 = vsub.s32 %v2637, %v2639
        %v2641 = vrot.slane %v2627, %v2640
        %v2642 = vcombine.high %v2634, %v2634
        %v2643 = vcombine.high %v2641, %v2641
        %v2645 = vunpack.c.l.s4 1966171168
        %v2646 = vunpack.c.0.s8 %v2645
        %v2647 = vlaneseq
        %v2648 = vshrl.u32 %v2647, 7
        %v2649 = vsub.s32 %v2646, %v2648
        %v2650 = vrot.slane %v2634, %v2649
        %v2652 = vunpack.c.l.s4 1966171168
        %v2653 = vunpack.c.0.s8 %v2652
        %v2654 = vlaneseq
        %v2655 = vshrl.u32 %v2654, 7
        %v2656 = vsub.s32 %v2653, %v2655
        %v2657 = vrot.slane %v2641, %v2656
        %v2659 = vunpack.c.l.s4 1966171168
        %v2660 = vunpack.c.0.s8 %v2659
        %v2661 = vlaneseq
        %v2662 = vshrl.u32 %v2661, 7
        %v2663 = vsub.s32 %v2660, %v2662
        %v2664 = vrot.slane %v2642, %v2663
        %v2666 = vunpack.c.l.s4 1966171168
        %v2667 = vunpack.c.0.s8 %v2666
        %v2668 = vlaneseq
        %v2669 = vshrl.u32 %v2668, 7
        %v2670 = vsub.s32 %v2667, %v2669
        %v2671 = vrot.slane %v2643, %v2670
        %v2672 = vcombine.high %v2650, %v2650
        %v2673 = vcombine.high %v2657, %v2657
        %v2674 = vcombine.high %v2664, %v2664
        %v2675 = vcombine.high %v2671, %v2671
        %v2676 = vcombine.high %v2330, %v2330
        %v2678 = vunpack.c.l.s4 1966171168
        %v2679 = vunpack.c.0.s8 %v2678
        %v2680 = vlaneseq
        %v2681 = vshrl.u32 %v2680, 7
        %v2682 = vsub.s32 %v2679, %v2681
        %v2683 = vrot.slane %v2330, %v2682
        %v2685 = vunpack.c.l.s4 1966171168
        %v2686 = vunpack.c.0.s8 %v2685
        %v2687 = vlaneseq
        %v2688 = vshrl.u32 %v2687, 7
        %v2689 = vsub.s32 %v2686, %v2688
        %v2690 = vrot.slane %v2676, %v2689
        %v2691 = vcombine.high %v2683, %v2683
        %v2693 = vunpack.c.l.s4 1966171168
        %v2694 = vunpack.c.0.s8 %v2693
        %v2695 = vlaneseq
        %v2696 = vshrl.u32 %v2695, 7
        %v2697 = vsub.s32 %v2694, %v2696
        %v2698 = vrot.slane %v2683, %v2697
        %v2700 = vunpack.c.l.s4 1966171168
        %v2701 = vunpack.c.0.s8 %v2700
        %v2702 = vlaneseq
        %v2703 = vshrl.u32 %v2702, 7
        %v2704 = vsub.s32 %v2701, %v2703
        %v2705 = vrot.slane %v2690, %v2704
        %v2707 = vunpack.c.l.s4 1966171168
        %v2708 = vunpack.c.0.s8 %v2707
        %v2709 = vlaneseq
        %v2710 = vshrl.u32 %v2709, 7
        %v2711 = vsub.s32 %v2708, %v2710
        %v2712 = vrot.slane %v2691, %v2711
        %v2713 = vcombine.high %v2698, %v2698
        %v2714 = vcombine.high %v2712, %v2712
        %v2715 = vcombine.high %v2333, %v2333
        %v2717 = vunpack.c.l.s4 1966171168
        %v2718 = vunpack.c.0.s8 %v2717
        %v2719 = vlaneseq
        %v2720 = vshrl.u32 %v2719, 7
        %v2721 = vsub.s32 %v2718, %v2720
        %v2722 = vrot.slane %v2333, %v2721
        %v2724 = vunpack.c.l.s4 1966171168
        %v2725 = vunpack.c.0.s8 %v2724
        %v2726 = vlaneseq
        %v2727 = vshrl.u32 %v2726, 7
        %v2728 = vsub.s32 %v2725, %v2727
        %v2729 = vrot.slane %v2715, %v2728
        %v2730 = vcombine.high %v2722, %v2722
        %v2731 = vcombine.high %v2729, %v2729
        %v2733 = vunpack.c.l.s4 1966171168
        %v2734 = vunpack.c.0.s8 %v2733
        %v2735 = vlaneseq
        %v2736 = vshrl.u32 %v2735, 7
        %v2737 = vsub.s32 %v2734, %v2736
        %v2738 = vrot.slane %v2722, %v2737
        %v2740 = vunpack.c.l.s4 1966171168
        %v2741 = vunpack.c.0.s8 %v2740
        %v2742 = vlaneseq
        %v2743 = vshrl.u32 %v2742, 7
        %v2744 = vsub.s32 %v2741, %v2743
        %v2745 = vrot.slane %v2729, %v2744
        %v2747 = vunpack.c.l.s4 1966171168
        %v2748 = vunpack.c.0.s8 %v2747
        %v2749 = vlaneseq
        %v2750 = vshrl.u32 %v2749, 7
        %v2751 = vsub.s32 %v2748, %v2750
        %v2752 = vrot.slane %v2730, %v2751
        %v2754 = vunpack.c.l.s4 1966171168
        %v2755 = vunpack.c.0.s8 %v2754
        %v2756 = vlaneseq
        %v2757 = vshrl.u32 %v2756, 7
        %v2758 = vsub.s32 %v2755, %v2757
        %v2759 = vrot.slane %v2731, %v2758
        %v2760 = vcombine.high %v2738, %v2738
        %v2761 = vcombine.high %v2745, %v2745
        %v2762 = vcombine.high %v2752, %v2752
        %v2763 = vcombine.high %v2759, %v2759
        %v2764 = vcombine.high %v2334, %v2334
        %v2766 = vunpack.c.l.s4 1966171168
        %v2767 = vunpack.c.0.s8 %v2766
        %v2768 = vlaneseq
        %v2769 = vshrl.u32 %v2768, 7
        %v2770 = vsub.s32 %v2767, %v2769
        %v2771 = vrot.slane %v2334, %v2770
        %v2773 = vunpack.c.l.s4 1966171168
        %v2774 = vunpack.c.0.s8 %v2773
        %v2775 = vlaneseq
        %v2776 = vshrl.u32 %v2775, 7
        %v2777 = vsub.s32 %v2774, %v2776
        %v2778 = vrot.slane %v2764, %v2777
        %v2779 = vcombine.high %v2771, %v2771
        %v2781 = vunpack.c.l.s4 1966171168
        %v2782 = vunpack.c.0.s8 %v2781
        %v2783 = vlaneseq
        %v2784 = vshrl.u32 %v2783, 7
        %v2785 = vsub.s32 %v2782, %v2784
        %v2786 = vrot.slane %v2771, %v2785
        %v2788 = vunpack.c.l.s4 1966171168
        %v2789 = vunpack.c.0.s8 %v2788
        %v2790 = vlaneseq
        %v2791 = vshrl.u32 %v2790, 7
        %v2792 = vsub.s32 %v2789, %v2791
        %v2793 = vrot.slane %v2778, %v2792
        %v2795 = vunpack.c.l.s4 1966171168
        %v2796 = vunpack.c.0.s8 %v2795
        %v2797 = vlaneseq
        %v2798 = vshrl.u32 %v2797, 7
        %v2799 = vsub.s32 %v2796, %v2798
        %v2800 = vrot.slane %v2779, %v2799
        %v2801 = vcombine.high %v2786, %v2786
        %v2802 = vcombine.high %v2800, %v2800
        %v2803 = vcombine.high %v2337, %v2337
        %v2805 = vunpack.c.l.s4 1966171168
        %v2806 = vunpack.c.0.s8 %v2805
        %v2807 = vlaneseq
        %v2808 = vshrl.u32 %v2807, 7
        %v2809 = vsub.s32 %v2806, %v2808
        %v2810 = vrot.slane %v2337, %v2809
        %v2812 = vunpack.c.l.s4 1966171168
        %v2813 = vunpack.c.0.s8 %v2812
        %v2814 = vlaneseq
        %v2815 = vshrl.u32 %v2814, 7
        %v2816 = vsub.s32 %v2813, %v2815
        %v2817 = vrot.slane %v2803, %v2816
        %v2818 = vcombine.high %v2810, %v2810
        %v2819 = vcombine.high %v2817, %v2817
        %v2821 = vunpack.c.l.s4 1966171168
        %v2822 = vunpack.c.0.s8 %v2821
        %v2823 = vlaneseq
        %v2824 = vshrl.u32 %v2823, 7
        %v2825 = vsub.s32 %v2822, %v2824
        %v2826 = vrot.slane %v2810, %v2825
        %v2828 = vunpack.c.l.s4 1966171168
        %v2829 = vunpack.c.0.s8 %v2828
        %v2830 = vlaneseq
        %v2831 = vshrl.u32 %v2830, 7
        %v2832 = vsub.s32 %v2829, %v2831
        %v2833 = vrot.slane %v2817, %v2832
        %v2835 = vunpack.c.l.s4 1966171168
        %v2836 = vunpack.c.0.s8 %v2835
        %v2837 = vlaneseq
        %v2838 = vshrl.u32 %v2837, 7
        %v2839 = vsub.s32 %v2836, %v2838
        %v2840 = vrot.slane %v2818, %v2839
        %v2842 = vunpack.c.l.s4 1966171168
        %v2843 = vunpack.c.0.s8 %v2842
        %v2844 = vlaneseq
        %v2845 = vshrl.u32 %v2844, 7
        %v2846 = vsub.s32 %v2843, %v2845
        %v2847 = vrot.slane %v2819, %v2846
        %v2848 = vcombine.high %v2826, %v2826
        %v2849 = vcombine.high %v2833, %v2833
        %v2850 = vcombine.high %v2840, %v2840
        %v2851 = vcombine.high %v2847, %v2847
        %v2852 = vcombine.high %v2338, %v2338
        %v2854 = vunpack.c.l.s4 1966171168
        %v2855 = vunpack.c.0.s8 %v2854
        %v2856 = vlaneseq
        %v2857 = vshrl.u32 %v2856, 7
        %v2858 = vsub.s32 %v2855, %v2857
        %v2859 = vrot.slane %v2338, %v2858
        %v2861 = vunpack.c.l.s4 1966171168
        %v2862 = vunpack.c.0.s8 %v2861
        %v2863 = vlaneseq
        %v2864 = vshrl.u32 %v2863, 7
        %v2865 = vsub.s32 %v2862, %v2864
        %v2866 = vrot.slane %v2852, %v2865
        %v2867 = vcombine.high %v2859, %v2859
        %v2869 = vunpack.c.l.s4 1966171168
        %v2870 = vunpack.c.0.s8 %v2869
        %v2871 = vlaneseq
        %v2872 = vshrl.u32 %v2871, 7
        %v2873 = vsub.s32 %v2870, %v2872
        %v2874 = vrot.slane %v2859, %v2873
        %v2876 = vunpack.c.l.s4 1966171168
        %v2877 = vunpack.c.0.s8 %v2876
        %v2878 = vlaneseq
        %v2879 = vshrl.u32 %v2878, 7
        %v2880 = vsub.s32 %v2877, %v2879
        %v2881 = vrot.slane %v2866, %v2880
        %v2883 = vunpack.c.l.s4 1966171168
        %v2884 = vunpack.c.0.s8 %v2883
        %v2885 = vlaneseq
        %v2886 = vshrl.u32 %v2885, 7
        %v2887 = vsub.s32 %v2884, %v2886
        %v2888 = vrot.slane %v2867, %v2887
        %v2889 = vcombine.high %v2874, %v2874
        %v2890 = vcombine.high %v2888, %v2888
        %v2891 = vcombine.high %v2341, %v2341
        %v2893 = vunpack.c.l.s4 1966171168
        %v2894 = vunpack.c.0.s8 %v2893
        %v2895 = vlaneseq
        %v2896 = vshrl.u32 %v2895, 7
        %v2897 = vsub.s32 %v2894, %v2896
        %v2898 = vrot.slane %v2341, %v2897
        %v2900 = vunpack.c.l.s4 1966171168
        %v2901 = vunpack.c.0.s8 %v2900
        %v2902 = vlaneseq
        %v2903 = vshrl.u32 %v2902, 7
        %v2904 = vsub.s32 %v2901, %v2903
        %v2905 = vrot.slane %v2891, %v2904
        %v2906 = vcombine.high %v2898, %v2898
        %v2907 = vcombine.high %v2905, %v2905
        %v2909 = vunpack.c.l.s4 1966171168
        %v2910 = vunpack.c.0.s8 %v2909
        %v2911 = vlaneseq
        %v2912 = vshrl.u32 %v2911, 7
        %v2913 = vsub.s32 %v2910, %v2912
        %v2914 = vrot.slane %v2898, %v2913
        %v2916 = vunpack.c.l.s4 1966171168
        %v2917 = vunpack.c.0.s8 %v2916
        %v2918 = vlaneseq
        %v2919 = vshrl.u32 %v2918, 7
        %v2920 = vsub.s32 %v2917, %v2919
        %v2921 = vrot.slane %v2905, %v2920
        %v2923 = vunpack.c.l.s4 1966171168
        %v2924 = vunpack.c.0.s8 %v2923
        %v2925 = vlaneseq
        %v2926 = vshrl.u32 %v2925, 7
        %v2927 = vsub.s32 %v2924, %v2926
        %v2928 = vrot.slane %v2906, %v2927
        %v2930 = vunpack.c.l.s4 1966171168
        %v2931 = vunpack.c.0.s8 %v2930
        %v2932 = vlaneseq
        %v2933 = vshrl.u32 %v2932, 7
        %v2934 = vsub.s32 %v2931, %v2933
        %v2935 = vrot.slane %v2907, %v2934
        %v2936 = vcombine.high %v2914, %v2914
        %v2937 = vcombine.high %v2921, %v2921
        %v2938 = vcombine.high %v2928, %v2928
        %v2939 = vcombine.high %v2935, %v2935
        %v2940 = vcombine.high %v2342, %v2342
        %v2942 = vunpack.c.l.s4 1966171168
        %v2943 = vunpack.c.0.s8 %v2942
        %v2944 = vlaneseq
        %v2945 = vshrl.u32 %v2944, 7
        %v2946 = vsub.s32 %v2943, %v2945
        %v2947 = vrot.slane %v2342, %v2946
        %v2949 = vunpack.c.l.s4 1966171168
        %v2950 = vunpack.c.0.s8 %v2949
        %v2951 = vlaneseq
        %v2952 = vshrl.u32 %v2951, 7
        %v2953 = vsub.s32 %v2950, %v2952
        %v2954 = vrot.slane %v2940, %v2953
        %v2955 = vcombine.high %v2947, %v2947
        %v2957 = vunpack.c.l.s4 1966171168
        %v2958 = vunpack.c.0.s8 %v2957
        %v2959 = vlaneseq
        %v2960 = vshrl.u32 %v2959, 7
        %v2961 = vsub.s32 %v2958, %v2960
        %v2962 = vrot.slane %v2947, %v2961
        %v2964 = vunpack.c.l.s4 1966171168
        %v2965 = vunpack.c.0.s8 %v2964
        %v2966 = vlaneseq
        %v2967 = vshrl.u32 %v2966, 7
        %v2968 = vsub.s32 %v2965, %v2967
        %v2969 = vrot.slane %v2954, %v2968
        %v2971 = vunpack.c.l.s4 1966171168
        %v2972 = vunpack.c.0.s8 %v2971
        %v2973 = vlaneseq
        %v2974 = vshrl.u32 %v2973, 7
        %v2975 = vsub.s32 %v2972, %v2974
        %v2976 = vrot.slane %v2955, %v2975
        %v2977 = vcombine.high %v2962, %v2962
        %v2978 = vcombine.high %v2976, %v2976
        %v2979 = vcombine.high %v2426, %v2426
        %v2981 = vunpack.c.l.s4 1966171168
        %v2982 = vunpack.c.0.s8 %v2981
        %v2983 = vlaneseq
        %v2984 = vshrl.u32 %v2983, 7
        %v2985 = vsub.s32 %v2982, %v2984
        %v2986 = vrot.slane %v2979, %v2985
        %v2987 = vcombine.high %v2514, %v2514
        %v2989 = vunpack.c.l.s4 1966171168
        %v2990 = vunpack.c.0.s8 %v2989
        %v2991 = vlaneseq
        %v2992 = vshrl.u32 %v2991, 7
        %v2993 = vsub.s32 %v2990, %v2992
        %v2994 = vrot.slane %v2987, %v2993
        %v2995 = vcombine.high %v2602, %v2602
        %v2997 = vunpack.c.l.s4 1966171168
        %v2998 = vunpack.c.0.s8 %v2997
        %v2999 = vlaneseq
        %v3000 = vshrl.u32 %v2999, 7
        %v3001 = vsub.s32 %v2998, %v3000
        %v3002 = vrot.slane %v2995, %v3001
        %v3003 = vcombine.high %v2690, %v2690
        %v3005 = vunpack.c.l.s4 1966171168
        %v3006 = vunpack.c.0.s8 %v3005
        %v3007 = vlaneseq
        %v3008 = vshrl.u32 %v3007, 7
        %v3009 = vsub.s32 %v3006, %v3008
        %v3010 = vrot.slane %v3003, %v3009
        %v3011 = vcombine.high %v2778, %v2778
        %v3013 = vunpack.c.l.s4 1966171168
        %v3014 = vunpack.c.0.s8 %v3013
        %v3015 = vlaneseq
        %v3016 = vshrl.u32 %v3015, 7
        %v3017 = vsub.s32 %v3014, %v3016
        %v3018 = vrot.slane %v3011, %v3017
        %v3019 = vcombine.high %v2866, %v2866
        %v3021 = vunpack.c.l.s4 1966171168
        %v3022 = vunpack.c.0.s8 %v3021
        %v3023 = vlaneseq
        %v3024 = vshrl.u32 %v3023, 7
        %v3025 = vsub.s32 %v3022, %v3024
        %v3026 = vrot.slane %v3019, %v3025
        %v3027 = vcombine.high %v2954, %v2954
        %v3029 = vunpack.c.l.s4 1966171168
        %v3030 = vunpack.c.0.s8 %v3029
        %v3031 = vlaneseq
        %v3032 = vshrl.u32 %v3031, 7
        %v3033 = vsub.s32 %v3030, %v3032
        %v3034 = vrot.slane %v3027, %v3033
        %v3035 = vcombine.high %v2441, %v2441
        %v3036 = vcombine.high %v2529, %v2529
        %v3037 = vcombine.high %v2617, %v2617
        %v3038 = vcombine.high %v2705, %v2705
        %v3039 = vcombine.high %v2793, %v2793
        %v3040 = vcombine.high %v2881, %v2881
        %v3041 = vcombine.high %v2969, %v2969
        %v3042 = vcombine.high %v2986, %v2986
        %v3043 = vcombine.high %v2994, %v2994
        %v3044 = vcombine.high %v3002, %v3002
        %v3045 = vcombine.high %v3010, %v3010
        %v3046 = vcombine.high %v3018, %v3018
        %v3047 = vcombine.high %v3026, %v3026
        %v3048 = vcombine.high %v3034, %v3034
        %v3063 = vcombine.high %v2319, %v2319
        %v3065 = vunpack.c.l.s4 1966171168
        %v3066 = vunpack.c.0.s8 %v3065
        %v3067 = vlaneseq
        %v3068 = vshrl.u32 %v3067, 7
        %v3069 = vsub.s32 %v3066, %v3068
        %v3070 = vrot.slane %v2319, %v3069
        %v3072 = vunpack.c.l.s4 1966171168
        %v3073 = vunpack.c.0.s8 %v3072
        %v3074 = vlaneseq
        %v3075 = vshrl.u32 %v3074, 7
        %v3076 = vsub.s32 %v3073, %v3075
        %v3077 = vrot.slane %v3063, %v3076
        %v3078 = vcombine.high %v3070, %v3070
        %v3079 = vcombine.high %v3077, %v3077
        %v3081 = vunpack.c.l.s4 1966171168
        %v3082 = vunpack.c.0.s8 %v3081
        %v3083 = vlaneseq
        %v3084 = vshrl.u32 %v3083, 7
        %v3085 = vsub.s32 %v3082, %v3084
        %v3086 = vrot.slane %v3070, %v3085
        %v3088 = vunpack.c.l.s4 1966171168
        %v3089 = vunpack.c.0.s8 %v3088
        %v3090 = vlaneseq
        %v3091 = vshrl.u32 %v3090, 7
        %v3092 = vsub.s32 %v3089, %v3091
        %v3093 = vrot.slane %v3077, %v3092
        %v3095 = vunpack.c.l.s4 1966171168
        %v3096 = vunpack.c.0.s8 %v3095
        %v3097 = vlaneseq
        %v3098 = vshrl.u32 %v3097, 7
        %v3099 = vsub.s32 %v3096, %v3098
        %v3100 = vrot.slane %v3078, %v3099
        %v3102 = vunpack.c.l.s4 1966171168
        %v3103 = vunpack.c.0.s8 %v3102
        %v3104 = vlaneseq
        %v3105 = vshrl.u32 %v3104, 7
        %v3106 = vsub.s32 %v3103, %v3105
        %v3107 = vrot.slane %v3079, %v3106
        %v3108 = vcombine.high %v3086, %v3086
        %v3109 = vcombine.high %v3093, %v3093
        %v3110 = vcombine.high %v3100, %v3100
        %v3111 = vcombine.high %v3107, %v3107
        %v3112 = vcombine.high %v2320, %v2320
        %v3114 = vunpack.c.l.s4 1966171168
        %v3115 = vunpack.c.0.s8 %v3114
        %v3116 = vlaneseq
        %v3117 = vshrl.u32 %v3116, 7
        %v3118 = vsub.s32 %v3115, %v3117
        %v3119 = vrot.slane %v2320, %v3118
        %v3121 = vunpack.c.l.s4 1966171168
        %v3122 = vunpack.c.0.s8 %v3121
        %v3123 = vlaneseq
        %v3124 = vshrl.u32 %v3123, 7
        %v3125 = vsub.s32 %v3122, %v3124
        %v3126 = vrot.slane %v3112, %v3125
        %v3127 = vcombine.high %v3119, %v3119
        %v3129 = vunpack.c.l.s4 1966171168
        %v3130 = vunpack.c.0.s8 %v3129
        %v3131 = vlaneseq
        %v3132 = vshrl.u32 %v3131, 7
        %v3133 = vsub.s32 %v3130, %v3132
        %v3134 = vrot.slane %v3119, %v3133
        %v3136 = vunpack.c.l.s4 1966171168
        %v3137 = vunpack.c.0.s8 %v3136
        %v3138 = vlaneseq
        %v3139 = vshrl.u32 %v3138, 7
        %v3140 = vsub.s32 %v3137, %v3139
        %v3141 = vrot.slane %v3126, %v3140
        %v3143 = vunpack.c.l.s4 1966171168
        %v3144 = vunpack.c.0.s8 %v3143
        %v3145 = vlaneseq
        %v3146 = vshrl.u32 %v3145, 7
        %v3147 = vsub.s32 %v3144, %v3146
        %v3148 = vrot.slane %v3127, %v3147
        %v3149 = vcombine.high %v3134, %v3134
        %v3150 = vcombine.high %v3148, %v3148
        %v3151 = vcombine.high %v2323, %v2323
        %v3153 = vunpack.c.l.s4 1966171168
        %v3154 = vunpack.c.0.s8 %v3153
        %v3155 = vlaneseq
        %v3156 = vshrl.u32 %v3155, 7
        %v3157 = vsub.s32 %v3154, %v3156
        %v3158 = vrot.slane %v2323, %v3157
        %v3160 = vunpack.c.l.s4 1966171168
        %v3161 = vunpack.c.0.s8 %v3160
        %v3162 = vlaneseq
        %v3163 = vshrl.u32 %v3162, 7
        %v3164 = vsub.s32 %v3161, %v3163
        %v3165 = vrot.slane %v3151, %v3164
        %v3166 = vcombine.high %v3158, %v3158
        %v3167 = vcombine.high %v3165, %v3165
        %v3169 = vunpack.c.l.s4 1966171168
        %v3170 = vunpack.c.0.s8 %v3169
        %v3171 = vlaneseq
        %v3172 = vshrl.u32 %v3171, 7
        %v3173 = vsub.s32 %v3170, %v3172
        %v3174 = vrot.slane %v3158, %v3173
        %v3176 = vunpack.c.l.s4 1966171168
        %v3177 = vunpack.c.0.s8 %v3176
        %v3178 = vlaneseq
        %v3179 = vshrl.u32 %v3178, 7
        %v3180 = vsub.s32 %v3177, %v3179
        %v3181 = vrot.slane %v3165, %v3180
        %v3183 = vunpack.c.l.s4 1966171168
        %v3184 = vunpack.c.0.s8 %v3183
        %v3185 = vlaneseq
        %v3186 = vshrl.u32 %v3185, 7
        %v3187 = vsub.s32 %v3184, %v3186
        %v3188 = vrot.slane %v3166, %v3187
        %v3190 = vunpack.c.l.s4 1966171168
        %v3191 = vunpack.c.0.s8 %v3190
        %v3192 = vlaneseq
        %v3193 = vshrl.u32 %v3192, 7
        %v3194 = vsub.s32 %v3191, %v3193
        %v3195 = vrot.slane %v3167, %v3194
        %v3196 = vcombine.high %v3174, %v3174
        %v3197 = vcombine.high %v3181, %v3181
        %v3198 = vcombine.high %v3188, %v3188
        %v3199 = vcombine.high %v3195, %v3195
        %v3200 = vcombine.high %v2324, %v2324
        %v3202 = vunpack.c.l.s4 1966171168
        %v3203 = vunpack.c.0.s8 %v3202
        %v3204 = vlaneseq
        %v3205 = vshrl.u32 %v3204, 7
        %v3206 = vsub.s32 %v3203, %v3205
        %v3207 = vrot.slane %v2324, %v3206
        %v3209 = vunpack.c.l.s4 1966171168
        %v3210 = vunpack.c.0.s8 %v3209
        %v3211 = vlaneseq
        %v3212 = vshrl.u32 %v3211, 7
        %v3213 = vsub.s32 %v3210, %v3212
        %v3214 = vrot.slane %v3200, %v3213
        %v3215 = vcombine.high %v3207, %v3207
        %v3217 = vunpack.c.l.s4 1966171168
        %v3218 = vunpack.c.0.s8 %v3217
        %v3219 = vlaneseq
        %v3220 = vshrl.u32 %v3219, 7
        %v3221 = vsub.s32 %v3218, %v3220
        %v3222 = vrot.slane %v3207, %v3221
        %v3224 = vunpack.c.l.s4 1966171168
        %v3225 = vunpack.c.0.s8 %v3224
        %v3226 = vlaneseq
        %v3227 = vshrl.u32 %v3226, 7
        %v3228 = vsub.s32 %v3225, %v3227
        %v3229 = vrot.slane %v3214, %v3228
        %v3231 = vunpack.c.l.s4 1966171168
        %v3232 = vunpack.c.0.s8 %v3231
        %v3233 = vlaneseq
        %v3234 = vshrl.u32 %v3233, 7
        %v3235 = vsub.s32 %v3232, %v3234
        %v3236 = vrot.slane %v3215, %v3235
        %v3237 = vcombine.high %v3222, %v3222
        %v3238 = vcombine.high %v3236, %v3236
        %v3239 = vcombine.high %v2327, %v2327
        %v3241 = vunpack.c.l.s4 1966171168
        %v3242 = vunpack.c.0.s8 %v3241
        %v3243 = vlaneseq
        %v3244 = vshrl.u32 %v3243, 7
        %v3245 = vsub.s32 %v3242, %v3244
        %v3246 = vrot.slane %v2327, %v3245
        %v3248 = vunpack.c.l.s4 1966171168
        %v3249 = vunpack.c.0.s8 %v3248
        %v3250 = vlaneseq
        %v3251 = vshrl.u32 %v3250, 7
        %v3252 = vsub.s32 %v3249, %v3251
        %v3253 = vrot.slane %v3239, %v3252
        %v3254 = vcombine.high %v3246, %v3246
        %v3255 = vcombine.high %v3253, %v3253
        %v3257 = vunpack.c.l.s4 1966171168
        %v3258 = vunpack.c.0.s8 %v3257
        %v3259 = vlaneseq
        %v3260 = vshrl.u32 %v3259, 7
        %v3261 = vsub.s32 %v3258, %v3260
        %v3262 = vrot.slane %v3246, %v3261
        %v3264 = vunpack.c.l.s4 1966171168
        %v3265 = vunpack.c.0.s8 %v3264
        %v3266 = vlaneseq
        %v3267 = vshrl.u32 %v3266, 7
        %v3268 = vsub.s32 %v3265, %v3267
        %v3269 = vrot.slane %v3253, %v3268
        %v3271 = vunpack.c.l.s4 1966171168
        %v3272 = vunpack.c.0.s8 %v3271
        %v3273 = vlaneseq
        %v3274 = vshrl.u32 %v3273, 7
        %v3275 = vsub.s32 %v3272, %v3274
        %v3276 = vrot.slane %v3254, %v3275
        %v3278 = vunpack.c.l.s4 1966171168
        %v3279 = vunpack.c.0.s8 %v3278
        %v3280 = vlaneseq
        %v3281 = vshrl.u32 %v3280, 7
        %v3282 = vsub.s32 %v3279, %v3281
        %v3283 = vrot.slane %v3255, %v3282
        %v3284 = vcombine.high %v3262, %v3262
        %v3285 = vcombine.high %v3269, %v3269
        %v3286 = vcombine.high %v3276, %v3276
        %v3287 = vcombine.high %v3283, %v3283
        %v3288 = vcombine.high %v2328, %v2328
        %v3290 = vunpack.c.l.s4 1966171168
        %v3291 = vunpack.c.0.s8 %v3290
        %v3292 = vlaneseq
        %v3293 = vshrl.u32 %v3292, 7
        %v3294 = vsub.s32 %v3291, %v3293
        %v3295 = vrot.slane %v2328, %v3294
        %v3297 = vunpack.c.l.s4 1966171168
        %v3298 = vunpack.c.0.s8 %v3297
        %v3299 = vlaneseq
        %v3300 = vshrl.u32 %v3299, 7
        %v3301 = vsub.s32 %v3298, %v3300
        %v3302 = vrot.slane %v3288, %v3301
        %v3303 = vcombine.high %v3295, %v3295
        %v3305 = vunpack.c.l.s4 1966171168
        %v3306 = vunpack.c.0.s8 %v3305
        %v3307 = vlaneseq
        %v3308 = vshrl.u32 %v3307, 7
        %v3309 = vsub.s32 %v3306, %v3308
        %v3310 = vrot.slane %v3295, %v3309
        %v3312 = vunpack.c.l.s4 1966171168
        %v3313 = vunpack.c.0.s8 %v3312
        %v3314 = vlaneseq
        %v3315 = vshrl.u32 %v3314, 7
        %v3316 = vsub.s32 %v3313, %v3315
        %v3317 = vrot.slane %v3302, %v3316
        %v3319 = vunpack.c.l.s4 1966171168
        %v3320 = vunpack.c.0.s8 %v3319
        %v3321 = vlaneseq
        %v3322 = vshrl.u32 %v3321, 7
        %v3323 = vsub.s32 %v3320, %v3322
        %v3324 = vrot.slane %v3303, %v3323
        %v3325 = vcombine.high %v3310, %v3310
        %v3326 = vcombine.high %v3324, %v3324
        %v3327 = vcombine.high %v2331, %v2331
        %v3329 = vunpack.c.l.s4 1966171168
        %v3330 = vunpack.c.0.s8 %v3329
        %v3331 = vlaneseq
        %v3332 = vshrl.u32 %v3331, 7
        %v3333 = vsub.s32 %v3330, %v3332
        %v3334 = vrot.slane %v2331, %v3333
        %v3336 = vunpack.c.l.s4 1966171168
        %v3337 = vunpack.c.0.s8 %v3336
        %v3338 = vlaneseq
        %v3339 = vshrl.u32 %v3338, 7
        %v3340 = vsub.s32 %v3337, %v3339
        %v3341 = vrot.slane %v3327, %v3340
        %v3342 = vcombine.high %v3334, %v3334
        %v3343 = vcombine.high %v3341, %v3341
        %v3345 = vunpack.c.l.s4 1966171168
        %v3346 = vunpack.c.0.s8 %v3345
        %v3347 = vlaneseq
        %v3348 = vshrl.u32 %v3347, 7
        %v3349 = vsub.s32 %v3346, %v3348
        %v3350 = vrot.slane %v3334, %v3349
        %v3352 = vunpack.c.l.s4 1966171168
        %v3353 = vunpack.c.0.s8 %v3352
        %v3354 = vlaneseq
        %v3355 = vshrl.u32 %v3354, 7
        %v3356 = vsub.s32 %v3353, %v3355
        %v3357 = vrot.slane %v3341, %v3356
        %v3359 = vunpack.c.l.s4 1966171168
        %v3360 = vunpack.c.0.s8 %v3359
        %v3361 = vlaneseq
        %v3362 = vshrl.u32 %v3361, 7
        %v3363 = vsub.s32 %v3360, %v3362
        %v3364 = vrot.slane %v3342, %v3363
        %v3366 = vunpack.c.l.s4 1966171168
        %v3367 = vunpack.c.0.s8 %v3366
        %v3368 = vlaneseq
        %v3369 = vshrl.u32 %v3368, 7
        %v3370 = vsub.s32 %v3367, %v3369
        %v3371 = vrot.slane %v3343, %v3370
        %v3372 = vcombine.high %v3350, %v3350
        %v3373 = vcombine.high %v3357, %v3357
        %v3374 = vcombine.high %v3364, %v3364
        %v3375 = vcombine.high %v3371, %v3371
        %v3376 = vcombine.high %v2332, %v2332
        %v3378 = vunpack.c.l.s4 1966171168
        %v3379 = vunpack.c.0.s8 %v3378
        %v3380 = vlaneseq
        %v3381 = vshrl.u32 %v3380, 7
        %v3382 = vsub.s32 %v3379, %v3381
        %v3383 = vrot.slane %v2332, %v3382
        %v3385 = vunpack.c.l.s4 1966171168
        %v3386 = vunpack.c.0.s8 %v3385
        %v3387 = vlaneseq
        %v3388 = vshrl.u32 %v3387, 7
        %v3389 = vsub.s32 %v3386, %v3388
        %v3390 = vrot.slane %v3376, %v3389
        %v3391 = vcombine.high %v3383, %v3383
        %v3393 = vunpack.c.l.s4 1966171168
        %v3394 = vunpack.c.0.s8 %v3393
        %v3395 = vlaneseq
        %v3396 = vshrl.u32 %v3395, 7
        %v3397 = vsub.s32 %v3394, %v3396
        %v3398 = vrot.slane %v3383, %v3397
        %v3400 = vunpack.c.l.s4 1966171168
        %v3401 = vunpack.c.0.s8 %v3400
        %v3402 = vlaneseq
        %v3403 = vshrl.u32 %v3402, 7
        %v3404 = vsub.s32 %v3401, %v3403
        %v3405 = vrot.slane %v3390, %v3404
        %v3407 = vunpack.c.l.s4 1966171168
        %v3408 = vunpack.c.0.s8 %v3407
        %v3409 = vlaneseq
        %v3410 = vshrl.u32 %v3409, 7
        %v3411 = vsub.s32 %v3408, %v3410
        %v3412 = vrot.slane %v3391, %v3411
        %v3413 = vcombine.high %v3398, %v3398
        %v3414 = vcombine.high %v3412, %v3412
        %v3415 = vcombine.high %v2335, %v2335
        %v3417 = vunpack.c.l.s4 1966171168
        %v3418 = vunpack.c.0.s8 %v3417
        %v3419 = vlaneseq
        %v3420 = vshrl.u32 %v3419, 7
        %v3421 = vsub.s32 %v3418, %v3420
        %v3422 = vrot.slane %v2335, %v3421
        %v3424 = vunpack.c.l.s4 1966171168
        %v3425 = vunpack.c.0.s8 %v3424
        %v3426 = vlaneseq
        %v3427 = vshrl.u32 %v3426, 7
        %v3428 = vsub.s32 %v3425, %v3427
        %v3429 = vrot.slane %v3415, %v3428
        %v3430 = vcombine.high %v3422, %v3422
        %v3431 = vcombine.high %v3429, %v3429
        %v3433 = vunpack.c.l.s4 1966171168
        %v3434 = vunpack.c.0.s8 %v3433
        %v3435 = vlaneseq
        %v3436 = vshrl.u32 %v3435, 7
        %v3437 = vsub.s32 %v3434, %v3436
        %v3438 = vrot.slane %v3422, %v3437
        %v3440 = vunpack.c.l.s4 1966171168
        %v3441 = vunpack.c.0.s8 %v3440
        %v3442 = vlaneseq
        %v3443 = vshrl.u32 %v3442, 7
        %v3444 = vsub.s32 %v3441, %v3443
        %v3445 = vrot.slane %v3429, %v3444
        %v3447 = vunpack.c.l.s4 1966171168
        %v3448 = vunpack.c.0.s8 %v3447
        %v3449 = vlaneseq
        %v3450 = vshrl.u32 %v3449, 7
        %v3451 = vsub.s32 %v3448, %v3450
        %v3452 = vrot.slane %v3430, %v3451
        %v3454 = vunpack.c.l.s4 1966171168
        %v3455 = vunpack.c.0.s8 %v3454
        %v3456 = vlaneseq
        %v3457 = vshrl.u32 %v3456, 7
        %v3458 = vsub.s32 %v3455, %v3457
        %v3459 = vrot.slane %v3431, %v3458
        %v3460 = vcombine.high %v3438, %v3438
        %v3461 = vcombine.high %v3445, %v3445
        %v3462 = vcombine.high %v3452, %v3452
        %v3463 = vcombine.high %v3459, %v3459
        %v3464 = vcombine.high %v2336, %v2336
        %v3466 = vunpack.c.l.s4 1966171168
        %v3467 = vunpack.c.0.s8 %v3466
        %v3468 = vlaneseq
        %v3469 = vshrl.u32 %v3468, 7
        %v3470 = vsub.s32 %v3467, %v3469
        %v3471 = vrot.slane %v2336, %v3470
        %v3473 = vunpack.c.l.s4 1966171168
        %v3474 = vunpack.c.0.s8 %v3473
        %v3475 = vlaneseq
        %v3476 = vshrl.u32 %v3475, 7
        %v3477 = vsub.s32 %v3474, %v3476
        %v3478 = vrot.slane %v3464, %v3477
        %v3479 = vcombine.high %v3471, %v3471
        %v3481 = vunpack.c.l.s4 1966171168
        %v3482 = vunpack.c.0.s8 %v3481
        %v3483 = vlaneseq
        %v3484 = vshrl.u32 %v3483, 7
        %v3485 = vsub.s32 %v3482, %v3484
        %v3486 = vrot.slane %v3471, %v3485
        %v3488 = vunpack.c.l.s4 1966171168
        %v3489 = vunpack.c.0.s8 %v3488
        %v3490 = vlaneseq
        %v3491 = vshrl.u32 %v3490, 7
        %v3492 = vsub.s32 %v3489, %v3491
        %v3493 = vrot.slane %v3478, %v3492
        %v3495 = vunpack.c.l.s4 1966171168
        %v3496 = vunpack.c.0.s8 %v3495
        %v3497 = vlaneseq
        %v3498 = vshrl.u32 %v3497, 7
        %v3499 = vsub.s32 %v3496, %v3498
        %v3500 = vrot.slane %v3479, %v3499
        %v3501 = vcombine.high %v3486, %v3486
        %v3502 = vcombine.high %v3500, %v3500
        %v3503 = vcombine.high %v2339, %v2339
        %v3505 = vunpack.c.l.s4 1966171168
        %v3506 = vunpack.c.0.s8 %v3505
        %v3507 = vlaneseq
        %v3508 = vshrl.u32 %v3507, 7
        %v3509 = vsub.s32 %v3506, %v3508
        %v3510 = vrot.slane %v2339, %v3509
        %v3512 = vunpack.c.l.s4 1966171168
        %v3513 = vunpack.c.0.s8 %v3512
        %v3514 = vlaneseq
        %v3515 = vshrl.u32 %v3514, 7
        %v3516 = vsub.s32 %v3513, %v3515
        %v3517 = vrot.slane %v3503, %v3516
        %v3518 = vcombine.high %v3510, %v3510
        %v3519 = vcombine.high %v3517, %v3517
        %v3521 = vunpack.c.l.s4 1966171168
        %v3522 = vunpack.c.0.s8 %v3521
        %v3523 = vlaneseq
        %v3524 = vshrl.u32 %v3523, 7
        %v3525 = vsub.s32 %v3522, %v3524
        %v3526 = vrot.slane %v3510, %v3525
        %v3528 = vunpack.c.l.s4 1966171168
        %v3529 = vunpack.c.0.s8 %v3528
        %v3530 = vlaneseq
        %v3531 = vshrl.u32 %v3530, 7
        %v3532 = vsub.s32 %v3529, %v3531
        %v3533 = vrot.slane %v3517, %v3532
        %v3535 = vunpack.c.l.s4 1966171168
        %v3536 = vunpack.c.0.s8 %v3535
        %v3537 = vlaneseq
        %v3538 = vshrl.u32 %v3537, 7
        %v3539 = vsub.s32 %v3536, %v3538
        %v3540 = vrot.slane %v3518, %v3539
        %v3542 = vunpack.c.l.s4 1966171168
        %v3543 = vunpack.c.0.s8 %v3542
        %v3544 = vlaneseq
        %v3545 = vshrl.u32 %v3544, 7
        %v3546 = vsub.s32 %v3543, %v3545
        %v3547 = vrot.slane %v3519, %v3546
        %v3548 = vcombine.high %v3526, %v3526
        %v3549 = vcombine.high %v3533, %v3533
        %v3550 = vcombine.high %v3540, %v3540
        %v3551 = vcombine.high %v3547, %v3547
        %v3552 = vcombine.high %v2340, %v2340
        %v3554 = vunpack.c.l.s4 1966171168
        %v3555 = vunpack.c.0.s8 %v3554
        %v3556 = vlaneseq
        %v3557 = vshrl.u32 %v3556, 7
        %v3558 = vsub.s32 %v3555, %v3557
        %v3559 = vrot.slane %v2340, %v3558
        %v3561 = vunpack.c.l.s4 1966171168
        %v3562 = vunpack.c.0.s8 %v3561
        %v3563 = vlaneseq
        %v3564 = vshrl.u32 %v3563, 7
        %v3565 = vsub.s32 %v3562, %v3564
        %v3566 = vrot.slane %v3552, %v3565
        %v3567 = vcombine.high %v3559, %v3559
        %v3569 = vunpack.c.l.s4 1966171168
        %v3570 = vunpack.c.0.s8 %v3569
        %v3571 = vlaneseq
        %v3572 = vshrl.u32 %v3571, 7
        %v3573 = vsub.s32 %v3570, %v3572
        %v3574 = vrot.slane %v3559, %v3573
        %v3576 = vunpack.c.l.s4 1966171168
        %v3577 = vunpack.c.0.s8 %v3576
        %v3578 = vlaneseq
        %v3579 = vshrl.u32 %v3578, 7
        %v3580 = vsub.s32 %v3577, %v3579
        %v3581 = vrot.slane %v3566, %v3580
        %v3583 = vunpack.c.l.s4 1966171168
        %v3584 = vunpack.c.0.s8 %v3583
        %v3585 = vlaneseq
        %v3586 = vshrl.u32 %v3585, 7
        %v3587 = vsub.s32 %v3584, %v3586
        %v3588 = vrot.slane %v3567, %v3587
        %v3589 = vcombine.high %v3574, %v3574
        %v3590 = vcombine.high %v3588, %v3588
        %v3591 = vcombine.high %v2343, %v2343
        %v3593 = vunpack.c.l.s4 1966171168
        %v3594 = vunpack.c.0.s8 %v3593
        %v3595 = vlaneseq
        %v3596 = vshrl.u32 %v3595, 7
        %v3597 = vsub.s32 %v3594, %v3596
        %v3598 = vrot.slane %v2343, %v3597
        %v3600 = vunpack.c.l.s4 1966171168
        %v3601 = vunpack.c.0.s8 %v3600
        %v3602 = vlaneseq
        %v3603 = vshrl.u32 %v3602, 7
        %v3604 = vsub.s32 %v3601, %v3603
        %v3605 = vrot.slane %v3591, %v3604
        %v3606 = vcombine.high %v3598, %v3598
        %v3607 = vcombine.high %v3605, %v3605
        %v3609 = vunpack.c.l.s4 1966171168
        %v3610 = vunpack.c.0.s8 %v3609
        %v3611 = vlaneseq
        %v3612 = vshrl.u32 %v3611, 7
        %v3613 = vsub.s32 %v3610, %v3612
        %v3614 = vrot.slane %v3598, %v3613
        %v3616 = vunpack.c.l.s4 1966171168
        %v3617 = vunpack.c.0.s8 %v3616
        %v3618 = vlaneseq
        %v3619 = vshrl.u32 %v3618, 7
        %v3620 = vsub.s32 %v3617, %v3619
        %v3621 = vrot.slane %v3605, %v3620
        %v3623 = vunpack.c.l.s4 1966171168
        %v3624 = vunpack.c.0.s8 %v3623
        %v3625 = vlaneseq
        %v3626 = vshrl.u32 %v3625, 7
        %v3627 = vsub.s32 %v3624, %v3626
        %v3628 = vrot.slane %v3606, %v3627
        %v3630 = vunpack.c.l.s4 1966171168
        %v3631 = vunpack.c.0.s8 %v3630
        %v3632 = vlaneseq
        %v3633 = vshrl.u32 %v3632, 7
        %v3634 = vsub.s32 %v3631, %v3633
        %v3635 = vrot.slane %v3607, %v3634
        %v3636 = vcombine.high %v3614, %v3614
        %v3637 = vcombine.high %v3621, %v3621
        %v3638 = vcombine.high %v3628, %v3628
        %v3639 = vcombine.high %v3635, %v3635
        %v3640 = vcombine.high %v2344, %v2344
        %v3642 = vunpack.c.l.s4 1966171168
        %v3643 = vunpack.c.0.s8 %v3642
        %v3644 = vlaneseq
        %v3645 = vshrl.u32 %v3644, 7
        %v3646 = vsub.s32 %v3643, %v3645
        %v3647 = vrot.slane %v2344, %v3646
        %v3649 = vunpack.c.l.s4 1966171168
        %v3650 = vunpack.c.0.s8 %v3649
        %v3651 = vlaneseq
        %v3652 = vshrl.u32 %v3651, 7
        %v3653 = vsub.s32 %v3650, %v3652
        %v3654 = vrot.slane %v3640, %v3653
        %v3655 = vcombine.high %v3647, %v3647
        %v3657 = vunpack.c.l.s4 1966171168
        %v3658 = vunpack.c.0.s8 %v3657
        %v3659 = vlaneseq
        %v3660 = vshrl.u32 %v3659, 7
        %v3661 = vsub.s32 %v3658, %v3660
        %v3662 = vrot.slane %v3647, %v3661
        %v3664 = vunpack.c.l.s4 1966171168
        %v3665 = vunpack.c.0.s8 %v3664
        %v3666 = vlaneseq
        %v3667 = vshrl.u32 %v3666, 7
        %v3668 = vsub.s32 %v3665, %v3667
        %v3669 = vrot.slane %v3654, %v3668
        %v3671 = vunpack.c.l.s4 1966171168
        %v3672 = vunpack.c.0.s8 %v3671
        %v3673 = vlaneseq
        %v3674 = vshrl.u32 %v3673, 7
        %v3675 = vsub.s32 %v3672, %v3674
        %v3676 = vrot.slane %v3655, %v3675
        %v3677 = vcombine.high %v3662, %v3662
        %v3678 = vcombine.high %v3676, %v3676
        %v3679 = vcombine.high %v3126, %v3126
        %v3681 = vunpack.c.l.s4 1966171168
        %v3682 = vunpack.c.0.s8 %v3681
        %v3683 = vlaneseq
        %v3684 = vshrl.u32 %v3683, 7
        %v3685 = vsub.s32 %v3682, %v3684
        %v3686 = vrot.slane %v3679, %v3685
        %v3687 = vcombine.high %v3214, %v3214
        %v3689 = vunpack.c.l.s4 1966171168
        %v3690 = vunpack.c.0.s8 %v3689
        %v3691 = vlaneseq
        %v3692 = vshrl.u32 %v3691, 7
        %v3693 = vsub.s32 %v3690, %v3692
        %v3694 = vrot.slane %v3687, %v3693
        %v3695 = vcombine.high %v3302, %v3302
        %v3697 = vunpack.c.l.s4 1966171168
        %v3698 = vunpack.c.0.s8 %v3697
        %v3699 = vlaneseq
        %v3700 = vshrl.u32 %v3699, 7
        %v3701 = vsub.s32 %v3698, %v3700
        %v3702 = vrot.slane %v3695, %v3701
        %v3703 = vcombine.high %v3390, %v3390
        %v3705 = vunpack.c.l.s4 1966171168
        %v3706 = vunpack.c.0.s8 %v3705
        %v3707 = vlaneseq
        %v3708 = vshrl.u32 %v3707, 7
        %v3709 = vsub.s32 %v3706, %v3708
        %v3710 = vrot.slane %v3703, %v3709
        %v3711 = vcombine.high %v3478, %v3478
        %v3713 = vunpack.c.l.s4 1966171168
        %v3714 = vunpack.c.0.s8 %v3713
        %v3715 = vlaneseq
        %v3716 = vshrl.u32 %v3715, 7
        %v3717 = vsub.s32 %v3714, %v3716
        %v3718 = vrot.slane %v3711, %v3717
        %v3719 = vcombine.high %v3566, %v3566
        %v3721 = vunpack.c.l.s4 1966171168
        %v3722 = vunpack.c.0.s8 %v3721
        %v3723 = vlaneseq
        %v3724 = vshrl.u32 %v3723, 7
        %v3725 = vsub.s32 %v3722, %v3724
        %v3726 = vrot.slane %v3719, %v3725
        %v3727 = vcombine.high %v3654, %v3654
        %v3729 = vunpack.c.l.s4 1966171168
        %v3730 = vunpack.c.0.s8 %v3729
        %v3731 = vlaneseq
        %v3732 = vshrl.u32 %v3731, 7
        %v3733 = vsub.s32 %v3730, %v3732
        %v3734 = vrot.slane %v3727, %v3733
        %v3735 = vcombine.high %v3141, %v3141
        %v3736 = vcombine.high %v3229, %v3229
        %v3737 = vcombine.high %v3317, %v3317
        %v3738 = vcombine.high %v3405, %v3405
        %v3739 = vcombine.high %v3493, %v3493
        %v3740 = vcombine.high %v3581, %v3581
        %v3741 = vcombine.high %v3669, %v3669
        %v3742 = vcombine.high %v3686, %v3686
        %v3743 = vcombine.high %v3694, %v3694
        %v3744 = vcombine.high %v3702, %v3702
        %v3745 = vcombine.high %v3710, %v3710
        %v3746 = vcombine.high %v3718, %v3718
        %v3747 = vcombine.high %v3726, %v3726
        %v3748 = vcombine.high %v3734, %v3734
        %v3751 = vcombine.high %v2345, %v2345
        %v3753 = vunpack.c.l.s4 1966171168
        %v3754 = vunpack.c.0.s8 %v3753
        %v3755 = vlaneseq
        %v3756 = vshrl.u32 %v3755, 7
        %v3757 = vsub.s32 %v3754, %v3756
        %v3758 = vrot.slane %v2345, %v3757
        %v3760 = vunpack.c.l.s4 1966171168
        %v3761 = vunpack.c.0.s8 %v3760
        %v3762 = vlaneseq
        %v3763 = vshrl.u32 %v3762, 7
        %v3764 = vsub.s32 %v3761, %v3763
        %v3765 = vrot.slane %v3751, %v3764
        %v3766 = vcombine.high %v3758, %v3758
        %v3767 = vcombine.high %v3765, %v3765
        %v3769 = vunpack.c.l.s4 1966171168
        %v3770 = vunpack.c.0.s8 %v3769
        %v3771 = vlaneseq
        %v3772 = vshrl.u32 %v3771, 7
        %v3773 = vsub.s32 %v3770, %v3772
        %v3774 = vrot.slane %v3758, %v3773
        %v3776 = vunpack.c.l.s4 1966171168
        %v3777 = vunpack.c.0.s8 %v3776
        %v3778 = vlaneseq
        %v3779 = vshrl.u32 %v3778, 7
        %v3780 = vsub.s32 %v3777, %v3779
        %v3781 = vrot.slane %v3765, %v3780
        %v3783 = vunpack.c.l.s4 1966171168
        %v3784 = vunpack.c.0.s8 %v3783
        %v3785 = vlaneseq
        %v3786 = vshrl.u32 %v3785, 7
        %v3787 = vsub.s32 %v3784, %v3786
        %v3788 = vrot.slane %v3766, %v3787
        %v3790 = vunpack.c.l.s4 1966171168
        %v3791 = vunpack.c.0.s8 %v3790
        %v3792 = vlaneseq
        %v3793 = vshrl.u32 %v3792, 7
        %v3794 = vsub.s32 %v3791, %v3793
        %v3795 = vrot.slane %v3767, %v3794
        %v3796 = vcombine.high %v3774, %v3774
        %v3797 = vcombine.high %v3781, %v3781
        %v3798 = vcombine.high %v3788, %v3788
        %v3799 = vcombine.high %v3795, %v3795
        %v3800 = vcombine.high %v2346, %v2346
        %v3802 = vunpack.c.l.s4 1966171168
        %v3803 = vunpack.c.0.s8 %v3802
        %v3804 = vlaneseq
        %v3805 = vshrl.u32 %v3804, 7
        %v3806 = vsub.s32 %v3803, %v3805
        %v3807 = vrot.slane %v2346, %v3806
        %v3809 = vunpack.c.l.s4 1966171168
        %v3810 = vunpack.c.0.s8 %v3809
        %v3811 = vlaneseq
        %v3812 = vshrl.u32 %v3811, 7
        %v3813 = vsub.s32 %v3810, %v3812
        %v3814 = vrot.slane %v3800, %v3813
        %v3815 = vcombine.high %v3807, %v3807
        %v3817 = vunpack.c.l.s4 1966171168
        %v3818 = vunpack.c.0.s8 %v3817
        %v3819 = vlaneseq
        %v3820 = vshrl.u32 %v3819, 7
        %v3821 = vsub.s32 %v3818, %v3820
        %v3822 = vrot.slane %v3807, %v3821
        %v3824 = vunpack.c.l.s4 1966171168
        %v3825 = vunpack.c.0.s8 %v3824
        %v3826 = vlaneseq
        %v3827 = vshrl.u32 %v3826, 7
        %v3828 = vsub.s32 %v3825, %v3827
        %v3829 = vrot.slane %v3814, %v3828
        %v3831 = vunpack.c.l.s4 1966171168
        %v3832 = vunpack.c.0.s8 %v3831
        %v3833 = vlaneseq
        %v3834 = vshrl.u32 %v3833, 7
        %v3835 = vsub.s32 %v3832, %v3834
        %v3836 = vrot.slane %v3815, %v3835
        %v3837 = vcombine.high %v3822, %v3822
        %v3838 = vcombine.high %v3836, %v3836
        %v3839 = vcombine.high %v3814, %v3814
        %v3841 = vunpack.c.l.s4 1966171168
        %v3842 = vunpack.c.0.s8 %v3841
        %v3843 = vlaneseq
        %v3844 = vshrl.u32 %v3843, 7
        %v3845 = vsub.s32 %v3842, %v3844
        %v3846 = vrot.slane %v3839, %v3845
        %v3847 = vcombine.high %v3829, %v3829
        %v3848 = vcombine.high %v3846, %v3846
        %v3851 = vcombine.high %v2347, %v2347
        %v3853 = vunpack.c.l.s4 1966171168
        %v3854 = vunpack.c.0.s8 %v3853
        %v3855 = vlaneseq
        %v3856 = vshrl.u32 %v3855, 7
        %v3857 = vsub.s32 %v3854, %v3856
        %v3858 = vrot.slane %v2347, %v3857
        %v3860 = vunpack.c.l.s4 1966171168
        %v3861 = vunpack.c.0.s8 %v3860
        %v3862 = vlaneseq
        %v3863 = vshrl.u32 %v3862, 7
        %v3864 = vsub.s32 %v3861, %v3863
        %v3865 = vrot.slane %v3851, %v3864
        %v3866 = vcombine.high %v3858, %v3858
        %v3867 = vcombine.high %v3865, %v3865
        %v3869 = vunpack.c.l.s4 1966171168
        %v3870 = vunpack.c.0.s8 %v3869
        %v3871 = vlaneseq
        %v3872 = vshrl.u32 %v3871, 7
        %v3873 = vsub.s32 %v3870, %v3872
        %v3874 = vrot.slane %v3858, %v3873
        %v3876 = vunpack.c.l.s4 1966171168
        %v3877 = vunpack.c.0.s8 %v3876
        %v3878 = vlaneseq
        %v3879 = vshrl.u32 %v3878, 7
        %v3880 = vsub.s32 %v3877, %v3879
        %v3881 = vrot.slane %v3865, %v3880
        %v3883 = vunpack.c.l.s4 1966171168
        %v3884 = vunpack.c.0.s8 %v3883
        %v3885 = vlaneseq
        %v3886 = vshrl.u32 %v3885, 7
        %v3887 = vsub.s32 %v3884, %v3886
        %v3888 = vrot.slane %v3866, %v3887
        %v3890 = vunpack.c.l.s4 1966171168
        %v3891 = vunpack.c.0.s8 %v3890
        %v3892 = vlaneseq
        %v3893 = vshrl.u32 %v3892, 7
        %v3894 = vsub.s32 %v3891, %v3893
        %v3895 = vrot.slane %v3867, %v3894
        %v3896 = vcombine.high %v3874, %v3874
        %v3897 = vcombine.high %v3881, %v3881
        %v3898 = vcombine.high %v3888, %v3888
        %v3899 = vcombine.high %v3895, %v3895
        %v3900 = vcombine.high %v2348, %v2348
        %v3902 = vunpack.c.l.s4 1966171168
        %v3903 = vunpack.c.0.s8 %v3902
        %v3904 = vlaneseq
        %v3905 = vshrl.u32 %v3904, 7
        %v3906 = vsub.s32 %v3903, %v3905
        %v3907 = vrot.slane %v2348, %v3906
        %v3909 = vunpack.c.l.s4 1966171168
        %v3910 = vunpack.c.0.s8 %v3909
        %v3911 = vlaneseq
        %v3912 = vshrl.u32 %v3911, 7
        %v3913 = vsub.s32 %v3910, %v3912
        %v3914 = vrot.slane %v3900, %v3913
        %v3915 = vcombine.high %v3907, %v3907
        %v3917 = vunpack.c.l.s4 1966171168
        %v3918 = vunpack.c.0.s8 %v3917
        %v3919 = vlaneseq
        %v3920 = vshrl.u32 %v3919, 7
        %v3921 = vsub.s32 %v3918, %v3920
        %v3922 = vrot.slane %v3907, %v3921
        %v3924 = vunpack.c.l.s4 1966171168
        %v3925 = vunpack.c.0.s8 %v3924
        %v3926 = vlaneseq
        %v3927 = vshrl.u32 %v3926, 7
        %v3928 = vsub.s32 %v3925, %v3927
        %v3929 = vrot.slane %v3914, %v3928
        %v3931 = vunpack.c.l.s4 1966171168
        %v3932 = vunpack.c.0.s8 %v3931
        %v3933 = vlaneseq
        %v3934 = vshrl.u32 %v3933, 7
        %v3935 = vsub.s32 %v3932, %v3934
        %v3936 = vrot.slane %v3915, %v3935
        %v3937 = vcombine.high %v3922, %v3922
        %v3938 = vcombine.high %v3936, %v3936
        %v3939 = vcombine.high %v3914, %v3914
        %v3941 = vunpack.c.l.s4 1966171168
        %v3942 = vunpack.c.0.s8 %v3941
        %v3943 = vlaneseq
        %v3944 = vshrl.u32 %v3943, 7
        %v3945 = vsub.s32 %v3942, %v3944
        %v3946 = vrot.slane %v3939, %v3945
        %v3947 = vcombine.high %v3929, %v3929
        %v3948 = vcombine.high %v3946, %v3946
        %v3949 = vcombine.low %v2386, %v2400
        %v3950 = vcombine.low %v2408, %v2410
        %v3951 = vcombine.low %v2393, %v2407
        %v3952 = vcombine.low %v2409, %v2411
        %v3954 = vunpack.c.l.s4 1966171168
        %v3955 = vunpack.c.0.s8 %v3954
        %v3956 = vlaneseq
        %v3957 = vshrl.u32 %v3956, 7
        %v3958 = vsub.s32 %v3955, %v3957
        %v3959 = vrot.slane %v3949, %v3958
        %v3961 = vunpack.c.l.s4 1966171168
        %v3962 = vunpack.c.0.s8 %v3961
        %v3963 = vlaneseq
        %v3964 = vshrl.u32 %v3963, 7
        %v3965 = vsub.s32 %v3962, %v3964
        %v3966 = vrot.slane %v3950, %v3965
        %v3968 = vunpack.c.l.s4 1966171168
        %v3969 = vunpack.c.0.s8 %v3968
        %v3970 = vlaneseq
        %v3971 = vshrl.u32 %v3970, 7
        %v3972 = vsub.s32 %v3969, %v3971
        %v3973 = vrot.slane %v3951, %v3972
        %v3975 = vunpack.c.l.s4 1966171168
        %v3976 = vunpack.c.0.s8 %v3975
        %v3977 = vlaneseq
        %v3978 = vshrl.u32 %v3977, 7
        %v3979 = vsub.s32 %v3976, %v3978
        %v3980 = vrot.slane %v3952, %v3979
        %v3981 = vcombine.low %v3959, %v3966
        %v3982 = vcombine.low %v3973, %v3980
        %v3984 = vunpack.c.l.s4 1966171168
        %v3985 = vunpack.c.0.s8 %v3984
        %v3986 = vlaneseq
        %v3987 = vshrl.u32 %v3986, 7
        %v3988 = vsub.s32 %v3985, %v3987
        %v3989 = vrot.slane %v3981, %v3988
        %v3991 = vunpack.c.l.s4 1966171168
        %v3992 = vunpack.c.0.s8 %v3991
        %v3993 = vlaneseq
        %v3994 = vshrl.u32 %v3993, 7
        %v3995 = vsub.s32 %v3992, %v3994
        %v3996 = vrot.slane %v3982, %v3995
        %v3997 = vcombine.low %v3989, %v3996
        %v3998 = vcombine.low %v2434, %v2448
        %v3999 = vcombine.low %v2449, %v2450
        %v4000 = vcombine.low %v2441, %v2474
        %v4001 = vcombine.low %v2488, %v2496
        %v4003 = vunpack.c.l.s4 1966171168
        %v4004 = vunpack.c.0.s8 %v4003
        %v4005 = vlaneseq
        %v4006 = vshrl.u32 %v4005, 7
        %v4007 = vsub.s32 %v4004, %v4006
        %v4008 = vrot.slane %v3998, %v4007
        %v4010 = vunpack.c.l.s4 1966171168
        %v4011 = vunpack.c.0.s8 %v4010
        %v4012 = vlaneseq
        %v4013 = vshrl.u32 %v4012, 7
        %v4014 = vsub.s32 %v4011, %v4013
        %v4015 = vrot.slane %v3999, %v4014
        %v4017 = vunpack.c.l.s4 1966171168
        %v4018 = vunpack.c.0.s8 %v4017
        %v4019 = vlaneseq
        %v4020 = vshrl.u32 %v4019, 7
        %v4021 = vsub.s32 %v4018, %v4020
        %v4022 = vrot.slane %v4000, %v4021
        %v4024 = vunpack.c.l.s4 1966171168
        %v4025 = vunpack.c.0.s8 %v4024
        %v4026 = vlaneseq
        %v4027 = vshrl.u32 %v4026, 7
        %v4028 = vsub.s32 %v4025, %v4027
        %v4029 = vrot.slane %v4001, %v4028
        %v4030 = vcombine.low %v4008, %v4015
        %v4031 = vcombine.low %v4022, %v4029
        %v4033 = vunpack.c.l.s4 1966171168
        %v4034 = vunpack.c.0.s8 %v4033
        %v4035 = vlaneseq
        %v4036 = vshrl.u32 %v4035, 7
        %v4037 = vsub.s32 %v4034, %v4036
        %v4038 = vrot.slane %v4030, %v4037
        %v4040 = vunpack.c.l.s4 1966171168
        %v4041 = vunpack.c.0.s8 %v4040
        %v4042 = vlaneseq
        %v4043 = vshrl.u32 %v4042, 7
        %v4044 = vsub.s32 %v4041, %v4043
        %v4045 = vrot.slane %v4031, %v4044
        %v4046 = vcombine.low %v4038, %v4045
        %v4047 = vcombine.low %v2498, %v2481
        %v4048 = vcombine.low %v2495, %v2497
        %v4049 = vcombine.low %v2499, %v2522
        %v4050 = vcombine.low %v2536, %v2537
        %v4052 = vunpack.c.l.s4 1966171168
        %v4053 = vunpack.c.0.s8 %v4052
        %v4054 = vlaneseq
        %v4055 = vshrl.u32 %v4054, 7
        %v4056 = vsub.s32 %v4053, %v4055
        %v4057 = vrot.slane %v4047, %v4056
        %v4059 = vunpack.c.l.s4 1966171168
        %v4060 = vunpack.c.0.s8 %v4059
        %v4061 = vlaneseq
        %v4062 = vshrl.u32 %v4061, 7
        %v4063 = vsub.s32 %v4060, %v4062
        %v4064 = vrot.slane %v4048, %v4063
        %v4066 = vunpack.c.l.s4 1966171168
        %v4067 = vunpack.c.0.s8 %v4066
        %v4068 = vlaneseq
        %v4069 = vshrl.u32 %v4068, 7
        %v4070 = vsub.s32 %v4067, %v4069
        %v4071 = vrot.slane %v4049, %v4070
        %v4073 = vunpack.c.l.s4 1966171168
        %v4074 = vunpack.c.0.s8 %v4073
        %v4075 = vlaneseq
        %v4076 = vshrl.u32 %v4075, 7
        %v4077 = vsub.s32 %v4074, %v4076
        %v4078 = vrot.slane %v4050, %v4077
        %v4079 = vcombine.low %v4057, %v4064
        %v4080 = vcombine.low %v4071, %v4078
        %v4082 = vunpack.c.l.s4 1966171168
        %v4083 = vunpack.c.0.s8 %v4082
        %v4084 = vlaneseq
        %v4085 = vshrl.u32 %v4084, 7
        %v4086 = vsub.s32 %v4083, %v4085
        %v4087 = vrot.slane %v4079, %v4086
        %v4089 = vunpack.c.l.s4 1966171168
        %v4090 = vunpack.c.0.s8 %v4089
        %v4091 = vlaneseq
        %v4092 = vshrl.u32 %v4091, 7
        %v4093 = vsub.s32 %v4090, %v4092
        %v4094 = vrot.slane %v4080, %v4093
        %v4095 = vcombine.low %v4087, %v4094
        %v4096 = vcombine.low %v2538, %v2529
        %v4097 = vcombine.low %v2562, %v2576
        %v4098 = vcombine.low %v2584, %v2586
        %v4099 = vcombine.low %v2569, %v2583
        %v4101 = vunpack.c.l.s4 1966171168
        %v4102 = vunpack.c.0.s8 %v4101
        %v4103 = vlaneseq
        %v4104 = vshrl.u32 %v4103, 7
        %v4105 = vsub.s32 %v4102, %v4104
        %v4106 = vrot.slane %v4096, %v4105
        %v4108 = vunpack.c.l.s4 1966171168
        %v4109 = vunpack.c.0.s8 %v4108
        %v4110 = vlaneseq
        %v4111 = vshrl.u32 %v4110, 7
        %v4112 = vsub.s32 %v4109, %v4111
        %v4113 = vrot.slane %v4097, %v4112
        %v4115 = vunpack.c.l.s4 1966171168
        %v4116 = vunpack.c.0.s8 %v4115
        %v4117 = vlaneseq
        %v4118 = vshrl.u32 %v4117, 7
        %v4119 = vsub.s32 %v4116, %v4118
        %v4120 = vrot.slane %v4098, %v4119
        %v4122 = vunpack.c.l.s4 1966171168
        %v4123 = vunpack.c.0.s8 %v4122
        %v4124 = vlaneseq
        %v4125 = vshrl.u32 %v4124, 7
        %v4126 = vsub.s32 %v4123, %v4125
        %v4127 = vrot.slane %v4099, %v4126
        %v4128 = vcombine.low %v4106, %v4113
        %v4129 = vcombine.low %v4120, %v4127
        %v4131 = vunpack.c.l.s4 1966171168
        %v4132 = vunpack.c.0.s8 %v4131
        %v4133 = vlaneseq
        %v4134 = vshrl.u32 %v4133, 7
        %v4135 = vsub.s32 %v4132, %v4134
        %v4136 = vrot.slane %v4128, %v4135
        %v4138 = vunpack.c.l.s4 1966171168
        %v4139 = vunpack.c.0.s8 %v4138
        %v4140 = vlaneseq
        %v4141 = vshrl.u32 %v4140, 7
        %v4142 = vsub.s32 %v4139, %v4141
        %v4143 = vrot.slane %v4129, %v4142
        %v4144 = vcombine.low %v4136, %v4143
        %v4145 = vcombine.low %v2585, %v2587
        %v4146 = vcombine.low %v2610, %v2624
        %v4147 = vcombine.low %v2625, %v2626
        %v4148 = vcombine.low %v2617, %v2650
        %v4150 = vunpack.c.l.s4 1966171168
        %v4151 = vunpack.c.0.s8 %v4150
        %v4152 = vlaneseq
        %v4153 = vshrl.u32 %v4152, 7
        %v4154 = vsub.s32 %v4151, %v4153
        %v4155 = vrot.slane %v4145, %v4154
        %v4157 = vunpack.c.l.s4 1966171168
        %v4158 = vunpack.c.0.s8 %v4157
        %v4159 = vlaneseq
        %v4160 = vshrl.u32 %v4159, 7
        %v4161 = vsub.s32 %v4158, %v4160
        %v4162 = vrot.slane %v4146, %v4161
        %v4164 = vunpack.c.l.s4 1966171168
        %v4165 = vunpack.c.0.s8 %v4164
        %v4166 = vlaneseq
        %v4167 = vshrl.u32 %v4166, 7
        %v4168 = vsub.s32 %v4165, %v4167
        %v4169 = vrot.slane %v4147, %v4168
        %v4171 = vunpack.c.l.s4 1966171168
        %v4172 = vunpack.c.0.s8 %v4171
        %v4173 = vlaneseq
        %v4174 = vshrl.u32 %v4173, 7
        %v4175 = vsub.s32 %v4172, %v4174
        %v4176 = vrot.slane %v4148, %v4175
        %v4177 = vcombine.low %v4155, %v4162
        %v4178 = vcombine.low %v4169, %v4176
        %v4180 = vunpack.c.l.s4 1966171168
        %v4181 = vunpack.c.0.s8 %v4180
        %v4182 = vlaneseq
        %v4183 = vshrl.u32 %v4182, 7
        %v4184 = vsub.s32 %v4181, %v4183
        %v4185 = vrot.slane %v4177, %v4184
        %v4187 = vunpack.c.l.s4 1966171168
        %v4188 = vunpack.c.0.s8 %v4187
        %v4189 = vlaneseq
        %v4190 = vshrl.u32 %v4189, 7
        %v4191 = vsub.s32 %v4188, %v4190
        %v4192 = vrot.slane %v4178, %v4191
        %v4193 = vcombine.low %v4185, %v4192
        %v4194 = vcombine.low %v2664, %v2672
        %v4195 = vcombine.low %v2674, %v2657
        %v4196 = vcombine.low %v2671, %v2673
        %v4197 = vcombine.low %v2675, %v2698
        %v4199 = vunpack.c.l.s4 1966171168
        %v4200 = vunpack.c.0.s8 %v4199
        %v4201 = vlaneseq
        %v4202 = vshrl.u32 %v4201, 7
        %v4203 = vsub.s32 %v4200, %v4202
        %v4204 = vrot.slane %v4194, %v4203
        %v4206 = vunpack.c.l.s4 1966171168
        %v4207 = vunpack.c.0.s8 %v4206
        %v4208 = vlaneseq
        %v4209 = vshrl.u32 %v4208, 7
        %v4210 = vsub.s32 %v4207, %v4209
        %v4211 = vrot.slane %v4195, %v4210
        %v4213 = vunpack.c.l.s4 1966171168
        %v4214 = vunpack.c.0.s8 %v4213
        %v4215 = vlaneseq
        %v4216 = vshrl.u32 %v4215, 7
        %v4217 = vsub.s32 %v4214, %v4216
        %v4218 = vrot.slane %v4196, %v4217
        %v4220 = vunpack.c.l.s4 1966171168
        %v4221 = vunpack.c.0.s8 %v4220
        %v4222 = vlaneseq
        %v4223 = vshrl.u32 %v4222, 7
        %v4224 = vsub.s32 %v4221, %v4223
        %v4225 = vrot.slane %v4197, %v4224
        %v4226 = vcombine.low %v4204, %v4211
        %v4227 = vcombine.low %v4218, %v4225
        %v4229 = vunpack.c.l.s4 1966171168
        %v4230 = vunpack.c.0.s8 %v4229
        %v4231 = vlaneseq
        %v4232 = vshrl.u32 %v4231, 7
        %v4233 = vsub.s32 %v4230, %v4232
        %v4234 = vrot.slane %v4226, %v4233
        %v4236 = vunpack.c.l.s4 1966171168
        %v4237 = vunpack.c.0.s8 %v4236
        %v4238 = vlaneseq
        %v4239 = vshrl.u32 %v4238, 7
        %v4240 = vsub.s32 %v4237, %v4239
        %v4241 = vrot.slane %v4227, %v4240
        %v4242 = vcombine.low %v4234, %v4241
        %v4243 = vcombine.low %v2712, %v2713
        %v4244 = vcombine.low %v2714, %v2705
        %v4245 = vcombine.low %v2738, %v2752
        %v4246 = vcombine.low %v2760, %v2762
        %v4248 = vunpack.c.l.s4 1966171168
        %v4249 = vunpack.c.0.s8 %v4248
        %v4250 = vlaneseq
        %v4251 = vshrl.u32 %v4250, 7
        %v4252 = vsub.s32 %v4249, %v4251
        %v4253 = vrot.slane %v4243, %v4252
        %v4255 = vunpack.c.l.s4 1966171168
        %v4256 = vunpack.c.0.s8 %v4255
        %v4257 = vlaneseq
        %v4258 = vshrl.u32 %v4257, 7
        %v4259 = vsub.s32 %v4256, %v4258
        %v4260 = vrot.slane %v4244, %v4259
        %v4262 = vunpack.c.l.s4 1966171168
        %v4263 = vunpack.c.0.s8 %v4262
        %v4264 = vlaneseq
        %v4265 = vshrl.u32 %v4264, 7
        %v4266 = vsub.s32 %v4263, %v4265
        %v4267 = vrot.slane %v4245, %v4266
        %v4269 = vunpack.c.l.s4 1966171168
        %v4270 = vunpack.c.0.s8 %v4269
        %v4271 = vlaneseq
        %v4272 = vshrl.u32 %v4271, 7
        %v4273 = vsub.s32 %v4270, %v4272
        %v4274 = vrot.slane %v4246, %v4273
        %v4275 = vcombine.low %v4253, %v4260
        %v4276 = vcombine.low %v4267, %v4274
        %v4278 = vunpack.c.l.s4 1966171168
        %v4279 = vunpack.c.0.s8 %v4278
        %v4280 = vlaneseq
        %v4281 = vshrl.u32 %v4280, 7
        %v4282 = vsub.s32 %v4279, %v4281
        %v4283 = vrot.slane %v4275, %v4282
        %v4285 = vunpack.c.l.s4 1966171168
        %v4286 = vunpack.c.0.s8 %v4285
        %v4287 = vlaneseq
        %v4288 = vshrl.u32 %v4287, 7
        %v4289 = vsub.s32 %v4286, %v4288
        %v4290 = vrot.slane %v4276, %v4289
        %v4291 = vcombine.low %v4283, %v4290
        %v4292 = vcombine.low %v2745, %v2759
        %v4293 = vcombine.low %v2761, %v2763
        %v4294 = vcombine.low %v2786, %v2800
        %v4295 = vcombine.low %v2801, %v2802
        %v4297 = vunpack.c.l.s4 1966171168
        %v4298 = vunpack.c.0.s8 %v4297
        %v4299 = vlaneseq
        %v4300 = vshrl.u32 %v4299, 7
        %v4301 = vsub.s32 %v4298, %v4300
        %v4302 = vrot.slane %v4292, %v4301
        %v4304 = vunpack.c.l.s4 1966171168
        %v4305 = vunpack.c.0.s8 %v4304
        %v4306 = vlaneseq
        %v4307 = vshrl.u32 %v4306, 7
        %v4308 = vsub.s32 %v4305, %v4307
        %v4309 = vrot.slane %v4293, %v4308
        %v4311 = vunpack.c.l.s4 1966171168
        %v4312 = vunpack.c.0.s8 %v4311
        %v4313 = vlaneseq
        %v4314 = vshrl.u32 %v4313, 7
        %v4315 = vsub.s32 %v4312, %v4314
        %v4316 = vrot.slane %v4294, %v4315
        %v4318 = vunpack.c.l.s4 1966171168
        %v4319 = vunpack.c.0.s8 %v4318
        %v4320 = vlaneseq
        %v4321 = vshrl.u32 %v4320, 7
        %v4322 = vsub.s32 %v4319, %v4321
        %v4323 = vrot.slane %v4295, %v4322
        %v4324 = vcombine.low %v4302, %v4309
        %v4325 = vcombine.low %v4316, %v4323
        %v4327 = vunpack.c.l.s4 1966171168
        %v4328 = vunpack.c.0.s8 %v4327
        %v4329 = vlaneseq
        %v4330 = vshrl.u32 %v4329, 7
        %v4331 = vsub.s32 %v4328, %v4330
        %v4332 = vrot.slane %v4324, %v4331
        %v4334 = vunpack.c.l.s4 1966171168
        %v4335 = vunpack.c.0.s8 %v4334
        %v4336 = vlaneseq
        %v4337 = vshrl.u32 %v4336, 7
        %v4338 = vsub.s32 %v4335, %v4337
        %v4339 = vrot.slane %v4325, %v4338
        %v4340 = vcombine.low %v4332, %v4339
        %v4341 = vcombine.low %v2793, %v2826
        %v4342 = vcombine.low %v2840, %v2848
        %v4343 = vcombine.low %v2850, %v2833
        %v4344 = vcombine.low %v2847, %v2849
        %v4346 = vunpack.c.l.s4 1966171168
        %v4347 = vunpack.c.0.s8 %v4346
        %v4348 = vlaneseq
        %v4349 = vshrl.u32 %v4348, 7
        %v4350 = vsub.s32 %v4347, %v4349
        %v4351 = vrot.slane %v4341, %v4350
        %v4353 = vunpack.c.l.s4 1966171168
        %v4354 = vunpack.c.0.s8 %v4353
        %v4355 = vlaneseq
        %v4356 = vshrl.u32 %v4355, 7
        %v4357 = vsub.s32 %v4354, %v4356
        %v4358 = vrot.slane %v4342, %v4357
        %v4360 = vunpack.c.l.s4 1966171168
        %v4361 = vunpack.c.0.s8 %v4360
        %v4362 = vlaneseq
        %v4363 = vshrl.u32 %v4362, 7
        %v4364 = vsub.s32 %v4361, %v4363
        %v4365 = vrot.slane %v4343, %v4364
        %v4367 = vunpack.c.l.s4 1966171168
        %v4368 = vunpack.c.0.s8 %v4367
        %v4369 = vlaneseq
        %v4370 = vshrl.u32 %v4369, 7
        %v4371 = vsub.s32 %v4368, %v4370
        %v4372 = vrot.slane %v4344, %v4371
        %v4373 = vcombine.low %v4351, %v4358
        %v4374 = vcombine.low %v4365, %v4372
        %v4376 = vunpack.c.l.s4 1966171168
        %v4377 = vunpack.c.0.s8 %v4376
        %v4378 = vlaneseq
        %v4379 = vshrl.u32 %v4378, 7
        %v4380 = vsub.s32 %v4377, %v4379
        %v4381 = vrot.slane %v4373, %v4380
        %v4383 = vunpack.c.l.s4 1966171168
        %v4384 = vunpack.c.0.s8 %v4383
        %v4385 = vlaneseq
        %v4386 = vshrl.u32 %v4385, 7
        %v4387 = vsub.s32 %v4384, %v4386
        %v4388 = vrot.slane %v4374, %v4387
        %v4389 = vcombine.low %v4381, %v4388
        %v4390 = vcombine.low %v2851, %v2874
        %v4391 = vcombine.low %v2888, %v2889
        %v4392 = vcombine.low %v2890, %v2881
        %v4393 = vcombine.low %v2914, %v2928
        %v4395 = vunpack.c.l.s4 1966171168
        %v4396 = vunpack.c.0.s8 %v4395
        %v4397 = vlaneseq
        %v4398 = vshrl.u32 %v4397, 7
        %v4399 = vsub.s32 %v4396, %v4398
        %v4400 = vrot.slane %v4390, %v4399
        %v4402 = vunpack.c.l.s4 1966171168
        %v4403 = vunpack.c.0.s8 %v4402
        %v4404 = vlaneseq
        %v4405 = vshrl.u32 %v4404, 7
        %v4406 = vsub.s32 %v4403, %v4405
        %v4407 = vrot.slane %v4391, %v4406
        %v4409 = vunpack.c.l.s4 1966171168
        %v4410 = vunpack.c.0.s8 %v4409
        %v4411 = vlaneseq
        %v4412 = vshrl.u32 %v4411, 7
        %v4413 = vsub.s32 %v4410, %v4412
        %v4414 = vrot.slane %v4392, %v4413
        %v4416 = vunpack.c.l.s4 1966171168
        %v4417 = vunpack.c.0.s8 %v4416
        %v4418 = vlaneseq
        %v4419 = vshrl.u32 %v4418, 7
        %v4420 = vsub.s32 %v4417, %v4419
        %v4421 = vrot.slane %v4393, %v4420
        %v4422 = vcombine.low %v4400, %v4407
        %v4423 = vcombine.low %v4414, %v4421
        %v4425 = vunpack.c.l.s4 1966171168
        %v4426 = vunpack.c.0.s8 %v4425
        %v4427 = vlaneseq
        %v4428 = vshrl.u32 %v4427, 7
        %v4429 = vsub.s32 %v4426, %v4428
        %v4430 = vrot.slane %v4422, %v4429
        %v4432 = vunpack.c.l.s4 1966171168
        %v4433 = vunpack.c.0.s8 %v4432
        %v4434 = vlaneseq
        %v4435 = vshrl.u32 %v4434, 7
        %v4436 = vsub.s32 %v4433, %v4435
        %v4437 = vrot.slane %v4423, %v4436
        %v4438 = vcombine.low %v4430, %v4437
        %v4439 = vcombine.low %v2936, %v2938
        %v4440 = vcombine.low %v2921, %v2935
        %v4441 = vcombine.low %v2937, %v2939
        %v4442 = vcombine.low %v2962, %v2976
        %v4444 = vunpack.c.l.s4 1966171168
        %v4445 = vunpack.c.0.s8 %v4444
        %v4446 = vlaneseq
        %v4447 = vshrl.u32 %v4446, 7
        %v4448 = vsub.s32 %v4445, %v4447
        %v4449 = vrot.slane %v4439, %v4448
        %v4451 = vunpack.c.l.s4 1966171168
        %v4452 = vunpack.c.0.s8 %v4451
        %v4453 = vlaneseq
        %v4454 = vshrl.u32 %v4453, 7
        %v4455 = vsub.s32 %v4452, %v4454
        %v4456 = vrot.slane %v4440, %v4455
        %v4458 = vunpack.c.l.s4 1966171168
        %v4459 = vunpack.c.0.s8 %v4458
        %v4460 = vlaneseq
        %v4461 = vshrl.u32 %v4460, 7
        %v4462 = vsub.s32 %v4459, %v4461
        %v4463 = vrot.slane %v4441, %v4462
        %v4465 = vunpack.c.l.s4 1966171168
        %v4466 = vunpack.c.0.s8 %v4465
        %v4467 = vlaneseq
        %v4468 = vshrl.u32 %v4467, 7
        %v4469 = vsub.s32 %v4466, %v4468
        %v4470 = vrot.slane %v4442, %v4469
        %v4471 = vcombine.low %v4449, %v4456
        %v4472 = vcombine.low %v4463, %v4470
        %v4474 = vunpack.c.l.s4 1966171168
        %v4475 = vunpack.c.0.s8 %v4474
        %v4476 = vlaneseq
        %v4477 = vshrl.u32 %v4476, 7
        %v4478 = vsub.s32 %v4475, %v4477
        %v4479 = vrot.slane %v4471, %v4478
        %v4481 = vunpack.c.l.s4 1966171168
        %v4482 = vunpack.c.0.s8 %v4481
        %v4483 = vlaneseq
        %v4484 = vshrl.u32 %v4483, 7
        %v4485 = vsub.s32 %v4482, %v4484
        %v4486 = vrot.slane %v4472, %v4485
        %v4487 = vcombine.low %v4479, %v4486
        %v4488 = vcombine.low %v2977, %v2978
        %v4490 = vunpack.c.l.s4 1966171168
        %v4491 = vunpack.c.0.s8 %v4490
        %v4492 = vlaneseq
        %v4493 = vshrl.u32 %v4492, 7
        %v4494 = vsub.s32 %v4491, %v4493
        %v4495 = vrot.slane %v4488, %v4494
        %v4497 = vunpack.c.l.s4 1966171168
        %v4498 = vunpack.c.0.s8 %v4497
        %v4499 = vlaneseq
        %v4500 = vshrl.u32 %v4499, 7
        %v4501 = vsub.s32 %v4498, %v4500
        %v4502 = vrot.slane %v2969, %v4501
        %v4503 = vcombine.low %v4495, %v4502
        %v4505 = vunpack.c.l.s4 1966171168
        %v4506 = vunpack.c.0.s8 %v4505
        %v4507 = vlaneseq
        %v4508 = vshrl.u32 %v4507, 7
        %v4509 = vsub.s32 %v4506, %v4508
        %v4510 = vrot.slane %v4503, %v4509
        %v4523 = vcombine.low %v2400, %v2408
        %v4524 = vcombine.low %v2410, %v2393
        %v4525 = vcombine.low %v2407, %v2409
        %v4526 = vcombine.low %v2411, %v2434
        %v4528 = vunpack.c.l.s4 1966171168
        %v4529 = vunpack.c.0.s8 %v4528
        %v4530 = vlaneseq
        %v4531 = vshrl.u32 %v4530, 7
        %v4532 = vsub.s32 %v4529, %v4531
        %v4533 = vrot.slane %v4523, %v4532
        %v4535 = vunpack.c.l.s4 1966171168
        %v4536 = vunpack.c.0.s8 %v4535
        %v4537 = vlaneseq
        %v4538 = vshrl.u32 %v4537, 7
        %v4539 = vsub.s32 %v4536, %v4538
        %v4540 = vrot.slane %v4524, %v4539
        %v4542 = vunpack.c.l.s4 1966171168
        %v4543 = vunpack.c.0.s8 %v4542
        %v4544 = vlaneseq
        %v4545 = vshrl.u32 %v4544, 7
        %v4546 = vsub.s32 %v4543, %v4545
        %v4547 = vrot.slane %v4525, %v4546
        %v4549 = vunpack.c.l.s4 1966171168
        %v4550 = vunpack.c.0.s8 %v4549
        %v4551 = vlaneseq
        %v4552 = vshrl.u32 %v4551, 7
        %v4553 = vsub.s32 %v4550, %v4552
        %v4554 = vrot.slane %v4526, %v4553
        %v4555 = vcombine.low %v4533, %v4540
        %v4556 = vcombine.low %v4547, %v4554
        %v4558 = vunpack.c.l.s4 1966171168
        %v4559 = vunpack.c.0.s8 %v4558
        %v4560 = vlaneseq
        %v4561 = vshrl.u32 %v4560, 7
        %v4562 = vsub.s32 %v4559, %v4561
        %v4563 = vrot.slane %v4555, %v4562
        %v4565 = vunpack.c.l.s4 1966171168
        %v4566 = vunpack.c.0.s8 %v4565
        %v4567 = vlaneseq
        %v4568 = vshrl.u32 %v4567, 7
        %v4569 = vsub.s32 %v4566, %v4568
        %v4570 = vrot.slane %v4556, %v4569
        %v4571 = vcombine.low %v4563, %v4570
        %v4572 = vcombine.low %v2448, %v2449
        %v4573 = vcombine.low %v2450, %v2441
        %v4574 = vcombine.low %v2986, %v2488
        %v4575 = vcombine.low %v2496, %v2498
        %v4577 = vunpack.c.l.s4 1966171168
        %v4578 = vunpack.c.0.s8 %v4577
        %v4579 = vlaneseq
        %v4580 = vshrl.u32 %v4579, 7
        %v4581 = vsub.s32 %v4578, %v4580
        %v4582 = vrot.slane %v4572, %v4581
        %v4584 = vunpack.c.l.s4 1966171168
        %v4585 = vunpack.c.0.s8 %v4584
        %v4586 = vlaneseq
        %v4587 = vshrl.u32 %v4586, 7
        %v4588 = vsub.s32 %v4585, %v4587
        %v4589 = vrot.slane %v4573, %v4588
        %v4591 = vunpack.c.l.s4 1966171168
        %v4592 = vunpack.c.0.s8 %v4591
        %v4593 = vlaneseq
        %v4594 = vshrl.u32 %v4593, 7
        %v4595 = vsub.s32 %v4592, %v4594
        %v4596 = vrot.slane %v4574, %v4595
        %v4598 = vunpack.c.l.s4 1966171168
        %v4599 = vunpack.c.0.s8 %v4598
        %v4600 = vlaneseq
        %v4601 = vshrl.u32 %v4600, 7
        %v4602 = vsub.s32 %v4599, %v4601
        %v4603 = vrot.slane %v4575, %v4602
        %v4604 = vcombine.low %v4582, %v4589
        %v4605 = vcombine.low %v4596, %v4603
        %v4607 = vunpack.c.l.s4 1966171168
        %v4608 = vunpack.c.0.s8 %v4607
        %v4609 = vlaneseq
        %v4610 = vshrl.u32 %v4609, 7
        %v4611 = vsub.s32 %v4608, %v4610
        %v4612 = vrot.slane %v4604, %v4611
        %v4614 = vunpack.c.l.s4 1966171168
        %v4615 = vunpack.c.0.s8 %v4614
        %v4616 = vlaneseq
        %v4617 = vshrl.u32 %v4616, 7
        %v4618 = vsub.s32 %v4615, %v4617
        %v4619 = vrot.slane %v4605, %v4618
        %v4620 = vcombine.low %v4612, %v4619
        %v4621 = vcombine.low %v2481, %v2495
        %v4622 = vcombine.low %v2497, %v2499
        %v4623 = vcombine.low %v2522, %v2536
        %v4624 = vcombine.low %v2537, %v2538
        %v4626 = vunpack.c.l.s4 1966171168
        %v4627 = vunpack.c.0.s8 %v4626
        %v4628 = vlaneseq
        %v4629 = vshrl.u32 %v4628, 7
        %v4630 = vsub.s32 %v4627, %v4629
        %v4631 = vrot.slane %v4621, %v4630
        %v4633 = vunpack.c.l.s4 1966171168
        %v4634 = vunpack.c.0.s8 %v4633
        %v4635 = vlaneseq
        %v4636 = vshrl.u32 %v4635, 7
        %v4637 = vsub.s32 %v4634, %v4636
        %v4638 = vrot.slane %v4622, %v4637
        %v4640 = vunpack.c.l.s4 1966171168
        %v4641 = vunpack.c.0.s8 %v4640
        %v4642 = vlaneseq
        %v4643 = vshrl.u32 %v4642, 7
        %v4644 = vsub.s32 %v4641, %v4643
        %v4645 = vrot.slane %v4623, %v4644
        %v4647 = vunpack.c.l.s4 1966171168
        %v4648 = vunpack.c.0.s8 %v4647
        %v4649 = vlaneseq
        %v4650 = vshrl.u32 %v4649, 7
        %v4651 = vsub.s32 %v4648, %v4650
        %v4652 = vrot.slane %v4624, %v4651
        %v4653 = vcombine.low %v4631, %v4638
        %v4654 = vcombine.low %v4645, %v4652
        %v4656 = vunpack.c.l.s4 1966171168
        %v4657 = vunpack.c.0.s8 %v4656
        %v4658 = vlaneseq
        %v4659 = vshrl.u32 %v4658, 7
        %v4660 = vsub.s32 %v4657, %v4659
        %v4661 = vrot.slane %v4653, %v4660
        %v4663 = vunpack.c.l.s4 1966171168
        %v4664 = vunpack.c.0.s8 %v4663
        %v4665 = vlaneseq
        %v4666 = vshrl.u32 %v4665, 7
        %v4667 = vsub.s32 %v4664, %v4666
        %v4668 = vrot.slane %v4654, %v4667
        %v4669 = vcombine.low %v4661, %v4668
        %v4670 = vcombine.low %v2529, %v2994
        %v4671 = vcombine.low %v2576, %v2584
        %v4672 = vcombine.low %v2586, %v2569
        %v4673 = vcombine.low %v2583, %v2585
        %v4675 = vunpack.c.l.s4 1966171168
        %v4676 = vunpack.c.0.s8 %v4675
        %v4677 = vlaneseq
        %v4678 = vshrl.u32 %v4677, 7
        %v4679 = vsub.s32 %v4676, %v4678
        %v4680 = vrot.slane %v4670, %v4679
        %v4682 = vunpack.c.l.s4 1966171168
        %v4683 = vunpack.c.0.s8 %v4682
        %v4684 = vlaneseq
        %v4685 = vshrl.u32 %v4684, 7
        %v4686 = vsub.s32 %v4683, %v4685
        %v4687 = vrot.slane %v4671, %v4686
        %v4689 = vunpack.c.l.s4 1966171168
        %v4690 = vunpack.c.0.s8 %v4689
        %v4691 = vlaneseq
        %v4692 = vshrl.u32 %v4691, 7
        %v4693 = vsub.s32 %v4690, %v4692
        %v4694 = vrot.slane %v4672, %v4693
        %v4696 = vunpack.c.l.s4 1966171168
        %v4697 = vunpack.c.0.s8 %v4696
        %v4698 = vlaneseq
        %v4699 = vshrl.u32 %v4698, 7
        %v4700 = vsub.s32 %v4697, %v4699
        %v4701 = vrot.slane %v4673, %v4700
        %v4702 = vcombine.low %v4680, %v4687
        %v4703 = vcombine.low %v4694, %v4701
        %v4705 = vunpack.c.l.s4 1966171168
        %v4706 = vunpack.c.0.s8 %v4705
        %v4707 = vlaneseq
        %v4708 = vshrl.u32 %v4707, 7
        %v4709 = vsub.s32 %v4706, %v4708
        %v4710 = vrot.slane %v4702, %v4709
        %v4712 = vunpack.c.l.s4 1966171168
        %v4713 = vunpack.c.0.s8 %v4712
        %v4714 = vlaneseq
        %v4715 = vshrl.u32 %v4714, 7
        %v4716 = vsub.s32 %v4713, %v4715
        %v4717 = vrot.slane %v4703, %v4716
        %v4718 = vcombine.low %v4710, %v4717
        %v4719 = vcombine.low %v2587, %v2610
        %v4720 = vcombine.low %v2624, %v2625
        %v4721 = vcombine.low %v2626, %v2617
        %v4722 = vcombine.low %v3002, %v2664
        %v4724 = vunpack.c.l.s4 1966171168
        %v4725 = vunpack.c.0.s8 %v4724
        %v4726 = vlaneseq
        %v4727 = vshrl.u32 %v4726, 7
        %v4728 = vsub.s32 %v4725, %v4727
        %v4729 = vrot.slane %v4719, %v4728
        %v4731 = vunpack.c.l.s4 1966171168
        %v4732 = vunpack.c.0.s8 %v4731
        %v4733 = vlaneseq
        %v4734 = vshrl.u32 %v4733, 7
        %v4735 = vsub.s32 %v4732, %v4734
        %v4736 = vrot.slane %v4720, %v4735
        %v4738 = vunpack.c.l.s4 1966171168
        %v4739 = vunpack.c.0.s8 %v4738
        %v4740 = vlaneseq
        %v4741 = vshrl.u32 %v4740, 7
        %v4742 = vsub.s32 %v4739, %v4741
        %v4743 = vrot.slane %v4721, %v4742
        %v4745 = vunpack.c.l.s4 1966171168
        %v4746 = vunpack.c.0.s8 %v4745
        %v4747 = vlaneseq
        %v4748 = vshrl.u32 %v4747, 7
        %v4749 = vsub.s32 %v4746, %v4748
        %v4750 = vrot.slane %v4722, %v4749
        %v4751 = vcombine.low %v4729, %v4736
        %v4752 = vcombine.low %v4743, %v4750
        %v4754 = vunpack.c.l.s4 1966171168
        %v4755 = vunpack.c.0.s8 %v4754
        %v4756 = vlaneseq
        %v4757 = vshrl.u32 %v4756, 7
        %v4758 = vsub.s32 %v4755, %v4757
        %v4759 = vrot.slane %v4751, %v4758
        %v4761 = vunpack.c.l.s4 1966171168
        %v4762 = vunpack.c.0.s8 %v4761
        %v4763 = vlaneseq
        %v4764 = vshrl.u32 %v4763, 7
        %v4765 = vsub.s32 %v4762, %v4764
        %v4766 = vrot.slane %v4752, %v4765
        %v4767 = vcombine.low %v4759, %v4766
        %v4768 = vcombine.low %v2672, %v2674
        %v4769 = vcombine.low %v2657, %v2671
        %v4770 = vcombine.low %v2673, %v2675
        %v4771 = vcombine.low %v2698, %v2712
        %v4773 = vunpack.c.l.s4 1966171168
        %v4774 = vunpack.c.0.s8 %v4773
        %v4775 = vlaneseq
        %v4776 = vshrl.u32 %v4775, 7
        %v4777 = vsub.s32 %v4774, %v4776
        %v4778 = vrot.slane %v4768, %v4777
        %v4780 = vunpack.c.l.s4 1966171168
        %v4781 = vunpack.c.0.s8 %v4780
        %v4782 = vlaneseq
        %v4783 = vshrl.u32 %v4782, 7
        %v4784 = vsub.s32 %v4781, %v4783
        %v4785 = vrot.slane %v4769, %v4784
        %v4787 = vunpack.c.l.s4 1966171168
        %v4788 = vunpack.c.0.s8 %v4787
        %v4789 = vlaneseq
        %v4790 = vshrl.u32 %v4789, 7
        %v4791 = vsub.s32 %v4788, %v4790
        %v4792 = vrot.slane %v4770, %v4791
        %v4794 = vunpack.c.l.s4 1966171168
        %v4795 = vunpack.c.0.s8 %v4794
        %v4796 = vlaneseq
        %v4797 = vshrl.u32 %v4796, 7
        %v4798 = vsub.s32 %v4795, %v4797
        %v4799 = vrot.slane %v4771, %v4798
        %v4800 = vcombine.low %v4778, %v4785
        %v4801 = vcombine.low %v4792, %v4799
        %v4803 = vunpack.c.l.s4 1966171168
        %v4804 = vunpack.c.0.s8 %v4803
        %v4805 = vlaneseq
        %v4806 = vshrl.u32 %v4805, 7
        %v4807 = vsub.s32 %v4804, %v4806
        %v4808 = vrot.slane %v4800, %v4807
        %v4810 = vunpack.c.l.s4 1966171168
        %v4811 = vunpack.c.0.s8 %v4810
        %v4812 = vlaneseq
        %v4813 = vshrl.u32 %v4812, 7
        %v4814 = vsub.s32 %v4811, %v4813
        %v4815 = vrot.slane %v4801, %v4814
        %v4816 = vcombine.low %v4808, %v4815
        %v4817 = vcombine.low %v2713, %v2714
        %v4818 = vcombine.low %v2705, %v3010
        %v4819 = vcombine.low %v2752, %v2760
        %v4820 = vcombine.low %v2762, %v2745
        %v4822 = vunpack.c.l.s4 1966171168
        %v4823 = vunpack.c.0.s8 %v4822
        %v4824 = vlaneseq
        %v4825 = vshrl.u32 %v4824, 7
        %v4826 = vsub.s32 %v4823, %v4825
        %v4827 = vrot.slane %v4817, %v4826
        %v4829 = vunpack.c.l.s4 1966171168
        %v4830 = vunpack.c.0.s8 %v4829
        %v4831 = vlaneseq
        %v4832 = vshrl.u32 %v4831, 7
        %v4833 = vsub.s32 %v4830, %v4832
        %v4834 = vrot.slane %v4818, %v4833
        %v4836 = vunpack.c.l.s4 1966171168
        %v4837 = vunpack.c.0.s8 %v4836
        %v4838 = vlaneseq
        %v4839 = vshrl.u32 %v4838, 7
        %v4840 = vsub.s32 %v4837, %v4839
        %v4841 = vrot.slane %v4819, %v4840
        %v4843 = vunpack.c.l.s4 1966171168
        %v4844 = vunpack.c.0.s8 %v4843
        %v4845 = vlaneseq
        %v4846 = vshrl.u32 %v4845, 7
        %v4847 = vsub.s32 %v4844, %v4846
        %v4848 = vrot.slane %v4820, %v4847
        %v4849 = vcombine.low %v4827, %v4834
        %v4850 = vcombine.low %v4841, %v4848
        %v4852 = vunpack.c.l.s4 1966171168
        %v4853 = vunpack.c.0.s8 %v4852
        %v4854 = vlaneseq
        %v4855 = vshrl.u32 %v4854, 7
        %v4856 = vsub.s32 %v4853, %v4855
        %v4857 = vrot.slane %v4849, %v4856
        %v4859 = vunpack.c.l.s4 1966171168
        %v4860 = vunpack.c.0.s8 %v4859
        %v4861 = vlaneseq
        %v4862 = vshrl.u32 %v4861, 7
        %v4863 = vsub.s32 %v4860, %v4862
        %v4864 = vrot.slane %v4850, %v4863
        %v4865 = vcombine.low %v4857, %v4864
        %v4866 = vcombine.low %v2759, %v2761
        %v4867 = vcombine.low %v2763, %v2786
        %v4868 = vcombine.low %v2800, %v2801
        %v4869 = vcombine.low %v2802, %v2793
        %v4871 = vunpack.c.l.s4 1966171168
        %v4872 = vunpack.c.0.s8 %v4871
        %v4873 = vlaneseq
        %v4874 = vshrl.u32 %v4873, 7
        %v4875 = vsub.s32 %v4872, %v4874
        %v4876 = vrot.slane %v4866, %v4875
        %v4878 = vunpack.c.l.s4 1966171168
        %v4879 = vunpack.c.0.s8 %v4878
        %v4880 = vlaneseq
        %v4881 = vshrl.u32 %v4880, 7
        %v4882 = vsub.s32 %v4879, %v4881
        %v4883 = vrot.slane %v4867, %v4882
        %v4885 = vunpack.c.l.s4 1966171168
        %v4886 = vunpack.c.0.s8 %v4885
        %v4887 = vlaneseq
        %v4888 = vshrl.u32 %v4887, 7
        %v4889 = vsub.s32 %v4886, %v4888
        %v4890 = vrot.slane %v4868, %v4889
        %v4892 = vunpack.c.l.s4 1966171168
        %v4893 = vunpack.c.0.s8 %v4892
        %v4894 = vlaneseq
        %v4895 = vshrl.u32 %v4894, 7
        %v4896 = vsub.s32 %v4893, %v4895
        %v4897 = vrot.slane %v4869, %v4896
        %v4898 = vcombine.low %v4876, %v4883
        %v4899 = vcombine.low %v4890, %v4897
        %v4901 = vunpack.c.l.s4 1966171168
        %v4902 = vunpack.c.0.s8 %v4901
        %v4903 = vlaneseq
        %v4904 = vshrl.u32 %v4903, 7
        %v4905 = vsub.s32 %v4902, %v4904
        %v4906 = vrot.slane %v4898, %v4905
        %v4908 = vunpack.c.l.s4 1966171168
        %v4909 = vunpack.c.0.s8 %v4908
        %v4910 = vlaneseq
        %v4911 = vshrl.u32 %v4910, 7
        %v4912 = vsub.s32 %v4909, %v4911
        %v4913 = vrot.slane %v4899, %v4912
        %v4914 = vcombine.low %v4906, %v4913
        %v4915 = vcombine.low %v3018, %v2840
        %v4916 = vcombine.low %v2848, %v2850
        %v4917 = vcombine.low %v2833, %v2847
        %v4918 = vcombine.low %v2849, %v2851
        %v4920 = vunpack.c.l.s4 1966171168
        %v4921 = vunpack.c.0.s8 %v4920
        %v4922 = vlaneseq
        %v4923 = vshrl.u32 %v4922, 7
        %v4924 = vsub.s32 %v4921, %v4923
        %v4925 = vrot.slane %v4915, %v4924
        %v4927 = vunpack.c.l.s4 1966171168
        %v4928 = vunpack.c.0.s8 %v4927
        %v4929 = vlaneseq
        %v4930 = vshrl.u32 %v4929, 7
        %v4931 = vsub.s32 %v4928, %v4930
        %v4932 = vrot.slane %v4916, %v4931
        %v4934 = vunpack.c.l.s4 1966171168
        %v4935 = vunpack.c.0.s8 %v4934
        %v4936 = vlaneseq
        %v4937 = vshrl.u32 %v4936, 7
        %v4938 = vsub.s32 %v4935, %v4937
        %v4939 = vrot.slane %v4917, %v4938
        %v4941 = vunpack.c.l.s4 1966171168
        %v4942 = vunpack.c.0.s8 %v4941
        %v4943 = vlaneseq
        %v4944 = vshrl.u32 %v4943, 7
        %v4945 = vsub.s32 %v4942, %v4944
        %v4946 = vrot.slane %v4918, %v4945
        %v4947 = vcombine.low %v4925, %v4932
        %v4948 = vcombine.low %v4939, %v4946
        %v4950 = vunpack.c.l.s4 1966171168
        %v4951 = vunpack.c.0.s8 %v4950
        %v4952 = vlaneseq
        %v4953 = vshrl.u32 %v4952, 7
        %v4954 = vsub.s32 %v4951, %v4953
        %v4955 = vrot.slane %v4947, %v4954
        %v4957 = vunpack.c.l.s4 1966171168
        %v4958 = vunpack.c.0.s8 %v4957
        %v4959 = vlaneseq
        %v4960 = vshrl.u32 %v4959, 7
        %v4961 = vsub.s32 %v4958, %v4960
        %v4962 = vrot.slane %v4948, %v4961
        %v4963 = vcombine.low %v4955, %v4962
        %v4964 = vcombine.low %v2874, %v2888
        %v4965 = vcombine.low %v2889, %v2890
        %v4966 = vcombine.low %v2881, %v3026
        %v4967 = vcombine.low %v2928, %v2936
        %v4969 = vunpack.c.l.s4 1966171168
        %v4970 = vunpack.c.0.s8 %v4969
        %v4971 = vlaneseq
        %v4972 = vshrl.u32 %v4971, 7
        %v4973 = vsub.s32 %v4970, %v4972
        %v4974 = vrot.slane %v4964, %v4973
        %v4976 = vunpack.c.l.s4 1966171168
        %v4977 = vunpack.c.0.s8 %v4976
        %v4978 = vlaneseq
        %v4979 = vshrl.u32 %v4978, 7
        %v4980 = vsub.s32 %v4977, %v4979
        %v4981 = vrot.slane %v4965, %v4980
        %v4983 = vunpack.c.l.s4 1966171168
        %v4984 = vunpack.c.0.s8 %v4983
        %v4985 = vlaneseq
        %v4986 = vshrl.u32 %v4985, 7
        %v4987 = vsub.s32 %v4984, %v4986
        %v4988 = vrot.slane %v4966, %v4987
        %v4990 = vunpack.c.l.s4 1966171168
        %v4991 = vunpack.c.0.s8 %v4990
        %v4992 = vlaneseq
        %v4993 = vshrl.u32 %v4992, 7
        %v4994 = vsub.s32 %v4991, %v4993
        %v4995 = vrot.slane %v4967, %v4994
        %v4996 = vcombine.low %v4974, %v4981
        %v4997 = vcombine.low %v4988, %v4995
        %v4999 = vunpack.c.l.s4 1966171168
        %v5000 = vunpack.c.0.s8 %v4999
        %v5001 = vlaneseq
        %v5002 = vshrl.u32 %v5001, 7
        %v5003 = vsub.s32 %v5000, %v5002
        %v5004 = vrot.slane %v4996, %v5003
        %v5006 = vunpack.c.l.s4 1966171168
        %v5007 = vunpack.c.0.s8 %v5006
        %v5008 = vlaneseq
        %v5009 = vshrl.u32 %v5008, 7
        %v5010 = vsub.s32 %v5007, %v5009
        %v5011 = vrot.slane %v4997, %v5010
        %v5012 = vcombine.low %v5004, %v5011
        %v5013 = vcombine.low %v2938, %v2921
        %v5014 = vcombine.low %v2935, %v2937
        %v5015 = vcombine.low %v2939, %v2962
        %v5016 = vcombine.low %v2976, %v2977
        %v5018 = vunpack.c.l.s4 1966171168
        %v5019 = vunpack.c.0.s8 %v5018
        %v5020 = vlaneseq
        %v5021 = vshrl.u32 %v5020, 7
        %v5022 = vsub.s32 %v5019, %v5021
        %v5023 = vrot.slane %v5013, %v5022
        %v5025 = vunpack.c.l.s4 1966171168
        %v5026 = vunpack.c.0.s8 %v5025
        %v5027 = vlaneseq
        %v5028 = vshrl.u32 %v5027, 7
        %v5029 = vsub.s32 %v5026, %v5028
        %v5030 = vrot.slane %v5014, %v5029
        %v5032 = vunpack.c.l.s4 1966171168
        %v5033 = vunpack.c.0.s8 %v5032
        %v5034 = vlaneseq
        %v5035 = vshrl.u32 %v5034, 7
        %v5036 = vsub.s32 %v5033, %v5035
        %v5037 = vrot.slane %v5015, %v5036
        %v5039 = vunpack.c.l.s4 1966171168
        %v5040 = vunpack.c.0.s8 %v5039
        %v5041 = vlaneseq
        %v5042 = vshrl.u32 %v5041, 7
        %v5043 = vsub.s32 %v5040, %v5042
        %v5044 = vrot.slane %v5016, %v5043
        %v5045 = vcombine.low %v5023, %v5030
        %v5046 = vcombine.low %v5037, %v5044
        %v5048 = vunpack.c.l.s4 1966171168
        %v5049 = vunpack.c.0.s8 %v5048
        %v5050 = vlaneseq
        %v5051 = vshrl.u32 %v5050, 7
        %v5052 = vsub.s32 %v5049, %v5051
        %v5053 = vrot.slane %v5045, %v5052
        %v5055 = vunpack.c.l.s4 1966171168
        %v5056 = vunpack.c.0.s8 %v5055
        %v5057 = vlaneseq
        %v5058 = vshrl.u32 %v5057, 7
        %v5059 = vsub.s32 %v5056, %v5058
        %v5060 = vrot.slane %v5046, %v5059
        %v5061 = vcombine.low %v5053, %v5060
        %v5062 = vcombine.low %v2978, %v2969
        %v5064 = vunpack.c.l.s4 1966171168
        %v5065 = vunpack.c.0.s8 %v5064
        %v5066 = vlaneseq
        %v5067 = vshrl.u32 %v5066, 7
        %v5068 = vsub.s32 %v5065, %v5067
        %v5069 = vrot.slane %v5062, %v5068
        %v5071 = vunpack.c.l.s4 1966171168
        %v5072 = vunpack.c.0.s8 %v5071
        %v5073 = vlaneseq
        %v5074 = vshrl.u32 %v5073, 7
        %v5075 = vsub.s32 %v5072, %v5074
        %v5076 = vrot.slane %v3034, %v5075
        %v5077 = vcombine.low %v5069, %v5076
        %v5079 = vunpack.c.l.s4 1966171168
        %v5080 = vunpack.c.0.s8 %v5079
        %v5081 = vlaneseq
        %v5082 = vshrl.u32 %v5081, 7
        %v5083 = vsub.s32 %v5080, %v5082
        %v5084 = vrot.slane %v5077, %v5083
        %5085 = vrot.lane.b32.xlu0 %v4571, 32
        %v5086 = vpop.permute.xlu0 %5085
        %5087 = vrot.lane.b32.xlu0 %v4620, 32
        %v5088 = vpop.permute.xlu0 %5087
        %5089 = vrot.lane.b32.xlu0 %v4669, 32
        %v5090 = vpop.permute.xlu0 %5089
        %5091 = vrot.lane.b32.xlu0 %v4718, 32
        %v5092 = vpop.permute.xlu0 %5091
        %5093 = vrot.lane.b32.xlu0 %v4767, 32
        %v5094 = vpop.permute.xlu0 %5093
        %5095 = vrot.lane.b32.xlu0 %v4816, 32
        %v5096 = vpop.permute.xlu0 %5095
        %5097 = vrot.lane.b32.xlu0 %v4865, 32
        %v5098 = vpop.permute.xlu0 %5097
        %5099 = vrot.lane.b32.xlu0 %v4914, 32
        %v5100 = vpop.permute.xlu0 %5099
        %5101 = vrot.lane.b32.xlu0 %v4963, 32
        %v5102 = vpop.permute.xlu0 %5101
        %5103 = vrot.lane.b32.xlu0 %v5012, 32
        %v5104 = vpop.permute.xlu0 %5103
        %5105 = vrot.lane.b32.xlu0 %v5061, 32
        %v5106 = vpop.permute.xlu0 %5105
        %5107 = vrot.lane.b32.xlu0 %v5084, 32
        %v5108 = vpop.permute.xlu0 %5107
        %v5121 = vcombine.low %v3966, %v3973
        %v5122 = vcombine.low %v3980, %v4008
        %v5124 = vunpack.c.l.s4 1966171168
        %v5125 = vunpack.c.0.s8 %v5124
        %v5126 = vlaneseq
        %v5127 = vshrl.u32 %v5126, 7
        %v5128 = vsub.s32 %v5125, %v5127
        %v5129 = vrot.slane %v5121, %v5128
        %v5131 = vunpack.c.l.s4 1966171168
        %v5132 = vunpack.c.0.s8 %v5131
        %v5133 = vlaneseq
        %v5134 = vshrl.u32 %v5133, 7
        %v5135 = vsub.s32 %v5132, %v5134
        %v5136 = vrot.slane %v5122, %v5135
        %v5137 = vcombine.low %v5129, %v5136
        %v5138 = vcombine.low %v2441, %v2986
        %v5139 = vcombine.low %v3035, %v2496
        %v5141 = vunpack.c.l.s4 1966171168
        %v5142 = vunpack.c.0.s8 %v5141
        %v5143 = vlaneseq
        %v5144 = vshrl.u32 %v5143, 7
        %v5145 = vsub.s32 %v5142, %v5144
        %v5146 = vrot.slane %v5138, %v5145
        %v5148 = vunpack.c.l.s4 1966171168
        %v5149 = vunpack.c.0.s8 %v5148
        %v5150 = vlaneseq
        %v5151 = vshrl.u32 %v5150, 7
        %v5152 = vsub.s32 %v5149, %v5151
        %v5153 = vrot.slane %v5139, %v5152
        %v5154 = vcombine.low %v4015, %v5146
        %v5155 = vcombine.low %v5153, %v4057
        %v5157 = vunpack.c.l.s4 1966171168
        %v5158 = vunpack.c.0.s8 %v5157
        %v5159 = vlaneseq
        %v5160 = vshrl.u32 %v5159, 7
        %v5161 = vsub.s32 %v5158, %v5160
        %v5162 = vrot.slane %v5154, %v5161
        %v5164 = vunpack.c.l.s4 1966171168
        %v5165 = vunpack.c.0.s8 %v5164
        %v5166 = vlaneseq
        %v5167 = vshrl.u32 %v5166, 7
        %v5168 = vsub.s32 %v5165, %v5167
        %v5169 = vrot.slane %v5155, %v5168
        %v5170 = vcombine.low %v5162, %v5169
        %v5171 = vcombine.low %v4064, %v4071
        %v5172 = vcombine.low %v4078, %v4106
        %v5174 = vunpack.c.l.s4 1966171168
        %v5175 = vunpack.c.0.s8 %v5174
        %v5176 = vlaneseq
        %v5177 = vshrl.u32 %v5176, 7
        %v5178 = vsub.s32 %v5175, %v5177
        %v5179 = vrot.slane %v5171, %v5178
        %v5181 = vunpack.c.l.s4 1966171168
        %v5182 = vunpack.c.0.s8 %v5181
        %v5183 = vlaneseq
        %v5184 = vshrl.u32 %v5183, 7
        %v5185 = vsub.s32 %v5182, %v5184
        %v5186 = vrot.slane %v5172, %v5185
        %v5187 = vcombine.low %v5179, %v5186
        %v5188 = vcombine.low %v2994, %v3036
        %v5190 = vunpack.c.l.s4 1966171168
        %v5191 = vunpack.c.0.s8 %v5190
        %v5192 = vlaneseq
        %v5193 = vshrl.u32 %v5192, 7
        %v5194 = vsub.s32 %v5191, %v5193
        %v5195 = vrot.slane %v5188, %v5194
        %v5196 = vcombine.low %v5195, %v4120
        %v5197 = vcombine.low %v4127, %v4155
        %v5199 = vunpack.c.l.s4 1966171168
        %v5200 = vunpack.c.0.s8 %v5199
        %v5201 = vlaneseq
        %v5202 = vshrl.u32 %v5201, 7
        %v5203 = vsub.s32 %v5200, %v5202
        %v5204 = vrot.slane %v5196, %v5203
        %v5206 = vunpack.c.l.s4 1966171168
        %v5207 = vunpack.c.0.s8 %v5206
        %v5208 = vlaneseq
        %v5209 = vshrl.u32 %v5208, 7
        %v5210 = vsub.s32 %v5207, %v5209
        %v5211 = vrot.slane %v5197, %v5210
        %v5212 = vcombine.low %v5204, %v5211
        %v5213 = vcombine.low %v2617, %v3002
        %v5214 = vcombine.low %v3037, %v2672
        %v5216 = vunpack.c.l.s4 1966171168
        %v5217 = vunpack.c.0.s8 %v5216
        %v5218 = vlaneseq
        %v5219 = vshrl.u32 %v5218, 7
        %v5220 = vsub.s32 %v5217, %v5219
        %v5221 = vrot.slane %v5213, %v5220
        %v5223 = vunpack.c.l.s4 1966171168
        %v5224 = vunpack.c.0.s8 %v5223
        %v5225 = vlaneseq
        %v5226 = vshrl.u32 %v5225, 7
        %v5227 = vsub.s32 %v5224, %v5226
        %v5228 = vrot.slane %v5214, %v5227
        %v5229 = vcombine.low %v4162, %v4169
        %v5230 = vcombine.low %v5221, %v5228
        %v5232 = vunpack.c.l.s4 1966171168
        %v5233 = vunpack.c.0.s8 %v5232
        %v5234 = vlaneseq
        %v5235 = vshrl.u32 %v5234, 7
        %v5236 = vsub.s32 %v5233, %v5235
        %v5237 = vrot.slane %v5229, %v5236
        %v5239 = vunpack.c.l.s4 1966171168
        %v5240 = vunpack.c.0.s8 %v5239
        %v5241 = vlaneseq
        %v5242 = vshrl.u32 %v5241, 7
        %v5243 = vsub.s32 %v5240, %v5242
        %v5244 = vrot.slane %v5230, %v5243
        %v5245 = vcombine.low %v5237, %v5244
        %v5246 = vcombine.low %v4211, %v4218
        %v5247 = vcombine.low %v4225, %v4253
        %v5249 = vunpack.c.l.s4 1966171168
        %v5250 = vunpack.c.0.s8 %v5249
        %v5251 = vlaneseq
        %v5252 = vshrl.u32 %v5251, 7
        %v5253 = vsub.s32 %v5250, %v5252
        %v5254 = vrot.slane %v5246, %v5253
        %v5256 = vunpack.c.l.s4 1966171168
        %v5257 = vunpack.c.0.s8 %v5256
        %v5258 = vlaneseq
        %v5259 = vshrl.u32 %v5258, 7
        %v5260 = vsub.s32 %v5257, %v5259
        %v5261 = vrot.slane %v5247, %v5260
        %v5262 = vcombine.low %v5254, %v5261
        %v5263 = vcombine.low %v3010, %v3038
        %v5265 = vunpack.c.l.s4 1966171168
        %v5266 = vunpack.c.0.s8 %v5265
        %v5267 = vlaneseq
        %v5268 = vshrl.u32 %v5267, 7
        %v5269 = vsub.s32 %v5266, %v5268
        %v5270 = vrot.slane %v5263, %v5269
        %v5271 = vcombine.low %v4260, %v5270
        %v5272 = vcombine.low %v4274, %v4302
        %v5274 = vunpack.c.l.s4 1966171168
        %v5275 = vunpack.c.0.s8 %v5274
        %v5276 = vlaneseq
        %v5277 = vshrl.u32 %v5276, 7
        %v5278 = vsub.s32 %v5275, %v5277
        %v5279 = vrot.slane %v5271, %v5278
        %v5281 = vunpack.c.l.s4 1966171168
        %v5282 = vunpack.c.0.s8 %v5281
        %v5283 = vlaneseq
        %v5284 = vshrl.u32 %v5283, 7
        %v5285 = vsub.s32 %v5282, %v5284
        %v5286 = vrot.slane %v5272, %v5285
        %v5287 = vcombine.low %v5279, %v5286
        %v5288 = vcombine.low %v2793, %v3018
        %v5290 = vunpack.c.l.s4 1966171168
        %v5291 = vunpack.c.0.s8 %v5290
        %v5292 = vlaneseq
        %v5293 = vshrl.u32 %v5292, 7
        %v5294 = vsub.s32 %v5291, %v5293
        %v5295 = vrot.slane %v5288, %v5294
        %v5296 = vcombine.low %v4309, %v4316
        %v5297 = vcombine.low %v4323, %v5295
        %v5299 = vunpack.c.l.s4 1966171168
        %v5300 = vunpack.c.0.s8 %v5299
        %v5301 = vlaneseq
        %v5302 = vshrl.u32 %v5301, 7
        %v5303 = vsub.s32 %v5300, %v5302
        %v5304 = vrot.slane %v5296, %v5303
        %v5306 = vunpack.c.l.s4 1966171168
        %v5307 = vunpack.c.0.s8 %v5306
        %v5308 = vlaneseq
        %v5309 = vshrl.u32 %v5308, 7
        %v5310 = vsub.s32 %v5307, %v5309
        %v5311 = vrot.slane %v5297, %v5310
        %v5312 = vcombine.low %v5304, %v5311
        %v5313 = vcombine.low %v3039, %v2848
        %v5315 = vunpack.c.l.s4 1966171168
        %v5316 = vunpack.c.0.s8 %v5315
        %v5317 = vlaneseq
        %v5318 = vshrl.u32 %v5317, 7
        %v5319 = vsub.s32 %v5316, %v5318
        %v5320 = vrot.slane %v5313, %v5319
        %v5321 = vcombine.low %v5320, %v4365
        %v5322 = vcombine.low %v4372, %v4400
        %v5324 = vunpack.c.l.s4 1966171168
        %v5325 = vunpack.c.0.s8 %v5324
        %v5326 = vlaneseq
        %v5327 = vshrl.u32 %v5326, 7
        %v5328 = vsub.s32 %v5325, %v5327
        %v5329 = vrot.slane %v5321, %v5328
        %v5331 = vunpack.c.l.s4 1966171168
        %v5332 = vunpack.c.0.s8 %v5331
        %v5333 = vlaneseq
        %v5334 = vshrl.u32 %v5333, 7
        %v5335 = vsub.s32 %v5332, %v5334
        %v5336 = vrot.slane %v5322, %v5335
        %v5337 = vcombine.low %v5329, %v5336
        %v5338 = vcombine.low %v3026, %v3040
        %v5340 = vunpack.c.l.s4 1966171168
        %v5341 = vunpack.c.0.s8 %v5340
        %v5342 = vlaneseq
        %v5343 = vshrl.u32 %v5342, 7
        %v5344 = vsub.s32 %v5341, %v5343
        %v5345 = vrot.slane %v5338, %v5344
        %v5346 = vcombine.low %v4407, %v4414
        %v5347 = vcombine.low %v5345, %v4449
        %v5349 = vunpack.c.l.s4 1966171168
        %v5350 = vunpack.c.0.s8 %v5349
        %v5351 = vlaneseq
        %v5352 = vshrl.u32 %v5351, 7
        %v5353 = vsub.s32 %v5350, %v5352
        %v5354 = vrot.slane %v5346, %v5353
        %v5356 = vunpack.c.l.s4 1966171168
        %v5357 = vunpack.c.0.s8 %v5356
        %v5358 = vlaneseq
        %v5359 = vshrl.u32 %v5358, 7
        %v5360 = vsub.s32 %v5357, %v5359
        %v5361 = vrot.slane %v5347, %v5360
        %v5362 = vcombine.low %v5354, %v5361
        %v5363 = vcombine.low %v4456, %v4463
        %v5364 = vcombine.low %v4470, %v4495
        %v5366 = vunpack.c.l.s4 1966171168
        %v5367 = vunpack.c.0.s8 %v5366
        %v5368 = vlaneseq
        %v5369 = vshrl.u32 %v5368, 7
        %v5370 = vsub.s32 %v5367, %v5369
        %v5371 = vrot.slane %v5363, %v5370
        %v5373 = vunpack.c.l.s4 1966171168
        %v5374 = vunpack.c.0.s8 %v5373
        %v5375 = vlaneseq
        %v5376 = vshrl.u32 %v5375, 7
        %v5377 = vsub.s32 %v5374, %v5376
        %v5378 = vrot.slane %v5364, %v5377
        %v5379 = vcombine.low %v5371, %v5378
        %v5380 = vcombine.low %v2969, %v3034
        %v5382 = vunpack.c.l.s4 1966171168
        %v5383 = vunpack.c.0.s8 %v5382
        %v5384 = vlaneseq
        %v5385 = vshrl.u32 %v5384, 7
        %v5386 = vsub.s32 %v5383, %v5385
        %v5387 = vrot.slane %v5380, %v5386
        %v5389 = vunpack.c.l.s4 1966171168
        %v5390 = vunpack.c.0.s8 %v5389
        %v5391 = vlaneseq
        %v5392 = vshrl.u32 %v5391, 7
        %v5393 = vsub.s32 %v5390, %v5392
        %v5394 = vrot.slane %v3041, %v5393
        %v5395 = vcombine.low %v5387, %v5394
        %v5397 = vunpack.c.l.s4 1966171168
        %v5398 = vunpack.c.0.s8 %v5397
        %v5399 = vlaneseq
        %v5400 = vshrl.u32 %v5399, 7
        %v5401 = vsub.s32 %v5398, %v5400
        %v5402 = vrot.slane %v5395, %v5401
        %5403 = vrot.lane.b32.xlu0 %v5137, 64
        %v5404 = vpop.permute.xlu0 %5403
        %5405 = vrot.lane.b32.xlu0 %v5170, 64
        %v5406 = vpop.permute.xlu0 %5405
        %5407 = vrot.lane.b32.xlu0 %v5187, 64
        %v5408 = vpop.permute.xlu0 %5407
        %5409 = vrot.lane.b32.xlu0 %v5212, 64
        %v5410 = vpop.permute.xlu0 %5409
        %5411 = vrot.lane.b32.xlu0 %v5245, 64
        %v5412 = vpop.permute.xlu0 %5411
        %5413 = vrot.lane.b32.xlu0 %v5262, 64
        %v5414 = vpop.permute.xlu0 %5413
        %5415 = vrot.lane.b32.xlu0 %v5287, 64
        %v5416 = vpop.permute.xlu0 %5415
        %5417 = vrot.lane.b32.xlu0 %v5312, 64
        %v5418 = vpop.permute.xlu0 %5417
        %5419 = vrot.lane.b32.xlu0 %v5337, 64
        %v5420 = vpop.permute.xlu0 %5419
        %5421 = vrot.lane.b32.xlu0 %v5362, 64
        %v5422 = vpop.permute.xlu0 %5421
        %5423 = vrot.lane.b32.xlu0 %v5379, 64
        %v5424 = vpop.permute.xlu0 %5423
        %5425 = vrot.lane.b32.xlu0 %v5402, 64
        %v5426 = vpop.permute.xlu0 %5425
        %v5439 = vcombine.low %v4540, %v4547
        %v5440 = vcombine.low %v4554, %v4582
        %v5442 = vunpack.c.l.s4 1966171168
        %v5443 = vunpack.c.0.s8 %v5442
        %v5444 = vlaneseq
        %v5445 = vshrl.u32 %v5444, 7
        %v5446 = vsub.s32 %v5443, %v5445
        %v5447 = vrot.slane %v5439, %v5446
        %v5449 = vunpack.c.l.s4 1966171168
        %v5450 = vunpack.c.0.s8 %v5449
        %v5451 = vlaneseq
        %v5452 = vshrl.u32 %v5451, 7
        %v5453 = vsub.s32 %v5450, %v5452
        %v5454 = vrot.slane %v5440, %v5453
        %v5455 = vcombine.low %v5447, %v5454
        %v5456 = vcombine.low %v2986, %v3035
        %v5457 = vcombine.low %v3042, %v2498
        %v5459 = vunpack.c.l.s4 1966171168
        %v5460 = vunpack.c.0.s8 %v5459
        %v5461 = vlaneseq
        %v5462 = vshrl.u32 %v5461, 7
        %v5463 = vsub.s32 %v5460, %v5462
        %v5464 = vrot.slane %v5456, %v5463
        %v5466 = vunpack.c.l.s4 1966171168
        %v5467 = vunpack.c.0.s8 %v5466
        %v5468 = vlaneseq
        %v5469 = vshrl.u32 %v5468, 7
        %v5470 = vsub.s32 %v5467, %v5469
        %v5471 = vrot.slane %v5457, %v5470
        %v5472 = vcombine.low %v4589, %v5464
        %v5473 = vcombine.low %v5471, %v4631
        %v5475 = vunpack.c.l.s4 1966171168
        %v5476 = vunpack.c.0.s8 %v5475
        %v5477 = vlaneseq
        %v5478 = vshrl.u32 %v5477, 7
        %v5479 = vsub.s32 %v5476, %v5478
        %v5480 = vrot.slane %v5472, %v5479
        %v5482 = vunpack.c.l.s4 1966171168
        %v5483 = vunpack.c.0.s8 %v5482
        %v5484 = vlaneseq
        %v5485 = vshrl.u32 %v5484, 7
        %v5486 = vsub.s32 %v5483, %v5485
        %v5487 = vrot.slane %v5473, %v5486
        %v5488 = vcombine.low %v5480, %v5487
        %v5489 = vcombine.low %v4638, %v4645
        %v5490 = vcombine.low %v4652, %v4680
        %v5492 = vunpack.c.l.s4 1966171168
        %v5493 = vunpack.c.0.s8 %v5492
        %v5494 = vlaneseq
        %v5495 = vshrl.u32 %v5494, 7
        %v5496 = vsub.s32 %v5493, %v5495
        %v5497 = vrot.slane %v5489, %v5496
        %v5499 = vunpack.c.l.s4 1966171168
        %v5500 = vunpack.c.0.s8 %v5499
        %v5501 = vlaneseq
        %v5502 = vshrl.u32 %v5501, 7
        %v5503 = vsub.s32 %v5500, %v5502
        %v5504 = vrot.slane %v5490, %v5503
        %v5505 = vcombine.low %v5497, %v5504
        %v5506 = vcombine.low %v3036, %v3043
        %v5508 = vunpack.c.l.s4 1966171168
        %v5509 = vunpack.c.0.s8 %v5508
        %v5510 = vlaneseq
        %v5511 = vshrl.u32 %v5510, 7
        %v5512 = vsub.s32 %v5509, %v5511
        %v5513 = vrot.slane %v5506, %v5512
        %v5514 = vcombine.low %v5513, %v4694
        %v5515 = vcombine.low %v4701, %v4729
        %v5517 = vunpack.c.l.s4 1966171168
        %v5518 = vunpack.c.0.s8 %v5517
        %v5519 = vlaneseq
        %v5520 = vshrl.u32 %v5519, 7
        %v5521 = vsub.s32 %v5518, %v5520
        %v5522 = vrot.slane %v5514, %v5521
        %v5524 = vunpack.c.l.s4 1966171168
        %v5525 = vunpack.c.0.s8 %v5524
        %v5526 = vlaneseq
        %v5527 = vshrl.u32 %v5526, 7
        %v5528 = vsub.s32 %v5525, %v5527
        %v5529 = vrot.slane %v5515, %v5528
        %v5530 = vcombine.low %v5522, %v5529
        %v5531 = vcombine.low %v3002, %v3037
        %v5532 = vcombine.low %v3044, %v2674
        %v5534 = vunpack.c.l.s4 1966171168
        %v5535 = vunpack.c.0.s8 %v5534
        %v5536 = vlaneseq
        %v5537 = vshrl.u32 %v5536, 7
        %v5538 = vsub.s32 %v5535, %v5537
        %v5539 = vrot.slane %v5531, %v5538
        %v5541 = vunpack.c.l.s4 1966171168
        %v5542 = vunpack.c.0.s8 %v5541
        %v5543 = vlaneseq
        %v5544 = vshrl.u32 %v5543, 7
        %v5545 = vsub.s32 %v5542, %v5544
        %v5546 = vrot.slane %v5532, %v5545
        %v5547 = vcombine.low %v4736, %v4743
        %v5548 = vcombine.low %v5539, %v5546
        %v5550 = vunpack.c.l.s4 1966171168
        %v5551 = vunpack.c.0.s8 %v5550
        %v5552 = vlaneseq
        %v5553 = vshrl.u32 %v5552, 7
        %v5554 = vsub.s32 %v5551, %v5553
        %v5555 = vrot.slane %v5547, %v5554
        %v5557 = vunpack.c.l.s4 1966171168
        %v5558 = vunpack.c.0.s8 %v5557
        %v5559 = vlaneseq
        %v5560 = vshrl.u32 %v5559, 7
        %v5561 = vsub.s32 %v5558, %v5560
        %v5562 = vrot.slane %v5548, %v5561
        %v5563 = vcombine.low %v5555, %v5562
        %v5564 = vcombine.low %v4785, %v4792
        %v5565 = vcombine.low %v4799, %v4827
        %v5567 = vunpack.c.l.s4 1966171168
        %v5568 = vunpack.c.0.s8 %v5567
        %v5569 = vlaneseq
        %v5570 = vshrl.u32 %v5569, 7
        %v5571 = vsub.s32 %v5568, %v5570
        %v5572 = vrot.slane %v5564, %v5571
        %v5574 = vunpack.c.l.s4 1966171168
        %v5575 = vunpack.c.0.s8 %v5574
        %v5576 = vlaneseq
        %v5577 = vshrl.u32 %v5576, 7
        %v5578 = vsub.s32 %v5575, %v5577
        %v5579 = vrot.slane %v5565, %v5578
        %v5580 = vcombine.low %v5572, %v5579
        %v5581 = vcombine.low %v3038, %v3045
        %v5583 = vunpack.c.l.s4 1966171168
        %v5584 = vunpack.c.0.s8 %v5583
        %v5585 = vlaneseq
        %v5586 = vshrl.u32 %v5585, 7
        %v5587 = vsub.s32 %v5584, %v5586
        %v5588 = vrot.slane %v5581, %v5587
        %v5589 = vcombine.low %v4834, %v5588
        %v5590 = vcombine.low %v4848, %v4876
        %v5592 = vunpack.c.l.s4 1966171168
        %v5593 = vunpack.c.0.s8 %v5592
        %v5594 = vlaneseq
        %v5595 = vshrl.u32 %v5594, 7
        %v5596 = vsub.s32 %v5593, %v5595
        %v5597 = vrot.slane %v5589, %v5596
        %v5599 = vunpack.c.l.s4 1966171168
        %v5600 = vunpack.c.0.s8 %v5599
        %v5601 = vlaneseq
        %v5602 = vshrl.u32 %v5601, 7
        %v5603 = vsub.s32 %v5600, %v5602
        %v5604 = vrot.slane %v5590, %v5603
        %v5605 = vcombine.low %v5597, %v5604
        %v5606 = vcombine.low %v3018, %v3039
        %v5608 = vunpack.c.l.s4 1966171168
        %v5609 = vunpack.c.0.s8 %v5608
        %v5610 = vlaneseq
        %v5611 = vshrl.u32 %v5610, 7
        %v5612 = vsub.s32 %v5609, %v5611
        %v5613 = vrot.slane %v5606, %v5612
        %v5614 = vcombine.low %v4883, %v4890
        %v5615 = vcombine.low %v4897, %v5613
        %v5617 = vunpack.c.l.s4 1966171168
        %v5618 = vunpack.c.0.s8 %v5617
        %v5619 = vlaneseq
        %v5620 = vshrl.u32 %v5619, 7
        %v5621 = vsub.s32 %v5618, %v5620
        %v5622 = vrot.slane %v5614, %v5621
        %v5624 = vunpack.c.l.s4 1966171168
        %v5625 = vunpack.c.0.s8 %v5624
        %v5626 = vlaneseq
        %v5627 = vshrl.u32 %v5626, 7
        %v5628 = vsub.s32 %v5625, %v5627
        %v5629 = vrot.slane %v5615, %v5628
        %v5630 = vcombine.low %v5622, %v5629
        %v5631 = vcombine.low %v3046, %v2850
        %v5633 = vunpack.c.l.s4 1966171168
        %v5634 = vunpack.c.0.s8 %v5633
        %v5635 = vlaneseq
        %v5636 = vshrl.u32 %v5635, 7
        %v5637 = vsub.s32 %v5634, %v5636
        %v5638 = vrot.slane %v5631, %v5637
        %v5639 = vcombine.low %v5638, %v4939
        %v5640 = vcombine.low %v4946, %v4974
        %v5642 = vunpack.c.l.s4 1966171168
        %v5643 = vunpack.c.0.s8 %v5642
        %v5644 = vlaneseq
        %v5645 = vshrl.u32 %v5644, 7
        %v5646 = vsub.s32 %v5643, %v5645
        %v5647 = vrot.slane %v5639, %v5646
        %v5649 = vunpack.c.l.s4 1966171168
        %v5650 = vunpack.c.0.s8 %v5649
        %v5651 = vlaneseq
        %v5652 = vshrl.u32 %v5651, 7
        %v5653 = vsub.s32 %v5650, %v5652
        %v5654 = vrot.slane %v5640, %v5653
        %v5655 = vcombine.low %v5647, %v5654
        %v5656 = vcombine.low %v3040, %v3047
        %v5658 = vunpack.c.l.s4 1966171168
        %v5659 = vunpack.c.0.s8 %v5658
        %v5660 = vlaneseq
        %v5661 = vshrl.u32 %v5660, 7
        %v5662 = vsub.s32 %v5659, %v5661
        %v5663 = vrot.slane %v5656, %v5662
        %v5664 = vcombine.low %v4981, %v4988
        %v5665 = vcombine.low %v5663, %v5023
        %v5667 = vunpack.c.l.s4 1966171168
        %v5668 = vunpack.c.0.s8 %v5667
        %v5669 = vlaneseq
        %v5670 = vshrl.u32 %v5669, 7
        %v5671 = vsub.s32 %v5668, %v5670
        %v5672 = vrot.slane %v5664, %v5671
        %v5674 = vunpack.c.l.s4 1966171168
        %v5675 = vunpack.c.0.s8 %v5674
        %v5676 = vlaneseq
        %v5677 = vshrl.u32 %v5676, 7
        %v5678 = vsub.s32 %v5675, %v5677
        %v5679 = vrot.slane %v5665, %v5678
        %v5680 = vcombine.low %v5672, %v5679
        %v5681 = vcombine.low %v5030, %v5037
        %v5682 = vcombine.low %v5044, %v5069
        %v5684 = vunpack.c.l.s4 1966171168
        %v5685 = vunpack.c.0.s8 %v5684
        %v5686 = vlaneseq
        %v5687 = vshrl.u32 %v5686, 7
        %v5688 = vsub.s32 %v5685, %v5687
        %v5689 = vrot.slane %v5681, %v5688
        %v5691 = vunpack.c.l.s4 1966171168
        %v5692 = vunpack.c.0.s8 %v5691
        %v5693 = vlaneseq
        %v5694 = vshrl.u32 %v5693, 7
        %v5695 = vsub.s32 %v5692, %v5694
        %v5696 = vrot.slane %v5682, %v5695
        %v5697 = vcombine.low %v5689, %v5696
        %v5698 = vcombine.low %v3034, %v3041
        %v5700 = vunpack.c.l.s4 1966171168
        %v5701 = vunpack.c.0.s8 %v5700
        %v5702 = vlaneseq
        %v5703 = vshrl.u32 %v5702, 7
        %v5704 = vsub.s32 %v5701, %v5703
        %v5705 = vrot.slane %v5698, %v5704
        %v5707 = vunpack.c.l.s4 1966171168
        %v5708 = vunpack.c.0.s8 %v5707
        %v5709 = vlaneseq
        %v5710 = vshrl.u32 %v5709, 7
        %v5711 = vsub.s32 %v5708, %v5710
        %v5712 = vrot.slane %v3048, %v5711
        %v5713 = vcombine.low %v5705, %v5712
        %v5715 = vunpack.c.l.s4 1966171168
        %v5716 = vunpack.c.0.s8 %v5715
        %v5717 = vlaneseq
        %v5718 = vshrl.u32 %v5717, 7
        %v5719 = vsub.s32 %v5716, %v5718
        %v5720 = vrot.slane %v5713, %v5719
        %5721 = vrot.lane.b32.xlu0 %v5455, 96
        %v5722 = vpop.permute.xlu0 %5721
        %5723 = vrot.lane.b32.xlu0 %v5488, 96
        %v5724 = vpop.permute.xlu0 %5723
        %5725 = vrot.lane.b32.xlu0 %v5505, 96
        %v5726 = vpop.permute.xlu0 %5725
        %5727 = vrot.lane.b32.xlu0 %v5530, 96
        %v5728 = vpop.permute.xlu0 %5727
        %5729 = vrot.lane.b32.xlu0 %v5563, 96
        %v5730 = vpop.permute.xlu0 %5729
        %5731 = vrot.lane.b32.xlu0 %v5580, 96
        %v5732 = vpop.permute.xlu0 %5731
        %5733 = vrot.lane.b32.xlu0 %v5605, 96
        %v5734 = vpop.permute.xlu0 %5733
        %5735 = vrot.lane.b32.xlu0 %v5630, 96
        %v5736 = vpop.permute.xlu0 %5735
        %5737 = vrot.lane.b32.xlu0 %v5655, 96
        %v5738 = vpop.permute.xlu0 %5737
        %5739 = vrot.lane.b32.xlu0 %v5680, 96
        %v5740 = vpop.permute.xlu0 %5739
        %5741 = vrot.lane.b32.xlu0 %v5697, 96
        %v5742 = vpop.permute.xlu0 %5741
        %5743 = vrot.lane.b32.xlu0 %v5720, 96
        %v5744 = vpop.permute.xlu0 %5743
        %v5757 = vcombine.low %v3086, %v3100
        %v5758 = vcombine.low %v3108, %v3110
        %v5759 = vcombine.low %v3093, %v3107
        %v5760 = vcombine.low %v3109, %v3111
        %v5762 = vunpack.c.l.s4 1966171168
        %v5763 = vunpack.c.0.s8 %v5762
        %v5764 = vlaneseq
        %v5765 = vshrl.u32 %v5764, 7
        %v5766 = vsub.s32 %v5763, %v5765
        %v5767 = vrot.slane %v5757, %v5766
        %v5769 = vunpack.c.l.s4 1966171168
        %v5770 = vunpack.c.0.s8 %v5769
        %v5771 = vlaneseq
        %v5772 = vshrl.u32 %v5771, 7
        %v5773 = vsub.s32 %v5770, %v5772
        %v5774 = vrot.slane %v5758, %v5773
        %v5776 = vunpack.c.l.s4 1966171168
        %v5777 = vunpack.c.0.s8 %v5776
        %v5778 = vlaneseq
        %v5779 = vshrl.u32 %v5778, 7
        %v5780 = vsub.s32 %v5777, %v5779
        %v5781 = vrot.slane %v5759, %v5780
        %v5783 = vunpack.c.l.s4 1966171168
        %v5784 = vunpack.c.0.s8 %v5783
        %v5785 = vlaneseq
        %v5786 = vshrl.u32 %v5785, 7
        %v5787 = vsub.s32 %v5784, %v5786
        %v5788 = vrot.slane %v5760, %v5787
        %v5789 = vcombine.low %v5767, %v5774
        %v5790 = vcombine.low %v5781, %v5788
        %v5792 = vunpack.c.l.s4 1966171168
        %v5793 = vunpack.c.0.s8 %v5792
        %v5794 = vlaneseq
        %v5795 = vshrl.u32 %v5794, 7
        %v5796 = vsub.s32 %v5793, %v5795
        %v5797 = vrot.slane %v5789, %v5796
        %v5799 = vunpack.c.l.s4 1966171168
        %v5800 = vunpack.c.0.s8 %v5799
        %v5801 = vlaneseq
        %v5802 = vshrl.u32 %v5801, 7
        %v5803 = vsub.s32 %v5800, %v5802
        %v5804 = vrot.slane %v5790, %v5803
        %v5805 = vcombine.low %v5797, %v5804
        %v5806 = vcombine.low %v3134, %v3148
        %v5807 = vcombine.low %v3149, %v3150
        %v5808 = vcombine.low %v3141, %v3174
        %v5809 = vcombine.low %v3188, %v3196
        %v5811 = vunpack.c.l.s4 1966171168
        %v5812 = vunpack.c.0.s8 %v5811
        %v5813 = vlaneseq
        %v5814 = vshrl.u32 %v5813, 7
        %v5815 = vsub.s32 %v5812, %v5814
        %v5816 = vrot.slane %v5806, %v5815
        %v5818 = vunpack.c.l.s4 1966171168
        %v5819 = vunpack.c.0.s8 %v5818
        %v5820 = vlaneseq
        %v5821 = vshrl.u32 %v5820, 7
        %v5822 = vsub.s32 %v5819, %v5821
        %v5823 = vrot.slane %v5807, %v5822
        %v5825 = vunpack.c.l.s4 1966171168
        %v5826 = vunpack.c.0.s8 %v5825
        %v5827 = vlaneseq
        %v5828 = vshrl.u32 %v5827, 7
        %v5829 = vsub.s32 %v5826, %v5828
        %v5830 = vrot.slane %v5808, %v5829
        %v5832 = vunpack.c.l.s4 1966171168
        %v5833 = vunpack.c.0.s8 %v5832
        %v5834 = vlaneseq
        %v5835 = vshrl.u32 %v5834, 7
        %v5836 = vsub.s32 %v5833, %v5835
        %v5837 = vrot.slane %v5809, %v5836
        %v5838 = vcombine.low %v5816, %v5823
        %v5839 = vcombine.low %v5830, %v5837
        %v5841 = vunpack.c.l.s4 1966171168
        %v5842 = vunpack.c.0.s8 %v5841
        %v5843 = vlaneseq
        %v5844 = vshrl.u32 %v5843, 7
        %v5845 = vsub.s32 %v5842, %v5844
        %v5846 = vrot.slane %v5838, %v5845
        %v5848 = vunpack.c.l.s4 1966171168
        %v5849 = vunpack.c.0.s8 %v5848
        %v5850 = vlaneseq
        %v5851 = vshrl.u32 %v5850, 7
        %v5852 = vsub.s32 %v5849, %v5851
        %v5853 = vrot.slane %v5839, %v5852
        %v5854 = vcombine.low %v5846, %v5853
        %v5855 = vcombine.low %v3198, %v3181
        %v5856 = vcombine.low %v3195, %v3197
        %v5857 = vcombine.low %v3199, %v3222
        %v5858 = vcombine.low %v3236, %v3237
        %v5860 = vunpack.c.l.s4 1966171168
        %v5861 = vunpack.c.0.s8 %v5860
        %v5862 = vlaneseq
        %v5863 = vshrl.u32 %v5862, 7
        %v5864 = vsub.s32 %v5861, %v5863
        %v5865 = vrot.slane %v5855, %v5864
        %v5867 = vunpack.c.l.s4 1966171168
        %v5868 = vunpack.c.0.s8 %v5867
        %v5869 = vlaneseq
        %v5870 = vshrl.u32 %v5869, 7
        %v5871 = vsub.s32 %v5868, %v5870
        %v5872 = vrot.slane %v5856, %v5871
        %v5874 = vunpack.c.l.s4 1966171168
        %v5875 = vunpack.c.0.s8 %v5874
        %v5876 = vlaneseq
        %v5877 = vshrl.u32 %v5876, 7
        %v5878 = vsub.s32 %v5875, %v5877
        %v5879 = vrot.slane %v5857, %v5878
        %v5881 = vunpack.c.l.s4 1966171168
        %v5882 = vunpack.c.0.s8 %v5881
        %v5883 = vlaneseq
        %v5884 = vshrl.u32 %v5883, 7
        %v5885 = vsub.s32 %v5882, %v5884
        %v5886 = vrot.slane %v5858, %v5885
        %v5887 = vcombine.low %v5865, %v5872
        %v5888 = vcombine.low %v5879, %v5886
        %v5890 = vunpack.c.l.s4 1966171168
        %v5891 = vunpack.c.0.s8 %v5890
        %v5892 = vlaneseq
        %v5893 = vshrl.u32 %v5892, 7
        %v5894 = vsub.s32 %v5891, %v5893
        %v5895 = vrot.slane %v5887, %v5894
        %v5897 = vunpack.c.l.s4 1966171168
        %v5898 = vunpack.c.0.s8 %v5897
        %v5899 = vlaneseq
        %v5900 = vshrl.u32 %v5899, 7
        %v5901 = vsub.s32 %v5898, %v5900
        %v5902 = vrot.slane %v5888, %v5901
        %v5903 = vcombine.low %v5895, %v5902
        %v5904 = vcombine.low %v3238, %v3229
        %v5905 = vcombine.low %v3262, %v3276
        %v5906 = vcombine.low %v3284, %v3286
        %v5907 = vcombine.low %v3269, %v3283
        %v5909 = vunpack.c.l.s4 1966171168
        %v5910 = vunpack.c.0.s8 %v5909
        %v5911 = vlaneseq
        %v5912 = vshrl.u32 %v5911, 7
        %v5913 = vsub.s32 %v5910, %v5912
        %v5914 = vrot.slane %v5904, %v5913
        %v5916 = vunpack.c.l.s4 1966171168
        %v5917 = vunpack.c.0.s8 %v5916
        %v5918 = vlaneseq
        %v5919 = vshrl.u32 %v5918, 7
        %v5920 = vsub.s32 %v5917, %v5919
        %v5921 = vrot.slane %v5905, %v5920
        %v5923 = vunpack.c.l.s4 1966171168
        %v5924 = vunpack.c.0.s8 %v5923
        %v5925 = vlaneseq
        %v5926 = vshrl.u32 %v5925, 7
        %v5927 = vsub.s32 %v5924, %v5926
        %v5928 = vrot.slane %v5906, %v5927
        %v5930 = vunpack.c.l.s4 1966171168
        %v5931 = vunpack.c.0.s8 %v5930
        %v5932 = vlaneseq
        %v5933 = vshrl.u32 %v5932, 7
        %v5934 = vsub.s32 %v5931, %v5933
        %v5935 = vrot.slane %v5907, %v5934
        %v5936 = vcombine.low %v5914, %v5921
        %v5937 = vcombine.low %v5928, %v5935
        %v5939 = vunpack.c.l.s4 1966171168
        %v5940 = vunpack.c.0.s8 %v5939
        %v5941 = vlaneseq
        %v5942 = vshrl.u32 %v5941, 7
        %v5943 = vsub.s32 %v5940, %v5942
        %v5944 = vrot.slane %v5936, %v5943
        %v5946 = vunpack.c.l.s4 1966171168
        %v5947 = vunpack.c.0.s8 %v5946
        %v5948 = vlaneseq
        %v5949 = vshrl.u32 %v5948, 7
        %v5950 = vsub.s32 %v5947, %v5949
        %v5951 = vrot.slane %v5937, %v5950
        %v5952 = vcombine.low %v5944, %v5951
        %v5953 = vcombine.low %v3285, %v3287
        %v5954 = vcombine.low %v3310, %v3324
        %v5955 = vcombine.low %v3325, %v3326
        %v5956 = vcombine.low %v3317, %v3350
        %v5958 = vunpack.c.l.s4 1966171168
        %v5959 = vunpack.c.0.s8 %v5958
        %v5960 = vlaneseq
        %v5961 = vshrl.u32 %v5960, 7
        %v5962 = vsub.s32 %v5959, %v5961
        %v5963 = vrot.slane %v5953, %v5962
        %v5965 = vunpack.c.l.s4 1966171168
        %v5966 = vunpack.c.0.s8 %v5965
        %v5967 = vlaneseq
        %v5968 = vshrl.u32 %v5967, 7
        %v5969 = vsub.s32 %v5966, %v5968
        %v5970 = vrot.slane %v5954, %v5969
        %v5972 = vunpack.c.l.s4 1966171168
        %v5973 = vunpack.c.0.s8 %v5972
        %v5974 = vlaneseq
        %v5975 = vshrl.u32 %v5974, 7
        %v5976 = vsub.s32 %v5973, %v5975
        %v5977 = vrot.slane %v5955, %v5976
        %v5979 = vunpack.c.l.s4 1966171168
        %v5980 = vunpack.c.0.s8 %v5979
        %v5981 = vlaneseq
        %v5982 = vshrl.u32 %v5981, 7
        %v5983 = vsub.s32 %v5980, %v5982
        %v5984 = vrot.slane %v5956, %v5983
        %v5985 = vcombine.low %v5963, %v5970
        %v5986 = vcombine.low %v5977, %v5984
        %v5988 = vunpack.c.l.s4 1966171168
        %v5989 = vunpack.c.0.s8 %v5988
        %v5990 = vlaneseq
        %v5991 = vshrl.u32 %v5990, 7
        %v5992 = vsub.s32 %v5989, %v5991
        %v5993 = vrot.slane %v5985, %v5992
        %v5995 = vunpack.c.l.s4 1966171168
        %v5996 = vunpack.c.0.s8 %v5995
        %v5997 = vlaneseq
        %v5998 = vshrl.u32 %v5997, 7
        %v5999 = vsub.s32 %v5996, %v5998
        %v6000 = vrot.slane %v5986, %v5999
        %v6001 = vcombine.low %v5993, %v6000
        %v6002 = vcombine.low %v3364, %v3372
        %v6003 = vcombine.low %v3374, %v3357
        %v6004 = vcombine.low %v3371, %v3373
        %v6005 = vcombine.low %v3375, %v3398
        %v6007 = vunpack.c.l.s4 1966171168
        %v6008 = vunpack.c.0.s8 %v6007
        %v6009 = vlaneseq
        %v6010 = vshrl.u32 %v6009, 7
        %v6011 = vsub.s32 %v6008, %v6010
        %v6012 = vrot.slane %v6002, %v6011
        %v6014 = vunpack.c.l.s4 1966171168
        %v6015 = vunpack.c.0.s8 %v6014
        %v6016 = vlaneseq
        %v6017 = vshrl.u32 %v6016, 7
        %v6018 = vsub.s32 %v6015, %v6017
        %v6019 = vrot.slane %v6003, %v6018
        %v6021 = vunpack.c.l.s4 1966171168
        %v6022 = vunpack.c.0.s8 %v6021
        %v6023 = vlaneseq
        %v6024 = vshrl.u32 %v6023, 7
        %v6025 = vsub.s32 %v6022, %v6024
        %v6026 = vrot.slane %v6004, %v6025
        %v6028 = vunpack.c.l.s4 1966171168
        %v6029 = vunpack.c.0.s8 %v6028
        %v6030 = vlaneseq
        %v6031 = vshrl.u32 %v6030, 7
        %v6032 = vsub.s32 %v6029, %v6031
        %v6033 = vrot.slane %v6005, %v6032
        %v6034 = vcombine.low %v6012, %v6019
        %v6035 = vcombine.low %v6026, %v6033
        %v6037 = vunpack.c.l.s4 1966171168
        %v6038 = vunpack.c.0.s8 %v6037
        %v6039 = vlaneseq
        %v6040 = vshrl.u32 %v6039, 7
        %v6041 = vsub.s32 %v6038, %v6040
        %v6042 = vrot.slane %v6034, %v6041
        %v6044 = vunpack.c.l.s4 1966171168
        %v6045 = vunpack.c.0.s8 %v6044
        %v6046 = vlaneseq
        %v6047 = vshrl.u32 %v6046, 7
        %v6048 = vsub.s32 %v6045, %v6047
        %v6049 = vrot.slane %v6035, %v6048
        %v6050 = vcombine.low %v6042, %v6049
        %v6051 = vcombine.low %v3412, %v3413
        %v6052 = vcombine.low %v3414, %v3405
        %v6053 = vcombine.low %v3438, %v3452
        %v6054 = vcombine.low %v3460, %v3462
        %v6056 = vunpack.c.l.s4 1966171168
        %v6057 = vunpack.c.0.s8 %v6056
        %v6058 = vlaneseq
        %v6059 = vshrl.u32 %v6058, 7
        %v6060 = vsub.s32 %v6057, %v6059
        %v6061 = vrot.slane %v6051, %v6060
        %v6063 = vunpack.c.l.s4 1966171168
        %v6064 = vunpack.c.0.s8 %v6063
        %v6065 = vlaneseq
        %v6066 = vshrl.u32 %v6065, 7
        %v6067 = vsub.s32 %v6064, %v6066
        %v6068 = vrot.slane %v6052, %v6067
        %v6070 = vunpack.c.l.s4 1966171168
        %v6071 = vunpack.c.0.s8 %v6070
        %v6072 = vlaneseq
        %v6073 = vshrl.u32 %v6072, 7
        %v6074 = vsub.s32 %v6071, %v6073
        %v6075 = vrot.slane %v6053, %v6074
        %v6077 = vunpack.c.l.s4 1966171168
        %v6078 = vunpack.c.0.s8 %v6077
        %v6079 = vlaneseq
        %v6080 = vshrl.u32 %v6079, 7
        %v6081 = vsub.s32 %v6078, %v6080
        %v6082 = vrot.slane %v6054, %v6081
        %v6083 = vcombine.low %v6061, %v6068
        %v6084 = vcombine.low %v6075, %v6082
        %v6086 = vunpack.c.l.s4 1966171168
        %v6087 = vunpack.c.0.s8 %v6086
        %v6088 = vlaneseq
        %v6089 = vshrl.u32 %v6088, 7
        %v6090 = vsub.s32 %v6087, %v6089
        %v6091 = vrot.slane %v6083, %v6090
        %v6093 = vunpack.c.l.s4 1966171168
        %v6094 = vunpack.c.0.s8 %v6093
        %v6095 = vlaneseq
        %v6096 = vshrl.u32 %v6095, 7
        %v6097 = vsub.s32 %v6094, %v6096
        %v6098 = vrot.slane %v6084, %v6097
        %v6099 = vcombine.low %v6091, %v6098
        %v6100 = vcombine.low %v3445, %v3459
        %v6101 = vcombine.low %v3461, %v3463
        %v6102 = vcombine.low %v3486, %v3500
        %v6103 = vcombine.low %v3501, %v3502
        %v6105 = vunpack.c.l.s4 1966171168
        %v6106 = vunpack.c.0.s8 %v6105
        %v6107 = vlaneseq
        %v6108 = vshrl.u32 %v6107, 7
        %v6109 = vsub.s32 %v6106, %v6108
        %v6110 = vrot.slane %v6100, %v6109
        %v6112 = vunpack.c.l.s4 1966171168
        %v6113 = vunpack.c.0.s8 %v6112
        %v6114 = vlaneseq
        %v6115 = vshrl.u32 %v6114, 7
        %v6116 = vsub.s32 %v6113, %v6115
        %v6117 = vrot.slane %v6101, %v6116
        %v6119 = vunpack.c.l.s4 1966171168
        %v6120 = vunpack.c.0.s8 %v6119
        %v6121 = vlaneseq
        %v6122 = vshrl.u32 %v6121, 7
        %v6123 = vsub.s32 %v6120, %v6122
        %v6124 = vrot.slane %v6102, %v6123
        %v6126 = vunpack.c.l.s4 1966171168
        %v6127 = vunpack.c.0.s8 %v6126
        %v6128 = vlaneseq
        %v6129 = vshrl.u32 %v6128, 7
        %v6130 = vsub.s32 %v6127, %v6129
        %v6131 = vrot.slane %v6103, %v6130
        %v6132 = vcombine.low %v6110, %v6117
        %v6133 = vcombine.low %v6124, %v6131
        %v6135 = vunpack.c.l.s4 1966171168
        %v6136 = vunpack.c.0.s8 %v6135
        %v6137 = vlaneseq
        %v6138 = vshrl.u32 %v6137, 7
        %v6139 = vsub.s32 %v6136, %v6138
        %v6140 = vrot.slane %v6132, %v6139
        %v6142 = vunpack.c.l.s4 1966171168
        %v6143 = vunpack.c.0.s8 %v6142
        %v6144 = vlaneseq
        %v6145 = vshrl.u32 %v6144, 7
        %v6146 = vsub.s32 %v6143, %v6145
        %v6147 = vrot.slane %v6133, %v6146
        %v6148 = vcombine.low %v6140, %v6147
        %v6149 = vcombine.low %v3493, %v3526
        %v6150 = vcombine.low %v3540, %v3548
        %v6151 = vcombine.low %v3550, %v3533
        %v6152 = vcombine.low %v3547, %v3549
        %v6154 = vunpack.c.l.s4 1966171168
        %v6155 = vunpack.c.0.s8 %v6154
        %v6156 = vlaneseq
        %v6157 = vshrl.u32 %v6156, 7
        %v6158 = vsub.s32 %v6155, %v6157
        %v6159 = vrot.slane %v6149, %v6158
        %v6161 = vunpack.c.l.s4 1966171168
        %v6162 = vunpack.c.0.s8 %v6161
        %v6163 = vlaneseq
        %v6164 = vshrl.u32 %v6163, 7
        %v6165 = vsub.s32 %v6162, %v6164
        %v6166 = vrot.slane %v6150, %v6165
        %v6168 = vunpack.c.l.s4 1966171168
        %v6169 = vunpack.c.0.s8 %v6168
        %v6170 = vlaneseq
        %v6171 = vshrl.u32 %v6170, 7
        %v6172 = vsub.s32 %v6169, %v6171
        %v6173 = vrot.slane %v6151, %v6172
        %v6175 = vunpack.c.l.s4 1966171168
        %v6176 = vunpack.c.0.s8 %v6175
        %v6177 = vlaneseq
        %v6178 = vshrl.u32 %v6177, 7
        %v6179 = vsub.s32 %v6176, %v6178
        %v6180 = vrot.slane %v6152, %v6179
        %v6181 = vcombine.low %v6159, %v6166
        %v6182 = vcombine.low %v6173, %v6180
        %v6184 = vunpack.c.l.s4 1966171168
        %v6185 = vunpack.c.0.s8 %v6184
        %v6186 = vlaneseq
        %v6187 = vshrl.u32 %v6186, 7
        %v6188 = vsub.s32 %v6185, %v6187
        %v6189 = vrot.slane %v6181, %v6188
        %v6191 = vunpack.c.l.s4 1966171168
        %v6192 = vunpack.c.0.s8 %v6191
        %v6193 = vlaneseq
        %v6194 = vshrl.u32 %v6193, 7
        %v6195 = vsub.s32 %v6192, %v6194
        %v6196 = vrot.slane %v6182, %v6195
        %v6197 = vcombine.low %v6189, %v6196
        %v6198 = vcombine.low %v3551, %v3574
        %v6199 = vcombine.low %v3588, %v3589
        %v6200 = vcombine.low %v3590, %v3581
        %v6201 = vcombine.low %v3614, %v3628
        %v6203 = vunpack.c.l.s4 1966171168
        %v6204 = vunpack.c.0.s8 %v6203
        %v6205 = vlaneseq
        %v6206 = vshrl.u32 %v6205, 7
        %v6207 = vsub.s32 %v6204, %v6206
        %v6208 = vrot.slane %v6198, %v6207
        %v6210 = vunpack.c.l.s4 1966171168
        %v6211 = vunpack.c.0.s8 %v6210
        %v6212 = vlaneseq
        %v6213 = vshrl.u32 %v6212, 7
        %v6214 = vsub.s32 %v6211, %v6213
        %v6215 = vrot.slane %v6199, %v6214
        %v6217 = vunpack.c.l.s4 1966171168
        %v6218 = vunpack.c.0.s8 %v6217
        %v6219 = vlaneseq
        %v6220 = vshrl.u32 %v6219, 7
        %v6221 = vsub.s32 %v6218, %v6220
        %v6222 = vrot.slane %v6200, %v6221
        %v6224 = vunpack.c.l.s4 1966171168
        %v6225 = vunpack.c.0.s8 %v6224
        %v6226 = vlaneseq
        %v6227 = vshrl.u32 %v6226, 7
        %v6228 = vsub.s32 %v6225, %v6227
        %v6229 = vrot.slane %v6201, %v6228
        %v6230 = vcombine.low %v6208, %v6215
        %v6231 = vcombine.low %v6222, %v6229
        %v6233 = vunpack.c.l.s4 1966171168
        %v6234 = vunpack.c.0.s8 %v6233
        %v6235 = vlaneseq
        %v6236 = vshrl.u32 %v6235, 7
        %v6237 = vsub.s32 %v6234, %v6236
        %v6238 = vrot.slane %v6230, %v6237
        %v6240 = vunpack.c.l.s4 1966171168
        %v6241 = vunpack.c.0.s8 %v6240
        %v6242 = vlaneseq
        %v6243 = vshrl.u32 %v6242, 7
        %v6244 = vsub.s32 %v6241, %v6243
        %v6245 = vrot.slane %v6231, %v6244
        %v6246 = vcombine.low %v6238, %v6245
        %v6247 = vcombine.low %v3636, %v3638
        %v6248 = vcombine.low %v3621, %v3635
        %v6249 = vcombine.low %v3637, %v3639
        %v6250 = vcombine.low %v3662, %v3676
        %v6252 = vunpack.c.l.s4 1966171168
        %v6253 = vunpack.c.0.s8 %v6252
        %v6254 = vlaneseq
        %v6255 = vshrl.u32 %v6254, 7
        %v6256 = vsub.s32 %v6253, %v6255
        %v6257 = vrot.slane %v6247, %v6256
        %v6259 = vunpack.c.l.s4 1966171168
        %v6260 = vunpack.c.0.s8 %v6259
        %v6261 = vlaneseq
        %v6262 = vshrl.u32 %v6261, 7
        %v6263 = vsub.s32 %v6260, %v6262
        %v6264 = vrot.slane %v6248, %v6263
        %v6266 = vunpack.c.l.s4 1966171168
        %v6267 = vunpack.c.0.s8 %v6266
        %v6268 = vlaneseq
        %v6269 = vshrl.u32 %v6268, 7
        %v6270 = vsub.s32 %v6267, %v6269
        %v6271 = vrot.slane %v6249, %v6270
        %v6273 = vunpack.c.l.s4 1966171168
        %v6274 = vunpack.c.0.s8 %v6273
        %v6275 = vlaneseq
        %v6276 = vshrl.u32 %v6275, 7
        %v6277 = vsub.s32 %v6274, %v6276
        %v6278 = vrot.slane %v6250, %v6277
        %v6279 = vcombine.low %v6257, %v6264
        %v6280 = vcombine.low %v6271, %v6278
        %v6282 = vunpack.c.l.s4 1966171168
        %v6283 = vunpack.c.0.s8 %v6282
        %v6284 = vlaneseq
        %v6285 = vshrl.u32 %v6284, 7
        %v6286 = vsub.s32 %v6283, %v6285
        %v6287 = vrot.slane %v6279, %v6286
        %v6289 = vunpack.c.l.s4 1966171168
        %v6290 = vunpack.c.0.s8 %v6289
        %v6291 = vlaneseq
        %v6292 = vshrl.u32 %v6291, 7
        %v6293 = vsub.s32 %v6290, %v6292
        %v6294 = vrot.slane %v6280, %v6293
        %v6295 = vcombine.low %v6287, %v6294
        %v6296 = vcombine.low %v3677, %v3678
        %v6298 = vunpack.c.l.s4 1966171168
        %v6299 = vunpack.c.0.s8 %v6298
        %v6300 = vlaneseq
        %v6301 = vshrl.u32 %v6300, 7
        %v6302 = vsub.s32 %v6299, %v6301
        %v6303 = vrot.slane %v6296, %v6302
        %v6305 = vunpack.c.l.s4 1966171168
        %v6306 = vunpack.c.0.s8 %v6305
        %v6307 = vlaneseq
        %v6308 = vshrl.u32 %v6307, 7
        %v6309 = vsub.s32 %v6306, %v6308
        %v6310 = vrot.slane %v3669, %v6309
        %v6311 = vcombine.low %v6303, %v6310
        %v6313 = vunpack.c.l.s4 1966171168
        %v6314 = vunpack.c.0.s8 %v6313
        %v6315 = vlaneseq
        %v6316 = vshrl.u32 %v6315, 7
        %v6317 = vsub.s32 %v6314, %v6316
        %v6318 = vrot.slane %v6311, %v6317
        %v6331 = vcombine.low %v3100, %v3108
        %v6332 = vcombine.low %v3110, %v3093
        %v6333 = vcombine.low %v3107, %v3109
        %v6334 = vcombine.low %v3111, %v3134
        %v6336 = vunpack.c.l.s4 1966171168
        %v6337 = vunpack.c.0.s8 %v6336
        %v6338 = vlaneseq
        %v6339 = vshrl.u32 %v6338, 7
        %v6340 = vsub.s32 %v6337, %v6339
        %v6341 = vrot.slane %v6331, %v6340
        %v6343 = vunpack.c.l.s4 1966171168
        %v6344 = vunpack.c.0.s8 %v6343
        %v6345 = vlaneseq
        %v6346 = vshrl.u32 %v6345, 7
        %v6347 = vsub.s32 %v6344, %v6346
        %v6348 = vrot.slane %v6332, %v6347
        %v6350 = vunpack.c.l.s4 1966171168
        %v6351 = vunpack.c.0.s8 %v6350
        %v6352 = vlaneseq
        %v6353 = vshrl.u32 %v6352, 7
        %v6354 = vsub.s32 %v6351, %v6353
        %v6355 = vrot.slane %v6333, %v6354
        %v6357 = vunpack.c.l.s4 1966171168
        %v6358 = vunpack.c.0.s8 %v6357
        %v6359 = vlaneseq
        %v6360 = vshrl.u32 %v6359, 7
        %v6361 = vsub.s32 %v6358, %v6360
        %v6362 = vrot.slane %v6334, %v6361
        %v6363 = vcombine.low %v6341, %v6348
        %v6364 = vcombine.low %v6355, %v6362
        %v6366 = vunpack.c.l.s4 1966171168
        %v6367 = vunpack.c.0.s8 %v6366
        %v6368 = vlaneseq
        %v6369 = vshrl.u32 %v6368, 7
        %v6370 = vsub.s32 %v6367, %v6369
        %v6371 = vrot.slane %v6363, %v6370
        %v6373 = vunpack.c.l.s4 1966171168
        %v6374 = vunpack.c.0.s8 %v6373
        %v6375 = vlaneseq
        %v6376 = vshrl.u32 %v6375, 7
        %v6377 = vsub.s32 %v6374, %v6376
        %v6378 = vrot.slane %v6364, %v6377
        %v6379 = vcombine.low %v6371, %v6378
        %v6380 = vcombine.low %v3148, %v3149
        %v6381 = vcombine.low %v3150, %v3141
        %v6382 = vcombine.low %v3686, %v3188
        %v6383 = vcombine.low %v3196, %v3198
        %v6385 = vunpack.c.l.s4 1966171168
        %v6386 = vunpack.c.0.s8 %v6385
        %v6387 = vlaneseq
        %v6388 = vshrl.u32 %v6387, 7
        %v6389 = vsub.s32 %v6386, %v6388
        %v6390 = vrot.slane %v6380, %v6389
        %v6392 = vunpack.c.l.s4 1966171168
        %v6393 = vunpack.c.0.s8 %v6392
        %v6394 = vlaneseq
        %v6395 = vshrl.u32 %v6394, 7
        %v6396 = vsub.s32 %v6393, %v6395
        %v6397 = vrot.slane %v6381, %v6396
        %v6399 = vunpack.c.l.s4 1966171168
        %v6400 = vunpack.c.0.s8 %v6399
        %v6401 = vlaneseq
        %v6402 = vshrl.u32 %v6401, 7
        %v6403 = vsub.s32 %v6400, %v6402
        %v6404 = vrot.slane %v6382, %v6403
        %v6406 = vunpack.c.l.s4 1966171168
        %v6407 = vunpack.c.0.s8 %v6406
        %v6408 = vlaneseq
        %v6409 = vshrl.u32 %v6408, 7
        %v6410 = vsub.s32 %v6407, %v6409
        %v6411 = vrot.slane %v6383, %v6410
        %v6412 = vcombine.low %v6390, %v6397
        %v6413 = vcombine.low %v6404, %v6411
        %v6415 = vunpack.c.l.s4 1966171168
        %v6416 = vunpack.c.0.s8 %v6415
        %v6417 = vlaneseq
        %v6418 = vshrl.u32 %v6417, 7
        %v6419 = vsub.s32 %v6416, %v6418
        %v6420 = vrot.slane %v6412, %v6419
        %v6422 = vunpack.c.l.s4 1966171168
        %v6423 = vunpack.c.0.s8 %v6422
        %v6424 = vlaneseq
        %v6425 = vshrl.u32 %v6424, 7
        %v6426 = vsub.s32 %v6423, %v6425
        %v6427 = vrot.slane %v6413, %v6426
        %v6428 = vcombine.low %v6420, %v6427
        %v6429 = vcombine.low %v3181, %v3195
        %v6430 = vcombine.low %v3197, %v3199
        %v6431 = vcombine.low %v3222, %v3236
        %v6432 = vcombine.low %v3237, %v3238
        %v6434 = vunpack.c.l.s4 1966171168
        %v6435 = vunpack.c.0.s8 %v6434
        %v6436 = vlaneseq
        %v6437 = vshrl.u32 %v6436, 7
        %v6438 = vsub.s32 %v6435, %v6437
        %v6439 = vrot.slane %v6429, %v6438
        %v6441 = vunpack.c.l.s4 1966171168
        %v6442 = vunpack.c.0.s8 %v6441
        %v6443 = vlaneseq
        %v6444 = vshrl.u32 %v6443, 7
        %v6445 = vsub.s32 %v6442, %v6444
        %v6446 = vrot.slane %v6430, %v6445
        %v6448 = vunpack.c.l.s4 1966171168
        %v6449 = vunpack.c.0.s8 %v6448
        %v6450 = vlaneseq
        %v6451 = vshrl.u32 %v6450, 7
        %v6452 = vsub.s32 %v6449, %v6451
        %v6453 = vrot.slane %v6431, %v6452
        %v6455 = vunpack.c.l.s4 1966171168
        %v6456 = vunpack.c.0.s8 %v6455
        %v6457 = vlaneseq
        %v6458 = vshrl.u32 %v6457, 7
        %v6459 = vsub.s32 %v6456, %v6458
        %v6460 = vrot.slane %v6432, %v6459
        %v6461 = vcombine.low %v6439, %v6446
        %v6462 = vcombine.low %v6453, %v6460
        %v6464 = vunpack.c.l.s4 1966171168
        %v6465 = vunpack.c.0.s8 %v6464
        %v6466 = vlaneseq
        %v6467 = vshrl.u32 %v6466, 7
        %v6468 = vsub.s32 %v6465, %v6467
        %v6469 = vrot.slane %v6461, %v6468
        %v6471 = vunpack.c.l.s4 1966171168
        %v6472 = vunpack.c.0.s8 %v6471
        %v6473 = vlaneseq
        %v6474 = vshrl.u32 %v6473, 7
        %v6475 = vsub.s32 %v6472, %v6474
        %v6476 = vrot.slane %v6462, %v6475
        %v6477 = vcombine.low %v6469, %v6476
        %v6478 = vcombine.low %v3229, %v3694
        %v6479 = vcombine.low %v3276, %v3284
        %v6480 = vcombine.low %v3286, %v3269
        %v6481 = vcombine.low %v3283, %v3285
        %v6483 = vunpack.c.l.s4 1966171168
        %v6484 = vunpack.c.0.s8 %v6483
        %v6485 = vlaneseq
        %v6486 = vshrl.u32 %v6485, 7
        %v6487 = vsub.s32 %v6484, %v6486
        %v6488 = vrot.slane %v6478, %v6487
        %v6490 = vunpack.c.l.s4 1966171168
        %v6491 = vunpack.c.0.s8 %v6490
        %v6492 = vlaneseq
        %v6493 = vshrl.u32 %v6492, 7
        %v6494 = vsub.s32 %v6491, %v6493
        %v6495 = vrot.slane %v6479, %v6494
        %v6497 = vunpack.c.l.s4 1966171168
        %v6498 = vunpack.c.0.s8 %v6497
        %v6499 = vlaneseq
        %v6500 = vshrl.u32 %v6499, 7
        %v6501 = vsub.s32 %v6498, %v6500
        %v6502 = vrot.slane %v6480, %v6501
        %v6504 = vunpack.c.l.s4 1966171168
        %v6505 = vunpack.c.0.s8 %v6504
        %v6506 = vlaneseq
        %v6507 = vshrl.u32 %v6506, 7
        %v6508 = vsub.s32 %v6505, %v6507
        %v6509 = vrot.slane %v6481, %v6508
        %v6510 = vcombine.low %v6488, %v6495
        %v6511 = vcombine.low %v6502, %v6509
        %v6513 = vunpack.c.l.s4 1966171168
        %v6514 = vunpack.c.0.s8 %v6513
        %v6515 = vlaneseq
        %v6516 = vshrl.u32 %v6515, 7
        %v6517 = vsub.s32 %v6514, %v6516
        %v6518 = vrot.slane %v6510, %v6517
        %v6520 = vunpack.c.l.s4 1966171168
        %v6521 = vunpack.c.0.s8 %v6520
        %v6522 = vlaneseq
        %v6523 = vshrl.u32 %v6522, 7
        %v6524 = vsub.s32 %v6521, %v6523
        %v6525 = vrot.slane %v6511, %v6524
        %v6526 = vcombine.low %v6518, %v6525
        %v6527 = vcombine.low %v3287, %v3310
        %v6528 = vcombine.low %v3324, %v3325
        %v6529 = vcombine.low %v3326, %v3317
        %v6530 = vcombine.low %v3702, %v3364
        %v6532 = vunpack.c.l.s4 1966171168
        %v6533 = vunpack.c.0.s8 %v6532
        %v6534 = vlaneseq
        %v6535 = vshrl.u32 %v6534, 7
        %v6536 = vsub.s32 %v6533, %v6535
        %v6537 = vrot.slane %v6527, %v6536
        %v6539 = vunpack.c.l.s4 1966171168
        %v6540 = vunpack.c.0.s8 %v6539
        %v6541 = vlaneseq
        %v6542 = vshrl.u32 %v6541, 7
        %v6543 = vsub.s32 %v6540, %v6542
        %v6544 = vrot.slane %v6528, %v6543
        %v6546 = vunpack.c.l.s4 1966171168
        %v6547 = vunpack.c.0.s8 %v6546
        %v6548 = vlaneseq
        %v6549 = vshrl.u32 %v6548, 7
        %v6550 = vsub.s32 %v6547, %v6549
        %v6551 = vrot.slane %v6529, %v6550
        %v6553 = vunpack.c.l.s4 1966171168
        %v6554 = vunpack.c.0.s8 %v6553
        %v6555 = vlaneseq
        %v6556 = vshrl.u32 %v6555, 7
        %v6557 = vsub.s32 %v6554, %v6556
        %v6558 = vrot.slane %v6530, %v6557
        %v6559 = vcombine.low %v6537, %v6544
        %v6560 = vcombine.low %v6551, %v6558
        %v6562 = vunpack.c.l.s4 1966171168
        %v6563 = vunpack.c.0.s8 %v6562
        %v6564 = vlaneseq
        %v6565 = vshrl.u32 %v6564, 7
        %v6566 = vsub.s32 %v6563, %v6565
        %v6567 = vrot.slane %v6559, %v6566
        %v6569 = vunpack.c.l.s4 1966171168
        %v6570 = vunpack.c.0.s8 %v6569
        %v6571 = vlaneseq
        %v6572 = vshrl.u32 %v6571, 7
        %v6573 = vsub.s32 %v6570, %v6572
        %v6574 = vrot.slane %v6560, %v6573
        %v6575 = vcombine.low %v6567, %v6574
        %v6576 = vcombine.low %v3372, %v3374
        %v6577 = vcombine.low %v3357, %v3371
        %v6578 = vcombine.low %v3373, %v3375
        %v6579 = vcombine.low %v3398, %v3412
        %v6581 = vunpack.c.l.s4 1966171168
        %v6582 = vunpack.c.0.s8 %v6581
        %v6583 = vlaneseq
        %v6584 = vshrl.u32 %v6583, 7
        %v6585 = vsub.s32 %v6582, %v6584
        %v6586 = vrot.slane %v6576, %v6585
        %v6588 = vunpack.c.l.s4 1966171168
        %v6589 = vunpack.c.0.s8 %v6588
        %v6590 = vlaneseq
        %v6591 = vshrl.u32 %v6590, 7
        %v6592 = vsub.s32 %v6589, %v6591
        %v6593 = vrot.slane %v6577, %v6592
        %v6595 = vunpack.c.l.s4 1966171168
        %v6596 = vunpack.c.0.s8 %v6595
        %v6597 = vlaneseq
        %v6598 = vshrl.u32 %v6597, 7
        %v6599 = vsub.s32 %v6596, %v6598
        %v6600 = vrot.slane %v6578, %v6599
        %v6602 = vunpack.c.l.s4 1966171168
        %v6603 = vunpack.c.0.s8 %v6602
        %v6604 = vlaneseq
        %v6605 = vshrl.u32 %v6604, 7
        %v6606 = vsub.s32 %v6603, %v6605
        %v6607 = vrot.slane %v6579, %v6606
        %v6608 = vcombine.low %v6586, %v6593
        %v6609 = vcombine.low %v6600, %v6607
        %v6611 = vunpack.c.l.s4 1966171168
        %v6612 = vunpack.c.0.s8 %v6611
        %v6613 = vlaneseq
        %v6614 = vshrl.u32 %v6613, 7
        %v6615 = vsub.s32 %v6612, %v6614
        %v6616 = vrot.slane %v6608, %v6615
        %v6618 = vunpack.c.l.s4 1966171168
        %v6619 = vunpack.c.0.s8 %v6618
        %v6620 = vlaneseq
        %v6621 = vshrl.u32 %v6620, 7
        %v6622 = vsub.s32 %v6619, %v6621
        %v6623 = vrot.slane %v6609, %v6622
        %v6624 = vcombine.low %v6616, %v6623
        %v6625 = vcombine.low %v3413, %v3414
        %v6626 = vcombine.low %v3405, %v3710
        %v6627 = vcombine.low %v3452, %v3460
        %v6628 = vcombine.low %v3462, %v3445
        %v6630 = vunpack.c.l.s4 1966171168
        %v6631 = vunpack.c.0.s8 %v6630
        %v6632 = vlaneseq
        %v6633 = vshrl.u32 %v6632, 7
        %v6634 = vsub.s32 %v6631, %v6633
        %v6635 = vrot.slane %v6625, %v6634
        %v6637 = vunpack.c.l.s4 1966171168
        %v6638 = vunpack.c.0.s8 %v6637
        %v6639 = vlaneseq
        %v6640 = vshrl.u32 %v6639, 7
        %v6641 = vsub.s32 %v6638, %v6640
        %v6642 = vrot.slane %v6626, %v6641
        %v6644 = vunpack.c.l.s4 1966171168
        %v6645 = vunpack.c.0.s8 %v6644
        %v6646 = vlaneseq
        %v6647 = vshrl.u32 %v6646, 7
        %v6648 = vsub.s32 %v6645, %v6647
        %v6649 = vrot.slane %v6627, %v6648
        %v6651 = vunpack.c.l.s4 1966171168
        %v6652 = vunpack.c.0.s8 %v6651
        %v6653 = vlaneseq
        %v6654 = vshrl.u32 %v6653, 7
        %v6655 = vsub.s32 %v6652, %v6654
        %v6656 = vrot.slane %v6628, %v6655
        %v6657 = vcombine.low %v6635, %v6642
        %v6658 = vcombine.low %v6649, %v6656
        %v6660 = vunpack.c.l.s4 1966171168
        %v6661 = vunpack.c.0.s8 %v6660
        %v6662 = vlaneseq
        %v6663 = vshrl.u32 %v6662, 7
        %v6664 = vsub.s32 %v6661, %v6663
        %v6665 = vrot.slane %v6657, %v6664
        %v6667 = vunpack.c.l.s4 1966171168
        %v6668 = vunpack.c.0.s8 %v6667
        %v6669 = vlaneseq
        %v6670 = vshrl.u32 %v6669, 7
        %v6671 = vsub.s32 %v6668, %v6670
        %v6672 = vrot.slane %v6658, %v6671
        %v6673 = vcombine.low %v6665, %v6672
        %v6674 = vcombine.low %v3459, %v3461
        %v6675 = vcombine.low %v3463, %v3486
        %v6676 = vcombine.low %v3500, %v3501
        %v6677 = vcombine.low %v3502, %v3493
        %v6679 = vunpack.c.l.s4 1966171168
        %v6680 = vunpack.c.0.s8 %v6679
        %v6681 = vlaneseq
        %v6682 = vshrl.u32 %v6681, 7
        %v6683 = vsub.s32 %v6680, %v6682
        %v6684 = vrot.slane %v6674, %v6683
        %v6686 = vunpack.c.l.s4 1966171168
        %v6687 = vunpack.c.0.s8 %v6686
        %v6688 = vlaneseq
        %v6689 = vshrl.u32 %v6688, 7
        %v6690 = vsub.s32 %v6687, %v6689
        %v6691 = vrot.slane %v6675, %v6690
        %v6693 = vunpack.c.l.s4 1966171168
        %v6694 = vunpack.c.0.s8 %v6693
        %v6695 = vlaneseq
        %v6696 = vshrl.u32 %v6695, 7
        %v6697 = vsub.s32 %v6694, %v6696
        %v6698 = vrot.slane %v6676, %v6697
        %v6700 = vunpack.c.l.s4 1966171168
        %v6701 = vunpack.c.0.s8 %v6700
        %v6702 = vlaneseq
        %v6703 = vshrl.u32 %v6702, 7
        %v6704 = vsub.s32 %v6701, %v6703
        %v6705 = vrot.slane %v6677, %v6704
        %v6706 = vcombine.low %v6684, %v6691
        %v6707 = vcombine.low %v6698, %v6705
        %v6709 = vunpack.c.l.s4 1966171168
        %v6710 = vunpack.c.0.s8 %v6709
        %v6711 = vlaneseq
        %v6712 = vshrl.u32 %v6711, 7
        %v6713 = vsub.s32 %v6710, %v6712
        %v6714 = vrot.slane %v6706, %v6713
        %v6716 = vunpack.c.l.s4 1966171168
        %v6717 = vunpack.c.0.s8 %v6716
        %v6718 = vlaneseq
        %v6719 = vshrl.u32 %v6718, 7
        %v6720 = vsub.s32 %v6717, %v6719
        %v6721 = vrot.slane %v6707, %v6720
        %v6722 = vcombine.low %v6714, %v6721
        %v6723 = vcombine.low %v3718, %v3540
        %v6724 = vcombine.low %v3548, %v3550
        %v6725 = vcombine.low %v3533, %v3547
        %v6726 = vcombine.low %v3549, %v3551
        %v6728 = vunpack.c.l.s4 1966171168
        %v6729 = vunpack.c.0.s8 %v6728
        %v6730 = vlaneseq
        %v6731 = vshrl.u32 %v6730, 7
        %v6732 = vsub.s32 %v6729, %v6731
        %v6733 = vrot.slane %v6723, %v6732
        %v6735 = vunpack.c.l.s4 1966171168
        %v6736 = vunpack.c.0.s8 %v6735
        %v6737 = vlaneseq
        %v6738 = vshrl.u32 %v6737, 7
        %v6739 = vsub.s32 %v6736, %v6738
        %v6740 = vrot.slane %v6724, %v6739
        %v6742 = vunpack.c.l.s4 1966171168
        %v6743 = vunpack.c.0.s8 %v6742
        %v6744 = vlaneseq
        %v6745 = vshrl.u32 %v6744, 7
        %v6746 = vsub.s32 %v6743, %v6745
        %v6747 = vrot.slane %v6725, %v6746
        %v6749 = vunpack.c.l.s4 1966171168
        %v6750 = vunpack.c.0.s8 %v6749
        %v6751 = vlaneseq
        %v6752 = vshrl.u32 %v6751, 7
        %v6753 = vsub.s32 %v6750, %v6752
        %v6754 = vrot.slane %v6726, %v6753
        %v6755 = vcombine.low %v6733, %v6740
        %v6756 = vcombine.low %v6747, %v6754
        %v6758 = vunpack.c.l.s4 1966171168
        %v6759 = vunpack.c.0.s8 %v6758
        %v6760 = vlaneseq
        %v6761 = vshrl.u32 %v6760, 7
        %v6762 = vsub.s32 %v6759, %v6761
        %v6763 = vrot.slane %v6755, %v6762
        %v6765 = vunpack.c.l.s4 1966171168
        %v6766 = vunpack.c.0.s8 %v6765
        %v6767 = vlaneseq
        %v6768 = vshrl.u32 %v6767, 7
        %v6769 = vsub.s32 %v6766, %v6768
        %v6770 = vrot.slane %v6756, %v6769
        %v6771 = vcombine.low %v6763, %v6770
        %v6772 = vcombine.low %v3574, %v3588
        %v6773 = vcombine.low %v3589, %v3590
        %v6774 = vcombine.low %v3581, %v3726
        %v6775 = vcombine.low %v3628, %v3636
        %v6777 = vunpack.c.l.s4 1966171168
        %v6778 = vunpack.c.0.s8 %v6777
        %v6779 = vlaneseq
        %v6780 = vshrl.u32 %v6779, 7
        %v6781 = vsub.s32 %v6778, %v6780
        %v6782 = vrot.slane %v6772, %v6781
        %v6784 = vunpack.c.l.s4 1966171168
        %v6785 = vunpack.c.0.s8 %v6784
        %v6786 = vlaneseq
        %v6787 = vshrl.u32 %v6786, 7
        %v6788 = vsub.s32 %v6785, %v6787
        %v6789 = vrot.slane %v6773, %v6788
        %v6791 = vunpack.c.l.s4 1966171168
        %v6792 = vunpack.c.0.s8 %v6791
        %v6793 = vlaneseq
        %v6794 = vshrl.u32 %v6793, 7
        %v6795 = vsub.s32 %v6792, %v6794
        %v6796 = vrot.slane %v6774, %v6795
        %v6798 = vunpack.c.l.s4 1966171168
        %v6799 = vunpack.c.0.s8 %v6798
        %v6800 = vlaneseq
        %v6801 = vshrl.u32 %v6800, 7
        %v6802 = vsub.s32 %v6799, %v6801
        %v6803 = vrot.slane %v6775, %v6802
        %v6804 = vcombine.low %v6782, %v6789
        %v6805 = vcombine.low %v6796, %v6803
        %v6807 = vunpack.c.l.s4 1966171168
        %v6808 = vunpack.c.0.s8 %v6807
        %v6809 = vlaneseq
        %v6810 = vshrl.u32 %v6809, 7
        %v6811 = vsub.s32 %v6808, %v6810
        %v6812 = vrot.slane %v6804, %v6811
        %v6814 = vunpack.c.l.s4 1966171168
        %v6815 = vunpack.c.0.s8 %v6814
        %v6816 = vlaneseq
        %v6817 = vshrl.u32 %v6816, 7
        %v6818 = vsub.s32 %v6815, %v6817
        %v6819 = vrot.slane %v6805, %v6818
        %v6820 = vcombine.low %v6812, %v6819
        %v6821 = vcombine.low %v3638, %v3621
        %v6822 = vcombine.low %v3635, %v3637
        %v6823 = vcombine.low %v3639, %v3662
        %v6824 = vcombine.low %v3676, %v3677
        %v6826 = vunpack.c.l.s4 1966171168
        %v6827 = vunpack.c.0.s8 %v6826
        %v6828 = vlaneseq
        %v6829 = vshrl.u32 %v6828, 7
        %v6830 = vsub.s32 %v6827, %v6829
        %v6831 = vrot.slane %v6821, %v6830
        %v6833 = vunpack.c.l.s4 1966171168
        %v6834 = vunpack.c.0.s8 %v6833
        %v6835 = vlaneseq
        %v6836 = vshrl.u32 %v6835, 7
        %v6837 = vsub.s32 %v6834, %v6836
        %v6838 = vrot.slane %v6822, %v6837
        %v6840 = vunpack.c.l.s4 1966171168
        %v6841 = vunpack.c.0.s8 %v6840
        %v6842 = vlaneseq
        %v6843 = vshrl.u32 %v6842, 7
        %v6844 = vsub.s32 %v6841, %v6843
        %v6845 = vrot.slane %v6823, %v6844
        %v6847 = vunpack.c.l.s4 1966171168
        %v6848 = vunpack.c.0.s8 %v6847
        %v6849 = vlaneseq
        %v6850 = vshrl.u32 %v6849, 7
        %v6851 = vsub.s32 %v6848, %v6850
        %v6852 = vrot.slane %v6824, %v6851
        %v6853 = vcombine.low %v6831, %v6838
        %v6854 = vcombine.low %v6845, %v6852
        %v6856 = vunpack.c.l.s4 1966171168
        %v6857 = vunpack.c.0.s8 %v6856
        %v6858 = vlaneseq
        %v6859 = vshrl.u32 %v6858, 7
        %v6860 = vsub.s32 %v6857, %v6859
        %v6861 = vrot.slane %v6853, %v6860
        %v6863 = vunpack.c.l.s4 1966171168
        %v6864 = vunpack.c.0.s8 %v6863
        %v6865 = vlaneseq
        %v6866 = vshrl.u32 %v6865, 7
        %v6867 = vsub.s32 %v6864, %v6866
        %v6868 = vrot.slane %v6854, %v6867
        %v6869 = vcombine.low %v6861, %v6868
        %v6870 = vcombine.low %v3678, %v3669
        %v6872 = vunpack.c.l.s4 1966171168
        %v6873 = vunpack.c.0.s8 %v6872
        %v6874 = vlaneseq
        %v6875 = vshrl.u32 %v6874, 7
        %v6876 = vsub.s32 %v6873, %v6875
        %v6877 = vrot.slane %v6870, %v6876
        %v6879 = vunpack.c.l.s4 1966171168
        %v6880 = vunpack.c.0.s8 %v6879
        %v6881 = vlaneseq
        %v6882 = vshrl.u32 %v6881, 7
        %v6883 = vsub.s32 %v6880, %v6882
        %v6884 = vrot.slane %v3734, %v6883
        %v6885 = vcombine.low %v6877, %v6884
        %v6887 = vunpack.c.l.s4 1966171168
        %v6888 = vunpack.c.0.s8 %v6887
        %v6889 = vlaneseq
        %v6890 = vshrl.u32 %v6889, 7
        %v6891 = vsub.s32 %v6888, %v6890
        %v6892 = vrot.slane %v6885, %v6891
        %6893 = vrot.lane.b32.xlu0 %v6379, 32
        %v6894 = vpop.permute.xlu0 %6893
        %6895 = vrot.lane.b32.xlu0 %v6428, 32
        %v6896 = vpop.permute.xlu0 %6895
        %6897 = vrot.lane.b32.xlu0 %v6477, 32
        %v6898 = vpop.permute.xlu0 %6897
        %6899 = vrot.lane.b32.xlu0 %v6526, 32
        %v6900 = vpop.permute.xlu0 %6899
        %6901 = vrot.lane.b32.xlu0 %v6575, 32
        %v6902 = vpop.permute.xlu0 %6901
        %6903 = vrot.lane.b32.xlu0 %v6624, 32
        %v6904 = vpop.permute.xlu0 %6903
        %6905 = vrot.lane.b32.xlu0 %v6673, 32
        %v6906 = vpop.permute.xlu0 %6905
        %6907 = vrot.lane.b32.xlu0 %v6722, 32
        %v6908 = vpop.permute.xlu0 %6907
        %6909 = vrot.lane.b32.xlu0 %v6771, 32
        %v6910 = vpop.permute.xlu0 %6909
        %6911 = vrot.lane.b32.xlu0 %v6820, 32
        %v6912 = vpop.permute.xlu0 %6911
        %6913 = vrot.lane.b32.xlu0 %v6869, 32
        %v6914 = vpop.permute.xlu0 %6913
        %6915 = vrot.lane.b32.xlu0 %v6892, 32
        %v6916 = vpop.permute.xlu0 %6915
        %v6929 = vcombine.low %v5774, %v5781
        %v6930 = vcombine.low %v5788, %v5816
        %v6932 = vunpack.c.l.s4 1966171168
        %v6933 = vunpack.c.0.s8 %v6932
        %v6934 = vlaneseq
        %v6935 = vshrl.u32 %v6934, 7
        %v6936 = vsub.s32 %v6933, %v6935
        %v6937 = vrot.slane %v6929, %v6936
        %v6939 = vunpack.c.l.s4 1966171168
        %v6940 = vunpack.c.0.s8 %v6939
        %v6941 = vlaneseq
        %v6942 = vshrl.u32 %v6941, 7
        %v6943 = vsub.s32 %v6940, %v6942
        %v6944 = vrot.slane %v6930, %v6943
        %v6945 = vcombine.low %v6937, %v6944
        %v6946 = vcombine.low %v3141, %v3686
        %v6947 = vcombine.low %v3735, %v3196
        %v6949 = vunpack.c.l.s4 1966171168
        %v6950 = vunpack.c.0.s8 %v6949
        %v6951 = vlaneseq
        %v6952 = vshrl.u32 %v6951, 7
        %v6953 = vsub.s32 %v6950, %v6952
        %v6954 = vrot.slane %v6946, %v6953
        %v6956 = vunpack.c.l.s4 1966171168
        %v6957 = vunpack.c.0.s8 %v6956
        %v6958 = vlaneseq
        %v6959 = vshrl.u32 %v6958, 7
        %v6960 = vsub.s32 %v6957, %v6959
        %v6961 = vrot.slane %v6947, %v6960
        %v6962 = vcombine.low %v5823, %v6954
        %v6963 = vcombine.low %v6961, %v5865
        %v6965 = vunpack.c.l.s4 1966171168
        %v6966 = vunpack.c.0.s8 %v6965
        %v6967 = vlaneseq
        %v6968 = vshrl.u32 %v6967, 7
        %v6969 = vsub.s32 %v6966, %v6968
        %v6970 = vrot.slane %v6962, %v6969
        %v6972 = vunpack.c.l.s4 1966171168
        %v6973 = vunpack.c.0.s8 %v6972
        %v6974 = vlaneseq
        %v6975 = vshrl.u32 %v6974, 7
        %v6976 = vsub.s32 %v6973, %v6975
        %v6977 = vrot.slane %v6963, %v6976
        %v6978 = vcombine.low %v6970, %v6977
        %v6979 = vcombine.low %v5872, %v5879
        %v6980 = vcombine.low %v5886, %v5914
        %v6982 = vunpack.c.l.s4 1966171168
        %v6983 = vunpack.c.0.s8 %v6982
        %v6984 = vlaneseq
        %v6985 = vshrl.u32 %v6984, 7
        %v6986 = vsub.s32 %v6983, %v6985
        %v6987 = vrot.slane %v6979, %v6986
        %v6989 = vunpack.c.l.s4 1966171168
        %v6990 = vunpack.c.0.s8 %v6989
        %v6991 = vlaneseq
        %v6992 = vshrl.u32 %v6991, 7
        %v6993 = vsub.s32 %v6990, %v6992
        %v6994 = vrot.slane %v6980, %v6993
        %v6995 = vcombine.low %v6987, %v6994
        %v6996 = vcombine.low %v3694, %v3736
        %v6998 = vunpack.c.l.s4 1966171168
        %v6999 = vunpack.c.0.s8 %v6998
        %v7000 = vlaneseq
        %v7001 = vshrl.u32 %v7000, 7
        %v7002 = vsub.s32 %v6999, %v7001
        %v7003 = vrot.slane %v6996, %v7002
        %v7004 = vcombine.low %v7003, %v5928
        %v7005 = vcombine.low %v5935, %v5963
        %v7007 = vunpack.c.l.s4 1966171168
        %v7008 = vunpack.c.0.s8 %v7007
        %v7009 = vlaneseq
        %v7010 = vshrl.u32 %v7009, 7
        %v7011 = vsub.s32 %v7008, %v7010
        %v7012 = vrot.slane %v7004, %v7011
        %v7014 = vunpack.c.l.s4 1966171168
        %v7015 = vunpack.c.0.s8 %v7014
        %v7016 = vlaneseq
        %v7017 = vshrl.u32 %v7016, 7
        %v7018 = vsub.s32 %v7015, %v7017
        %v7019 = vrot.slane %v7005, %v7018
        %v7020 = vcombine.low %v7012, %v7019
        %v7021 = vcombine.low %v3317, %v3702
        %v7022 = vcombine.low %v3737, %v3372
        %v7024 = vunpack.c.l.s4 1966171168
        %v7025 = vunpack.c.0.s8 %v7024
        %v7026 = vlaneseq
        %v7027 = vshrl.u32 %v7026, 7
        %v7028 = vsub.s32 %v7025, %v7027
        %v7029 = vrot.slane %v7021, %v7028
        %v7031 = vunpack.c.l.s4 1966171168
        %v7032 = vunpack.c.0.s8 %v7031
        %v7033 = vlaneseq
        %v7034 = vshrl.u32 %v7033, 7
        %v7035 = vsub.s32 %v7032, %v7034
        %v7036 = vrot.slane %v7022, %v7035
        %v7037 = vcombine.low %v5970, %v5977
        %v7038 = vcombine.low %v7029, %v7036
        %v7040 = vunpack.c.l.s4 1966171168
        %v7041 = vunpack.c.0.s8 %v7040
        %v7042 = vlaneseq
        %v7043 = vshrl.u32 %v7042, 7
        %v7044 = vsub.s32 %v7041, %v7043
        %v7045 = vrot.slane %v7037, %v7044
        %v7047 = vunpack.c.l.s4 1966171168
        %v7048 = vunpack.c.0.s8 %v7047
        %v7049 = vlaneseq
        %v7050 = vshrl.u32 %v7049, 7
        %v7051 = vsub.s32 %v7048, %v7050
        %v7052 = vrot.slane %v7038, %v7051
        %v7053 = vcombine.low %v7045, %v7052
        %v7054 = vcombine.low %v6019, %v6026
        %v7055 = vcombine.low %v6033, %v6061
        %v7057 = vunpack.c.l.s4 1966171168
        %v7058 = vunpack.c.0.s8 %v7057
        %v7059 = vlaneseq
        %v7060 = vshrl.u32 %v7059, 7
        %v7061 = vsub.s32 %v7058, %v7060
        %v7062 = vrot.slane %v7054, %v7061
        %v7064 = vunpack.c.l.s4 1966171168
        %v7065 = vunpack.c.0.s8 %v7064
        %v7066 = vlaneseq
        %v7067 = vshrl.u32 %v7066, 7
        %v7068 = vsub.s32 %v7065, %v7067
        %v7069 = vrot.slane %v7055, %v7068
        %v7070 = vcombine.low %v7062, %v7069
        %v7071 = vcombine.low %v3710, %v3738
        %v7073 = vunpack.c.l.s4 1966171168
        %v7074 = vunpack.c.0.s8 %v7073
        %v7075 = vlaneseq
        %v7076 = vshrl.u32 %v7075, 7
        %v7077 = vsub.s32 %v7074, %v7076
        %v7078 = vrot.slane %v7071, %v7077
        %v7079 = vcombine.low %v6068, %v7078
        %v7080 = vcombine.low %v6082, %v6110
        %v7082 = vunpack.c.l.s4 1966171168
        %v7083 = vunpack.c.0.s8 %v7082
        %v7084 = vlaneseq
        %v7085 = vshrl.u32 %v7084, 7
        %v7086 = vsub.s32 %v7083, %v7085
        %v7087 = vrot.slane %v7079, %v7086
        %v7089 = vunpack.c.l.s4 1966171168
        %v7090 = vunpack.c.0.s8 %v7089
        %v7091 = vlaneseq
        %v7092 = vshrl.u32 %v7091, 7
        %v7093 = vsub.s32 %v7090, %v7092
        %v7094 = vrot.slane %v7080, %v7093
        %v7095 = vcombine.low %v7087, %v7094
        %v7096 = vcombine.low %v3493, %v3718
        %v7098 = vunpack.c.l.s4 1966171168
        %v7099 = vunpack.c.0.s8 %v7098
        %v7100 = vlaneseq
        %v7101 = vshrl.u32 %v7100, 7
        %v7102 = vsub.s32 %v7099, %v7101
        %v7103 = vrot.slane %v7096, %v7102
        %v7104 = vcombine.low %v6117, %v6124
        %v7105 = vcombine.low %v6131, %v7103
        %v7107 = vunpack.c.l.s4 1966171168
        %v7108 = vunpack.c.0.s8 %v7107
        %v7109 = vlaneseq
        %v7110 = vshrl.u32 %v7109, 7
        %v7111 = vsub.s32 %v7108, %v7110
        %v7112 = vrot.slane %v7104, %v7111
        %v7114 = vunpack.c.l.s4 1966171168
        %v7115 = vunpack.c.0.s8 %v7114
        %v7116 = vlaneseq
        %v7117 = vshrl.u32 %v7116, 7
        %v7118 = vsub.s32 %v7115, %v7117
        %v7119 = vrot.slane %v7105, %v7118
        %v7120 = vcombine.low %v7112, %v7119
        %v7121 = vcombine.low %v3739, %v3548
        %v7123 = vunpack.c.l.s4 1966171168
        %v7124 = vunpack.c.0.s8 %v7123
        %v7125 = vlaneseq
        %v7126 = vshrl.u32 %v7125, 7
        %v7127 = vsub.s32 %v7124, %v7126
        %v7128 = vrot.slane %v7121, %v7127
        %v7129 = vcombine.low %v7128, %v6173
        %v7130 = vcombine.low %v6180, %v6208
        %v7132 = vunpack.c.l.s4 1966171168
        %v7133 = vunpack.c.0.s8 %v7132
        %v7134 = vlaneseq
        %v7135 = vshrl.u32 %v7134, 7
        %v7136 = vsub.s32 %v7133, %v7135
        %v7137 = vrot.slane %v7129, %v7136
        %v7139 = vunpack.c.l.s4 1966171168
        %v7140 = vunpack.c.0.s8 %v7139
        %v7141 = vlaneseq
        %v7142 = vshrl.u32 %v7141, 7
        %v7143 = vsub.s32 %v7140, %v7142
        %v7144 = vrot.slane %v7130, %v7143
        %v7145 = vcombine.low %v7137, %v7144
        %v7146 = vcombine.low %v3726, %v3740
        %v7148 = vunpack.c.l.s4 1966171168
        %v7149 = vunpack.c.0.s8 %v7148
        %v7150 = vlaneseq
        %v7151 = vshrl.u32 %v7150, 7
        %v7152 = vsub.s32 %v7149, %v7151
        %v7153 = vrot.slane %v7146, %v7152
        %v7154 = vcombine.low %v6215, %v6222
        %v7155 = vcombine.low %v7153, %v6257
        %v7157 = vunpack.c.l.s4 1966171168
        %v7158 = vunpack.c.0.s8 %v7157
        %v7159 = vlaneseq
        %v7160 = vshrl.u32 %v7159, 7
        %v7161 = vsub.s32 %v7158, %v7160
        %v7162 = vrot.slane %v7154, %v7161
        %v7164 = vunpack.c.l.s4 1966171168
        %v7165 = vunpack.c.0.s8 %v7164
        %v7166 = vlaneseq
        %v7167 = vshrl.u32 %v7166, 7
        %v7168 = vsub.s32 %v7165, %v7167
        %v7169 = vrot.slane %v7155, %v7168
        %v7170 = vcombine.low %v7162, %v7169
        %v7171 = vcombine.low %v6264, %v6271
        %v7172 = vcombine.low %v6278, %v6303
        %v7174 = vunpack.c.l.s4 1966171168
        %v7175 = vunpack.c.0.s8 %v7174
        %v7176 = vlaneseq
        %v7177 = vshrl.u32 %v7176, 7
        %v7178 = vsub.s32 %v7175, %v7177
        %v7179 = vrot.slane %v7171, %v7178
        %v7181 = vunpack.c.l.s4 1966171168
        %v7182 = vunpack.c.0.s8 %v7181
        %v7183 = vlaneseq
        %v7184 = vshrl.u32 %v7183, 7
        %v7185 = vsub.s32 %v7182, %v7184
        %v7186 = vrot.slane %v7172, %v7185
        %v7187 = vcombine.low %v7179, %v7186
        %v7188 = vcombine.low %v3669, %v3734
        %v7190 = vunpack.c.l.s4 1966171168
        %v7191 = vunpack.c.0.s8 %v7190
        %v7192 = vlaneseq
        %v7193 = vshrl.u32 %v7192, 7
        %v7194 = vsub.s32 %v7191, %v7193
        %v7195 = vrot.slane %v7188, %v7194
        %v7197 = vunpack.c.l.s4 1966171168
        %v7198 = vunpack.c.0.s8 %v7197
        %v7199 = vlaneseq
        %v7200 = vshrl.u32 %v7199, 7
        %v7201 = vsub.s32 %v7198, %v7200
        %v7202 = vrot.slane %v3741, %v7201
        %v7203 = vcombine.low %v7195, %v7202
        %v7205 = vunpack.c.l.s4 1966171168
        %v7206 = vunpack.c.0.s8 %v7205
        %v7207 = vlaneseq
        %v7208 = vshrl.u32 %v7207, 7
        %v7209 = vsub.s32 %v7206, %v7208
        %v7210 = vrot.slane %v7203, %v7209
        %7211 = vrot.lane.b32.xlu0 %v6945, 64
        %v7212 = vpop.permute.xlu0 %7211
        %7213 = vrot.lane.b32.xlu0 %v6978, 64
        %v7214 = vpop.permute.xlu0 %7213
        %7215 = vrot.lane.b32.xlu0 %v6995, 64
        %v7216 = vpop.permute.xlu0 %7215
        %7217 = vrot.lane.b32.xlu0 %v7020, 64
        %v7218 = vpop.permute.xlu0 %7217
        %7219 = vrot.lane.b32.xlu0 %v7053, 64
        %v7220 = vpop.permute.xlu0 %7219
        %7221 = vrot.lane.b32.xlu0 %v7070, 64
        %v7222 = vpop.permute.xlu0 %7221
        %7223 = vrot.lane.b32.xlu0 %v7095, 64
        %v7224 = vpop.permute.xlu0 %7223
        %7225 = vrot.lane.b32.xlu0 %v7120, 64
        %v7226 = vpop.permute.xlu0 %7225
        %7227 = vrot.lane.b32.xlu0 %v7145, 64
        %v7228 = vpop.permute.xlu0 %7227
        %7229 = vrot.lane.b32.xlu0 %v7170, 64
        %v7230 = vpop.permute.xlu0 %7229
        %7231 = vrot.lane.b32.xlu0 %v7187, 64
        %v7232 = vpop.permute.xlu0 %7231
        %7233 = vrot.lane.b32.xlu0 %v7210, 64
        %v7234 = vpop.permute.xlu0 %7233
        %v7247 = vcombine.low %v6348, %v6355
        %v7248 = vcombine.low %v6362, %v6390
        %v7250 = vunpack.c.l.s4 1966171168
        %v7251 = vunpack.c.0.s8 %v7250
        %v7252 = vlaneseq
        %v7253 = vshrl.u32 %v7252, 7
        %v7254 = vsub.s32 %v7251, %v7253
        %v7255 = vrot.slane %v7247, %v7254
        %v7257 = vunpack.c.l.s4 1966171168
        %v7258 = vunpack.c.0.s8 %v7257
        %v7259 = vlaneseq
        %v7260 = vshrl.u32 %v7259, 7
        %v7261 = vsub.s32 %v7258, %v7260
        %v7262 = vrot.slane %v7248, %v7261
        %v7263 = vcombine.low %v7255, %v7262
        %v7264 = vcombine.low %v3686, %v3735
        %v7265 = vcombine.low %v3742, %v3198
        %v7267 = vunpack.c.l.s4 1966171168
        %v7268 = vunpack.c.0.s8 %v7267
        %v7269 = vlaneseq
        %v7270 = vshrl.u32 %v7269, 7
        %v7271 = vsub.s32 %v7268, %v7270
        %v7272 = vrot.slane %v7264, %v7271
        %v7274 = vunpack.c.l.s4 1966171168
        %v7275 = vunpack.c.0.s8 %v7274
        %v7276 = vlaneseq
        %v7277 = vshrl.u32 %v7276, 7
        %v7278 = vsub.s32 %v7275, %v7277
        %v7279 = vrot.slane %v7265, %v7278
        %v7280 = vcombine.low %v6397, %v7272
        %v7281 = vcombine.low %v7279, %v6439
        %v7283 = vunpack.c.l.s4 1966171168
        %v7284 = vunpack.c.0.s8 %v7283
        %v7285 = vlaneseq
        %v7286 = vshrl.u32 %v7285, 7
        %v7287 = vsub.s32 %v7284, %v7286
        %v7288 = vrot.slane %v7280, %v7287
        %v7290 = vunpack.c.l.s4 1966171168
        %v7291 = vunpack.c.0.s8 %v7290
        %v7292 = vlaneseq
        %v7293 = vshrl.u32 %v7292, 7
        %v7294 = vsub.s32 %v7291, %v7293
        %v7295 = vrot.slane %v7281, %v7294
        %v7296 = vcombine.low %v7288, %v7295
        %v7297 = vcombine.low %v6446, %v6453
        %v7298 = vcombine.low %v6460, %v6488
        %v7300 = vunpack.c.l.s4 1966171168
        %v7301 = vunpack.c.0.s8 %v7300
        %v7302 = vlaneseq
        %v7303 = vshrl.u32 %v7302, 7
        %v7304 = vsub.s32 %v7301, %v7303
        %v7305 = vrot.slane %v7297, %v7304
        %v7307 = vunpack.c.l.s4 1966171168
        %v7308 = vunpack.c.0.s8 %v7307
        %v7309 = vlaneseq
        %v7310 = vshrl.u32 %v7309, 7
        %v7311 = vsub.s32 %v7308, %v7310
        %v7312 = vrot.slane %v7298, %v7311
        %v7313 = vcombine.low %v7305, %v7312
        %v7314 = vcombine.low %v3736, %v3743
        %v7316 = vunpack.c.l.s4 1966171168
        %v7317 = vunpack.c.0.s8 %v7316
        %v7318 = vlaneseq
        %v7319 = vshrl.u32 %v7318, 7
        %v7320 = vsub.s32 %v7317, %v7319
        %v7321 = vrot.slane %v7314, %v7320
        %v7322 = vcombine.low %v7321, %v6502
        %v7323 = vcombine.low %v6509, %v6537
        %v7325 = vunpack.c.l.s4 1966171168
        %v7326 = vunpack.c.0.s8 %v7325
        %v7327 = vlaneseq
        %v7328 = vshrl.u32 %v7327, 7
        %v7329 = vsub.s32 %v7326, %v7328
        %v7330 = vrot.slane %v7322, %v7329
        %v7332 = vunpack.c.l.s4 1966171168
        %v7333 = vunpack.c.0.s8 %v7332
        %v7334 = vlaneseq
        %v7335 = vshrl.u32 %v7334, 7
        %v7336 = vsub.s32 %v7333, %v7335
        %v7337 = vrot.slane %v7323, %v7336
        %v7338 = vcombine.low %v7330, %v7337
        %v7339 = vcombine.low %v3702, %v3737
        %v7340 = vcombine.low %v3744, %v3374
        %v7342 = vunpack.c.l.s4 1966171168
        %v7343 = vunpack.c.0.s8 %v7342
        %v7344 = vlaneseq
        %v7345 = vshrl.u32 %v7344, 7
        %v7346 = vsub.s32 %v7343, %v7345
        %v7347 = vrot.slane %v7339, %v7346
        %v7349 = vunpack.c.l.s4 1966171168
        %v7350 = vunpack.c.0.s8 %v7349
        %v7351 = vlaneseq
        %v7352 = vshrl.u32 %v7351, 7
        %v7353 = vsub.s32 %v7350, %v7352
        %v7354 = vrot.slane %v7340, %v7353
        %v7355 = vcombine.low %v6544, %v6551
        %v7356 = vcombine.low %v7347, %v7354
        %v7358 = vunpack.c.l.s4 1966171168
        %v7359 = vunpack.c.0.s8 %v7358
        %v7360 = vlaneseq
        %v7361 = vshrl.u32 %v7360, 7
        %v7362 = vsub.s32 %v7359, %v7361
        %v7363 = vrot.slane %v7355, %v7362
        %v7365 = vunpack.c.l.s4 1966171168
        %v7366 = vunpack.c.0.s8 %v7365
        %v7367 = vlaneseq
        %v7368 = vshrl.u32 %v7367, 7
        %v7369 = vsub.s32 %v7366, %v7368
        %v7370 = vrot.slane %v7356, %v7369
        %v7371 = vcombine.low %v7363, %v7370
        %v7372 = vcombine.low %v6593, %v6600
        %v7373 = vcombine.low %v6607, %v6635
        %v7375 = vunpack.c.l.s4 1966171168
        %v7376 = vunpack.c.0.s8 %v7375
        %v7377 = vlaneseq
        %v7378 = vshrl.u32 %v7377, 7
        %v7379 = vsub.s32 %v7376, %v7378
        %v7380 = vrot.slane %v7372, %v7379
        %v7382 = vunpack.c.l.s4 1966171168
        %v7383 = vunpack.c.0.s8 %v7382
        %v7384 = vlaneseq
        %v7385 = vshrl.u32 %v7384, 7
        %v7386 = vsub.s32 %v7383, %v7385
        %v7387 = vrot.slane %v7373, %v7386
        %v7388 = vcombine.low %v7380, %v7387
        %v7389 = vcombine.low %v3738, %v3745
        %v7391 = vunpack.c.l.s4 1966171168
        %v7392 = vunpack.c.0.s8 %v7391
        %v7393 = vlaneseq
        %v7394 = vshrl.u32 %v7393, 7
        %v7395 = vsub.s32 %v7392, %v7394
        %v7396 = vrot.slane %v7389, %v7395
        %v7397 = vcombine.low %v6642, %v7396
        %v7398 = vcombine.low %v6656, %v6684
        %v7400 = vunpack.c.l.s4 1966171168
        %v7401 = vunpack.c.0.s8 %v7400
        %v7402 = vlaneseq
        %v7403 = vshrl.u32 %v7402, 7
        %v7404 = vsub.s32 %v7401, %v7403
        %v7405 = vrot.slane %v7397, %v7404
        %v7407 = vunpack.c.l.s4 1966171168
        %v7408 = vunpack.c.0.s8 %v7407
        %v7409 = vlaneseq
        %v7410 = vshrl.u32 %v7409, 7
        %v7411 = vsub.s32 %v7408, %v7410
        %v7412 = vrot.slane %v7398, %v7411
        %v7413 = vcombine.low %v7405, %v7412
        %v7414 = vcombine.low %v3718, %v3739
        %v7416 = vunpack.c.l.s4 1966171168
        %v7417 = vunpack.c.0.s8 %v7416
        %v7418 = vlaneseq
        %v7419 = vshrl.u32 %v7418, 7
        %v7420 = vsub.s32 %v7417, %v7419
        %v7421 = vrot.slane %v7414, %v7420
        %v7422 = vcombine.low %v6691, %v6698
        %v7423 = vcombine.low %v6705, %v7421
        %v7425 = vunpack.c.l.s4 1966171168
        %v7426 = vunpack.c.0.s8 %v7425
        %v7427 = vlaneseq
        %v7428 = vshrl.u32 %v7427, 7
        %v7429 = vsub.s32 %v7426, %v7428
        %v7430 = vrot.slane %v7422, %v7429
        %v7432 = vunpack.c.l.s4 1966171168
        %v7433 = vunpack.c.0.s8 %v7432
        %v7434 = vlaneseq
        %v7435 = vshrl.u32 %v7434, 7
        %v7436 = vsub.s32 %v7433, %v7435
        %v7437 = vrot.slane %v7423, %v7436
        %v7438 = vcombine.low %v7430, %v7437
        %v7439 = vcombine.low %v3746, %v3550
        %v7441 = vunpack.c.l.s4 1966171168
        %v7442 = vunpack.c.0.s8 %v7441
        %v7443 = vlaneseq
        %v7444 = vshrl.u32 %v7443, 7
        %v7445 = vsub.s32 %v7442, %v7444
        %v7446 = vrot.slane %v7439, %v7445
        %v7447 = vcombine.low %v7446, %v6747
        %v7448 = vcombine.low %v6754, %v6782
        %v7450 = vunpack.c.l.s4 1966171168
        %v7451 = vunpack.c.0.s8 %v7450
        %v7452 = vlaneseq
        %v7453 = vshrl.u32 %v7452, 7
        %v7454 = vsub.s32 %v7451, %v7453
        %v7455 = vrot.slane %v7447, %v7454
        %v7457 = vunpack.c.l.s4 1966171168
        %v7458 = vunpack.c.0.s8 %v7457
        %v7459 = vlaneseq
        %v7460 = vshrl.u32 %v7459, 7
        %v7461 = vsub.s32 %v7458, %v7460
        %v7462 = vrot.slane %v7448, %v7461
        %v7463 = vcombine.low %v7455, %v7462
        %v7464 = vcombine.low %v3740, %v3747
        %v7466 = vunpack.c.l.s4 1966171168
        %v7467 = vunpack.c.0.s8 %v7466
        %v7468 = vlaneseq
        %v7469 = vshrl.u32 %v7468, 7
        %v7470 = vsub.s32 %v7467, %v7469
        %v7471 = vrot.slane %v7464, %v7470
        %v7472 = vcombine.low %v6789, %v6796
        %v7473 = vcombine.low %v7471, %v6831
        %v7475 = vunpack.c.l.s4 1966171168
        %v7476 = vunpack.c.0.s8 %v7475
        %v7477 = vlaneseq
        %v7478 = vshrl.u32 %v7477, 7
        %v7479 = vsub.s32 %v7476, %v7478
        %v7480 = vrot.slane %v7472, %v7479
        %v7482 = vunpack.c.l.s4 1966171168
        %v7483 = vunpack.c.0.s8 %v7482
        %v7484 = vlaneseq
        %v7485 = vshrl.u32 %v7484, 7
        %v7486 = vsub.s32 %v7483, %v7485
        %v7487 = vrot.slane %v7473, %v7486
        %v7488 = vcombine.low %v7480, %v7487
        %v7489 = vcombine.low %v6838, %v6845
        %v7490 = vcombine.low %v6852, %v6877
        %v7492 = vunpack.c.l.s4 1966171168
        %v7493 = vunpack.c.0.s8 %v7492
        %v7494 = vlaneseq
        %v7495 = vshrl.u32 %v7494, 7
        %v7496 = vsub.s32 %v7493, %v7495
        %v7497 = vrot.slane %v7489, %v7496
        %v7499 = vunpack.c.l.s4 1966171168
        %v7500 = vunpack.c.0.s8 %v7499
        %v7501 = vlaneseq
        %v7502 = vshrl.u32 %v7501, 7
        %v7503 = vsub.s32 %v7500, %v7502
        %v7504 = vrot.slane %v7490, %v7503
        %v7505 = vcombine.low %v7497, %v7504
        %v7506 = vcombine.low %v3734, %v3741
        %v7508 = vunpack.c.l.s4 1966171168
        %v7509 = vunpack.c.0.s8 %v7508
        %v7510 = vlaneseq
        %v7511 = vshrl.u32 %v7510, 7
        %v7512 = vsub.s32 %v7509, %v7511
        %v7513 = vrot.slane %v7506, %v7512
        %v7515 = vunpack.c.l.s4 1966171168
        %v7516 = vunpack.c.0.s8 %v7515
        %v7517 = vlaneseq
        %v7518 = vshrl.u32 %v7517, 7
        %v7519 = vsub.s32 %v7516, %v7518
        %v7520 = vrot.slane %v3748, %v7519
        %v7521 = vcombine.low %v7513, %v7520
        %v7523 = vunpack.c.l.s4 1966171168
        %v7524 = vunpack.c.0.s8 %v7523
        %v7525 = vlaneseq
        %v7526 = vshrl.u32 %v7525, 7
        %v7527 = vsub.s32 %v7524, %v7526
        %v7528 = vrot.slane %v7521, %v7527
        %7529 = vrot.lane.b32.xlu0 %v7263, 96
        %v7530 = vpop.permute.xlu0 %7529
        %7531 = vrot.lane.b32.xlu0 %v7296, 96
        %v7532 = vpop.permute.xlu0 %7531
        %7533 = vrot.lane.b32.xlu0 %v7313, 96
        %v7534 = vpop.permute.xlu0 %7533
        %7535 = vrot.lane.b32.xlu0 %v7338, 96
        %v7536 = vpop.permute.xlu0 %7535
        %7537 = vrot.lane.b32.xlu0 %v7371, 96
        %v7538 = vpop.permute.xlu0 %7537
        %7539 = vrot.lane.b32.xlu0 %v7388, 96
        %v7540 = vpop.permute.xlu0 %7539
        %7541 = vrot.lane.b32.xlu0 %v7413, 96
        %v7542 = vpop.permute.xlu0 %7541
        %7543 = vrot.lane.b32.xlu0 %v7438, 96
        %v7544 = vpop.permute.xlu0 %7543
        %7545 = vrot.lane.b32.xlu0 %v7463, 96
        %v7546 = vpop.permute.xlu0 %7545
        %7547 = vrot.lane.b32.xlu0 %v7488, 96
        %v7548 = vpop.permute.xlu0 %7547
        %7549 = vrot.lane.b32.xlu0 %v7505, 96
        %v7550 = vpop.permute.xlu0 %7549
        %7551 = vrot.lane.b32.xlu0 %v7528, 96
        %v7552 = vpop.permute.xlu0 %7551
        %v7565 = vcombine.low %v2474, %v2488
        %v7567 = vunpack.c.l.s4 1966171168
        %v7568 = vunpack.c.0.s8 %v7567
        %v7569 = vlaneseq
        %v7570 = vshrl.u32 %v7569, 7
        %v7571 = vsub.s32 %v7568, %v7570
        %v7572 = vrot.slane %v7565, %v7571
        %v7573 = vcombine.low %v7572, %v4603
        %v7575 = vunpack.c.l.s4 1966171168
        %v7576 = vunpack.c.0.s8 %v7575
        %v7577 = vlaneseq
        %v7578 = vshrl.u32 %v7577, 7
        %v7579 = vsub.s32 %v7576, %v7578
        %v7580 = vrot.slane %v7573, %v7579
        %v7581 = vcombine.low %v7580, %v4661
        %v7582 = vcombine.low %v2529, %v2562
        %v7584 = vunpack.c.l.s4 1966171168
        %v7585 = vunpack.c.0.s8 %v7584
        %v7586 = vlaneseq
        %v7587 = vshrl.u32 %v7586, 7
        %v7588 = vsub.s32 %v7585, %v7587
        %v7589 = vrot.slane %v7582, %v7588
        %v7590 = vcombine.low %v7589, %v4687
        %v7592 = vunpack.c.l.s4 1966171168
        %v7593 = vunpack.c.0.s8 %v7592
        %v7594 = vlaneseq
        %v7595 = vshrl.u32 %v7594, 7
        %v7596 = vsub.s32 %v7593, %v7595
        %v7597 = vrot.slane %v7590, %v7596
        %v7598 = vcombine.low %v4668, %v7597
        %v7599 = vcombine.low %v4717, %v4759
        %v7600 = vcombine.low %v2650, %v2664
        %v7602 = vunpack.c.l.s4 1966171168
        %v7603 = vunpack.c.0.s8 %v7602
        %v7604 = vlaneseq
        %v7605 = vshrl.u32 %v7604, 7
        %v7606 = vsub.s32 %v7603, %v7605
        %v7607 = vrot.slane %v7600, %v7606
        %v7608 = vcombine.low %v4743, %v7607
        %v7610 = vunpack.c.l.s4 1966171168
        %v7611 = vunpack.c.0.s8 %v7610
        %v7612 = vlaneseq
        %v7613 = vshrl.u32 %v7612, 7
        %v7614 = vsub.s32 %v7611, %v7613
        %v7615 = vrot.slane %v7608, %v7614
        %v7616 = vcombine.low %v7615, %v4808
        %v7617 = vcombine.low %v2705, %v2738
        %v7619 = vunpack.c.l.s4 1966171168
        %v7620 = vunpack.c.0.s8 %v7619
        %v7621 = vlaneseq
        %v7622 = vshrl.u32 %v7621, 7
        %v7623 = vsub.s32 %v7620, %v7622
        %v7624 = vrot.slane %v7617, %v7623
        %v7625 = vcombine.low %v4827, %v7624
        %v7627 = vunpack.c.l.s4 1966171168
        %v7628 = vunpack.c.0.s8 %v7627
        %v7629 = vlaneseq
        %v7630 = vshrl.u32 %v7629, 7
        %v7631 = vsub.s32 %v7628, %v7630
        %v7632 = vrot.slane %v7625, %v7631
        %v7633 = vcombine.low %v4815, %v7632
        %v7634 = vcombine.low %v4864, %v4906
        %v7635 = vcombine.low %v2826, %v2840
        %v7637 = vunpack.c.l.s4 1966171168
        %v7638 = vunpack.c.0.s8 %v7637
        %v7639 = vlaneseq
        %v7640 = vshrl.u32 %v7639, 7
        %v7641 = vsub.s32 %v7638, %v7640
        %v7642 = vrot.slane %v7635, %v7641
        %v7643 = vcombine.low %v7642, %v4932
        %v7645 = vunpack.c.l.s4 1966171168
        %v7646 = vunpack.c.0.s8 %v7645
        %v7647 = vlaneseq
        %v7648 = vshrl.u32 %v7647, 7
        %v7649 = vsub.s32 %v7646, %v7648
        %v7650 = vrot.slane %v7643, %v7649
        %v7651 = vcombine.low %v4913, %v7650
        %v7652 = vcombine.low %v4962, %v5004
        %v7653 = vcombine.low %v2881, %v2914
        %v7655 = vunpack.c.l.s4 1966171168
        %v7656 = vunpack.c.0.s8 %v7655
        %v7657 = vlaneseq
        %v7658 = vshrl.u32 %v7657, 7
        %v7659 = vsub.s32 %v7656, %v7658
        %v7660 = vrot.slane %v7653, %v7659
        %v7661 = vcombine.low %v7660, %v4995
        %v7663 = vunpack.c.l.s4 1966171168
        %v7664 = vunpack.c.0.s8 %v7663
        %v7665 = vlaneseq
        %v7666 = vshrl.u32 %v7665, 7
        %v7667 = vsub.s32 %v7664, %v7666
        %v7668 = vrot.slane %v7661, %v7667
        %v7669 = vcombine.low %v7668, %v5053
        %v7670 = vcombine.low %v3774, %v3788
        %v7672 = vunpack.c.l.s4 1966171168
        %v7673 = vunpack.c.0.s8 %v7672
        %v7674 = vlaneseq
        %v7675 = vshrl.u32 %v7674, 7
        %v7676 = vsub.s32 %v7673, %v7675
        %v7677 = vrot.slane %v7670, %v7676
        %v7678 = vcombine.low %v5069, %v7677
        %v7680 = vunpack.c.l.s4 1966171168
        %v7681 = vunpack.c.0.s8 %v7680
        %v7682 = vlaneseq
        %v7683 = vshrl.u32 %v7682, 7
        %v7684 = vsub.s32 %v7681, %v7683
        %v7685 = vrot.slane %v7678, %v7684
        %v7686 = vcombine.low %v5060, %v7685
        %v7687 = vcombine.low %v3796, %v3798
        %v7688 = vcombine.low %v3781, %v3795
        %v7689 = vcombine.low %v3797, %v3799
        %v7690 = vcombine.low %v3822, %v3836
        %v7692 = vunpack.c.l.s4 1966171168
        %v7693 = vunpack.c.0.s8 %v7692
        %v7694 = vlaneseq
        %v7695 = vshrl.u32 %v7694, 7
        %v7696 = vsub.s32 %v7693, %v7695
        %v7697 = vrot.slane %v7687, %v7696
        %v7699 = vunpack.c.l.s4 1966171168
        %v7700 = vunpack.c.0.s8 %v7699
        %v7701 = vlaneseq
        %v7702 = vshrl.u32 %v7701, 7
        %v7703 = vsub.s32 %v7700, %v7702
        %v7704 = vrot.slane %v7688, %v7703
        %v7706 = vunpack.c.l.s4 1966171168
        %v7707 = vunpack.c.0.s8 %v7706
        %v7708 = vlaneseq
        %v7709 = vshrl.u32 %v7708, 7
        %v7710 = vsub.s32 %v7707, %v7709
        %v7711 = vrot.slane %v7689, %v7710
        %v7713 = vunpack.c.l.s4 1966171168
        %v7714 = vunpack.c.0.s8 %v7713
        %v7715 = vlaneseq
        %v7716 = vshrl.u32 %v7715, 7
        %v7717 = vsub.s32 %v7714, %v7716
        %v7718 = vrot.slane %v7690, %v7717
        %v7719 = vcombine.low %v7697, %v7704
        %v7720 = vcombine.low %v7711, %v7718
        %v7722 = vunpack.c.l.s4 1966171168
        %v7723 = vunpack.c.0.s8 %v7722
        %v7724 = vlaneseq
        %v7725 = vshrl.u32 %v7724, 7
        %v7726 = vsub.s32 %v7723, %v7725
        %v7727 = vrot.slane %v7719, %v7726
        %v7729 = vunpack.c.l.s4 1966171168
        %v7730 = vunpack.c.0.s8 %v7729
        %v7731 = vlaneseq
        %v7732 = vshrl.u32 %v7731, 7
        %v7733 = vsub.s32 %v7730, %v7732
        %v7734 = vrot.slane %v7720, %v7733
        %v7735 = vcombine.low %v7727, %v7734
        %v7736 = vcombine.low %v3837, %v3838
        %v7738 = vunpack.c.l.s4 1966171168
        %v7739 = vunpack.c.0.s8 %v7738
        %v7740 = vlaneseq
        %v7741 = vshrl.u32 %v7740, 7
        %v7742 = vsub.s32 %v7739, %v7741
        %v7743 = vrot.slane %v7736, %v7742
        %v7745 = vunpack.c.l.s4 1966171168
        %v7746 = vunpack.c.0.s8 %v7745
        %v7747 = vlaneseq
        %v7748 = vshrl.u32 %v7747, 7
        %v7749 = vsub.s32 %v7746, %v7748
        %v7750 = vrot.slane %v3829, %v7749
        %v7751 = vcombine.low %v7743, %v7750
        %v7753 = vunpack.c.l.s4 1966171168
        %v7754 = vunpack.c.0.s8 %v7753
        %v7755 = vlaneseq
        %v7756 = vshrl.u32 %v7755, 7
        %v7757 = vsub.s32 %v7754, %v7756
        %v7758 = vrot.slane %v7751, %v7757
        %v7771 = vcombine.low %v4029, %v4057
        %v7773 = vunpack.c.l.s4 1966171168
        %v7774 = vunpack.c.0.s8 %v7773
        %v7775 = vlaneseq
        %v7776 = vshrl.u32 %v7775, 7
        %v7777 = vsub.s32 %v7774, %v7776
        %v7778 = vrot.slane %v7771, %v7777
        %v7779 = vcombine.low %v7778, %v5179
        %v7780 = vcombine.low %v2994, %v2576
        %v7782 = vunpack.c.l.s4 1966171168
        %v7783 = vunpack.c.0.s8 %v7782
        %v7784 = vlaneseq
        %v7785 = vshrl.u32 %v7784, 7
        %v7786 = vsub.s32 %v7783, %v7785
        %v7787 = vrot.slane %v7780, %v7786
        %v7788 = vcombine.low %v7787, %v4120
        %v7790 = vunpack.c.l.s4 1966171168
        %v7791 = vunpack.c.0.s8 %v7790
        %v7792 = vlaneseq
        %v7793 = vshrl.u32 %v7792, 7
        %v7794 = vsub.s32 %v7791, %v7793
        %v7795 = vrot.slane %v7788, %v7794
        %v7796 = vcombine.low %v5186, %v7795
        %v7797 = vcombine.low %v5211, %v5237
        %v7798 = vcombine.low %v5221, %v4204
        %v7800 = vunpack.c.l.s4 1966171168
        %v7801 = vunpack.c.0.s8 %v7800
        %v7802 = vlaneseq
        %v7803 = vshrl.u32 %v7802, 7
        %v7804 = vsub.s32 %v7801, %v7803
        %v7805 = vrot.slane %v7798, %v7804
        %v7806 = vcombine.low %v7805, %v5254
        %v7807 = vcombine.low %v3010, %v2752
        %v7809 = vunpack.c.l.s4 1966171168
        %v7810 = vunpack.c.0.s8 %v7809
        %v7811 = vlaneseq
        %v7812 = vshrl.u32 %v7811, 7
        %v7813 = vsub.s32 %v7810, %v7812
        %v7814 = vrot.slane %v7807, %v7813
        %v7815 = vcombine.low %v4260, %v7814
        %v7817 = vunpack.c.l.s4 1966171168
        %v7818 = vunpack.c.0.s8 %v7817
        %v7819 = vlaneseq
        %v7820 = vshrl.u32 %v7819, 7
        %v7821 = vsub.s32 %v7818, %v7820
        %v7822 = vrot.slane %v7815, %v7821
        %v7823 = vcombine.low %v5261, %v7822
        %v7824 = vcombine.low %v5286, %v5304
        %v7825 = vcombine.low %v4358, %v4365
        %v7827 = vunpack.c.l.s4 1966171168
        %v7828 = vunpack.c.0.s8 %v7827
        %v7829 = vlaneseq
        %v7830 = vshrl.u32 %v7829, 7
        %v7831 = vsub.s32 %v7828, %v7830
        %v7832 = vrot.slane %v7825, %v7831
        %v7833 = vcombine.low %v5311, %v7832
        %v7834 = vcombine.low %v5336, %v5354
        %v7835 = vcombine.low %v3026, %v2928
        %v7837 = vunpack.c.l.s4 1966171168
        %v7838 = vunpack.c.0.s8 %v7837
        %v7839 = vlaneseq
        %v7840 = vshrl.u32 %v7839, 7
        %v7841 = vsub.s32 %v7838, %v7840
        %v7842 = vrot.slane %v7835, %v7841
        %v7843 = vcombine.low %v7842, %v4449
        %v7845 = vunpack.c.l.s4 1966171168
        %v7846 = vunpack.c.0.s8 %v7845
        %v7847 = vlaneseq
        %v7848 = vshrl.u32 %v7847, 7
        %v7849 = vsub.s32 %v7846, %v7848
        %v7850 = vrot.slane %v7843, %v7849
        %v7851 = vcombine.low %v7850, %v5371
        %v7852 = vcombine.low %v3788, %v3796
        %v7854 = vunpack.c.l.s4 1966171168
        %v7855 = vunpack.c.0.s8 %v7854
        %v7856 = vlaneseq
        %v7857 = vshrl.u32 %v7856, 7
        %v7858 = vsub.s32 %v7855, %v7857
        %v7859 = vrot.slane %v7852, %v7858
        %v7860 = vcombine.low %v5387, %v7859
        %v7862 = vunpack.c.l.s4 1966171168
        %v7863 = vunpack.c.0.s8 %v7862
        %v7864 = vlaneseq
        %v7865 = vshrl.u32 %v7864, 7
        %v7866 = vsub.s32 %v7863, %v7865
        %v7867 = vrot.slane %v7860, %v7866
        %v7868 = vcombine.low %v5378, %v7867
        %v7869 = vcombine.low %v3798, %v3781
        %v7870 = vcombine.low %v3795, %v3797
        %v7871 = vcombine.low %v3799, %v3822
        %v7872 = vcombine.low %v3836, %v3837
        %v7874 = vunpack.c.l.s4 1966171168
        %v7875 = vunpack.c.0.s8 %v7874
        %v7876 = vlaneseq
        %v7877 = vshrl.u32 %v7876, 7
        %v7878 = vsub.s32 %v7875, %v7877
        %v7879 = vrot.slane %v7869, %v7878
        %v7881 = vunpack.c.l.s4 1966171168
        %v7882 = vunpack.c.0.s8 %v7881
        %v7883 = vlaneseq
        %v7884 = vshrl.u32 %v7883, 7
        %v7885 = vsub.s32 %v7882, %v7884
        %v7886 = vrot.slane %v7870, %v7885
        %v7888 = vunpack.c.l.s4 1966171168
        %v7889 = vunpack.c.0.s8 %v7888
        %v7890 = vlaneseq
        %v7891 = vshrl.u32 %v7890, 7
        %v7892 = vsub.s32 %v7889, %v7891
        %v7893 = vrot.slane %v7871, %v7892
        %v7895 = vunpack.c.l.s4 1966171168
        %v7896 = vunpack.c.0.s8 %v7895
        %v7897 = vlaneseq
        %v7898 = vshrl.u32 %v7897, 7
        %v7899 = vsub.s32 %v7896, %v7898
        %v7900 = vrot.slane %v7872, %v7899
        %v7901 = vcombine.low %v7879, %v7886
        %v7902 = vcombine.low %v7893, %v7900
        %v7904 = vunpack.c.l.s4 1966171168
        %v7905 = vunpack.c.0.s8 %v7904
        %v7906 = vlaneseq
        %v7907 = vshrl.u32 %v7906, 7
        %v7908 = vsub.s32 %v7905, %v7907
        %v7909 = vrot.slane %v7901, %v7908
        %v7911 = vunpack.c.l.s4 1966171168
        %v7912 = vunpack.c.0.s8 %v7911
        %v7913 = vlaneseq
        %v7914 = vshrl.u32 %v7913, 7
        %v7915 = vsub.s32 %v7912, %v7914
        %v7916 = vrot.slane %v7902, %v7915
        %v7917 = vcombine.low %v7909, %v7916
        %v7918 = vcombine.low %v3838, %v3829
        %v7920 = vunpack.c.l.s4 1966171168
        %v7921 = vunpack.c.0.s8 %v7920
        %v7922 = vlaneseq
        %v7923 = vshrl.u32 %v7922, 7
        %v7924 = vsub.s32 %v7921, %v7923
        %v7925 = vrot.slane %v7918, %v7924
        %v7927 = vunpack.c.l.s4 1966171168
        %v7928 = vunpack.c.0.s8 %v7927
        %v7929 = vlaneseq
        %v7930 = vshrl.u32 %v7929, 7
        %v7931 = vsub.s32 %v7928, %v7930
        %v7932 = vrot.slane %v3846, %v7931
        %v7933 = vcombine.low %v7925, %v7932
        %v7935 = vunpack.c.l.s4 1966171168
        %v7936 = vunpack.c.0.s8 %v7935
        %v7937 = vlaneseq
        %v7938 = vshrl.u32 %v7937, 7
        %v7939 = vsub.s32 %v7936, %v7938
        %v7940 = vrot.slane %v7933, %v7939
        %7941 = vrot.lane.b32.xlu0 %v7779, 32
        %v7942 = vpop.permute.xlu0 %7941
        %7943 = vrot.lane.b32.xlu0 %v7796, 32
        %v7944 = vpop.permute.xlu0 %7943
        %7945 = vrot.lane.b32.xlu0 %v7797, 32
        %v7946 = vpop.permute.xlu0 %7945
        %7947 = vrot.lane.b32.xlu0 %v7806, 32
        %v7948 = vpop.permute.xlu0 %7947
        %7949 = vrot.lane.b32.xlu0 %v7823, 32
        %v7950 = vpop.permute.xlu0 %7949
        %7951 = vrot.lane.b32.xlu0 %v7824, 32
        %v7952 = vpop.permute.xlu0 %7951
        %7953 = vrot.lane.b32.xlu0 %v7833, 32
        %v7954 = vpop.permute.xlu0 %7953
        %7955 = vrot.lane.b32.xlu0 %v7834, 32
        %v7956 = vpop.permute.xlu0 %7955
        %7957 = vrot.lane.b32.xlu0 %v7851, 32
        %v7958 = vpop.permute.xlu0 %7957
        %7959 = vrot.lane.b32.xlu0 %v7868, 32
        %v7960 = vpop.permute.xlu0 %7959
        %7961 = vrot.lane.b32.xlu0 %v7917, 32
        %v7962 = vpop.permute.xlu0 %7961
        %7963 = vrot.lane.b32.xlu0 %v7940, 32
        %v7964 = vpop.permute.xlu0 %7963
        %v7977 = vcombine.low %v4603, %v4631
        %v7979 = vunpack.c.l.s4 1966171168
        %v7980 = vunpack.c.0.s8 %v7979
        %v7981 = vlaneseq
        %v7982 = vshrl.u32 %v7981, 7
        %v7983 = vsub.s32 %v7980, %v7982
        %v7984 = vrot.slane %v7977, %v7983
        %v7985 = vcombine.low %v7984, %v5497
        %v7986 = vcombine.low %v3036, %v2584
        %v7988 = vunpack.c.l.s4 1966171168
        %v7989 = vunpack.c.0.s8 %v7988
        %v7990 = vlaneseq
        %v7991 = vshrl.u32 %v7990, 7
        %v7992 = vsub.s32 %v7989, %v7991
        %v7993 = vrot.slane %v7986, %v7992
        %v7994 = vcombine.low %v7993, %v4694
        %v7996 = vunpack.c.l.s4 1966171168
        %v7997 = vunpack.c.0.s8 %v7996
        %v7998 = vlaneseq
        %v7999 = vshrl.u32 %v7998, 7
        %v8000 = vsub.s32 %v7997, %v7999
        %v8001 = vrot.slane %v7994, %v8000
        %v8002 = vcombine.low %v5504, %v8001
        %v8003 = vcombine.low %v5529, %v5555
        %v8004 = vcombine.low %v5539, %v4778
        %v8006 = vunpack.c.l.s4 1966171168
        %v8007 = vunpack.c.0.s8 %v8006
        %v8008 = vlaneseq
        %v8009 = vshrl.u32 %v8008, 7
        %v8010 = vsub.s32 %v8007, %v8009
        %v8011 = vrot.slane %v8004, %v8010
        %v8012 = vcombine.low %v8011, %v5572
        %v8013 = vcombine.low %v3038, %v2760
        %v8015 = vunpack.c.l.s4 1966171168
        %v8016 = vunpack.c.0.s8 %v8015
        %v8017 = vlaneseq
        %v8018 = vshrl.u32 %v8017, 7
        %v8019 = vsub.s32 %v8016, %v8018
        %v8020 = vrot.slane %v8013, %v8019
        %v8021 = vcombine.low %v4834, %v8020
        %v8023 = vunpack.c.l.s4 1966171168
        %v8024 = vunpack.c.0.s8 %v8023
        %v8025 = vlaneseq
        %v8026 = vshrl.u32 %v8025, 7
        %v8027 = vsub.s32 %v8024, %v8026
        %v8028 = vrot.slane %v8021, %v8027
        %v8029 = vcombine.low %v5579, %v8028
        %v8030 = vcombine.low %v5604, %v5622
        %v8031 = vcombine.low %v4932, %v4939
        %v8033 = vunpack.c.l.s4 1966171168
        %v8034 = vunpack.c.0.s8 %v8033
        %v8035 = vlaneseq
        %v8036 = vshrl.u32 %v8035, 7
        %v8037 = vsub.s32 %v8034, %v8036
        %v8038 = vrot.slane %v8031, %v8037
        %v8039 = vcombine.low %v5629, %v8038
        %v8040 = vcombine.low %v5654, %v5672
        %v8041 = vcombine.low %v3040, %v2936
        %v8043 = vunpack.c.l.s4 1966171168
        %v8044 = vunpack.c.0.s8 %v8043
        %v8045 = vlaneseq
        %v8046 = vshrl.u32 %v8045, 7
        %v8047 = vsub.s32 %v8044, %v8046
        %v8048 = vrot.slane %v8041, %v8047
        %v8049 = vcombine.low %v8048, %v5023
        %v8051 = vunpack.c.l.s4 1966171168
        %v8052 = vunpack.c.0.s8 %v8051
        %v8053 = vlaneseq
        %v8054 = vshrl.u32 %v8053, 7
        %v8055 = vsub.s32 %v8052, %v8054
        %v8056 = vrot.slane %v8049, %v8055
        %v8057 = vcombine.low %v8056, %v5689
        %v8058 = vcombine.low %v5705, %v7697
        %v8060 = vunpack.c.l.s4 1966171168
        %v8061 = vunpack.c.0.s8 %v8060
        %v8062 = vlaneseq
        %v8063 = vshrl.u32 %v8062, 7
        %v8064 = vsub.s32 %v8061, %v8063
        %v8065 = vrot.slane %v8058, %v8064
        %v8066 = vcombine.low %v5696, %v8065
        %v8067 = vcombine.low %v7704, %v7711
        %v8068 = vcombine.low %v7718, %v7743
        %v8070 = vunpack.c.l.s4 1966171168
        %v8071 = vunpack.c.0.s8 %v8070
        %v8072 = vlaneseq
        %v8073 = vshrl.u32 %v8072, 7
        %v8074 = vsub.s32 %v8071, %v8073
        %v8075 = vrot.slane %v8067, %v8074
        %v8077 = vunpack.c.l.s4 1966171168
        %v8078 = vunpack.c.0.s8 %v8077
        %v8079 = vlaneseq
        %v8080 = vshrl.u32 %v8079, 7
        %v8081 = vsub.s32 %v8078, %v8080
        %v8082 = vrot.slane %v8068, %v8081
        %v8083 = vcombine.low %v8075, %v8082
        %v8084 = vcombine.low %v3829, %v3846
        %v8086 = vunpack.c.l.s4 1966171168
        %v8087 = vunpack.c.0.s8 %v8086
        %v8088 = vlaneseq
        %v8089 = vshrl.u32 %v8088, 7
        %v8090 = vsub.s32 %v8087, %v8089
        %v8091 = vrot.slane %v8084, %v8090
        %v8093 = vunpack.c.l.s4 1966171168
        %v8094 = vunpack.c.0.s8 %v8093
        %v8095 = vlaneseq
        %v8096 = vshrl.u32 %v8095, 7
        %v8097 = vsub.s32 %v8094, %v8096
        %v8098 = vrot.slane %v3847, %v8097
        %v8099 = vcombine.low %v8091, %v8098
        %v8101 = vunpack.c.l.s4 1966171168
        %v8102 = vunpack.c.0.s8 %v8101
        %v8103 = vlaneseq
        %v8104 = vshrl.u32 %v8103, 7
        %v8105 = vsub.s32 %v8102, %v8104
        %v8106 = vrot.slane %v8099, %v8105
        %8107 = vrot.lane.b32.xlu0 %v7985, 64
        %v8108 = vpop.permute.xlu0 %8107
        %8109 = vrot.lane.b32.xlu0 %v8002, 64
        %v8110 = vpop.permute.xlu0 %8109
        %8111 = vrot.lane.b32.xlu0 %v8003, 64
        %v8112 = vpop.permute.xlu0 %8111
        %8113 = vrot.lane.b32.xlu0 %v8012, 64
        %v8114 = vpop.permute.xlu0 %8113
        %8115 = vrot.lane.b32.xlu0 %v8029, 64
        %v8116 = vpop.permute.xlu0 %8115
        %8117 = vrot.lane.b32.xlu0 %v8030, 64
        %v8118 = vpop.permute.xlu0 %8117
        %8119 = vrot.lane.b32.xlu0 %v8039, 64
        %v8120 = vpop.permute.xlu0 %8119
        %8121 = vrot.lane.b32.xlu0 %v8040, 64
        %v8122 = vpop.permute.xlu0 %8121
        %8123 = vrot.lane.b32.xlu0 %v8057, 64
        %v8124 = vpop.permute.xlu0 %8123
        %8125 = vrot.lane.b32.xlu0 %v8066, 64
        %v8126 = vpop.permute.xlu0 %8125
        %8127 = vrot.lane.b32.xlu0 %v8083, 64
        %v8128 = vpop.permute.xlu0 %8127
        %8129 = vrot.lane.b32.xlu0 %v8106, 64
        %v8130 = vpop.permute.xlu0 %8129
        %v8143 = vcombine.low %v3043, %v2586
        %v8145 = vunpack.c.l.s4 1966171168
        %v8146 = vunpack.c.0.s8 %v8145
        %v8147 = vlaneseq
        %v8148 = vshrl.u32 %v8147, 7
        %v8149 = vsub.s32 %v8146, %v8148
        %v8150 = vrot.slane %v8143, %v8149
        %v8151 = vcombine.low %v4106, %v5195
        %v8152 = vcombine.low %v8150, %v4127
        %v8154 = vunpack.c.l.s4 1966171168
        %v8155 = vunpack.c.0.s8 %v8154
        %v8156 = vlaneseq
        %v8157 = vshrl.u32 %v8156, 7
        %v8158 = vsub.s32 %v8155, %v8157
        %v8159 = vrot.slane %v8151, %v8158
        %v8161 = vunpack.c.l.s4 1966171168
        %v8162 = vunpack.c.0.s8 %v8161
        %v8163 = vlaneseq
        %v8164 = vshrl.u32 %v8163, 7
        %v8165 = vsub.s32 %v8162, %v8164
        %v8166 = vrot.slane %v8152, %v8165
        %v8167 = vcombine.low %v8159, %v8166
        %v8168 = vcombine.low %v4169, %v5221
        %v8170 = vunpack.c.l.s4 1966171168
        %v8171 = vunpack.c.0.s8 %v8170
        %v8172 = vlaneseq
        %v8173 = vshrl.u32 %v8172, 7
        %v8174 = vsub.s32 %v8171, %v8173
        %v8175 = vrot.slane %v8168, %v8174
        %v8176 = vcombine.low %v4185, %v8175
        %v8177 = vcombine.low %v3037, %v3044
        %v8179 = vunpack.c.l.s4 1966171168
        %v8180 = vunpack.c.0.s8 %v8179
        %v8181 = vlaneseq
        %v8182 = vshrl.u32 %v8181, 7
        %v8183 = vsub.s32 %v8180, %v8182
        %v8184 = vrot.slane %v8177, %v8183
        %v8185 = vcombine.low %v8184, %v4211
        %v8187 = vunpack.c.l.s4 1966171168
        %v8188 = vunpack.c.0.s8 %v8187
        %v8189 = vlaneseq
        %v8190 = vshrl.u32 %v8189, 7
        %v8191 = vsub.s32 %v8188, %v8190
        %v8192 = vrot.slane %v8185, %v8191
        %v8193 = vcombine.low %v8192, %v4241
        %v8194 = vcombine.low %v3045, %v2762
        %v8196 = vunpack.c.l.s4 1966171168
        %v8197 = vunpack.c.0.s8 %v8196
        %v8198 = vlaneseq
        %v8199 = vshrl.u32 %v8198, 7
        %v8200 = vsub.s32 %v8197, %v8199
        %v8201 = vrot.slane %v8194, %v8200
        %v8202 = vcombine.low %v5270, %v8201
        %v8204 = vunpack.c.l.s4 1966171168
        %v8205 = vunpack.c.0.s8 %v8204
        %v8206 = vlaneseq
        %v8207 = vshrl.u32 %v8206, 7
        %v8208 = vsub.s32 %v8205, %v8207
        %v8209 = vrot.slane %v8202, %v8208
        %v8210 = vcombine.low %v4283, %v8209
        %v8211 = vcombine.low %v3039, %v3046
        %v8213 = vunpack.c.l.s4 1966171168
        %v8214 = vunpack.c.0.s8 %v8213
        %v8215 = vlaneseq
        %v8216 = vshrl.u32 %v8215, 7
        %v8217 = vsub.s32 %v8214, %v8216
        %v8218 = vrot.slane %v8211, %v8217
        %v8219 = vcombine.low %v5295, %v8218
        %v8221 = vunpack.c.l.s4 1966171168
        %v8222 = vunpack.c.0.s8 %v8221
        %v8223 = vlaneseq
        %v8224 = vshrl.u32 %v8223, 7
        %v8225 = vsub.s32 %v8222, %v8224
        %v8226 = vrot.slane %v8219, %v8225
        %v8227 = vcombine.low %v8226, %v4388
        %v8228 = vcombine.low %v4414, %v5345
        %v8230 = vunpack.c.l.s4 1966171168
        %v8231 = vunpack.c.0.s8 %v8230
        %v8232 = vlaneseq
        %v8233 = vshrl.u32 %v8232, 7
        %v8234 = vsub.s32 %v8231, %v8233
        %v8235 = vrot.slane %v8228, %v8234
        %v8236 = vcombine.low %v4430, %v8235
        %v8237 = vcombine.low %v3047, %v2938
        %v8239 = vunpack.c.l.s4 1966171168
        %v8240 = vunpack.c.0.s8 %v8239
        %v8241 = vlaneseq
        %v8242 = vshrl.u32 %v8241, 7
        %v8243 = vsub.s32 %v8240, %v8242
        %v8244 = vrot.slane %v8237, %v8243
        %v8245 = vcombine.low %v8244, %v4456
        %v8247 = vunpack.c.l.s4 1966171168
        %v8248 = vunpack.c.0.s8 %v8247
        %v8249 = vlaneseq
        %v8250 = vshrl.u32 %v8249, 7
        %v8251 = vsub.s32 %v8248, %v8250
        %v8252 = vrot.slane %v8245, %v8251
        %v8253 = vcombine.low %v8252, %v4486
        %v8254 = vcombine.low %v3041, %v3048
        %v8256 = vunpack.c.l.s4 1966171168
        %v8257 = vunpack.c.0.s8 %v8256
        %v8258 = vlaneseq
        %v8259 = vshrl.u32 %v8258, 7
        %v8260 = vsub.s32 %v8257, %v8259
        %v8261 = vrot.slane %v8254, %v8260
        %v8262 = vcombine.low %v4495, %v5387
        %v8263 = vcombine.low %v8261, %v7879
        %v8265 = vunpack.c.l.s4 1966171168
        %v8266 = vunpack.c.0.s8 %v8265
        %v8267 = vlaneseq
        %v8268 = vshrl.u32 %v8267, 7
        %v8269 = vsub.s32 %v8266, %v8268
        %v8270 = vrot.slane %v8262, %v8269
        %v8272 = vunpack.c.l.s4 1966171168
        %v8273 = vunpack.c.0.s8 %v8272
        %v8274 = vlaneseq
        %v8275 = vshrl.u32 %v8274, 7
        %v8276 = vsub.s32 %v8273, %v8275
        %v8277 = vrot.slane %v8263, %v8276
        %v8278 = vcombine.low %v8270, %v8277
        %v8279 = vcombine.low %v7886, %v7893
        %v8280 = vcombine.low %v7900, %v7925
        %v8282 = vunpack.c.l.s4 1966171168
        %v8283 = vunpack.c.0.s8 %v8282
        %v8284 = vlaneseq
        %v8285 = vshrl.u32 %v8284, 7
        %v8286 = vsub.s32 %v8283, %v8285
        %v8287 = vrot.slane %v8279, %v8286
        %v8289 = vunpack.c.l.s4 1966171168
        %v8290 = vunpack.c.0.s8 %v8289
        %v8291 = vlaneseq
        %v8292 = vshrl.u32 %v8291, 7
        %v8293 = vsub.s32 %v8290, %v8292
        %v8294 = vrot.slane %v8280, %v8293
        %v8295 = vcombine.low %v8287, %v8294
        %v8296 = vcombine.low %v3846, %v3847
        %v8298 = vunpack.c.l.s4 1966171168
        %v8299 = vunpack.c.0.s8 %v8298
        %v8300 = vlaneseq
        %v8301 = vshrl.u32 %v8300, 7
        %v8302 = vsub.s32 %v8299, %v8301
        %v8303 = vrot.slane %v8296, %v8302
        %v8305 = vunpack.c.l.s4 1966171168
        %v8306 = vunpack.c.0.s8 %v8305
        %v8307 = vlaneseq
        %v8308 = vshrl.u32 %v8307, 7
        %v8309 = vsub.s32 %v8306, %v8308
        %v8310 = vrot.slane %v3848, %v8309
        %v8311 = vcombine.low %v8303, %v8310
        %v8313 = vunpack.c.l.s4 1966171168
        %v8314 = vunpack.c.0.s8 %v8313
        %v8315 = vlaneseq
        %v8316 = vshrl.u32 %v8315, 7
        %v8317 = vsub.s32 %v8314, %v8316
        %v8318 = vrot.slane %v8311, %v8317
        %8319 = vrot.lane.b32.xlu0 %v4095, 96
        %v8320 = vpop.permute.xlu0 %8319
        %8321 = vrot.lane.b32.xlu0 %v8167, 96
        %v8322 = vpop.permute.xlu0 %8321
        %8323 = vrot.lane.b32.xlu0 %v8176, 96
        %v8324 = vpop.permute.xlu0 %8323
        %8325 = vrot.lane.b32.xlu0 %v8193, 96
        %v8326 = vpop.permute.xlu0 %8325
        %8327 = vrot.lane.b32.xlu0 %v8210, 96
        %v8328 = vpop.permute.xlu0 %8327
        %8329 = vrot.lane.b32.xlu0 %v4340, 96
        %v8330 = vpop.permute.xlu0 %8329
        %8331 = vrot.lane.b32.xlu0 %v8227, 96
        %v8332 = vpop.permute.xlu0 %8331
        %8333 = vrot.lane.b32.xlu0 %v8236, 96
        %v8334 = vpop.permute.xlu0 %8333
        %8335 = vrot.lane.b32.xlu0 %v8253, 96
        %v8336 = vpop.permute.xlu0 %8335
        %8337 = vrot.lane.b32.xlu0 %v8278, 96
        %v8338 = vpop.permute.xlu0 %8337
        %8339 = vrot.lane.b32.xlu0 %v8295, 96
        %v8340 = vpop.permute.xlu0 %8339
        %8341 = vrot.lane.b32.xlu0 %v8318, 96
        %v8342 = vpop.permute.xlu0 %8341
        %v8355 = vcombine.low %v3174, %v3188
        %v8357 = vunpack.c.l.s4 1966171168
        %v8358 = vunpack.c.0.s8 %v8357
        %v8359 = vlaneseq
        %v8360 = vshrl.u32 %v8359, 7
        %v8361 = vsub.s32 %v8358, %v8360
        %v8362 = vrot.slane %v8355, %v8361
        %v8363 = vcombine.low %v8362, %v6411
        %v8365 = vunpack.c.l.s4 1966171168
        %v8366 = vunpack.c.0.s8 %v8365
        %v8367 = vlaneseq
        %v8368 = vshrl.u32 %v8367, 7
        %v8369 = vsub.s32 %v8366, %v8368
        %v8370 = vrot.slane %v8363, %v8369
        %v8371 = vcombine.low %v8370, %v6469
        %v8372 = vcombine.low %v3229, %v3262
        %v8374 = vunpack.c.l.s4 1966171168
        %v8375 = vunpack.c.0.s8 %v8374
        %v8376 = vlaneseq
        %v8377 = vshrl.u32 %v8376, 7
        %v8378 = vsub.s32 %v8375, %v8377
        %v8379 = vrot.slane %v8372, %v8378
        %v8380 = vcombine.low %v8379, %v6495
        %v8382 = vunpack.c.l.s4 1966171168
        %v8383 = vunpack.c.0.s8 %v8382
        %v8384 = vlaneseq
        %v8385 = vshrl.u32 %v8384, 7
        %v8386 = vsub.s32 %v8383, %v8385
        %v8387 = vrot.slane %v8380, %v8386
        %v8388 = vcombine.low %v6476, %v8387
        %v8389 = vcombine.low %v6525, %v6567
        %v8390 = vcombine.low %v3350, %v3364
        %v8392 = vunpack.c.l.s4 1966171168
        %v8393 = vunpack.c.0.s8 %v8392
        %v8394 = vlaneseq
        %v8395 = vshrl.u32 %v8394, 7
        %v8396 = vsub.s32 %v8393, %v8395
        %v8397 = vrot.slane %v8390, %v8396
        %v8398 = vcombine.low %v6551, %v8397
        %v8400 = vunpack.c.l.s4 1966171168
        %v8401 = vunpack.c.0.s8 %v8400
        %v8402 = vlaneseq
        %v8403 = vshrl.u32 %v8402, 7
        %v8404 = vsub.s32 %v8401, %v8403
        %v8405 = vrot.slane %v8398, %v8404
        %v8406 = vcombine.low %v8405, %v6616
        %v8407 = vcombine.low %v3405, %v3438
        %v8409 = vunpack.c.l.s4 1966171168
        %v8410 = vunpack.c.0.s8 %v8409
        %v8411 = vlaneseq
        %v8412 = vshrl.u32 %v8411, 7
        %v8413 = vsub.s32 %v8410, %v8412
        %v8414 = vrot.slane %v8407, %v8413
        %v8415 = vcombine.low %v6635, %v8414
        %v8417 = vunpack.c.l.s4 1966171168
        %v8418 = vunpack.c.0.s8 %v8417
        %v8419 = vlaneseq
        %v8420 = vshrl.u32 %v8419, 7
        %v8421 = vsub.s32 %v8418, %v8420
        %v8422 = vrot.slane %v8415, %v8421
        %v8423 = vcombine.low %v6623, %v8422
        %v8424 = vcombine.low %v6672, %v6714
        %v8425 = vcombine.low %v3526, %v3540
        %v8427 = vunpack.c.l.s4 1966171168
        %v8428 = vunpack.c.0.s8 %v8427
        %v8429 = vlaneseq
        %v8430 = vshrl.u32 %v8429, 7
        %v8431 = vsub.s32 %v8428, %v8430
        %v8432 = vrot.slane %v8425, %v8431
        %v8433 = vcombine.low %v8432, %v6740
        %v8435 = vunpack.c.l.s4 1966171168
        %v8436 = vunpack.c.0.s8 %v8435
        %v8437 = vlaneseq
        %v8438 = vshrl.u32 %v8437, 7
        %v8439 = vsub.s32 %v8436, %v8438
        %v8440 = vrot.slane %v8433, %v8439
        %v8441 = vcombine.low %v6721, %v8440
        %v8442 = vcombine.low %v6770, %v6812
        %v8443 = vcombine.low %v3581, %v3614
        %v8445 = vunpack.c.l.s4 1966171168
        %v8446 = vunpack.c.0.s8 %v8445
        %v8447 = vlaneseq
        %v8448 = vshrl.u32 %v8447, 7
        %v8449 = vsub.s32 %v8446, %v8448
        %v8450 = vrot.slane %v8443, %v8449
        %v8451 = vcombine.low %v8450, %v6803
        %v8453 = vunpack.c.l.s4 1966171168
        %v8454 = vunpack.c.0.s8 %v8453
        %v8455 = vlaneseq
        %v8456 = vshrl.u32 %v8455, 7
        %v8457 = vsub.s32 %v8454, %v8456
        %v8458 = vrot.slane %v8451, %v8457
        %v8459 = vcombine.low %v8458, %v6861
        %v8460 = vcombine.low %v3874, %v3888
        %v8462 = vunpack.c.l.s4 1966171168
        %v8463 = vunpack.c.0.s8 %v8462
        %v8464 = vlaneseq
        %v8465 = vshrl.u32 %v8464, 7
        %v8466 = vsub.s32 %v8463, %v8465
        %v8467 = vrot.slane %v8460, %v8466
        %v8468 = vcombine.low %v6877, %v8467
        %v8470 = vunpack.c.l.s4 1966171168
        %v8471 = vunpack.c.0.s8 %v8470
        %v8472 = vlaneseq
        %v8473 = vshrl.u32 %v8472, 7
        %v8474 = vsub.s32 %v8471, %v8473
        %v8475 = vrot.slane %v8468, %v8474
        %v8476 = vcombine.low %v6868, %v8475
        %v8477 = vcombine.low %v3896, %v3898
        %v8478 = vcombine.low %v3881, %v3895
        %v8479 = vcombine.low %v3897, %v3899
        %v8480 = vcombine.low %v3922, %v3936
        %v8482 = vunpack.c.l.s4 1966171168
        %v8483 = vunpack.c.0.s8 %v8482
        %v8484 = vlaneseq
        %v8485 = vshrl.u32 %v8484, 7
        %v8486 = vsub.s32 %v8483, %v8485
        %v8487 = vrot.slane %v8477, %v8486
        %v8489 = vunpack.c.l.s4 1966171168
        %v8490 = vunpack.c.0.s8 %v8489
        %v8491 = vlaneseq
        %v8492 = vshrl.u32 %v8491, 7
        %v8493 = vsub.s32 %v8490, %v8492
        %v8494 = vrot.slane %v8478, %v8493
        %v8496 = vunpack.c.l.s4 1966171168
        %v8497 = vunpack.c.0.s8 %v8496
        %v8498 = vlaneseq
        %v8499 = vshrl.u32 %v8498, 7
        %v8500 = vsub.s32 %v8497, %v8499
        %v8501 = vrot.slane %v8479, %v8500
        %v8503 = vunpack.c.l.s4 1966171168
        %v8504 = vunpack.c.0.s8 %v8503
        %v8505 = vlaneseq
        %v8506 = vshrl.u32 %v8505, 7
        %v8507 = vsub.s32 %v8504, %v8506
        %v8508 = vrot.slane %v8480, %v8507
        %v8509 = vcombine.low %v8487, %v8494
        %v8510 = vcombine.low %v8501, %v8508
        %v8512 = vunpack.c.l.s4 1966171168
        %v8513 = vunpack.c.0.s8 %v8512
        %v8514 = vlaneseq
        %v8515 = vshrl.u32 %v8514, 7
        %v8516 = vsub.s32 %v8513, %v8515
        %v8517 = vrot.slane %v8509, %v8516
        %v8519 = vunpack.c.l.s4 1966171168
        %v8520 = vunpack.c.0.s8 %v8519
        %v8521 = vlaneseq
        %v8522 = vshrl.u32 %v8521, 7
        %v8523 = vsub.s32 %v8520, %v8522
        %v8524 = vrot.slane %v8510, %v8523
        %v8525 = vcombine.low %v8517, %v8524
        %v8526 = vcombine.low %v3937, %v3938
        %v8528 = vunpack.c.l.s4 1966171168
        %v8529 = vunpack.c.0.s8 %v8528
        %v8530 = vlaneseq
        %v8531 = vshrl.u32 %v8530, 7
        %v8532 = vsub.s32 %v8529, %v8531
        %v8533 = vrot.slane %v8526, %v8532
        %v8535 = vunpack.c.l.s4 1966171168
        %v8536 = vunpack.c.0.s8 %v8535
        %v8537 = vlaneseq
        %v8538 = vshrl.u32 %v8537, 7
        %v8539 = vsub.s32 %v8536, %v8538
        %v8540 = vrot.slane %v3929, %v8539
        %v8541 = vcombine.low %v8533, %v8540
        %v8543 = vunpack.c.l.s4 1966171168
        %v8544 = vunpack.c.0.s8 %v8543
        %v8545 = vlaneseq
        %v8546 = vshrl.u32 %v8545, 7
        %v8547 = vsub.s32 %v8544, %v8546
        %v8548 = vrot.slane %v8541, %v8547
        %v8561 = vcombine.low %v5837, %v5865
        %v8563 = vunpack.c.l.s4 1966171168
        %v8564 = vunpack.c.0.s8 %v8563
        %v8565 = vlaneseq
        %v8566 = vshrl.u32 %v8565, 7
        %v8567 = vsub.s32 %v8564, %v8566
        %v8568 = vrot.slane %v8561, %v8567
        %v8569 = vcombine.low %v8568, %v6987
        %v8570 = vcombine.low %v3694, %v3276
        %v8572 = vunpack.c.l.s4 1966171168
        %v8573 = vunpack.c.0.s8 %v8572
        %v8574 = vlaneseq
        %v8575 = vshrl.u32 %v8574, 7
        %v8576 = vsub.s32 %v8573, %v8575
        %v8577 = vrot.slane %v8570, %v8576
        %v8578 = vcombine.low %v8577, %v5928
        %v8580 = vunpack.c.l.s4 1966171168
        %v8581 = vunpack.c.0.s8 %v8580
        %v8582 = vlaneseq
        %v8583 = vshrl.u32 %v8582, 7
        %v8584 = vsub.s32 %v8581, %v8583
        %v8585 = vrot.slane %v8578, %v8584
        %v8586 = vcombine.low %v6994, %v8585
        %v8587 = vcombine.low %v7019, %v7045
        %v8588 = vcombine.low %v7029, %v6012
        %v8590 = vunpack.c.l.s4 1966171168
        %v8591 = vunpack.c.0.s8 %v8590
        %v8592 = vlaneseq
        %v8593 = vshrl.u32 %v8592, 7
        %v8594 = vsub.s32 %v8591, %v8593
        %v8595 = vrot.slane %v8588, %v8594
        %v8596 = vcombine.low %v8595, %v7062
        %v8597 = vcombine.low %v3710, %v3452
        %v8599 = vunpack.c.l.s4 1966171168
        %v8600 = vunpack.c.0.s8 %v8599
        %v8601 = vlaneseq
        %v8602 = vshrl.u32 %v8601, 7
        %v8603 = vsub.s32 %v8600, %v8602
        %v8604 = vrot.slane %v8597, %v8603
        %v8605 = vcombine.low %v6068, %v8604
        %v8607 = vunpack.c.l.s4 1966171168
        %v8608 = vunpack.c.0.s8 %v8607
        %v8609 = vlaneseq
        %v8610 = vshrl.u32 %v8609, 7
        %v8611 = vsub.s32 %v8608, %v8610
        %v8612 = vrot.slane %v8605, %v8611
        %v8613 = vcombine.low %v7069, %v8612
        %v8614 = vcombine.low %v7094, %v7112
        %v8615 = vcombine.low %v6166, %v6173
        %v8617 = vunpack.c.l.s4 1966171168
        %v8618 = vunpack.c.0.s8 %v8617
        %v8619 = vlaneseq
        %v8620 = vshrl.u32 %v8619, 7
        %v8621 = vsub.s32 %v8618, %v8620
        %v8622 = vrot.slane %v8615, %v8621
        %v8623 = vcombine.low %v7119, %v8622
        %v8624 = vcombine.low %v7144, %v7162
        %v8625 = vcombine.low %v3726, %v3628
        %v8627 = vunpack.c.l.s4 1966171168
        %v8628 = vunpack.c.0.s8 %v8627
        %v8629 = vlaneseq
        %v8630 = vshrl.u32 %v8629, 7
        %v8631 = vsub.s32 %v8628, %v8630
        %v8632 = vrot.slane %v8625, %v8631
        %v8633 = vcombine.low %v8632, %v6257
        %v8635 = vunpack.c.l.s4 1966171168
        %v8636 = vunpack.c.0.s8 %v8635
        %v8637 = vlaneseq
        %v8638 = vshrl.u32 %v8637, 7
        %v8639 = vsub.s32 %v8636, %v8638
        %v8640 = vrot.slane %v8633, %v8639
        %v8641 = vcombine.low %v8640, %v7179
        %v8642 = vcombine.low %v3888, %v3896
        %v8644 = vunpack.c.l.s4 1966171168
        %v8645 = vunpack.c.0.s8 %v8644
        %v8646 = vlaneseq
        %v8647 = vshrl.u32 %v8646, 7
        %v8648 = vsub.s32 %v8645, %v8647
        %v8649 = vrot.slane %v8642, %v8648
        %v8650 = vcombine.low %v7195, %v8649
        %v8652 = vunpack.c.l.s4 1966171168
        %v8653 = vunpack.c.0.s8 %v8652
        %v8654 = vlaneseq
        %v8655 = vshrl.u32 %v8654, 7
        %v8656 = vsub.s32 %v8653, %v8655
        %v8657 = vrot.slane %v8650, %v8656
        %v8658 = vcombine.low %v7186, %v8657
        %v8659 = vcombine.low %v3898, %v3881
        %v8660 = vcombine.low %v3895, %v3897
        %v8661 = vcombine.low %v3899, %v3922
        %v8662 = vcombine.low %v3936, %v3937
        %v8664 = vunpack.c.l.s4 1966171168
        %v8665 = vunpack.c.0.s8 %v8664
        %v8666 = vlaneseq
        %v8667 = vshrl.u32 %v8666, 7
        %v8668 = vsub.s32 %v8665, %v8667
        %v8669 = vrot.slane %v8659, %v8668
        %v8671 = vunpack.c.l.s4 1966171168
        %v8672 = vunpack.c.0.s8 %v8671
        %v8673 = vlaneseq
        %v8674 = vshrl.u32 %v8673, 7
        %v8675 = vsub.s32 %v8672, %v8674
        %v8676 = vrot.slane %v8660, %v8675
        %v8678 = vunpack.c.l.s4 1966171168
        %v8679 = vunpack.c.0.s8 %v8678
        %v8680 = vlaneseq
        %v8681 = vshrl.u32 %v8680, 7
        %v8682 = vsub.s32 %v8679, %v8681
        %v8683 = vrot.slane %v8661, %v8682
        %v8685 = vunpack.c.l.s4 1966171168
        %v8686 = vunpack.c.0.s8 %v8685
        %v8687 = vlaneseq
        %v8688 = vshrl.u32 %v8687, 7
        %v8689 = vsub.s32 %v8686, %v8688
        %v8690 = vrot.slane %v8662, %v8689
        %v8691 = vcombine.low %v8669, %v8676
        %v8692 = vcombine.low %v8683, %v8690
        %v8694 = vunpack.c.l.s4 1966171168
        %v8695 = vunpack.c.0.s8 %v8694
        %v8696 = vlaneseq
        %v8697 = vshrl.u32 %v8696, 7
        %v8698 = vsub.s32 %v8695, %v8697
        %v8699 = vrot.slane %v8691, %v8698
        %v8701 = vunpack.c.l.s4 1966171168
        %v8702 = vunpack.c.0.s8 %v8701
        %v8703 = vlaneseq
        %v8704 = vshrl.u32 %v8703, 7
        %v8705 = vsub.s32 %v8702, %v8704
        %v8706 = vrot.slane %v8692, %v8705
        %v8707 = vcombine.low %v8699, %v8706
        %v8708 = vcombine.low %v3938, %v3929
        %v8710 = vunpack.c.l.s4 1966171168
        %v8711 = vunpack.c.0.s8 %v8710
        %v8712 = vlaneseq
        %v8713 = vshrl.u32 %v8712, 7
        %v8714 = vsub.s32 %v8711, %v8713
        %v8715 = vrot.slane %v8708, %v8714
        %v8717 = vunpack.c.l.s4 1966171168
        %v8718 = vunpack.c.0.s8 %v8717
        %v8719 = vlaneseq
        %v8720 = vshrl.u32 %v8719, 7
        %v8721 = vsub.s32 %v8718, %v8720
        %v8722 = vrot.slane %v3946, %v8721
        %v8723 = vcombine.low %v8715, %v8722
        %v8725 = vunpack.c.l.s4 1966171168
        %v8726 = vunpack.c.0.s8 %v8725
        %v8727 = vlaneseq
        %v8728 = vshrl.u32 %v8727, 7
        %v8729 = vsub.s32 %v8726, %v8728
        %v8730 = vrot.slane %v8723, %v8729
        %8731 = vrot.lane.b32.xlu0 %v8569, 32
        %v8732 = vpop.permute.xlu0 %8731
        %8733 = vrot.lane.b32.xlu0 %v8586, 32
        %v8734 = vpop.permute.xlu0 %8733
        %8735 = vrot.lane.b32.xlu0 %v8587, 32
        %v8736 = vpop.permute.xlu0 %8735
        %8737 = vrot.lane.b32.xlu0 %v8596, 32
        %v8738 = vpop.permute.xlu0 %8737
        %8739 = vrot.lane.b32.xlu0 %v8613, 32
        %v8740 = vpop.permute.xlu0 %8739
        %8741 = vrot.lane.b32.xlu0 %v8614, 32
        %v8742 = vpop.permute.xlu0 %8741
        %8743 = vrot.lane.b32.xlu0 %v8623, 32
        %v8744 = vpop.permute.xlu0 %8743
        %8745 = vrot.lane.b32.xlu0 %v8624, 32
        %v8746 = vpop.permute.xlu0 %8745
        %8747 = vrot.lane.b32.xlu0 %v8641, 32
        %v8748 = vpop.permute.xlu0 %8747
        %8749 = vrot.lane.b32.xlu0 %v8658, 32
        %v8750 = vpop.permute.xlu0 %8749
        %8751 = vrot.lane.b32.xlu0 %v8707, 32
        %v8752 = vpop.permute.xlu0 %8751
        %8753 = vrot.lane.b32.xlu0 %v8730, 32
        %v8754 = vpop.permute.xlu0 %8753
        %v8767 = vcombine.low %v6411, %v6439
        %v8769 = vunpack.c.l.s4 1966171168
        %v8770 = vunpack.c.0.s8 %v8769
        %v8771 = vlaneseq
        %v8772 = vshrl.u32 %v8771, 7
        %v8773 = vsub.s32 %v8770, %v8772
        %v8774 = vrot.slane %v8767, %v8773
        %v8775 = vcombine.low %v8774, %v7305
        %v8776 = vcombine.low %v3736, %v3284
        %v8778 = vunpack.c.l.s4 1966171168
        %v8779 = vunpack.c.0.s8 %v8778
        %v8780 = vlaneseq
        %v8781 = vshrl.u32 %v8780, 7
        %v8782 = vsub.s32 %v8779, %v8781
        %v8783 = vrot.slane %v8776, %v8782
        %v8784 = vcombine.low %v8783, %v6502
        %v8786 = vunpack.c.l.s4 1966171168
        %v8787 = vunpack.c.0.s8 %v8786
        %v8788 = vlaneseq
        %v8789 = vshrl.u32 %v8788, 7
        %v8790 = vsub.s32 %v8787, %v8789
        %v8791 = vrot.slane %v8784, %v8790
        %v8792 = vcombine.low %v7312, %v8791
        %v8793 = vcombine.low %v7337, %v7363
        %v8794 = vcombine.low %v7347, %v6586
        %v8796 = vunpack.c.l.s4 1966171168
        %v8797 = vunpack.c.0.s8 %v8796
        %v8798 = vlaneseq
        %v8799 = vshrl.u32 %v8798, 7
        %v8800 = vsub.s32 %v8797, %v8799
        %v8801 = vrot.slane %v8794, %v8800
        %v8802 = vcombine.low %v8801, %v7380
        %v8803 = vcombine.low %v3738, %v3460
        %v8805 = vunpack.c.l.s4 1966171168
        %v8806 = vunpack.c.0.s8 %v8805
        %v8807 = vlaneseq
        %v8808 = vshrl.u32 %v8807, 7
        %v8809 = vsub.s32 %v8806, %v8808
        %v8810 = vrot.slane %v8803, %v8809
        %v8811 = vcombine.low %v6642, %v8810
        %v8813 = vunpack.c.l.s4 1966171168
        %v8814 = vunpack.c.0.s8 %v8813
        %v8815 = vlaneseq
        %v8816 = vshrl.u32 %v8815, 7
        %v8817 = vsub.s32 %v8814, %v8816
        %v8818 = vrot.slane %v8811, %v8817
        %v8819 = vcombine.low %v7387, %v8818
        %v8820 = vcombine.low %v7412, %v7430
        %v8821 = vcombine.low %v6740, %v6747
        %v8823 = vunpack.c.l.s4 1966171168
        %v8824 = vunpack.c.0.s8 %v8823
        %v8825 = vlaneseq
        %v8826 = vshrl.u32 %v8825, 7
        %v8827 = vsub.s32 %v8824, %v8826
        %v8828 = vrot.slane %v8821, %v8827
        %v8829 = vcombine.low %v7437, %v8828
        %v8830 = vcombine.low %v7462, %v7480
        %v8831 = vcombine.low %v3740, %v3636
        %v8833 = vunpack.c.l.s4 1966171168
        %v8834 = vunpack.c.0.s8 %v8833
        %v8835 = vlaneseq
        %v8836 = vshrl.u32 %v8835, 7
        %v8837 = vsub.s32 %v8834, %v8836
        %v8838 = vrot.slane %v8831, %v8837
        %v8839 = vcombine.low %v8838, %v6831
        %v8841 = vunpack.c.l.s4 1966171168
        %v8842 = vunpack.c.0.s8 %v8841
        %v8843 = vlaneseq
        %v8844 = vshrl.u32 %v8843, 7
        %v8845 = vsub.s32 %v8842, %v8844
        %v8846 = vrot.slane %v8839, %v8845
        %v8847 = vcombine.low %v8846, %v7497
        %v8848 = vcombine.low %v7513, %v8487
        %v8850 = vunpack.c.l.s4 1966171168
        %v8851 = vunpack.c.0.s8 %v8850
        %v8852 = vlaneseq
        %v8853 = vshrl.u32 %v8852, 7
        %v8854 = vsub.s32 %v8851, %v8853
        %v8855 = vrot.slane %v8848, %v8854
        %v8856 = vcombine.low %v7504, %v8855
        %v8857 = vcombine.low %v8494, %v8501
        %v8858 = vcombine.low %v8508, %v8533
        %v8860 = vunpack.c.l.s4 1966171168
        %v8861 = vunpack.c.0.s8 %v8860
        %v8862 = vlaneseq
        %v8863 = vshrl.u32 %v8862, 7
        %v8864 = vsub.s32 %v8861, %v8863
        %v8865 = vrot.slane %v8857, %v8864
        %v8867 = vunpack.c.l.s4 1966171168
        %v8868 = vunpack.c.0.s8 %v8867
        %v8869 = vlaneseq
        %v8870 = vshrl.u32 %v8869, 7
        %v8871 = vsub.s32 %v8868, %v8870
        %v8872 = vrot.slane %v8858, %v8871
        %v8873 = vcombine.low %v8865, %v8872
        %v8874 = vcombine.low %v3929, %v3946
        %v8876 = vunpack.c.l.s4 1966171168
        %v8877 = vunpack.c.0.s8 %v8876
        %v8878 = vlaneseq
        %v8879 = vshrl.u32 %v8878, 7
        %v8880 = vsub.s32 %v8877, %v8879
        %v8881 = vrot.slane %v8874, %v8880
        %v8883 = vunpack.c.l.s4 1966171168
        %v8884 = vunpack.c.0.s8 %v8883
        %v8885 = vlaneseq
        %v8886 = vshrl.u32 %v8885, 7
        %v8887 = vsub.s32 %v8884, %v8886
        %v8888 = vrot.slane %v3947, %v8887
        %v8889 = vcombine.low %v8881, %v8888
        %v8891 = vunpack.c.l.s4 1966171168
        %v8892 = vunpack.c.0.s8 %v8891
        %v8893 = vlaneseq
        %v8894 = vshrl.u32 %v8893, 7
        %v8895 = vsub.s32 %v8892, %v8894
        %v8896 = vrot.slane %v8889, %v8895
        %8897 = vrot.lane.b32.xlu0 %v8775, 64
        %v8898 = vpop.permute.xlu0 %8897
        %8899 = vrot.lane.b32.xlu0 %v8792, 64
        %v8900 = vpop.permute.xlu0 %8899
        %8901 = vrot.lane.b32.xlu0 %v8793, 64
        %v8902 = vpop.permute.xlu0 %8901
        %8903 = vrot.lane.b32.xlu0 %v8802, 64
        %v8904 = vpop.permute.xlu0 %8903
        %8905 = vrot.lane.b32.xlu0 %v8819, 64
        %v8906 = vpop.permute.xlu0 %8905
        %8907 = vrot.lane.b32.xlu0 %v8820, 64
        %v8908 = vpop.permute.xlu0 %8907
        %8909 = vrot.lane.b32.xlu0 %v8829, 64
        %v8910 = vpop.permute.xlu0 %8909
        %8911 = vrot.lane.b32.xlu0 %v8830, 64
        %v8912 = vpop.permute.xlu0 %8911
        %8913 = vrot.lane.b32.xlu0 %v8847, 64
        %v8914 = vpop.permute.xlu0 %8913
        %8915 = vrot.lane.b32.xlu0 %v8856, 64
        %v8916 = vpop.permute.xlu0 %8915
        %8917 = vrot.lane.b32.xlu0 %v8873, 64
        %v8918 = vpop.permute.xlu0 %8917
        %8919 = vrot.lane.b32.xlu0 %v8896, 64
        %v8920 = vpop.permute.xlu0 %8919
        %v8933 = vcombine.low %v3743, %v3286
        %v8935 = vunpack.c.l.s4 1966171168
        %v8936 = vunpack.c.0.s8 %v8935
        %v8937 = vlaneseq
        %v8938 = vshrl.u32 %v8937, 7
        %v8939 = vsub.s32 %v8936, %v8938
        %v8940 = vrot.slane %v8933, %v8939
        %v8941 = vcombine.low %v5914, %v7003
        %v8942 = vcombine.low %v8940, %v5935
        %v8944 = vunpack.c.l.s4 1966171168
        %v8945 = vunpack.c.0.s8 %v8944
        %v8946 = vlaneseq
        %v8947 = vshrl.u32 %v8946, 7
        %v8948 = vsub.s32 %v8945, %v8947
        %v8949 = vrot.slane %v8941, %v8948
        %v8951 = vunpack.c.l.s4 1966171168
        %v8952 = vunpack.c.0.s8 %v8951
        %v8953 = vlaneseq
        %v8954 = vshrl.u32 %v8953, 7
        %v8955 = vsub.s32 %v8952, %v8954
        %v8956 = vrot.slane %v8942, %v8955
        %v8957 = vcombine.low %v8949, %v8956
        %v8958 = vcombine.low %v5977, %v7029
        %v8960 = vunpack.c.l.s4 1966171168
        %v8961 = vunpack.c.0.s8 %v8960
        %v8962 = vlaneseq
        %v8963 = vshrl.u32 %v8962, 7
        %v8964 = vsub.s32 %v8961, %v8963
        %v8965 = vrot.slane %v8958, %v8964
        %v8966 = vcombine.low %v5993, %v8965
        %v8967 = vcombine.low %v3737, %v3744
        %v8969 = vunpack.c.l.s4 1966171168
        %v8970 = vunpack.c.0.s8 %v8969
        %v8971 = vlaneseq
        %v8972 = vshrl.u32 %v8971, 7
        %v8973 = vsub.s32 %v8970, %v8972
        %v8974 = vrot.slane %v8967, %v8973
        %v8975 = vcombine.low %v8974, %v6019
        %v8977 = vunpack.c.l.s4 1966171168
        %v8978 = vunpack.c.0.s8 %v8977
        %v8979 = vlaneseq
        %v8980 = vshrl.u32 %v8979, 7
        %v8981 = vsub.s32 %v8978, %v8980
        %v8982 = vrot.slane %v8975, %v8981
        %v8983 = vcombine.low %v8982, %v6049
        %v8984 = vcombine.low %v3745, %v3462
        %v8986 = vunpack.c.l.s4 1966171168
        %v8987 = vunpack.c.0.s8 %v8986
        %v8988 = vlaneseq
        %v8989 = vshrl.u32 %v8988, 7
        %v8990 = vsub.s32 %v8987, %v8989
        %v8991 = vrot.slane %v8984, %v8990
        %v8992 = vcombine.low %v7078, %v8991
        %v8994 = vunpack.c.l.s4 1966171168
        %v8995 = vunpack.c.0.s8 %v8994
        %v8996 = vlaneseq
        %v8997 = vshrl.u32 %v8996, 7
        %v8998 = vsub.s32 %v8995, %v8997
        %v8999 = vrot.slane %v8992, %v8998
        %v9000 = vcombine.low %v6091, %v8999
        %v9001 = vcombine.low %v3739, %v3746
        %v9003 = vunpack.c.l.s4 1966171168
        %v9004 = vunpack.c.0.s8 %v9003
        %v9005 = vlaneseq
        %v9006 = vshrl.u32 %v9005, 7
        %v9007 = vsub.s32 %v9004, %v9006
        %v9008 = vrot.slane %v9001, %v9007
        %v9009 = vcombine.low %v7103, %v9008
        %v9011 = vunpack.c.l.s4 1966171168
        %v9012 = vunpack.c.0.s8 %v9011
        %v9013 = vlaneseq
        %v9014 = vshrl.u32 %v9013, 7
        %v9015 = vsub.s32 %v9012, %v9014
        %v9016 = vrot.slane %v9009, %v9015
        %v9017 = vcombine.low %v9016, %v6196
        %v9018 = vcombine.low %v6222, %v7153
        %v9020 = vunpack.c.l.s4 1966171168
        %v9021 = vunpack.c.0.s8 %v9020
        %v9022 = vlaneseq
        %v9023 = vshrl.u32 %v9022, 7
        %v9024 = vsub.s32 %v9021, %v9023
        %v9025 = vrot.slane %v9018, %v9024
        %v9026 = vcombine.low %v6238, %v9025
        %v9027 = vcombine.low %v3747, %v3638
        %v9029 = vunpack.c.l.s4 1966171168
        %v9030 = vunpack.c.0.s8 %v9029
        %v9031 = vlaneseq
        %v9032 = vshrl.u32 %v9031, 7
        %v9033 = vsub.s32 %v9030, %v9032
        %v9034 = vrot.slane %v9027, %v9033
        %v9035 = vcombine.low %v9034, %v6264
        %v9037 = vunpack.c.l.s4 1966171168
        %v9038 = vunpack.c.0.s8 %v9037
        %v9039 = vlaneseq
        %v9040 = vshrl.u32 %v9039, 7
        %v9041 = vsub.s32 %v9038, %v9040
        %v9042 = vrot.slane %v9035, %v9041
        %v9043 = vcombine.low %v9042, %v6294
        %v9044 = vcombine.low %v3741, %v3748
        %v9046 = vunpack.c.l.s4 1966171168
        %v9047 = vunpack.c.0.s8 %v9046
        %v9048 = vlaneseq
        %v9049 = vshrl.u32 %v9048, 7
        %v9050 = vsub.s32 %v9047, %v9049
        %v9051 = vrot.slane %v9044, %v9050
        %v9052 = vcombine.low %v6303, %v7195
        %v9053 = vcombine.low %v9051, %v8669
        %v9055 = vunpack.c.l.s4 1966171168
        %v9056 = vunpack.c.0.s8 %v9055
        %v9057 = vlaneseq
        %v9058 = vshrl.u32 %v9057, 7
        %v9059 = vsub.s32 %v9056, %v9058
        %v9060 = vrot.slane %v9052, %v9059
        %v9062 = vunpack.c.l.s4 1966171168
        %v9063 = vunpack.c.0.s8 %v9062
        %v9064 = vlaneseq
        %v9065 = vshrl.u32 %v9064, 7
        %v9066 = vsub.s32 %v9063, %v9065
        %v9067 = vrot.slane %v9053, %v9066
        %v9068 = vcombine.low %v9060, %v9067
        %v9069 = vcombine.low %v8676, %v8683
        %v9070 = vcombine.low %v8690, %v8715
        %v9072 = vunpack.c.l.s4 1966171168
        %v9073 = vunpack.c.0.s8 %v9072
        %v9074 = vlaneseq
        %v9075 = vshrl.u32 %v9074, 7
        %v9076 = vsub.s32 %v9073, %v9075
        %v9077 = vrot.slane %v9069, %v9076
        %v9079 = vunpack.c.l.s4 1966171168
        %v9080 = vunpack.c.0.s8 %v9079
        %v9081 = vlaneseq
        %v9082 = vshrl.u32 %v9081, 7
        %v9083 = vsub.s32 %v9080, %v9082
        %v9084 = vrot.slane %v9070, %v9083
        %v9085 = vcombine.low %v9077, %v9084
        %v9086 = vcombine.low %v3946, %v3947
        %v9088 = vunpack.c.l.s4 1966171168
        %v9089 = vunpack.c.0.s8 %v9088
        %v9090 = vlaneseq
        %v9091 = vshrl.u32 %v9090, 7
        %v9092 = vsub.s32 %v9089, %v9091
        %v9093 = vrot.slane %v9086, %v9092
        %v9095 = vunpack.c.l.s4 1966171168
        %v9096 = vunpack.c.0.s8 %v9095
        %v9097 = vlaneseq
        %v9098 = vshrl.u32 %v9097, 7
        %v9099 = vsub.s32 %v9096, %v9098
        %v9100 = vrot.slane %v3948, %v9099
        %v9101 = vcombine.low %v9093, %v9100
        %v9103 = vunpack.c.l.s4 1966171168
        %v9104 = vunpack.c.0.s8 %v9103
        %v9105 = vlaneseq
        %v9106 = vshrl.u32 %v9105, 7
        %v9107 = vsub.s32 %v9104, %v9106
        %v9108 = vrot.slane %v9101, %v9107
        %9109 = vrot.lane.b32.xlu0 %v5903, 96
        %v9110 = vpop.permute.xlu0 %9109
        %9111 = vrot.lane.b32.xlu0 %v8957, 96
        %v9112 = vpop.permute.xlu0 %9111
        %9113 = vrot.lane.b32.xlu0 %v8966, 96
        %v9114 = vpop.permute.xlu0 %9113
        %9115 = vrot.lane.b32.xlu0 %v8983, 96
        %v9116 = vpop.permute.xlu0 %9115
        %9117 = vrot.lane.b32.xlu0 %v9000, 96
        %v9118 = vpop.permute.xlu0 %9117
        %9119 = vrot.lane.b32.xlu0 %v6148, 96
        %v9120 = vpop.permute.xlu0 %9119
        %9121 = vrot.lane.b32.xlu0 %v9017, 96
        %v9122 = vpop.permute.xlu0 %9121
        %9123 = vrot.lane.b32.xlu0 %v9026, 96
        %v9124 = vpop.permute.xlu0 %9123
        %9125 = vrot.lane.b32.xlu0 %v9043, 96
        %v9126 = vpop.permute.xlu0 %9125
        %9127 = vrot.lane.b32.xlu0 %v9068, 96
        %v9128 = vpop.permute.xlu0 %9127
        %9129 = vrot.lane.b32.xlu0 %v9085, 96
        %v9130 = vpop.permute.xlu0 %9129
        %9131 = vrot.lane.b32.xlu0 %v9108, 96
        %v9132 = vpop.permute.xlu0 %9131
        %vm9145 = vcmask 261120
        %v9146 = vsel %vm9145, %v3997, %v5086
        %v9147 = vsel %vm9145, %v4046, %v5088
        %v9148 = vsel %vm9145, %v4095, %v5090
        %v9149 = vsel %vm9145, %v4144, %v5092
        %v9150 = vsel %vm9145, %v4193, %v5094
        %v9151 = vsel %vm9145, %v4242, %v5096
        %v9152 = vsel %vm9145, %v4291, %v5098
        %v9153 = vsel %vm9145, %v4340, %v5100
        %v9154 = vsel %vm9145, %v4389, %v5102
        %v9155 = vsel %vm9145, %v4438, %v5104
        %v9156 = vsel %vm9145, %v4487, %v5106
        %v9157 = vsel %vm9145, %v4510, %v5108
        %vm9158 = vcmask 523264
        %v9159 = vsel %vm9158, %v9146, %v5404
        %v9160 = vsel %vm9158, %v9147, %v5406
        %v9161 = vsel %vm9158, %v9148, %v5408
        %v9162 = vsel %vm9158, %v9149, %v5410
        %v9163 = vsel %vm9158, %v9150, %v5412
        %v9164 = vsel %vm9158, %v9151, %v5414
        %v9165 = vsel %vm9158, %v9152, %v5416
        %v9166 = vsel %vm9158, %v9153, %v5418
        %v9167 = vsel %vm9158, %v9154, %v5420
        %v9168 = vsel %vm9158, %v9155, %v5422
        %v9169 = vsel %vm9158, %v9156, %v5424
        %v9170 = vsel %vm9158, %v9157, %v5426
        %vm9171 = vcmask 785408
        %v9172 = vsel %vm9171, %v9159, %v5722
        %v9173 = vsel %vm9171, %v9160, %v5724
        %v9174 = vsel %vm9171, %v9161, %v5726
        %v9175 = vsel %vm9171, %v9162, %v5728
        %v9176 = vsel %vm9171, %v9163, %v5730
        %v9177 = vsel %vm9171, %v9164, %v5732
        %v9178 = vsel %vm9171, %v9165, %v5734
        %v9179 = vsel %vm9171, %v9166, %v5736
        %v9180 = vsel %vm9171, %v9167, %v5738
        %v9181 = vsel %vm9171, %v9168, %v5740
        %v9182 = vsel %vm9171, %v9169, %v5742
        %v9183 = vsel %vm9171, %v9170, %v5744
        %v9184 = vsel %vm9145, %v5805, %v6894
        %v9185 = vsel %vm9145, %v5854, %v6896
        %v9186 = vsel %vm9145, %v5903, %v6898
        %v9187 = vsel %vm9145, %v5952, %v6900
        %v9188 = vsel %vm9145, %v6001, %v6902
        %v9189 = vsel %vm9145, %v6050, %v6904
        %v9190 = vsel %vm9145, %v6099, %v6906
        %v9191 = vsel %vm9145, %v6148, %v6908
        %v9192 = vsel %vm9145, %v6197, %v6910
        %v9193 = vsel %vm9145, %v6246, %v6912
        %v9194 = vsel %vm9145, %v6295, %v6914
        %v9195 = vsel %vm9145, %v6318, %v6916
        %v9196 = vsel %vm9158, %v9184, %v7212
        %v9197 = vsel %vm9158, %v9185, %v7214
        %v9198 = vsel %vm9158, %v9186, %v7216
        %v9199 = vsel %vm9158, %v9187, %v7218
        %v9200 = vsel %vm9158, %v9188, %v7220
        %v9201 = vsel %vm9158, %v9189, %v7222
        %v9202 = vsel %vm9158, %v9190, %v7224
        %v9203 = vsel %vm9158, %v9191, %v7226
        %v9204 = vsel %vm9158, %v9192, %v7228
        %v9205 = vsel %vm9158, %v9193, %v7230
        %v9206 = vsel %vm9158, %v9194, %v7232
        %v9207 = vsel %vm9158, %v9195, %v7234
        %v9208 = vsel %vm9171, %v9196, %v7530
        %v9209 = vsel %vm9171, %v9197, %v7532
        %v9210 = vsel %vm9171, %v9198, %v7534
        %v9211 = vsel %vm9171, %v9199, %v7536
        %v9212 = vsel %vm9171, %v9200, %v7538
        %v9213 = vsel %vm9171, %v9201, %v7540
        %v9214 = vsel %vm9171, %v9202, %v7542
        %v9215 = vsel %vm9171, %v9203, %v7544
        %v9216 = vsel %vm9171, %v9204, %v7546
        %v9217 = vsel %vm9171, %v9205, %v7548
        %v9218 = vsel %vm9171, %v9206, %v7550
        %v9219 = vsel %vm9171, %v9207, %v7552
        %v9220 = vsel %vm9145, %v7581, %v7942
        %v9221 = vsel %vm9145, %v7598, %v7944
        %v9222 = vsel %vm9145, %v7599, %v7946
        %v9223 = vsel %vm9145, %v7616, %v7948
        %v9224 = vsel %vm9145, %v7633, %v7950
        %v9225 = vsel %vm9145, %v7634, %v7952
        %v9226 = vsel %vm9145, %v7651, %v7954
        %v9227 = vsel %vm9145, %v7652, %v7956
        %v9228 = vsel %vm9145, %v7669, %v7958
        %v9229 = vsel %vm9145, %v7686, %v7960
        %v9230 = vsel %vm9145, %v7735, %v7962
        %v9231 = vsel %vm9145, %v7758, %v7964
        %v9232 = vsel %vm9158, %v9220, %v8108
        %v9233 = vsel %vm9158, %v9221, %v8110
        %v9234 = vsel %vm9158, %v9222, %v8112
        %v9235 = vsel %vm9158, %v9223, %v8114
        %v9236 = vsel %vm9158, %v9224, %v8116
        %v9237 = vsel %vm9158, %v9225, %v8118
        %v9238 = vsel %vm9158, %v9226, %v8120
        %v9239 = vsel %vm9158, %v9227, %v8122
        %v9240 = vsel %vm9158, %v9228, %v8124
        %v9241 = vsel %vm9158, %v9229, %v8126
        %v9242 = vsel %vm9158, %v9230, %v8128
        %v9243 = vsel %vm9158, %v9231, %v8130
        %v9244 = vsel %vm9171, %v9232, %v8320
        %v9245 = vsel %vm9171, %v9233, %v8322
        %v9246 = vsel %vm9171, %v9234, %v8324
        %v9247 = vsel %vm9171, %v9235, %v8326
        %v9248 = vsel %vm9171, %v9236, %v8328
        %v9249 = vsel %vm9171, %v9237, %v8330
        %v9250 = vsel %vm9171, %v9238, %v8332
        %v9251 = vsel %vm9171, %v9239, %v8334
        %v9252 = vsel %vm9171, %v9240, %v8336
        %v9253 = vsel %vm9171, %v9241, %v8338
        %v9254 = vsel %vm9171, %v9242, %v8340
        %v9255 = vsel %vm9171, %v9243, %v8342
        %v9256 = vsel %vm9145, %v8371, %v8732
        %v9257 = vsel %vm9145, %v8388, %v8734
        %v9258 = vsel %vm9145, %v8389, %v8736
        %v9259 = vsel %vm9145, %v8406, %v8738
        %v9260 = vsel %vm9145, %v8423, %v8740
        %v9261 = vsel %vm9145, %v8424, %v8742
        %v9262 = vsel %vm9145, %v8441, %v8744
        %v9263 = vsel %vm9145, %v8442, %v8746
        %v9264 = vsel %vm9145, %v8459, %v8748
        %v9265 = vsel %vm9145, %v8476, %v8750
        %v9266 = vsel %vm9145, %v8525, %v8752
        %v9267 = vsel %vm9145, %v8548, %v8754
        %v9268 = vsel %vm9158, %v9256, %v8898
        %v9269 = vsel %vm9158, %v9257, %v8900
        %v9270 = vsel %vm9158, %v9258, %v8902
        %v9271 = vsel %vm9158, %v9259, %v8904
        %v9272 = vsel %vm9158, %v9260, %v8906
        %v9273 = vsel %vm9158, %v9261, %v8908
        %v9274 = vsel %vm9158, %v9262, %v8910
        %v9275 = vsel %vm9158, %v9263, %v8912
        %v9276 = vsel %vm9158, %v9264, %v8914
        %v9277 = vsel %vm9158, %v9265, %v8916
        %v9278 = vsel %vm9158, %v9266, %v8918
        %v9279 = vsel %vm9158, %v9267, %v8920
        %v9280 = vsel %vm9171, %v9268, %v9110
        %v9281 = vsel %vm9171, %v9269, %v9112
        %v9282 = vsel %vm9171, %v9270, %v9114
        %v9283 = vsel %vm9171, %v9271, %v9116
        %v9284 = vsel %vm9171, %v9272, %v9118
        %v9285 = vsel %vm9171, %v9273, %v9120
        %v9286 = vsel %vm9171, %v9274, %v9122
        %v9287 = vsel %vm9171, %v9275, %v9124
        %v9288 = vsel %vm9171, %v9276, %v9126
        %v9289 = vsel %vm9171, %v9277, %v9128
        %v9290 = vsel %vm9171, %v9278, %v9130
        %v9291 = vsel %vm9171, %v9279, %v9132
        %v9292 = vpack.c.bf16 %v9173, %v9172
        %v9293 = vpack.c.bf16 %v9209, %v9208
        %v9294 = vpack.c.bf16 %v9245, %v9244
        %v9295 = vpack.c.bf16 %v9281, %v9280
        %v9296 = vpack.c.bf16 %v9175, %v9174
        %v9297 = vpack.c.bf16 %v9211, %v9210
        %v9298 = vpack.c.bf16 %v9247, %v9246
        %v9299 = vpack.c.bf16 %v9283, %v9282
        %v9300 = vpack.c.bf16 %v9177, %v9176
        %v9301 = vpack.c.bf16 %v9213, %v9212
        %v9302 = vpack.c.bf16 %v9249, %v9248
        %v9303 = vpack.c.bf16 %v9285, %v9284
        %v9304 = vpack.c.bf16 %v9179, %v9178
        %v9305 = vpack.c.bf16 %v9215, %v9214
        %v9306 = vpack.c.bf16 %v9251, %v9250
        %v9307 = vpack.c.bf16 %v9287, %v9286
        %v9308 = vpack.c.bf16 %v9181, %v9180
        %v9309 = vpack.c.bf16 %v9217, %v9216
        %v9310 = vpack.c.bf16 %v9253, %v9252
        %v9311 = vpack.c.bf16 %v9289, %v9288
        %v9312 = vpack.c.bf16 %v9183, %v9182
        %v9313 = vpack.c.bf16 %v9219, %v9218
        %v9314 = vpack.c.bf16 %v9255, %v9254
        %v9315 = vpack.c.bf16 %v9291, %v9290
        %v9316 = vld [vmem:[%s4] sm:$0xf]
        %v9317 = vld [vmem:[%s4 + $0x4] sm:$0xf]
        %v9318 = vld [vmem:[%s4 + $0x8] sm:$0xf]
        %v9319 = vld [vmem:[%s4 + $0xc] sm:$0xf]
        %v9320 = vld [vmem:[%s4 + $0x10] sm:$0xf]
        %v9321 = vld [vmem:[%s4 + $0x14] sm:$0xf]
        %v9322 = vld [vmem:[%s4 + $0x18] sm:$0xf]
        %v9323 = vld [vmem:[%s4 + $0x1c] sm:$0xf]
        %v9324 = vld [vmem:[%s4 + $0x20] sm:$0xf]
        %v9325 = vld [vmem:[%s4 + $0x24] sm:$0xf]
        %v9326 = vld [vmem:[%s4 + $0x28] sm:$0xf]
        %v9327 = vld [vmem:[%s4 + $0x2c] sm:$0xf]
        %v9328 = vld [vmem:[%s4 + $0x30] sm:$0xf]
        %v9329 = vld [vmem:[%s4 + $0x34] sm:$0xf]
        %v9330 = vld [vmem:[%s4 + $0x38] sm:$0xf]
        %v9331 = vld [vmem:[%s4 + $0x3c] sm:$0xf]
        %v9332 = vld [vmem:[%s4 + $0x40] sm:$0xf]
        %v9333 = vld [vmem:[%s4 + $0x44] sm:$0xf]
        %v9334 = vld [vmem:[%s4 + $0x48] sm:$0xf]
        %v9335 = vld [vmem:[%s4 + $0x4c] sm:$0xf]
        %v9336 = vld [vmem:[%s4 + $0x50] sm:$0xf]
        %v9337 = vld [vmem:[%s4 + $0x54] sm:$0xf]
        %v9338 = vld [vmem:[%s4 + $0x58] sm:$0xf]
        %v9339 = vld [vmem:[%s4 + $0x5c] sm:$0xf]
        %v9340 = vld [vmem:[%s4 + $0x60] sm:$0xf]
        %v9341 = vld [vmem:[%s4 + $0x64] sm:$0xf]
        %v9342 = vld [vmem:[%s4 + $0x68] sm:$0xf]
        %v9343 = vld [vmem:[%s4 + $0x6c] sm:$0xf]
        %v9344 = vld [vmem:[%s4 + $0x70] sm:$0xf]
        %v9345 = vld [vmem:[%s4 + $0x74] sm:$0xf]
        %v9346 = vld [vmem:[%s4 + $0x78] sm:$0xf]
        %v9347 = vld [vmem:[%s4 + $0x7c] sm:$0xf]
        %v9348 = vld [vmem:[%s4 + $0x80] sm:$0xf]
        %v9349 = vld [vmem:[%s4 + $0x84] sm:$0xf]
        %v9350 = vld [vmem:[%s4 + $0x88] sm:$0xf]
        %v9351 = vld [vmem:[%s4 + $0x8c] sm:$0xf]
        %v9352 = vld [vmem:[%s4 + $0x90] sm:$0xf]
        %v9353 = vld [vmem:[%s4 + $0x94] sm:$0xf]
        %v9354 = vld [vmem:[%s4 + $0x98] sm:$0xf]
        %v9355 = vld [vmem:[%s4 + $0x9c] sm:$0xf]
        %v9356 = vld [vmem:[%s4 + $0xa0] sm:$0xf]
        %v9357 = vld [vmem:[%s4 + $0xa4] sm:$0xf]
        %v9358 = vld [vmem:[%s4 + $0xa8] sm:$0xf]
        %v9359 = vld [vmem:[%s4 + $0xac] sm:$0xf]
        %v9360 = vld [vmem:[%s4 + $0xb0] sm:$0xf]
        %v9361 = vld [vmem:[%s4 + $0xb4] sm:$0xf]
        %v9362 = vld [vmem:[%s4 + $0xb8] sm:$0xf]
        %v9363 = vld [vmem:[%s4 + $0xbc] sm:$0xf]
        %v9364 = vld [vmem:[%s4 + $0xc0] sm:$0xf]
        %v9365 = vld [vmem:[%s4 + $0xc4] sm:$0xf]
        %v9366 = vld [vmem:[%s4 + $0xc8] sm:$0xf]
        %v9367 = vld [vmem:[%s4 + $0xcc] sm:$0xf]
        %v9368 = vld [vmem:[%s4 + $0xd0] sm:$0xf]
        %v9369 = vld [vmem:[%s4 + $0xd4] sm:$0xf]
        %v9370 = vld [vmem:[%s4 + $0xd8] sm:$0xf]
        %v9371 = vld [vmem:[%s4 + $0xdc] sm:$0xf]
        %v9372 = vld [vmem:[%s4 + $0xe0] sm:$0xf]
        %v9373 = vld [vmem:[%s4 + $0xe4] sm:$0xf]
        %v9374 = vld [vmem:[%s4 + $0xe8] sm:$0xf]
        %v9375 = vld [vmem:[%s4 + $0xec] sm:$0xf]
        %v9376 = vld [vmem:[%s4 + $0xf0] sm:$0xf]
        %v9377 = vld [vmem:[%s4 + $0xf4] sm:$0xf]
        %v9378 = vld [vmem:[%s4 + $0xf8] sm:$0xf]
        %v9379 = vld [vmem:[%s4 + $0xfc] sm:$0xf]
        %v9444 = vunpack.c.l.b16 %v9316
        %v9445 = vunpack.c.l.b16 %v9317
        %v9446 = vunpack.c.l.b16 %v9318
        %v9447 = vunpack.c.l.b16 %v9319
        %v9448 = vunpack.c.l.b16 %v9320
        %v9449 = vunpack.c.l.b16 %v9321
        %v9450 = vunpack.c.l.b16 %v9322
        %v9451 = vunpack.c.l.b16 %v9323
        %v9452 = vunpack.c.l.b16 %v9324
        %v9453 = vunpack.c.l.b16 %v9325
        %v9454 = vunpack.c.l.b16 %v9326
        %v9455 = vunpack.c.l.b16 %v9327
        %v9456 = vunpack.c.l.b16 %v9328
        %v9457 = vunpack.c.l.b16 %v9329
        %v9458 = vunpack.c.l.b16 %v9330
        %v9459 = vunpack.c.l.b16 %v9331
        %v9460 = vunpack.c.l.b16 %v9332
        %v9461 = vunpack.c.l.b16 %v9333
        %v9462 = vunpack.c.l.b16 %v9334
        %v9463 = vunpack.c.l.b16 %v9335
        %v9464 = vunpack.c.l.b16 %v9336
        %v9465 = vunpack.c.l.b16 %v9337
        %v9466 = vunpack.c.l.b16 %v9338
        %v9467 = vunpack.c.l.b16 %v9339
        %v9468 = vunpack.c.l.b16 %v9340
        %v9469 = vunpack.c.l.b16 %v9341
        %v9470 = vunpack.c.l.b16 %v9342
        %v9471 = vunpack.c.l.b16 %v9343
        %v9472 = vunpack.c.l.b16 %v9344
        %v9473 = vunpack.c.l.b16 %v9345
        %v9474 = vunpack.c.l.b16 %v9346
        %v9475 = vunpack.c.l.b16 %v9347
        %v9476 = vunpack.c.l.b16 %v9348
        %v9477 = vunpack.c.l.b16 %v9349
        %v9478 = vunpack.c.l.b16 %v9350
        %v9479 = vunpack.c.l.b16 %v9351
        %v9480 = vunpack.c.l.b16 %v9352
        %v9481 = vunpack.c.l.b16 %v9353
        %v9482 = vunpack.c.l.b16 %v9354
        %v9483 = vunpack.c.l.b16 %v9355
        %v9484 = vunpack.c.l.b16 %v9356
        %v9485 = vunpack.c.l.b16 %v9357
        %v9486 = vunpack.c.l.b16 %v9358
        %v9487 = vunpack.c.l.b16 %v9359
        %v9488 = vunpack.c.l.b16 %v9360
        %v9489 = vunpack.c.l.b16 %v9361
        %v9490 = vunpack.c.l.b16 %v9362
        %v9491 = vunpack.c.l.b16 %v9363
        %v9492 = vunpack.c.l.b16 %v9364
        %v9493 = vunpack.c.l.b16 %v9365
        %v9494 = vunpack.c.l.b16 %v9366
        %v9495 = vunpack.c.l.b16 %v9367
        %v9496 = vunpack.c.l.b16 %v9368
        %v9497 = vunpack.c.l.b16 %v9369
        %v9498 = vunpack.c.l.b16 %v9370
        %v9499 = vunpack.c.l.b16 %v9371
        %v9500 = vunpack.c.l.b16 %v9372
        %v9501 = vunpack.c.l.b16 %v9373
        %v9502 = vunpack.c.l.b16 %v9374
        %v9503 = vunpack.c.l.b16 %v9375
        %v9504 = vunpack.c.l.b16 %v9376
        %v9505 = vunpack.c.l.b16 %v9377
        %v9506 = vunpack.c.l.b16 %v9378
        %v9507 = vunpack.c.l.b16 %v9379
        %v9508 = vpack.c.b16 %v9445, %v9444
        %v9509 = vpack.c.b16 %v9447, %v9446
        %v9510 = vpack.c.b16 %v9449, %v9448
        %v9511 = vpack.c.b16 %v9451, %v9450
        %v9512 = vpack.c.b16 %v9453, %v9452
        %v9513 = vpack.c.b16 %v9455, %v9454
        %v9514 = vpack.c.b16 %v9457, %v9456
        %v9515 = vpack.c.b16 %v9459, %v9458
        %v9516 = vpack.c.b16 %v9461, %v9460
        %v9517 = vpack.c.b16 %v9463, %v9462
        %v9518 = vpack.c.b16 %v9465, %v9464
        %v9519 = vpack.c.b16 %v9467, %v9466
        %v9520 = vpack.c.b16 %v9469, %v9468
        %v9521 = vpack.c.b16 %v9471, %v9470
        %v9522 = vpack.c.b16 %v9473, %v9472
        %v9523 = vpack.c.b16 %v9475, %v9474
        %v9524 = vpack.c.b16 %v9477, %v9476
        %v9525 = vpack.c.b16 %v9479, %v9478
        %v9526 = vpack.c.b16 %v9481, %v9480
        %v9527 = vpack.c.b16 %v9483, %v9482
        %v9528 = vpack.c.b16 %v9485, %v9484
        %v9529 = vpack.c.b16 %v9487, %v9486
        %v9530 = vpack.c.b16 %v9489, %v9488
        %v9531 = vpack.c.b16 %v9491, %v9490
        %v9532 = vpack.c.b16 %v9493, %v9492
        %v9533 = vpack.c.b16 %v9495, %v9494
        %v9534 = vpack.c.b16 %v9497, %v9496
        %v9535 = vpack.c.b16 %v9499, %v9498
        %v9536 = vpack.c.b16 %v9501, %v9500
        %v9537 = vpack.c.b16 %v9503, %v9502
        %v9538 = vpack.c.b16 %v9505, %v9504
        %v9539 = vpack.c.b16 %v9507, %v9506
        %9572 = vmatprep.subr.bf16.mxu0 0
        %9573 = vmatpush1.bf16.msra.mxu0 %v9508
        %9574 = vmatprep.subr.bf16.mxu0 0
        %9575 = vmatpush1.bf16.msra.mxu0 %v9509
        %9576 = vmatprep.subr.bf16.mxu0 0
        %9577 = vmatpush1.bf16.msra.mxu0 %v9510
        %9578 = vmatprep.subr.bf16.mxu0 0
        %9579 = vmatpush1.bf16.msra.mxu0 %v9511
        %9580 = vmatprep.subr.bf16.mxu0 0
        %9581 = vmatpush1.bf16.msra.mxu0 %v9512
        %9582 = vmatprep.subr.bf16.mxu0 0
        %9583 = vmatpush1.bf16.msra.mxu0 %v9513
        %9584 = vmatprep.subr.bf16.mxu0 0
        %9585 = vmatpush1.bf16.msra.mxu0 %v9514
        %9586 = vmatprep.subr.bf16.mxu0 0
        %9587 = vmatpush1.bf16.msra.mxu0 %v9515
        %9588 = vmatprep.subr.bf16.mxu0 0
        %9589 = vmatpush1.bf16.msra.mxu0 %v9516
        %9590 = vmatprep.subr.bf16.mxu0 0
        %9591 = vmatpush1.bf16.msra.mxu0 %v9517
        %9592 = vmatprep.subr.bf16.mxu0 0
        %9593 = vmatpush1.bf16.msra.mxu0 %v9518
        %9594 = vmatprep.subr.bf16.mxu0 0
        %9595 = vmatpush1.bf16.msra.mxu0 %v9519
        %9596 = vmatprep.subr.bf16.mxu0 0
        %9597 = vmatpush1.bf16.msra.mxu0 %v9520
        %9598 = vmatprep.subr.bf16.mxu0 0
        %9599 = vmatpush1.bf16.msra.mxu0 %v9521
        %9600 = vmatprep.subr.bf16.mxu0 0
        %9601 = vmatpush1.bf16.msra.mxu0 %v9522
        %9602 = vmatprep.subr.bf16.mxu0 0
        %9603 = vmatpush1.bf16.msra.mxu0 %v9523
        %9604 = vmatprep.mubr.bf16.mxu0 %v9293
        %9605 = vmatmul.mubr.bf16.gmra.mrb[0].mxu0 %v9292
        %v9606 = vpop.f32.mrb[0].mxu0
        %v9607 = vadd.f32 0.0, %v9606
        %v9608 = vpop.f32.mrb[0].mxu0
        %v9609 = vpop.f32.mrb[0].mxu0
        %v9610 = vadd.f32 0.0, %v9609
        %v9611 = vpop.f32.mrb[0].mxu0
        %9612 = vmatprep.mubr.bf16.mxu0 %v9297
        %9613 = vmatmul.mubr.bf16.gmra.mrb[0].mxu0 %v9296
        %v9614 = vpop.f32.mrb[0].mxu0
        %v9615 = vadd.f32 0.0, %v9614
        %v9616 = vpop.f32.mrb[0].mxu0
        %v9617 = vpop.f32.mrb[0].mxu0
        %v9618 = vadd.f32 0.0, %v9617
        %v9619 = vpop.f32.mrb[0].mxu0
        %9620 = vmatprep.mubr.bf16.mxu0 %v9301
        %9621 = vmatmul.mubr.bf16.gmra.mrb[0].mxu0 %v9300
        %v9622 = vpop.f32.mrb[0].mxu0
        %v9623 = vadd.f32 0.0, %v9622
        %v9624 = vpop.f32.mrb[0].mxu0
        %v9625 = vpop.f32.mrb[0].mxu0
        %v9626 = vadd.f32 0.0, %v9625
        %v9627 = vpop.f32.mrb[0].mxu0
        %9628 = vmatprep.mubr.bf16.mxu0 %v9305
        %9629 = vmatmul.mubr.bf16.gmra.mrb[0].mxu0 %v9304
        %v9630 = vpop.f32.mrb[0].mxu0
        %v9631 = vadd.f32 0.0, %v9630
        %v9632 = vpop.f32.mrb[0].mxu0
        %v9633 = vpop.f32.mrb[0].mxu0
        %v9634 = vadd.f32 0.0, %v9633
        %v9635 = vpop.f32.mrb[0].mxu0
        %9636 = vmatprep.mubr.bf16.mxu0 %v9309
        %9637 = vmatmul.mubr.bf16.gmra.mrb[0].mxu0 %v9308
        %v9638 = vpop.f32.mrb[0].mxu0
        %v9639 = vadd.f32 0.0, %v9638
        %v9640 = vpop.f32.mrb[0].mxu0
        %v9641 = vpop.f32.mrb[0].mxu0
        %v9642 = vadd.f32 0.0, %v9641
        %v9643 = vpop.f32.mrb[0].mxu0
        %9644 = vmatprep.mubr.bf16.mxu0 %v9313
        %9645 = vmatmul.mubr.bf16.gmra.mrb[0].mxu0 %v9312
        %v9646 = vpop.f32.mrb[0].mxu0
        %v9647 = vadd.f32 0.0, %v9646
        %v9648 = vpop.f32.mrb[0].mxu0
        %v9649 = vpop.f32.mrb[0].mxu0
        %v9650 = vadd.f32 0.0, %v9649
        %v9651 = vpop.f32.mrb[0].mxu0
        %9652 = vdwg.mxu0
        %9653 = vmatprep.subr.bf16.mxu0 0
        %9654 = vmatpush1.bf16.msra.mxu0 %v9524
        %9655 = vmatprep.subr.bf16.mxu0 0
        %9656 = vmatpush1.bf16.msra.mxu0 %v9525
        %9657 = vmatprep.subr.bf16.mxu0 0
        %9658 = vmatpush1.bf16.msra.mxu0 %v9526
        %9659 = vmatprep.subr.bf16.mxu0 0
        %9660 = vmatpush1.bf16.msra.mxu0 %v9527
        %9661 = vmatprep.subr.bf16.mxu0 0
        %9662 = vmatpush1.bf16.msra.mxu0 %v9528
        %9663 = vmatprep.subr.bf16.mxu0 0
        %9664 = vmatpush1.bf16.msra.mxu0 %v9529
        %9665 = vmatprep.subr.bf16.mxu0 0
        %9666 = vmatpush1.bf16.msra.mxu0 %v9530
        %9667 = vmatprep.subr.bf16.mxu0 0
        %9668 = vmatpush1.bf16.msra.mxu0 %v9531
        %9669 = vmatprep.subr.bf16.mxu0 0
        %9670 = vmatpush1.bf16.msra.mxu0 %v9532
        %9671 = vmatprep.subr.bf16.mxu0 0
        %9672 = vmatpush1.bf16.msra.mxu0 %v9533
        %9673 = vmatprep.subr.bf16.mxu0 0
        %9674 = vmatpush1.bf16.msra.mxu0 %v9534
        %9675 = vmatprep.subr.bf16.mxu0 0
        %9676 = vmatpush1.bf16.msra.mxu0 %v9535
        %9677 = vmatprep.subr.bf16.mxu0 0
        %9678 = vmatpush1.bf16.msra.mxu0 %v9536
        %9679 = vmatprep.subr.bf16.mxu0 0
        %9680 = vmatpush1.bf16.msra.mxu0 %v9537
        %9681 = vmatprep.subr.bf16.mxu0 0
        %9682 = vmatpush1.bf16.msra.mxu0 %v9538
        %9683 = vmatprep.subr.bf16.mxu0 0
        %9684 = vmatpush1.bf16.msra.mxu0 %v9539
        %9685 = vmatprep.mubr.bf16.mxu0 %v9295
        %9686 = vmatmul.mubr.bf16.gmra.mrb[0].mxu0 %v9294
        %v9687 = vpop.f32.mrb[0].mxu0
        %v9688 = vadd.f32 %v9607, %v9687
        %v9689 = vpop.f32.mrb[0].mxu0
        %v9690 = vpop.f32.mrb[0].mxu0
        %v9691 = vadd.f32 %v9610, %v9690
        %v9692 = vpop.f32.mrb[0].mxu0
        %9693 = vmatprep.mubr.bf16.mxu0 %v9299
        %9694 = vmatmul.mubr.bf16.gmra.mrb[0].mxu0 %v9298
        %v9695 = vpop.f32.mrb[0].mxu0
        %v9696 = vadd.f32 %v9615, %v9695
        %v9697 = vpop.f32.mrb[0].mxu0
        %v9698 = vpop.f32.mrb[0].mxu0
        %v9699 = vadd.f32 %v9618, %v9698
        %v9700 = vpop.f32.mrb[0].mxu0
        %9701 = vmatprep.mubr.bf16.mxu0 %v9303
        %9702 = vmatmul.mubr.bf16.gmra.mrb[0].mxu0 %v9302
        %v9703 = vpop.f32.mrb[0].mxu0
        %v9704 = vadd.f32 %v9623, %v9703
        %v9705 = vpop.f32.mrb[0].mxu0
        %v9706 = vpop.f32.mrb[0].mxu0
        %v9707 = vadd.f32 %v9626, %v9706
        %v9708 = vpop.f32.mrb[0].mxu0
        %9709 = vmatprep.mubr.bf16.mxu0 %v9307
        %9710 = vmatmul.mubr.bf16.gmra.mrb[0].mxu0 %v9306
        %v9711 = vpop.f32.mrb[0].mxu0
        %v9712 = vadd.f32 %v9631, %v9711
        %v9713 = vpop.f32.mrb[0].mxu0
        %v9714 = vpop.f32.mrb[0].mxu0
        %v9715 = vadd.f32 %v9634, %v9714
        %v9716 = vpop.f32.mrb[0].mxu0
        %9717 = vmatprep.mubr.bf16.mxu0 %v9311
        %9718 = vmatmul.mubr.bf16.gmra.mrb[0].mxu0 %v9310
        %v9719 = vpop.f32.mrb[0].mxu0
        %v9720 = vadd.f32 %v9639, %v9719
        %v9721 = vpop.f32.mrb[0].mxu0
        %v9722 = vpop.f32.mrb[0].mxu0
        %v9723 = vadd.f32 %v9642, %v9722
        %v9724 = vpop.f32.mrb[0].mxu0
        %9725 = vmatprep.mubr.bf16.mxu0 %v9315
        %9726 = vmatmul.mubr.bf16.gmra.mrb[0].mxu0 %v9314
        %v9727 = vpop.f32.mrb[0].mxu0
        %v9728 = vadd.f32 %v9647, %v9727
        %v9729 = vpop.f32.mrb[0].mxu0
        %v9730 = vpop.f32.mrb[0].mxu0
        %v9731 = vadd.f32 %v9650, %v9730
        %v9732 = vpop.f32.mrb[0].mxu0
        %9733 = vdwg.mxu0
        %v9734 = vld [vmem:[%s5] sm:$0x1]
        %v9736 = vlaneseq
        %v9737 = vshrl.u32 %v9736, 7
        %v9738 = vsub.s32 0, %v9737
        %v9739 = vrot.slane %v9734, %v9738
        %v9741 = vmul.f32 %v9688, %v9739
        %v9742 = vmul.f32 %v9691, %v9739
        %v9743 = vmul.f32 %v9696, %v9739
        %v9744 = vmul.f32 %v9699, %v9739
        %v9745 = vmul.f32 %v9704, %v9739
        %v9746 = vmul.f32 %v9707, %v9739
        %v9747 = vmul.f32 %v9712, %v9739
        %v9748 = vmul.f32 %v9715, %v9739
        %v9749 = vmul.f32 %v9720, %v9739
        %v9750 = vmul.f32 %v9723, %v9739
        %v9751 = vmul.f32 %v9728, %v9739
        %v9752 = vmul.f32 %v9731, %v9739
        %v9753 = vld [vmem:[%s6] sm:$0x1]
        %v9755 = vlaneseq
        %v9756 = vshrl.u32 %v9755, 7
        %v9757 = vsub.s32 0, %v9756
        %v9758 = vrot.slane %v9753, %v9757
        %v9760 = vadd.f32 %v9741, %v9758
        %v9761 = vadd.f32 %v9742, %v9758
        %v9762 = vadd.f32 %v9743, %v9758
        %v9763 = vadd.f32 %v9744, %v9758
        %v9764 = vadd.f32 %v9745, %v9758
        %v9765 = vadd.f32 %v9746, %v9758
        %v9766 = vadd.f32 %v9747, %v9758
        %v9767 = vadd.f32 %v9748, %v9758
        %v9768 = vadd.f32 %v9749, %v9758
        %v9769 = vadd.f32 %v9750, %v9758
        %v9770 = vadd.f32 %v9751, %v9758
        %v9771 = vadd.f32 %v9752, %v9758
        %v9772 = vmax.f32 %v9760, 0.0
        %v9773 = vmax.f32 %v9761, 0.0
        %v9774 = vmax.f32 %v9762, 0.0
        %v9775 = vmax.f32 %v9763, 0.0
        %v9776 = vmax.f32 %v9764, 0.0
        %v9777 = vmax.f32 %v9765, 0.0
        %v9778 = vmax.f32 %v9766, 0.0
        %v9779 = vmax.f32 %v9767, 0.0
        %v9780 = vmax.f32 %v9768, 0.0
        %v9781 = vmax.f32 %v9769, 0.0
        %v9782 = vmax.f32 %v9770, 0.0
        %v9783 = vmax.f32 %v9771, 0.0
        %v9784 = vld [vmem:[%s7] sm:$0xff]
        %v9785 = vld [vmem:[%s7 + $0x8] sm:$0xff]
        %v9786 = vld [vmem:[%s7 + $0x10] sm:$0xff]
        %v9787 = vld [vmem:[%s7 + $0x18] sm:$0xff]
        %v9788 = vld [vmem:[%s7 + $0x20] sm:$0xff]
        %v9789 = vld [vmem:[%s7 + $0x28] sm:$0xff]
        %v9790 = vld [vmem:[%s7 + $0x30] sm:$0xff]
        %v9791 = vld [vmem:[%s7 + $0x38] sm:$0xff]
        %v9792 = vld [vmem:[%s7 + $0x40] sm:$0xff]
        %v9793 = vld [vmem:[%s7 + $0x48] sm:$0xff]
        %v9794 = vld [vmem:[%s7 + $0x50] sm:$0xff]
        %v9795 = vld [vmem:[%s7 + $0x58] sm:$0x7]
        %v9796 = vmul.f32 %v9772, %v9784
        %v9797 = vmul.f32 %v9773, %v9785
        %v9798 = vmul.f32 %v9774, %v9786
        %v9799 = vmul.f32 %v9775, %v9787
        %v9800 = vmul.f32 %v9776, %v9788
        %v9801 = vmul.f32 %v9777, %v9789
        %v9802 = vmul.f32 %v9778, %v9790
        %v9803 = vmul.f32 %v9779, %v9791
        %v9804 = vmul.f32 %v9780, %v9792
        %v9805 = vmul.f32 %v9781, %v9793
        %v9806 = vmul.f32 %v9782, %v9794
        %v9807 = vmul.f32 %v9783, %v9795
        %v9808 = vsel %vm9158, %v9796, 0.0
        %v9809 = vsel %vm9158, %v9797, 0.0
        %v9810 = vadd.f32 %v9808, %v9809
        %v9811 = vsel %vm9158, %v9798, 0.0
        %v9812 = vadd.f32 %v9810, %v9811
        %v9813 = vsel %vm9158, %v9799, 0.0
        %v9814 = vadd.f32 %v9812, %v9813
        %v9815 = vsel %vm9158, %v9800, 0.0
        %v9816 = vadd.f32 %v9814, %v9815
        %v9817 = vsel %vm9158, %v9801, 0.0
        %v9818 = vadd.f32 %v9816, %v9817
        %v9819 = vsel %vm9158, %v9802, 0.0
        %v9820 = vadd.f32 %v9818, %v9819
        %v9821 = vsel %vm9158, %v9803, 0.0
        %v9822 = vadd.f32 %v9820, %v9821
        %v9823 = vsel %vm9158, %v9804, 0.0
        %v9824 = vadd.f32 %v9822, %v9823
        %v9825 = vsel %vm9158, %v9805, 0.0
        %v9826 = vadd.f32 %v9824, %v9825
        %v9827 = vsel %vm9158, %v9806, 0.0
        %v9828 = vadd.f32 %v9826, %v9827
        %vm9829 = vcmask 518144
        %v9830 = vsel %vm9829, %v9807, 0.0
        %v9831 = vadd.f32 %v9828, %v9830
        %v9832 = vrot.slane %v9831, 4
        %v9833 = vadd.f32 %v9831, %v9832
        %v9834 = vrot.slane %v9833, 2
        %v9835 = vadd.f32 %v9833, %v9834
        %v9836 = vrot.slane %v9835, 1
        %v9837 = vadd.f32 %v9835, %v9836
        %v9838 = vsel %vm9158, %v9837, 0.0
        %9839 = vadd.xlane.f32.xlu0 %v9838
        %v9840 = vpop.xlane.xlu0 %9839
        %s9841 = scalar_lea.vmem %s7, 96
        %v9842 = vld [vmem:[%s9841] sm:$0xff]
        %v9843 = vld [vmem:[%s9841 + $0x8] sm:$0xff]
        %v9844 = vld [vmem:[%s9841 + $0x10] sm:$0xff]
        %v9845 = vld [vmem:[%s9841 + $0x18] sm:$0xff]
        %v9846 = vld [vmem:[%s9841 + $0x20] sm:$0xff]
        %v9847 = vld [vmem:[%s9841 + $0x28] sm:$0xff]
        %v9848 = vld [vmem:[%s9841 + $0x30] sm:$0xff]
        %v9849 = vld [vmem:[%s9841 + $0x38] sm:$0xff]
        %v9850 = vld [vmem:[%s9841 + $0x40] sm:$0xff]
        %v9851 = vld [vmem:[%s9841 + $0x48] sm:$0xff]
        %v9852 = vld [vmem:[%s9841 + $0x50] sm:$0xff]
        %v9853 = vld [vmem:[%s9841 + $0x58] sm:$0x7]
        %v9854 = vmul.f32 %v9772, %v9842
        %v9855 = vmul.f32 %v9773, %v9843
        %v9856 = vmul.f32 %v9774, %v9844
        %v9857 = vmul.f32 %v9775, %v9845
        %v9858 = vmul.f32 %v9776, %v9846
        %v9859 = vmul.f32 %v9777, %v9847
        %v9860 = vmul.f32 %v9778, %v9848
        %v9861 = vmul.f32 %v9779, %v9849
        %v9862 = vmul.f32 %v9780, %v9850
        %v9863 = vmul.f32 %v9781, %v9851
        %v9864 = vmul.f32 %v9782, %v9852
        %v9865 = vmul.f32 %v9783, %v9853
        %v9866 = vsel %vm9158, %v9854, 0.0
        %v9867 = vsel %vm9158, %v9855, 0.0
        %v9868 = vadd.f32 %v9866, %v9867
        %v9869 = vsel %vm9158, %v9856, 0.0
        %v9870 = vadd.f32 %v9868, %v9869
        %v9871 = vsel %vm9158, %v9857, 0.0
        %v9872 = vadd.f32 %v9870, %v9871
        %v9873 = vsel %vm9158, %v9858, 0.0
        %v9874 = vadd.f32 %v9872, %v9873
        %v9875 = vsel %vm9158, %v9859, 0.0
        %v9876 = vadd.f32 %v9874, %v9875
        %v9877 = vsel %vm9158, %v9860, 0.0
        %v9878 = vadd.f32 %v9876, %v9877
        %v9879 = vsel %vm9158, %v9861, 0.0
        %v9880 = vadd.f32 %v9878, %v9879
        %v9881 = vsel %vm9158, %v9862, 0.0
        %v9882 = vadd.f32 %v9880, %v9881
        %v9883 = vsel %vm9158, %v9863, 0.0
        %v9884 = vadd.f32 %v9882, %v9883
        %v9885 = vsel %vm9158, %v9864, 0.0
        %v9886 = vadd.f32 %v9884, %v9885
        %v9887 = vsel %vm9829, %v9865, 0.0
        %v9888 = vadd.f32 %v9886, %v9887
        %v9889 = vrot.slane %v9888, 4
        %v9890 = vadd.f32 %v9888, %v9889
        %v9891 = vrot.slane %v9890, 2
        %v9892 = vadd.f32 %v9890, %v9891
        %v9893 = vrot.slane %v9892, 1
        %v9894 = vadd.f32 %v9892, %v9893
        %v9895 = vsel %vm9158, %v9894, 0.0
        %9896 = vadd.xlane.f32.xlu0 %v9895
        %v9897 = vpop.xlane.xlu0 %9896
        %s9898 = scalar_lea.vmem %s7, 192
        %v9899 = vld [vmem:[%s9898] sm:$0xff]
        %v9900 = vld [vmem:[%s9898 + $0x8] sm:$0xff]
        %v9901 = vld [vmem:[%s9898 + $0x10] sm:$0xff]
        %v9902 = vld [vmem:[%s9898 + $0x18] sm:$0xff]
        %v9903 = vld [vmem:[%s9898 + $0x20] sm:$0xff]
        %v9904 = vld [vmem:[%s9898 + $0x28] sm:$0xff]
        %v9905 = vld [vmem:[%s9898 + $0x30] sm:$0xff]
        %v9906 = vld [vmem:[%s9898 + $0x38] sm:$0xff]
        %v9907 = vld [vmem:[%s9898 + $0x40] sm:$0xff]
        %v9908 = vld [vmem:[%s9898 + $0x48] sm:$0xff]
        %v9909 = vld [vmem:[%s9898 + $0x50] sm:$0xff]
        %v9910 = vld [vmem:[%s9898 + $0x58] sm:$0x7]
        %v9911 = vmul.f32 %v9772, %v9899
        %v9912 = vmul.f32 %v9773, %v9900
        %v9913 = vmul.f32 %v9774, %v9901
        %v9914 = vmul.f32 %v9775, %v9902
        %v9915 = vmul.f32 %v9776, %v9903
        %v9916 = vmul.f32 %v9777, %v9904
        %v9917 = vmul.f32 %v9778, %v9905
        %v9918 = vmul.f32 %v9779, %v9906
        %v9919 = vmul.f32 %v9780, %v9907
        %v9920 = vmul.f32 %v9781, %v9908
        %v9921 = vmul.f32 %v9782, %v9909
        %v9922 = vmul.f32 %v9783, %v9910
        %v9923 = vsel %vm9158, %v9911, 0.0
        %v9924 = vsel %vm9158, %v9912, 0.0
        %v9925 = vadd.f32 %v9923, %v9924
        %v9926 = vsel %vm9158, %v9913, 0.0
        %v9927 = vadd.f32 %v9925, %v9926
        %v9928 = vsel %vm9158, %v9914, 0.0
        %v9929 = vadd.f32 %v9927, %v9928
        %v9930 = vsel %vm9158, %v9915, 0.0
        %v9931 = vadd.f32 %v9929, %v9930
        %v9932 = vsel %vm9158, %v9916, 0.0
        %v9933 = vadd.f32 %v9931, %v9932
        %v9934 = vsel %vm9158, %v9917, 0.0
        %v9935 = vadd.f32 %v9933, %v9934
        %v9936 = vsel %vm9158, %v9918, 0.0
        %v9937 = vadd.f32 %v9935, %v9936
        %v9938 = vsel %vm9158, %v9919, 0.0
        %v9939 = vadd.f32 %v9937, %v9938
        %v9940 = vsel %vm9158, %v9920, 0.0
        %v9941 = vadd.f32 %v9939, %v9940
        %v9942 = vsel %vm9158, %v9921, 0.0
        %v9943 = vadd.f32 %v9941, %v9942
        %v9944 = vsel %vm9829, %v9922, 0.0
        %v9945 = vadd.f32 %v9943, %v9944
        %v9946 = vrot.slane %v9945, 4
        %v9947 = vadd.f32 %v9945, %v9946
        %v9948 = vrot.slane %v9947, 2
        %v9949 = vadd.f32 %v9947, %v9948
        %v9950 = vrot.slane %v9949, 1
        %v9951 = vadd.f32 %v9949, %v9950
        %v9952 = vsel %vm9158, %v9951, 0.0
        %9953 = vadd.xlane.f32.xlu0 %v9952
        %v9954 = vpop.xlane.xlu0 %9953
        %s9955 = scalar_lea.vmem %s7, 288
        %v9956 = vld [vmem:[%s9955] sm:$0xff]
        %v9957 = vld [vmem:[%s9955 + $0x8] sm:$0xff]
        %v9958 = vld [vmem:[%s9955 + $0x10] sm:$0xff]
        %v9959 = vld [vmem:[%s9955 + $0x18] sm:$0xff]
        %v9960 = vld [vmem:[%s9955 + $0x20] sm:$0xff]
        %v9961 = vld [vmem:[%s9955 + $0x28] sm:$0xff]
        %v9962 = vld [vmem:[%s9955 + $0x30] sm:$0xff]
        %v9963 = vld [vmem:[%s9955 + $0x38] sm:$0xff]
        %v9964 = vld [vmem:[%s9955 + $0x40] sm:$0xff]
        %v9965 = vld [vmem:[%s9955 + $0x48] sm:$0xff]
        %v9966 = vld [vmem:[%s9955 + $0x50] sm:$0xff]
        %v9967 = vld [vmem:[%s9955 + $0x58] sm:$0x7]
        %v9968 = vmul.f32 %v9772, %v9956
        %v9969 = vmul.f32 %v9773, %v9957
        %v9970 = vmul.f32 %v9774, %v9958
        %v9971 = vmul.f32 %v9775, %v9959
        %v9972 = vmul.f32 %v9776, %v9960
        %v9973 = vmul.f32 %v9777, %v9961
        %v9974 = vmul.f32 %v9778, %v9962
        %v9975 = vmul.f32 %v9779, %v9963
        %v9976 = vmul.f32 %v9780, %v9964
        %v9977 = vmul.f32 %v9781, %v9965
        %v9978 = vmul.f32 %v9782, %v9966
        %v9979 = vmul.f32 %v9783, %v9967
        %v9980 = vsel %vm9158, %v9968, 0.0
        %v9981 = vsel %vm9158, %v9969, 0.0
        %v9982 = vadd.f32 %v9980, %v9981
        %v9983 = vsel %vm9158, %v9970, 0.0
        %v9984 = vadd.f32 %v9982, %v9983
        %v9985 = vsel %vm9158, %v9971, 0.0
        %v9986 = vadd.f32 %v9984, %v9985
        %v9987 = vsel %vm9158, %v9972, 0.0
        %v9988 = vadd.f32 %v9986, %v9987
        %v9989 = vsel %vm9158, %v9973, 0.0
        %v9990 = vadd.f32 %v9988, %v9989
        %v9991 = vsel %vm9158, %v9974, 0.0
        %v9992 = vadd.f32 %v9990, %v9991
        %v9993 = vsel %vm9158, %v9975, 0.0
        %v9994 = vadd.f32 %v9992, %v9993
        %v9995 = vsel %vm9158, %v9976, 0.0
        %v9996 = vadd.f32 %v9994, %v9995
        %v9997 = vsel %vm9158, %v9977, 0.0
        %v9998 = vadd.f32 %v9996, %v9997
        %v9999 = vsel %vm9158, %v9978, 0.0
        %v10000 = vadd.f32 %v9998, %v9999
        %v10001 = vsel %vm9829, %v9979, 0.0
        %v10002 = vadd.f32 %v10000, %v10001
        %v10003 = vrot.slane %v10002, 4
        %v10004 = vadd.f32 %v10002, %v10003
        %v10005 = vrot.slane %v10004, 2
        %v10006 = vadd.f32 %v10004, %v10005
        %v10007 = vrot.slane %v10006, 1
        %v10008 = vadd.f32 %v10006, %v10007
        %v10009 = vsel %vm9158, %v10008, 0.0
        %10010 = vadd.xlane.f32.xlu0 %v10009
        %v10011 = vpop.xlane.xlu0 %10010
        %s10012 = scalar_lea.vmem %s7, 384
        %v10013 = vld [vmem:[%s10012] sm:$0xff]
        %v10014 = vld [vmem:[%s10012 + $0x8] sm:$0xff]
        %v10015 = vld [vmem:[%s10012 + $0x10] sm:$0xff]
        %v10016 = vld [vmem:[%s10012 + $0x18] sm:$0xff]
        %v10017 = vld [vmem:[%s10012 + $0x20] sm:$0xff]
        %v10018 = vld [vmem:[%s10012 + $0x28] sm:$0xff]
        %v10019 = vld [vmem:[%s10012 + $0x30] sm:$0xff]
        %v10020 = vld [vmem:[%s10012 + $0x38] sm:$0xff]
        %v10021 = vld [vmem:[%s10012 + $0x40] sm:$0xff]
        %v10022 = vld [vmem:[%s10012 + $0x48] sm:$0xff]
        %v10023 = vld [vmem:[%s10012 + $0x50] sm:$0xff]
        %v10024 = vld [vmem:[%s10012 + $0x58] sm:$0x7]
        %v10025 = vmul.f32 %v9772, %v10013
        %v10026 = vmul.f32 %v9773, %v10014
        %v10027 = vmul.f32 %v9774, %v10015
        %v10028 = vmul.f32 %v9775, %v10016
        %v10029 = vmul.f32 %v9776, %v10017
        %v10030 = vmul.f32 %v9777, %v10018
        %v10031 = vmul.f32 %v9778, %v10019
        %v10032 = vmul.f32 %v9779, %v10020
        %v10033 = vmul.f32 %v9780, %v10021
        %v10034 = vmul.f32 %v9781, %v10022
        %v10035 = vmul.f32 %v9782, %v10023
        %v10036 = vmul.f32 %v9783, %v10024
        %v10037 = vsel %vm9158, %v10025, 0.0
        %v10038 = vsel %vm9158, %v10026, 0.0
        %v10039 = vadd.f32 %v10037, %v10038
        %v10040 = vsel %vm9158, %v10027, 0.0
        %v10041 = vadd.f32 %v10039, %v10040
        %v10042 = vsel %vm9158, %v10028, 0.0
        %v10043 = vadd.f32 %v10041, %v10042
        %v10044 = vsel %vm9158, %v10029, 0.0
        %v10045 = vadd.f32 %v10043, %v10044
        %v10046 = vsel %vm9158, %v10030, 0.0
        %v10047 = vadd.f32 %v10045, %v10046
        %v10048 = vsel %vm9158, %v10031, 0.0
        %v10049 = vadd.f32 %v10047, %v10048
        %v10050 = vsel %vm9158, %v10032, 0.0
        %v10051 = vadd.f32 %v10049, %v10050
        %v10052 = vsel %vm9158, %v10033, 0.0
        %v10053 = vadd.f32 %v10051, %v10052
        %v10054 = vsel %vm9158, %v10034, 0.0
        %v10055 = vadd.f32 %v10053, %v10054
        %v10056 = vsel %vm9158, %v10035, 0.0
        %v10057 = vadd.f32 %v10055, %v10056
        %v10058 = vsel %vm9829, %v10036, 0.0
        %v10059 = vadd.f32 %v10057, %v10058
        %v10060 = vrot.slane %v10059, 4
        %v10061 = vadd.f32 %v10059, %v10060
        %v10062 = vrot.slane %v10061, 2
        %v10063 = vadd.f32 %v10061, %v10062
        %v10064 = vrot.slane %v10063, 1
        %v10065 = vadd.f32 %v10063, %v10064
        %v10066 = vsel %vm9158, %v10065, 0.0
        %10067 = vadd.xlane.f32.xlu0 %v10066
        %v10068 = vpop.xlane.xlu0 %10067
        %s10069 = scalar_lea.vmem %s7, 480
        %v10070 = vld [vmem:[%s10069] sm:$0xff]
        %v10071 = vld [vmem:[%s10069 + $0x8] sm:$0xff]
        %v10072 = vld [vmem:[%s10069 + $0x10] sm:$0xff]
        %v10073 = vld [vmem:[%s10069 + $0x18] sm:$0xff]
        %v10074 = vld [vmem:[%s10069 + $0x20] sm:$0xff]
        %v10075 = vld [vmem:[%s10069 + $0x28] sm:$0xff]
        %v10076 = vld [vmem:[%s10069 + $0x30] sm:$0xff]
        %v10077 = vld [vmem:[%s10069 + $0x38] sm:$0xff]
        %v10078 = vld [vmem:[%s10069 + $0x40] sm:$0xff]
        %v10079 = vld [vmem:[%s10069 + $0x48] sm:$0xff]
        %v10080 = vld [vmem:[%s10069 + $0x50] sm:$0xff]
        %v10081 = vld [vmem:[%s10069 + $0x58] sm:$0x7]
        %v10082 = vmul.f32 %v9772, %v10070
        %v10083 = vmul.f32 %v9773, %v10071
        %v10084 = vmul.f32 %v9774, %v10072
        %v10085 = vmul.f32 %v9775, %v10073
        %v10086 = vmul.f32 %v9776, %v10074
        %v10087 = vmul.f32 %v9777, %v10075
        %v10088 = vmul.f32 %v9778, %v10076
        %v10089 = vmul.f32 %v9779, %v10077
        %v10090 = vmul.f32 %v9780, %v10078
        %v10091 = vmul.f32 %v9781, %v10079
        %v10092 = vmul.f32 %v9782, %v10080
        %v10093 = vmul.f32 %v9783, %v10081
        %v10094 = vsel %vm9158, %v10082, 0.0
        %v10095 = vsel %vm9158, %v10083, 0.0
        %v10096 = vadd.f32 %v10094, %v10095
        %v10097 = vsel %vm9158, %v10084, 0.0
        %v10098 = vadd.f32 %v10096, %v10097
        %v10099 = vsel %vm9158, %v10085, 0.0
        %v10100 = vadd.f32 %v10098, %v10099
        %v10101 = vsel %vm9158, %v10086, 0.0
        %v10102 = vadd.f32 %v10100, %v10101
        %v10103 = vsel %vm9158, %v10087, 0.0
        %v10104 = vadd.f32 %v10102, %v10103
        %v10105 = vsel %vm9158, %v10088, 0.0
        %v10106 = vadd.f32 %v10104, %v10105
        %v10107 = vsel %vm9158, %v10089, 0.0
        %v10108 = vadd.f32 %v10106, %v10107
        %v10109 = vsel %vm9158, %v10090, 0.0
        %v10110 = vadd.f32 %v10108, %v10109
        %v10111 = vsel %vm9158, %v10091, 0.0
        %v10112 = vadd.f32 %v10110, %v10111
        %v10113 = vsel %vm9158, %v10092, 0.0
        %v10114 = vadd.f32 %v10112, %v10113
        %v10115 = vsel %vm9829, %v10093, 0.0
        %v10116 = vadd.f32 %v10114, %v10115
        %v10117 = vrot.slane %v10116, 4
        %v10118 = vadd.f32 %v10116, %v10117
        %v10119 = vrot.slane %v10118, 2
        %v10120 = vadd.f32 %v10118, %v10119
        %v10121 = vrot.slane %v10120, 1
        %v10122 = vadd.f32 %v10120, %v10121
        %v10123 = vsel %vm9158, %v10122, 0.0
        %10124 = vadd.xlane.f32.xlu0 %v10123
        %v10125 = vpop.xlane.xlu0 %10124
        %s10126 = scalar_lea.vmem %s7, 576
        %v10127 = vld [vmem:[%s10126] sm:$0xff]
        %v10128 = vld [vmem:[%s10126 + $0x8] sm:$0xff]
        %v10129 = vld [vmem:[%s10126 + $0x10] sm:$0xff]
        %v10130 = vld [vmem:[%s10126 + $0x18] sm:$0xff]
        %v10131 = vld [vmem:[%s10126 + $0x20] sm:$0xff]
        %v10132 = vld [vmem:[%s10126 + $0x28] sm:$0xff]
        %v10133 = vld [vmem:[%s10126 + $0x30] sm:$0xff]
        %v10134 = vld [vmem:[%s10126 + $0x38] sm:$0xff]
        %v10135 = vld [vmem:[%s10126 + $0x40] sm:$0xff]
        %v10136 = vld [vmem:[%s10126 + $0x48] sm:$0xff]
        %v10137 = vld [vmem:[%s10126 + $0x50] sm:$0xff]
        %v10138 = vld [vmem:[%s10126 + $0x58] sm:$0x7]
        %v10139 = vmul.f32 %v9772, %v10127
        %v10140 = vmul.f32 %v9773, %v10128
        %v10141 = vmul.f32 %v9774, %v10129
        %v10142 = vmul.f32 %v9775, %v10130
        %v10143 = vmul.f32 %v9776, %v10131
        %v10144 = vmul.f32 %v9777, %v10132
        %v10145 = vmul.f32 %v9778, %v10133
        %v10146 = vmul.f32 %v9779, %v10134
        %v10147 = vmul.f32 %v9780, %v10135
        %v10148 = vmul.f32 %v9781, %v10136
        %v10149 = vmul.f32 %v9782, %v10137
        %v10150 = vmul.f32 %v9783, %v10138
        %v10151 = vsel %vm9158, %v10139, 0.0
        %v10152 = vsel %vm9158, %v10140, 0.0
        %v10153 = vadd.f32 %v10151, %v10152
        %v10154 = vsel %vm9158, %v10141, 0.0
        %v10155 = vadd.f32 %v10153, %v10154
        %v10156 = vsel %vm9158, %v10142, 0.0
        %v10157 = vadd.f32 %v10155, %v10156
        %v10158 = vsel %vm9158, %v10143, 0.0
        %v10159 = vadd.f32 %v10157, %v10158
        %v10160 = vsel %vm9158, %v10144, 0.0
        %v10161 = vadd.f32 %v10159, %v10160
        %v10162 = vsel %vm9158, %v10145, 0.0
        %v10163 = vadd.f32 %v10161, %v10162
        %v10164 = vsel %vm9158, %v10146, 0.0
        %v10165 = vadd.f32 %v10163, %v10164
        %v10166 = vsel %vm9158, %v10147, 0.0
        %v10167 = vadd.f32 %v10165, %v10166
        %v10168 = vsel %vm9158, %v10148, 0.0
        %v10169 = vadd.f32 %v10167, %v10168
        %v10170 = vsel %vm9158, %v10149, 0.0
        %v10171 = vadd.f32 %v10169, %v10170
        %v10172 = vsel %vm9829, %v10150, 0.0
        %v10173 = vadd.f32 %v10171, %v10172
        %v10174 = vrot.slane %v10173, 4
        %v10175 = vadd.f32 %v10173, %v10174
        %v10176 = vrot.slane %v10175, 2
        %v10177 = vadd.f32 %v10175, %v10176
        %v10178 = vrot.slane %v10177, 1
        %v10179 = vadd.f32 %v10177, %v10178
        %v10180 = vsel %vm9158, %v10179, 0.0
        %10181 = vadd.xlane.f32.xlu0 %v10180
        %v10182 = vpop.xlane.xlu0 %10181
        %s10183 = scalar_lea.vmem %s7, 672
        %v10184 = vld [vmem:[%s10183] sm:$0xff]
        %v10185 = vld [vmem:[%s10183 + $0x8] sm:$0xff]
        %v10186 = vld [vmem:[%s10183 + $0x10] sm:$0xff]
        %v10187 = vld [vmem:[%s10183 + $0x18] sm:$0xff]
        %v10188 = vld [vmem:[%s10183 + $0x20] sm:$0xff]
        %v10189 = vld [vmem:[%s10183 + $0x28] sm:$0xff]
        %v10190 = vld [vmem:[%s10183 + $0x30] sm:$0xff]
        %v10191 = vld [vmem:[%s10183 + $0x38] sm:$0xff]
        %v10192 = vld [vmem:[%s10183 + $0x40] sm:$0xff]
        %v10193 = vld [vmem:[%s10183 + $0x48] sm:$0xff]
        %v10194 = vld [vmem:[%s10183 + $0x50] sm:$0xff]
        %v10195 = vld [vmem:[%s10183 + $0x58] sm:$0x7]
        %v10196 = vmul.f32 %v9772, %v10184
        %v10197 = vmul.f32 %v9773, %v10185
        %v10198 = vmul.f32 %v9774, %v10186
        %v10199 = vmul.f32 %v9775, %v10187
        %v10200 = vmul.f32 %v9776, %v10188
        %v10201 = vmul.f32 %v9777, %v10189
        %v10202 = vmul.f32 %v9778, %v10190
        %v10203 = vmul.f32 %v9779, %v10191
        %v10204 = vmul.f32 %v9780, %v10192
        %v10205 = vmul.f32 %v9781, %v10193
        %v10206 = vmul.f32 %v9782, %v10194
        %v10207 = vmul.f32 %v9783, %v10195
        %v10208 = vsel %vm9158, %v10196, 0.0
        %v10209 = vsel %vm9158, %v10197, 0.0
        %v10210 = vadd.f32 %v10208, %v10209
        %v10211 = vsel %vm9158, %v10198, 0.0
        %v10212 = vadd.f32 %v10210, %v10211
        %v10213 = vsel %vm9158, %v10199, 0.0
        %v10214 = vadd.f32 %v10212, %v10213
        %v10215 = vsel %vm9158, %v10200, 0.0
        %v10216 = vadd.f32 %v10214, %v10215
        %v10217 = vsel %vm9158, %v10201, 0.0
        %v10218 = vadd.f32 %v10216, %v10217
        %v10219 = vsel %vm9158, %v10202, 0.0
        %v10220 = vadd.f32 %v10218, %v10219
        %v10221 = vsel %vm9158, %v10203, 0.0
        %v10222 = vadd.f32 %v10220, %v10221
        %v10223 = vsel %vm9158, %v10204, 0.0
        %v10224 = vadd.f32 %v10222, %v10223
        %v10225 = vsel %vm9158, %v10205, 0.0
        %v10226 = vadd.f32 %v10224, %v10225
        %v10227 = vsel %vm9158, %v10206, 0.0
        %v10228 = vadd.f32 %v10226, %v10227
        %v10229 = vsel %vm9829, %v10207, 0.0
        %v10230 = vadd.f32 %v10228, %v10229
        %v10231 = vrot.slane %v10230, 4
        %v10232 = vadd.f32 %v10230, %v10231
        %v10233 = vrot.slane %v10232, 2
        %v10234 = vadd.f32 %v10232, %v10233
        %v10235 = vrot.slane %v10234, 1
        %v10236 = vadd.f32 %v10234, %v10235
        %v10237 = vsel %vm9158, %v10236, 0.0
        %10238 = vadd.xlane.f32.xlu0 %v10237
        %v10239 = vpop.xlane.xlu0 %10238
        %s10240 = scalar_lea.vmem %s7, 768
        %v10241 = vld [vmem:[%s10240] sm:$0xff]
        %v10242 = vld [vmem:[%s10240 + $0x8] sm:$0xff]
        %v10243 = vld [vmem:[%s10240 + $0x10] sm:$0xff]
        %v10244 = vld [vmem:[%s10240 + $0x18] sm:$0xff]
        %v10245 = vld [vmem:[%s10240 + $0x20] sm:$0xff]
        %v10246 = vld [vmem:[%s10240 + $0x28] sm:$0xff]
        %v10247 = vld [vmem:[%s10240 + $0x30] sm:$0xff]
        %v10248 = vld [vmem:[%s10240 + $0x38] sm:$0xff]
        %v10249 = vld [vmem:[%s10240 + $0x40] sm:$0xff]
        %v10250 = vld [vmem:[%s10240 + $0x48] sm:$0xff]
        %v10251 = vld [vmem:[%s10240 + $0x50] sm:$0xff]
        %v10252 = vld [vmem:[%s10240 + $0x58] sm:$0x7]
        %v10253 = vmul.f32 %v9772, %v10241
        %v10254 = vmul.f32 %v9773, %v10242
        %v10255 = vmul.f32 %v9774, %v10243
        %v10256 = vmul.f32 %v9775, %v10244
        %v10257 = vmul.f32 %v9776, %v10245
        %v10258 = vmul.f32 %v9777, %v10246
        %v10259 = vmul.f32 %v9778, %v10247
        %v10260 = vmul.f32 %v9779, %v10248
        %v10261 = vmul.f32 %v9780, %v10249
        %v10262 = vmul.f32 %v9781, %v10250
        %v10263 = vmul.f32 %v9782, %v10251
        %v10264 = vmul.f32 %v9783, %v10252
        %v10265 = vsel %vm9158, %v10253, 0.0
        %v10266 = vsel %vm9158, %v10254, 0.0
        %v10267 = vadd.f32 %v10265, %v10266
        %v10268 = vsel %vm9158, %v10255, 0.0
        %v10269 = vadd.f32 %v10267, %v10268
        %v10270 = vsel %vm9158, %v10256, 0.0
        %v10271 = vadd.f32 %v10269, %v10270
        %v10272 = vsel %vm9158, %v10257, 0.0
        %v10273 = vadd.f32 %v10271, %v10272
        %v10274 = vsel %vm9158, %v10258, 0.0
        %v10275 = vadd.f32 %v10273, %v10274
        %v10276 = vsel %vm9158, %v10259, 0.0
        %v10277 = vadd.f32 %v10275, %v10276
        %v10278 = vsel %vm9158, %v10260, 0.0
        %v10279 = vadd.f32 %v10277, %v10278
        %v10280 = vsel %vm9158, %v10261, 0.0
        %v10281 = vadd.f32 %v10279, %v10280
        %v10282 = vsel %vm9158, %v10262, 0.0
        %v10283 = vadd.f32 %v10281, %v10282
        %v10284 = vsel %vm9158, %v10263, 0.0
        %v10285 = vadd.f32 %v10283, %v10284
        %v10286 = vsel %vm9829, %v10264, 0.0
        %v10287 = vadd.f32 %v10285, %v10286
        %v10288 = vrot.slane %v10287, 4
        %v10289 = vadd.f32 %v10287, %v10288
        %v10290 = vrot.slane %v10289, 2
        %v10291 = vadd.f32 %v10289, %v10290
        %v10292 = vrot.slane %v10291, 1
        %v10293 = vadd.f32 %v10291, %v10292
        %v10294 = vsel %vm9158, %v10293, 0.0
        %10295 = vadd.xlane.f32.xlu0 %v10294
        %v10296 = vpop.xlane.xlu0 %10295
        %s10297 = scalar_lea.vmem %s7, 864
        %v10298 = vld [vmem:[%s10297] sm:$0xff]
        %v10299 = vld [vmem:[%s10297 + $0x8] sm:$0xff]
        %v10300 = vld [vmem:[%s10297 + $0x10] sm:$0xff]
        %v10301 = vld [vmem:[%s10297 + $0x18] sm:$0xff]
        %v10302 = vld [vmem:[%s10297 + $0x20] sm:$0xff]
        %v10303 = vld [vmem:[%s10297 + $0x28] sm:$0xff]
        %v10304 = vld [vmem:[%s10297 + $0x30] sm:$0xff]
        %v10305 = vld [vmem:[%s10297 + $0x38] sm:$0xff]
        %v10306 = vld [vmem:[%s10297 + $0x40] sm:$0xff]
        %v10307 = vld [vmem:[%s10297 + $0x48] sm:$0xff]
        %v10308 = vld [vmem:[%s10297 + $0x50] sm:$0xff]
        %v10309 = vld [vmem:[%s10297 + $0x58] sm:$0x7]
        %v10310 = vmul.f32 %v9772, %v10298
        %v10311 = vmul.f32 %v9773, %v10299
        %v10312 = vmul.f32 %v9774, %v10300
        %v10313 = vmul.f32 %v9775, %v10301
        %v10314 = vmul.f32 %v9776, %v10302
        %v10315 = vmul.f32 %v9777, %v10303
        %v10316 = vmul.f32 %v9778, %v10304
        %v10317 = vmul.f32 %v9779, %v10305
        %v10318 = vmul.f32 %v9780, %v10306
        %v10319 = vmul.f32 %v9781, %v10307
        %v10320 = vmul.f32 %v9782, %v10308
        %v10321 = vmul.f32 %v9783, %v10309
        %v10322 = vsel %vm9158, %v10310, 0.0
        %v10323 = vsel %vm9158, %v10311, 0.0
        %v10324 = vadd.f32 %v10322, %v10323
        %v10325 = vsel %vm9158, %v10312, 0.0
        %v10326 = vadd.f32 %v10324, %v10325
        %v10327 = vsel %vm9158, %v10313, 0.0
        %v10328 = vadd.f32 %v10326, %v10327
        %v10329 = vsel %vm9158, %v10314, 0.0
        %v10330 = vadd.f32 %v10328, %v10329
        %v10331 = vsel %vm9158, %v10315, 0.0
        %v10332 = vadd.f32 %v10330, %v10331
        %v10333 = vsel %vm9158, %v10316, 0.0
        %v10334 = vadd.f32 %v10332, %v10333
        %v10335 = vsel %vm9158, %v10317, 0.0
        %v10336 = vadd.f32 %v10334, %v10335
        %v10337 = vsel %vm9158, %v10318, 0.0
        %v10338 = vadd.f32 %v10336, %v10337
        %v10339 = vsel %vm9158, %v10319, 0.0
        %v10340 = vadd.f32 %v10338, %v10339
        %v10341 = vsel %vm9158, %v10320, 0.0
        %v10342 = vadd.f32 %v10340, %v10341
        %v10343 = vsel %vm9829, %v10321, 0.0
        %v10344 = vadd.f32 %v10342, %v10343
        %v10345 = vrot.slane %v10344, 4
        %v10346 = vadd.f32 %v10344, %v10345
        %v10347 = vrot.slane %v10346, 2
        %v10348 = vadd.f32 %v10346, %v10347
        %v10349 = vrot.slane %v10348, 1
        %v10350 = vadd.f32 %v10348, %v10349
        %v10351 = vsel %vm9158, %v10350, 0.0
        %10352 = vadd.xlane.f32.xlu0 %v10351
        %v10353 = vpop.xlane.xlu0 %10352
        %vm10354 = vcmask 7168
        %v10355 = vsel %vm10354, %v9840, %v9897
        %vm10356 = vcmask 15360
        %v10357 = vsel %vm10356, %v10355, %v9954
        %v10358 = vsel %vm304, %v10357, %v10011
        %vm10359 = vcmask 31744
        %v10360 = vsel %vm10359, %v10358, %v10068
        %vm10361 = vcmask 39936
        %v10362 = vsel %vm10361, %v10360, %v10125
        %v10363 = vsel %vm1760, %v10362, %v10182
        %vm10364 = vcmask 56320
        %v10365 = vsel %vm10364, %v10363, %v10239
        %vm10366 = vcmask 64512
        %v10367 = vsel %vm10366, %v10365, %v10296
        %v10368 = vsel %vm1793, %v10367, %v10353
        %vm10369 = vcmask 73728
        %10370 = vst.msk [vmem:[%s297] sm:$0x1] %vm10369, %v10368
        %s10371 = sand.u32 %s203, 1
        %s10372 = scalar_lea.sflag [#allocation4], %s10371
        %s10373 = sand.u32 %s203, 1
        %s10374 = scalar_lea.vmem [#allocation3], %s10373
        // Predicated region
        $region53: #{cnn_forward.1} parent=51 // pred_check
          %p10375 = pneg %p213
        $region54: #{cnn_forward.1} parent=51 // pred_check_branch
          %10377 = sbr.rel (%p10375) target = $region56
        $region55: #{cnn_forward.1} parent=51 // pred_region
          %s10379 = ssub.s32 16, 16
          %10380 = vsyncadd %s10372, %s10379
          %s10381 = smul.addr %s22, 16
          %s10382 = scalar_lea.hbm %s8, %s10381
          %s10384 = sshll.u32 %s10374, 4
          %s10385 = int_to_ptr.vmem [resolvable:$true] %s10384
          %10387 = dma.vmem_to_hbm [thread:$0]  %s10385, 16, %s10382, %s10372
        $region56: #{cnn_forward.1} parent=51 // pred_fallthru
          _
      $region52: #{cnn_forward.1} parent=5 // pred_fallthru
        _
      %p10388 = scmp.le.s32.totalorder 2, %s17
      // Predicated region
      $region57: #{cnn_forward.1} parent=5 // pred_check
        %p10389 = pneg %p10388
      $region58: #{cnn_forward.1} parent=5 // pred_check_branch
        %10391 = sbr.rel (%p10389) target = $region60
      $region59: #{cnn_forward.1} parent=5 // pred_region
        %s10392 = ssub.s32 %s17, 2
        // Predicated region
        $region61: #{cnn_forward.1} parent=59 // pred_check
          %p10393 = pneg %p219
        $region62: #{cnn_forward.1} parent=59 // pred_check_branch
          %10395 = sbr.rel (%p10393) target = $region64
        $region63: #{cnn_forward.1} parent=59 // pred_region
          %s10396 = sand.u32 %s204, 1
          %s10397 = scalar_lea.sflag [#allocation4], %s10396
          %s10398 = sand.u32 %s204, 1
          %s10399 = scalar_lea.vmem [#allocation3], %s10398
          %10400 = dma.done %s10397, 16
        $region64: #{cnn_forward.1} parent=59 // pred_fallthru
          _
      $region60: #{cnn_forward.1} parent=5 // pred_fallthru
        _
    $region6: #{cnn_forward.1} parent=1 // loop_footer
      %s21 = sadd.s32 1, %s17
    $region7: #{cnn_forward.1} parent=1 // loop_footer_branch
      %16 = sbr.rel target = $region3
    $region8: #{cnn_forward.1} parent=1 // loop_exit
      _
    %10401 = vsyncpa [#allocation4], 1
    %s10402 = scalar_lea.sflag [#allocation4], 1
    %10403 = vsyncpa %s10402, 1

</llo_original>
